<compile_context>
chip_gen: v7x
topology: tpu7x:2x2x1
jax: 0.10.0
libtpu: 0.0.40
codegen_flags: <defaults>
</compile_context>

<pallas_src>
import functools

import jax
import jax.numpy as jnp
from jax.experimental import pallas as pl
from jax.experimental.pallas import tpu as pltpu


LAYER_DIMS = [4096, 2048, 1024, 512, 256, 128, 64]  # hidden widths from __init__

_VMEM_LIMIT_BYTES = 48 * 1024 * 1024  # > 32 MiB scoped default, < v7x 64 MiB physical


def _nbytes(*arrs):
    return int(sum(a.size * a.dtype.itemsize for a in arrs))


def _stream_spec(block_shape, index_map, buffer_depth):
    """BlockSpec for a streamed weight; requests deeper multi-buffering when asked."""
    if buffer_depth and buffer_depth > 2:
        return pl.BlockSpec(block_shape, index_map,
                            pipeline_mode=pl.Buffered(buffer_depth))
    return pl.BlockSpec(block_shape, index_map)


# ----------------------------------------------------------------------------
# Kernel 1 (head): layers 1+2 fused.  w2 (bf16) streamed over grid (N2//tn, K2//tk);
# x / w1 / b1 VMEM-resident; L2 accumulates directly in the f32 output block.
# ----------------------------------------------------------------------------
def _head_kernel(x_ref, w1_ref, b1_ref, w2_ref, b2_ref, o_ref, act1_ref):
    k = pl.program_id(1)
    tk = w2_ref.shape[0]

    @pl.when(k == 0)
    def _():
        # Layer 1 is tiny (M x C x 4096); recompute at k==0 so each megacore core
        # is self-contained (scratch is per-core).  Stored bf16 for the L2 dot.
        a1 = (jnp.dot(x_ref[...], w1_ref[...], preferred_element_type=jnp.float32)
              + b1_ref[...])
        act1_ref[...] = jnp.maximum(a1, 0.0).astype(act1_ref.dtype)
        # Seed the layer-2 accumulator (output block, VMEM-resident across k)
        # with the bias — no separate zero-fill / scratch accumulator.
        o_ref[...] = jnp.broadcast_to(b2_ref[...], o_ref.shape)

    k_off = pl.multiple_of(k * tk, tk)
    o_ref[...] += jnp.dot(act1_ref[:, pl.ds(k_off, tk)], w2_ref[...],
                          preferred_element_type=jnp.float32)

    @pl.when(k == pl.num_programs(1) - 1)
    def _():
        o_ref[...] = jnp.maximum(o_ref[...], 0.0)


def head_layers12(x, w1, b1, w2, b2, *, buffer_depth):
    M, C = x.shape
    C1, H1 = w1.shape
    K2, N2 = w2.shape
    assert C1 == C and K2 == H1
    tn = N2 // 2 if N2 >= 256 else N2   # split w2's N across the two v7x TCs
    tk = min(K2, 1024)                  # 2 MiB bf16 tiles -> >=4 k-steps per TC
    assert K2 % tk == 0 and N2 % tn == 0
    b1r = b1.reshape(1, H1)
    b2r = b2.reshape(1, N2)

    flops = 2 * M * (C * H1 + H1 * N2)
    bytes_accessed = _nbytes(x, w1, b1r, w2, b2r) + M * N2 * 4

    return pl.pallas_call(
        _head_kernel,
        out_shape=jax.ShapeDtypeStruct((M, N2), jnp.float32),
        grid_spec=pltpu.PrefetchScalarGridSpec(
            num_scalar_prefetch=0,
            grid=(N2 // tn, K2 // tk),
            in_specs=[
                pl.BlockSpec((M, C), lambda j, k: (0, 0)),      # x: resident (bf16)
                pl.BlockSpec((C, H1), lambda j, k: (0, 0)),     # w1: resident (256 KB)
                pl.BlockSpec((1, H1), lambda j, k: (0, 0)),     # b1: resident (f32)
                _stream_spec((tk, tn), lambda j, k: (k, j), buffer_depth),  # w2 stream
                pl.BlockSpec((1, tn), lambda j, k: (0, j)),     # b2
            ],
            out_specs=pl.BlockSpec((M, tn), lambda j, k: (0, j)),
            scratch_shapes=[pltpu.VMEM((M, H1), jnp.bfloat16)],  # layer-1 activation
        ),
        compiler_params=pltpu.CompilerParams(
            dimension_semantics=("parallel", "arbitrary"),
            vmem_limit_bytes=_VMEM_LIMIT_BYTES,
        ),
        cost_estimate=pl.CostEstimate(
            flops=flops, transcendentals=0, bytes_accessed=bytes_accessed),
    )(x, w1, b1r, w2, b2r)


# ----------------------------------------------------------------------------
# Kernel 2 (mid + tail): layer 3 streamed over its K axis (1 MiB bf16 tiles),
# accumulated into a (M, 1024) f32 scratch; on the last k step the fully
# VMEM-resident tail (L4..L8) runs and writes the final (M, Q) output.
# ----------------------------------------------------------------------------
def _mid_tail_kernel(*refs):
    x_ref, w3_ref, b3_ref = refs[0], refs[1], refs[2]
    o_ref, acc_ref = refs[-2], refs[-1]
    tail_refs = refs[3:-2]   # w4,b4,...,w8,b8

    k = pl.program_id(0)
    tk = w3_ref.shape[0]

    @pl.when(k == 0)
    def _():
        acc_ref[...] = jnp.broadcast_to(b3_ref[...], acc_ref.shape)

    k_off = pl.multiple_of(k * tk, tk)
    acc_ref[...] += jnp.dot(
        x_ref[:, pl.ds(k_off, tk)].astype(jnp.bfloat16), w3_ref[...],
        preferred_element_type=jnp.float32)

    @pl.when(k == pl.num_programs(0) - 1)
    def _():
        h = jnp.maximum(acc_ref[...], 0.0)
        for i in range(0, len(tail_refs), 2):
            w_ref, b_ref = tail_refs[i], tail_refs[i + 1]
            h = jnp.maximum(
                jnp.dot(h.astype(jnp.bfloat16), w_ref[...],
                        preferred_element_type=jnp.float32) + b_ref[...],
                0.0)
        o_ref[...] = h.astype(o_ref.dtype)


def mid_and_tail(x, layers, *, buffer_depth):
    (w3, b3) = layers[0]
    tail = layers[1:]
    M, K3 = x.shape
    K3w, N3 = w3.shape
    assert K3 == K3w
    tk = min(K3, 512)   # 1 MiB bf16 tiles -> 4-step k pipeline
    assert K3 % tk == 0
    b3r = b3.reshape(1, N3)

    args = [x, w3, b3r]
    in_specs = [
        pl.BlockSpec((M, K3), lambda k: (0, 0)),                  # L3 input: resident
        _stream_spec((tk, N3), lambda k: (k, 0), buffer_depth),   # w3: streamed
        pl.BlockSpec((1, N3), lambda k: (0, 0)),                  # b3
    ]
    flops = 2 * M * K3 * N3
    for w, b in tail:
        br = b.reshape(1, b.shape[0])
        args += [w, br]
        in_specs += [
            pl.BlockSpec(w.shape, lambda k: (0, 0)),
            pl.BlockSpec(br.shape, lambda k: (0, 0)),
        ]
        flops += 2 * M * w.shape[0] * w.shape[1]
    n_out = tail[-1][0].shape[1]
    bytes_accessed = _nbytes(*args) + M * n_out * 4

    return pl.pallas_call(
        _mid_tail_kernel,
        out_shape=jax.ShapeDtypeStruct((M, n_out), jnp.float32),
        grid_spec=pltpu.PrefetchScalarGridSpec(
            num_scalar_prefetch=0,
            grid=(K3 // tk,),
            in_specs=in_specs,
            out_specs=pl.BlockSpec((M, n_out), lambda k: (0, 0)),
            scratch_shapes=[pltpu.VMEM((M, N3), jnp.float32)],    # L3 accumulator
        ),
        compiler_params=pltpu.CompilerParams(
            dimension_semantics=("arbitrary",),
            vmem_limit_bytes=_VMEM_LIMIT_BYTES,
        ),
        cost_estimate=pl.CostEstimate(
            flops=flops, transcendentals=0, bytes_accessed=bytes_accessed),
    )(*args)


# ----------------------------------------------------------------------------
# Parameter setup (deterministic, synthetic) and forward passes.
# ----------------------------------------------------------------------------
def init_params(key, num_channels, num_quantiles):
    dims = [num_channels] + LAYER_DIMS + [num_quantiles]
    params = []
    for i in range(len(dims) - 1):
        key, kw, kb = jax.random.split(key, 3)
        fan_in, fan_out = dims[i], dims[i + 1]
        bound = 1.0 / jnp.sqrt(fan_in)
        # PyTorch Linear stores weight as (out, in); we keep (in, out) — i.e. the
        # transpose — so every kernel computes x @ W directly.  Weights in bf16
        # (HBM-bound net -> half the bytes), biases stay f32.
        w = jax.random.uniform(kw, (fan_in, fan_out), jnp.float32,
                               -bound, bound).astype(jnp.bfloat16)
        b = jax.random.uniform(kb, (fan_out,), jnp.float32, -bound, bound)
        params.append((w, b))
    return params


@functools.partial(jax.jit, static_argnames=("buffer_depth",))
def net_forward(params, x, buffer_depth=3):
    """Pallas forward pass: 2 fused kernels for the 8 linear+ReLU layers."""
    xb = x.astype(jnp.bfloat16)
    (w1, b1), (w2, b2) = params[0], params[1]
    h = head_layers12(xb, w1, b1, w2, b2, buffer_depth=buffer_depth)  # L1+L2
    return mid_and_tail(h, params[2:], buffer_depth=buffer_depth)     # L3 + L4..L8


def net_forward_ref(params, x):
    """Plain-JAX mixed-precision reference matching the kernel's bf16 casts."""
    h = x
    for w, b in params:
        h = jnp.maximum(
            jnp.dot(h.astype(jnp.bfloat16), w,
                    preferred_element_type=jnp.float32) + b,
            0.0)
    return h


if __name__ == "__main__":
    num_channels = 32
    num_quantiles = 8
    batch = 8  # multiple of 8 -> clean sublane layout

    key = jax.random.PRNGKey(0)
    key, kx = jax.random.split(key)
    params = init_params(key, num_channels, num_quantiles)
    x = jax.random.normal(kx, (batch, num_channels), jnp.float32)

    try:
        out = jax.block_until_ready(net_forward(params, x, buffer_depth=3))
    except Exception:
        # Fallback for Pallas versions without BlockSpec(pipeline_mode=pl.Buffered(n)):
        # default double-buffering already keeps the weight DMAs back-to-back here.
        out = jax.block_until_ready(net_forward(params, x, buffer_depth=0))

    ref = net_forward_ref(params, x)
    assert out.shape == (batch, num_quantiles), out.shape
    max_err = float(jnp.max(jnp.abs(out - ref)))
    assert jnp.allclose(out, ref, atol=1e-2, rtol=1e-2), f"mismatch vs reference, max|err|={max_err}"

    print("KERNEL_OK")
</pallas_src>

<mosaic_0001>
module attributes {stable_mosaic.version = 11 : i64} {
  func.func @_head_kernel(%arg0: i32, %arg1: i32, %arg2: memref<8x32xbf16, #tpu.memory_space<vmem>>, %arg3: memref<32x4096xbf16, #tpu.memory_space<vmem>>, %arg4: memref<1x4096xf32, #tpu.memory_space<vmem>>, %arg5: memref<1024x1024xbf16, #tpu.memory_space<vmem>>, %arg6: memref<1x1024xf32, #tpu.memory_space<vmem>>, %arg7: memref<8x1024xf32, #tpu.memory_space<vmem>>, %arg8: memref<8x4096xbf16, #tpu.memory_space<vmem>>) attributes {dimension_semantics = [#tpu.dimension_semantics<parallel>, #tpu.dimension_semantics<arbitrary>], iteration_bounds = array<i64: 2, 4>, scalar_prefetch = 0 : i64, scratch_operands = 1 : i64, tpu.core_type = #tpu.core_type<tc>, window_params = [{pipeline_mode = #tpu.pipeline_mode<synchronous>, transform_indices = @transform_0, window_bounds = array<i64: 8, 32>}, {pipeline_mode = #tpu.pipeline_mode<synchronous>, transform_indices = @transform_1, window_bounds = array<i64: 32, 4096>}, {pipeline_mode = #tpu.pipeline_mode<synchronous>, transform_indices = @transform_2, window_bounds = array<i64: 1, 4096>}, {transform_indices = @transform_3, window_bounds = array<i64: 1024, 1024>}, {transform_indices = @transform_4, window_bounds = array<i64: 1, 1024>}, {transform_indices = @transform_5, window_bounds = array<i64: 8, 1024>}]} {
    %c0_i32 = arith.constant 0 : i32
    %0 = arith.cmpi eq, %arg1, %c0_i32 : i32
    %1 = arith.extui %0 : i1 to i32
    %c0_i32_0 = arith.constant 0 : i32
    %2 = arith.cmpi ne, %1, %c0_i32_0 : i32
    scf.if %2 {
      %c0_8 = arith.constant 0 : index
      %c0_9 = arith.constant 0 : index
      %15 = vector.load %arg2[%c0_8, %c0_9] : memref<8x32xbf16, #tpu.memory_space<vmem>>, vector<8x32xbf16>
      %c0_10 = arith.constant 0 : index
      %c0_11 = arith.constant 0 : index
      %16 = vector.load %arg3[%c0_10, %c0_11] : memref<32x4096xbf16, #tpu.memory_space<vmem>>, vector<32x4096xbf16>
      %cst_12 = arith.constant dense<0.000000e+00> : vector<8x4096xf32>
      %17 = tpu.matmul %15, %16, %cst_12 {dimension_numbers = #tpu.dot_dimension_numbers<[1], [0], [0], [1], [0, 0, 1, 1], [], []>} : vector<8x32xbf16>, vector<32x4096xbf16>, vector<8x4096xf32> -> vector<8x4096xf32>
      %c0_13 = arith.constant 0 : index
      %c0_14 = arith.constant 0 : index
      %18 = vector.load %arg4[%c0_13, %c0_14] : memref<1x4096xf32, #tpu.memory_space<vmem>>, vector<1x4096xf32>
      %19 = vector.broadcast %18 : vector<1x4096xf32> to vector<8x4096xf32>
      %20 = arith.addf %17, %19 : vector<8x4096xf32>
      %cst_15 = arith.constant 0.000000e+00 : f32
      %21 = vector.broadcast %cst_15 : f32 to vector<8x4096xf32>
      %22 = arith.maximumf %20, %21 : vector<8x4096xf32>
      %23 = arith.truncf %22 : vector<8x4096xf32> to vector<8x4096xbf16>
      %c0_16 = arith.constant 0 : index
      %c0_17 = arith.constant 0 : index
      %24 = vector.load %arg8[%c0_16, %c0_17] : memref<8x4096xbf16, #tpu.memory_space<vmem>>, vector<8x4096xbf16>
      tpu.vector_store %arg8[%c0_16, %c0_17], %23 {strides = array<i32>} : memref<8x4096xbf16, #tpu.memory_space<vmem>>, vector<8x4096xbf16>,
      %c0_18 = arith.constant 0 : index
      %c0_19 = arith.constant 0 : index
      %25 = vector.load %arg6[%c0_18, %c0_19] : memref<1x1024xf32, #tpu.memory_space<vmem>>, vector<1x1024xf32>
      %26 = vector.shape_cast %25 : vector<1x1024xf32> to vector<1x1024xf32>
      %27 = vector.broadcast %26 : vector<1x1024xf32> to vector<8x1024xf32>
      %c0_20 = arith.constant 0 : index
      %c0_21 = arith.constant 0 : index
      %28 = vector.load %arg7[%c0_20, %c0_21] : memref<8x1024xf32, #tpu.memory_space<vmem>>, vector<8x1024xf32>
      tpu.vector_store %arg7[%c0_20, %c0_21], %27 {strides = array<i32>} : memref<8x1024xf32, #tpu.memory_space<vmem>>, vector<8x1024xf32>,
    } else {
    }
    %c1024_i32 = arith.constant 1024 : i32
    %3 = arith.muli %arg1, %c1024_i32 : i32
    %4 = tpu.assume_multiple %3, 1024 : i32
    %c0 = arith.constant 0 : index
    %c0_1 = arith.constant 0 : index
    %5 = vector.load %arg7[%c0, %c0_1] : memref<8x1024xf32, #tpu.memory_space<vmem>>, vector<8x1024xf32>
    %c0_2 = arith.constant 0 : index
    %6 = arith.index_cast %4 : i32 to index
    %7 = vector.load %arg8[%c0_2, %6] : memref<8x4096xbf16, #tpu.memory_space<vmem>>, vector<8x1024xbf16>
    %c0_3 = arith.constant 0 : index
    %c0_4 = arith.constant 0 : index
    %8 = vector.load %arg5[%c0_3, %c0_4] : memref<1024x1024xbf16, #tpu.memory_space<vmem>>, vector<1024x1024xbf16>
    %cst = arith.constant dense<0.000000e+00> : vector<8x1024xf32>
    %9 = tpu.matmul %7, %8, %cst {dimension_numbers = #tpu.dot_dimension_numbers<[1], [0], [0], [1], [0, 0, 1, 1], [], []>} : vector<8x1024xbf16>, vector<1024x1024xbf16>, vector<8x1024xf32> -> vector<8x1024xf32>
    %10 = arith.addf %5, %9 : vector<8x1024xf32>
    %c0_5 = arith.constant 0 : index
    %c0_6 = arith.constant 0 : index
    %11 = vector.load %arg7[%c0_5, %c0_6] : memref<8x1024xf32, #tpu.memory_space<vmem>>, vector<8x1024xf32>
    tpu.vector_store %arg7[%c0_5, %c0_6], %10 {strides = array<i32>} : memref<8x1024xf32, #tpu.memory_space<vmem>>, vector<8x1024xf32>,
    %c3_i32 = arith.constant 3 : i32
    %12 = arith.cmpi eq, %arg1, %c3_i32 : i32
    %13 = arith.extui %12 : i1 to i32
    %c0_i32_7 = arith.constant 0 : i32
    %14 = arith.cmpi ne, %13, %c0_i32_7 : i32
    scf.if %14 {
      %c0_8 = arith.constant 0 : index
      %c0_9 = arith.constant 0 : index
      %15 = vector.load %arg7[%c0_8, %c0_9] : memref<8x1024xf32, #tpu.memory_space<vmem>>, vector<8x1024xf32>
      %cst_10 = arith.constant 0.000000e+00 : f32
      %16 = vector.broadcast %cst_10 : f32 to vector<8x1024xf32>
      %17 = arith.maximumf %15, %16 : vector<8x1024xf32>
      %c0_11 = arith.constant 0 : index
      %c0_12 = arith.constant 0 : index
      %18 = vector.load %arg7[%c0_11, %c0_12] : memref<8x1024xf32, #tpu.memory_space<vmem>>, vector<8x1024xf32>
      tpu.vector_store %arg7[%c0_11, %c0_12], %17 {strides = array<i32>} : memref<8x1024xf32, #tpu.memory_space<vmem>>, vector<8x1024xf32>,
    } else {
    }
    return
  }
  func.func @transform_0(%arg0: i32, %arg1: i32) -> (i32, i32) {
    %c0_i32 = arith.constant 0 : i32
    %c0_i32_0 = arith.constant 0 : i32
    %c0_i32_1 = arith.constant 0 : i32
    return %c0_i32, %c0_i32_0 : i32, i32
  }
  func.func @transform_1(%arg0: i32, %arg1: i32) -> (i32, i32) {
    %c0_i32 = arith.constant 0 : i32
    %c0_i32_0 = arith.constant 0 : i32
    %c0_i32_1 = arith.constant 0 : i32
    return %c0_i32, %c0_i32_0 : i32, i32
  }
  func.func @transform_2(%arg0: i32, %arg1: i32) -> (i32, i32) {
    %c0_i32 = arith.constant 0 : i32
    %c0_i32_0 = arith.constant 0 : i32
    %c0_i32_1 = arith.constant 0 : i32
    return %c0_i32, %c0_i32_0 : i32, i32
  }
  func.func @transform_3(%arg0: i32, %arg1: i32) -> (i32, i32) {
    %c0_i32 = arith.constant 0 : i32
    return %arg1, %arg0 : i32, i32
  }
  func.func @transform_4(%arg0: i32, %arg1: i32) -> (i32, i32) {
    %c0_i32 = arith.constant 0 : i32
    %c0_i32_0 = arith.constant 0 : i32
    return %c0_i32, %arg0 : i32, i32
  }
  func.func @transform_5(%arg0: i32, %arg1: i32) -> (i32, i32) {
    %c0_i32 = arith.constant 0 : i32
    %c0_i32_0 = arith.constant 0 : i32
    return %c0_i32, %arg0 : i32, i32
  }
}

module attributes {stable_mosaic.version = 11 : i64} {
  func.func @_mid_tail_kernel(%arg0: i32, %arg1: memref<8x2048xf32, #tpu.memory_space<vmem>>, %arg2: memref<512x1024xbf16, #tpu.memory_space<vmem>>, %arg3: memref<1x1024xf32, #tpu.memory_space<vmem>>, %arg4: memref<1024x512xbf16, #tpu.memory_space<vmem>>, %arg5: memref<1x512xf32, #tpu.memory_space<vmem>>, %arg6: memref<512x256xbf16, #tpu.memory_space<vmem>>, %arg7: memref<1x256xf32, #tpu.memory_space<vmem>>, %arg8: memref<256x128xbf16, #tpu.memory_space<vmem>>, %arg9: memref<1x128xf32, #tpu.memory_space<vmem>>, %arg10: memref<128x64xbf16, #tpu.memory_space<vmem>>, %arg11: memref<1x64xf32, #tpu.memory_space<vmem>>, %arg12: memref<64x8xbf16, #tpu.memory_space<vmem>>, %arg13: memref<1x8xf32, #tpu.memory_space<vmem>>, %arg14: memref<8x8xf32, #tpu.memory_space<vmem>>, %arg15: memref<8x1024xf32, #tpu.memory_space<vmem>>) attributes {dimension_semantics = [#tpu.dimension_semantics<arbitrary>], iteration_bounds = array<i64: 4>, scalar_prefetch = 0 : i64, scratch_operands = 1 : i64, tpu.core_type = #tpu.core_type<tc>, window_params = [{pipeline_mode = #tpu.pipeline_mode<synchronous>, transform_indices = @transform_0, window_bounds = array<i64: 8, 2048>}, {transform_indices = @transform_1, window_bounds = array<i64: 512, 1024>}, {pipeline_mode = #tpu.pipeline_mode<synchronous>, transform_indices = @transform_2, window_bounds = array<i64: 1, 1024>}, {pipeline_mode = #tpu.pipeline_mode<synchronous>, transform_indices = @transform_3, window_bounds = array<i64: 1024, 512>}, {pipeline_mode = #tpu.pipeline_mode<synchronous>, transform_indices = @transform_4, window_bounds = array<i64: 1, 512>}, {pipeline_mode = #tpu.pipeline_mode<synchronous>, transform_indices = @transform_5, window_bounds = array<i64: 512, 256>}, {pipeline_mode = #tpu.pipeline_mode<synchronous>, transform_indices = @transform_6, window_bounds = array<i64: 1, 256>}, {pipeline_mode = #tpu.pipeline_mode<synchronous>, transform_indices = @transform_7, window_bounds = array<i64: 256, 128>}, {pipeline_mode = #tpu.pipeline_mode<synchronous>, transform_indices = @transform_8, window_bounds = array<i64: 1, 128>}, {pipeline_mode = #tpu.pipeline_mode<synchronous>, transform_indices = @transform_9, window_bounds = array<i64: 128, 64>}, {pipeline_mode = #tpu.pipeline_mode<synchronous>, transform_indices = @transform_10, window_bounds = array<i64: 1, 64>}, {pipeline_mode = #tpu.pipeline_mode<synchronous>, transform_indices = @transform_11, window_bounds = array<i64: 64, 8>}, {pipeline_mode = #tpu.pipeline_mode<synchronous>, transform_indices = @transform_12, window_bounds = array<i64: 1, 8>}, {pipeline_mode = #tpu.pipeline_mode<synchronous>, transform_indices = @transform_13, window_bounds = array<i64: 8, 8>}]} {
    %c0_i32 = arith.constant 0 : i32
    %0 = arith.cmpi eq, %arg0, %c0_i32 : i32
    %1 = arith.extui %0 : i1 to i32
    %c0_i32_0 = arith.constant 0 : i32
    %2 = arith.cmpi ne, %1, %c0_i32_0 : i32
    scf.if %2 {
      %c0_8 = arith.constant 0 : index
      %c0_9 = arith.constant 0 : index
      %16 = vector.load %arg3[%c0_8, %c0_9] : memref<1x1024xf32, #tpu.memory_space<vmem>>, vector<1x1024xf32>
      %17 = vector.shape_cast %16 : vector<1x1024xf32> to vector<1x1024xf32>
      %18 = vector.broadcast %17 : vector<1x1024xf32> to vector<8x1024xf32>
      %c0_10 = arith.constant 0 : index
      %c0_11 = arith.constant 0 : index
      %19 = vector.load %arg15[%c0_10, %c0_11] : memref<8x1024xf32, #tpu.memory_space<vmem>>, vector<8x1024xf32>
      tpu.vector_store %arg15[%c0_10, %c0_11], %18 {strides = array<i32>} : memref<8x1024xf32, #tpu.memory_space<vmem>>, vector<8x1024xf32>,
    } else {
    }
    %c512_i32 = arith.constant 512 : i32
    %3 = arith.muli %arg0, %c512_i32 : i32
    %4 = tpu.assume_multiple %3, 512 : i32
    %c0 = arith.constant 0 : index
    %c0_1 = arith.constant 0 : index
    %5 = vector.load %arg15[%c0, %c0_1] : memref<8x1024xf32, #tpu.memory_space<vmem>>, vector<8x1024xf32>
    %c0_2 = arith.constant 0 : index
    %6 = arith.index_cast %4 : i32 to index
    %7 = vector.load %arg1[%c0_2, %6] : memref<8x2048xf32, #tpu.memory_space<vmem>>, vector<8x512xf32>
    %8 = arith.truncf %7 : vector<8x512xf32> to vector<8x512xbf16>
    %c0_3 = arith.constant 0 : index
    %c0_4 = arith.constant 0 : index
    %9 = vector.load %arg2[%c0_3, %c0_4] : memref<512x1024xbf16, #tpu.memory_space<vmem>>, vector<512x1024xbf16>
    %cst = arith.constant dense<0.000000e+00> : vector<8x1024xf32>
    %10 = tpu.matmul %8, %9, %cst {dimension_numbers = #tpu.dot_dimension_numbers<[1], [0], [0], [1], [0, 0, 1, 1], [], []>} : vector<8x512xbf16>, vector<512x1024xbf16>, vector<8x1024xf32> -> vector<8x1024xf32>
    %11 = arith.addf %5, %10 : vector<8x1024xf32>
    %c0_5 = arith.constant 0 : index
    %c0_6 = arith.constant 0 : index
    %12 = vector.load %arg15[%c0_5, %c0_6] : memref<8x1024xf32, #tpu.memory_space<vmem>>, vector<8x1024xf32>
    tpu.vector_store %arg15[%c0_5, %c0_6], %11 {strides = array<i32>} : memref<8x1024xf32, #tpu.memory_space<vmem>>, vector<8x1024xf32>,
    %c3_i32 = arith.constant 3 : i32
    %13 = arith.cmpi eq, %arg0, %c3_i32 : i32
    %14 = arith.extui %13 : i1 to i32
    %c0_i32_7 = arith.constant 0 : i32
    %15 = arith.cmpi ne, %14, %c0_i32_7 : i32
    scf.if %15 {
      %c0_8 = arith.constant 0 : index
      %c0_9 = arith.constant 0 : index
      %16 = vector.load %arg15[%c0_8, %c0_9] : memref<8x1024xf32, #tpu.memory_space<vmem>>, vector<8x1024xf32>
      %cst_10 = arith.constant 0.000000e+00 : f32
      %17 = vector.broadcast %cst_10 : f32 to vector<8x1024xf32>
      %18 = arith.maximumf %16, %17 : vector<8x1024xf32>
      %19 = arith.truncf %18 : vector<8x1024xf32> to vector<8x1024xbf16>
      %c0_11 = arith.constant 0 : index
      %c0_12 = arith.constant 0 : index
      %20 = vector.load %arg4[%c0_11, %c0_12] : memref<1024x512xbf16, #tpu.memory_space<vmem>>, vector<1024x512xbf16>
      %cst_13 = arith.constant dense<0.000000e+00> : vector<8x512xf32>
      %21 = tpu.matmul %19, %20, %cst_13 {dimension_numbers = #tpu.dot_dimension_numbers<[1], [0], [0], [1], [0, 0, 1, 1], [], []>} : vector<8x1024xbf16>, vector<1024x512xbf16>, vector<8x512xf32> -> vector<8x512xf32>
      %c0_14 = arith.constant 0 : index
      %c0_15 = arith.constant 0 : index
      %22 = vector.load %arg5[%c0_14, %c0_15] : memref<1x512xf32, #tpu.memory_space<vmem>>, vector<1x512xf32>
      %23 = vector.broadcast %22 : vector<1x512xf32> to vector<8x512xf32>
      %24 = arith.addf %21, %23 : vector<8x512xf32>
      %cst_16 = arith.constant 0.000000e+00 : f32
      %25 = vector.broadcast %cst_16 : f32 to vector<8x512xf32>
      %26 = arith.maximumf %24, %25 : vector<8x512xf32>
      %27 = arith.truncf %26 : vector<8x512xf32> to vector<8x512xbf16>
      %c0_17 = arith.constant 0 : index
      %c0_18 = arith.constant 0 : index
      %28 = vector.load %arg6[%c0_17, %c0_18] : memref<512x256xbf16, #tpu.memory_space<vmem>>, vector<512x256xbf16>
      %cst_19 = arith.constant dense<0.000000e+00> : vector<8x256xf32>
      %29 = tpu.matmul %27, %28, %cst_19 {dimension_numbers = #tpu.dot_dimension_numbers<[1], [0], [0], [1], [0, 0, 1, 1], [], []>} : vector<8x512xbf16>, vector<512x256xbf16>, vector<8x256xf32> -> vector<8x256xf32>
      %c0_20 = arith.constant 0 : index
      %c0_21 = arith.constant 0 : index
      %30 = vector.load %arg7[%c0_20, %c0_21] : memref<1x256xf32, #tpu.memory_space<vmem>>, vector<1x256xf32>
      %31 = vector.broadcast %30 : vector<1x256xf32> to vector<8x256xf32>
      %32 = arith.addf %29, %31 : vector<8x256xf32>
      %cst_22 = arith.constant 0.000000e+00 : f32
      %33 = vector.broadcast %cst_22 : f32 to vector<8x256xf32>
      %34 = arith.maximumf %32, %33 : vector<8x256xf32>
      %35 = arith.truncf %34 : vector<8x256xf32> to vector<8x256xbf16>
      %c0_23 = arith.constant 0 : index
      %c0_24 = arith.constant 0 : index
      %36 = vector.load %arg8[%c0_23, %c0_24] : memref<256x128xbf16, #tpu.memory_space<vmem>>, vector<256x128xbf16>
      %cst_25 = arith.constant dense<0.000000e+00> : vector<8x128xf32>
      %37 = tpu.matmul %35, %36, %cst_25 {dimension_numbers = #tpu.dot_dimension_numbers<[1], [0], [0], [1], [0, 0, 1, 1], [], []>} : vector<8x256xbf16>, vector<256x128xbf16>, vector<8x128xf32> -> vector<8x128xf32>
      %c0_26 = arith.constant 0 : index
      %c0_27 = arith.constant 0 : index
      %38 = vector.load %arg9[%c0_26, %c0_27] : memref<1x128xf32, #tpu.memory_space<vmem>>, vector<1x128xf32>
      %39 = vector.broadcast %38 : vector<1x128xf32> to vector<8x128xf32>
      %40 = arith.addf %37, %39 : vector<8x128xf32>
      %cst_28 = arith.constant 0.000000e+00 : f32
      %41 = vector.broadcast %cst_28 : f32 to vector<8x128xf32>
      %42 = arith.maximumf %40, %41 : vector<8x128xf32>
      %43 = arith.truncf %42 : vector<8x128xf32> to vector<8x128xbf16>
      %c0_29 = arith.constant 0 : index
      %c0_30 = arith.constant 0 : index
      %44 = vector.load %arg10[%c0_29, %c0_30] : memref<128x64xbf16, #tpu.memory_space<vmem>>, vector<128x64xbf16>
      %cst_31 = arith.constant dense<0.000000e+00> : vector<8x64xf32>
      %45 = tpu.matmul %43, %44, %cst_31 {dimension_numbers = #tpu.dot_dimension_numbers<[1], [0], [0], [1], [0, 0, 1, 1], [], []>} : vector<8x128xbf16>, vector<128x64xbf16>, vector<8x64xf32> -> vector<8x64xf32>
      %c0_32 = arith.constant 0 : index
      %c0_33 = arith.constant 0 : index
      %46 = vector.load %arg11[%c0_32, %c0_33] : memref<1x64xf32, #tpu.memory_space<vmem>>, vector<1x64xf32>
      %47 = vector.broadcast %46 : vector<1x64xf32> to vector<8x64xf32>
      %48 = arith.addf %45, %47 : vector<8x64xf32>
      %cst_34 = arith.constant 0.000000e+00 : f32
      %49 = vector.broadcast %cst_34 : f32 to vector<8x64xf32>
      %50 = arith.maximumf %48, %49 : vector<8x64xf32>
      %51 = arith.truncf %50 : vector<8x64xf32> to vector<8x64xbf16>
      %c0_35 = arith.constant 0 : index
      %c0_36 = arith.constant 0 : index
      %52 = vector.load %arg12[%c0_35, %c0_36] : memref<64x8xbf16, #tpu.memory_space<vmem>>, vector<64x8xbf16>
      %cst_37 = arith.constant dense<0.000000e+00> : vector<8x8xf32>
      %53 = tpu.matmul %51, %52, %cst_37 {dimension_numbers = #tpu.dot_dimension_numbers<[1], [0], [0], [1], [0, 0, 1, 1], [], []>} : vector<8x64xbf16>, vector<64x8xbf16>, vector<8x8xf32> -> vector<8x8xf32>
      %c0_38 = arith.constant 0 : index
      %c0_39 = arith.constant 0 : index
      %54 = vector.load %arg13[%c0_38, %c0_39] : memref<1x8xf32, #tpu.memory_space<vmem>>, vector<1x8xf32>
      %55 = vector.broadcast %54 : vector<1x8xf32> to vector<8x8xf32>
      %56 = arith.addf %53, %55 : vector<8x8xf32>
      %cst_40 = arith.constant 0.000000e+00 : f32
      %57 = vector.broadcast %cst_40 : f32 to vector<8x8xf32>
      %58 = arith.maximumf %56, %57 : vector<8x8xf32>
      %c0_41 = arith.constant 0 : index
      %c0_42 = arith.constant 0 : index
      %59 = vector.load %arg14[%c0_41, %c0_42] : memref<8x8xf32, #tpu.memory_space<vmem>>, vector<8x8xf32>
      tpu.vector_store %arg14[%c0_41, %c0_42], %58 {strides = array<i32>} : memref<8x8xf32, #tpu.memory_space<vmem>>, vector<8x8xf32>,
    } else {
    }
    return
  }
  func.func @transform_0(%arg0: i32) -> (i32, i32) {
    %c0_i32 = arith.constant 0 : i32
    %c0_i32_0 = arith.constant 0 : i32
    %c0_i32_1 = arith.constant 0 : i32
    return %c0_i32, %c0_i32_0 : i32, i32
  }
  func.func @transform_1(%arg0: i32) -> (i32, i32) {
    %c0_i32 = arith.constant 0 : i32
    %c0_i32_0 = arith.constant 0 : i32
    return %arg0, %c0_i32 : i32, i32
  }
  func.func @transform_2(%arg0: i32) -> (i32, i32) {
    %c0_i32 = arith.constant 0 : i32
    %c0_i32_0 = arith.constant 0 : i32
    %c0_i32_1 = arith.constant 0 : i32
    return %c0_i32, %c0_i32_0 : i32, i32
  }
  func.func @transform_3(%arg0: i32) -> (i32, i32) {
    %c0_i32 = arith.constant 0 : i32
    %c0_i32_0 = arith.constant 0 : i32
    %c0_i32_1 = arith.constant 0 : i32
    return %c0_i32, %c0_i32_0 : i32, i32
  }
  func.func @transform_4(%arg0: i32) -> (i32, i32) {
    %c0_i32 = arith.constant 0 : i32
    %c0_i32_0 = arith.constant 0 : i32
    %c0_i32_1 = arith.constant 0 : i32
    return %c0_i32, %c0_i32_0 : i32, i32
  }
  func.func @transform_5(%arg0: i32) -> (i32, i32) {
    %c0_i32 = arith.constant 0 : i32
    %c0_i32_0 = arith.constant 0 : i32
    %c0_i32_1 = arith.constant 0 : i32
    return %c0_i32, %c0_i32_0 : i32, i32
  }
  func.func @transform_6(%arg0: i32) -> (i32, i32) {
    %c0_i32 = arith.constant 0 : i32
    %c0_i32_0 = arith.constant 0 : i32
    %c0_i32_1 = arith.constant 0 : i32
    return %c0_i32, %c0_i32_0 : i32, i32
  }
  func.func @transform_7(%arg0: i32) -> (i32, i32) {
    %c0_i32 = arith.constant 0 : i32
    %c0_i32_0 = arith.constant 0 : i32
    %c0_i32_1 = arith.constant 0 : i32
    return %c0_i32, %c0_i32_0 : i32, i32
  }
  func.func @transform_8(%arg0: i32) -> (i32, i32) {
    %c0_i32 = arith.constant 0 : i32
    %c0_i32_0 = arith.constant 0 : i32
    %c0_i32_1 = arith.constant 0 : i32
    return %c0_i32, %c0_i32_0 : i32, i32
  }
  func.func @transform_9(%arg0: i32) -> (i32, i32) {
    %c0_i32 = arith.constant 0 : i32
    %c0_i32_0 = arith.constant 0 : i32
    %c0_i32_1 = arith.constant 0 : i32
    return %c0_i32, %c0_i32_0 : i32, i32
  }
  func.func @transform_10(%arg0: i32) -> (i32, i32) {
    %c0_i32 = arith.constant 0 : i32
    %c0_i32_0 = arith.constant 0 : i32
    %c0_i32_1 = arith.constant 0 : i32
    return %c0_i32, %c0_i32_0 : i32, i32
  }
  func.func @transform_11(%arg0: i32) -> (i32, i32) {
    %c0_i32 = arith.constant 0 : i32
    %c0_i32_0 = arith.constant 0 : i32
    %c0_i32_1 = arith.constant 0 : i32
    return %c0_i32, %c0_i32_0 : i32, i32
  }
  func.func @transform_12(%arg0: i32) -> (i32, i32) {
    %c0_i32 = arith.constant 0 : i32
    %c0_i32_0 = arith.constant 0 : i32
    %c0_i32_1 = arith.constant 0 : i32
    return %c0_i32, %c0_i32_0 : i32, i32
  }
  func.func @transform_13(%arg0: i32) -> (i32, i32) {
    %c0_i32 = arith.constant 0 : i32
    %c0_i32_0 = arith.constant 0 : i32
    %c0_i32_1 = arith.constant 0 : i32
    return %c0_i32, %c0_i32_0 : i32, i32
  }
}

</mosaic_0001>

<llo_original>
// kernel: net_forward.3
$region0: #{net_forward.3}
  #allocation0 [shape = 'u32[]', space=smem, size = 0x4, offset = 0x4, fixed_abs, tag = 'smem constant byte address 0x4 - core index']
  #allocation1 [shape = 'u32[144,128]{1,0:T(1,128)}', space=vmem, size = 0x12000, scoped, tag = 'internal scratch']
  #allocation2 [shape = 'f32[8,1024]{1,0:T(8,128)}', space=vmem, size = 0x8000, scoped, tag = 'scratch operand']
  %s0 = inlined_call_operand.vmem [shape: f32[8,2048], index: 0, kind: input, shape index: {}]
  %s1 = inlined_call_operand.vmem [shape: bf16[2048,1024], index: 1, kind: input, shape index: {}]
  %s2 = inlined_call_operand.vmem [shape: f32[1,1024], index: 2, kind: input, shape index: {}]
  %s3 = inlined_call_operand.vmem [shape: bf16[1024,512], index: 3, kind: input, shape index: {}]
  %s4 = inlined_call_operand.vmem [shape: f32[1,512], index: 4, kind: input, shape index: {}]
  %s5 = inlined_call_operand.vmem [shape: bf16[512,256], index: 5, kind: input, shape index: {}]
  %s6 = inlined_call_operand.vmem [shape: f32[1,256], index: 6, kind: input, shape index: {}]
  %s7 = inlined_call_operand.vmem [shape: bf16[256,128], index: 7, kind: input, shape index: {}]
  %s8 = inlined_call_operand.vmem [shape: f32[1,128], index: 8, kind: input, shape index: {}]
  %s9 = inlined_call_operand.vmem [shape: bf16[128,64], index: 9, kind: input, shape index: {}]
  %s10 = inlined_call_operand.vmem [shape: f32[1,64], index: 10, kind: input, shape index: {}]
  %s11 = inlined_call_operand.vmem [shape: bf16[64,8], index: 11, kind: input, shape index: {}]
  %s12 = inlined_call_operand.vmem [shape: f32[1,8], index: 12, kind: input, shape index: {}]
  %s13 = inlined_call_operand.hbm [shape: f32[8,8], index: 13, kind: output, shape index: {}]
  %s14 = sld [smem:[#allocation0]]
  $region93: #{net_forward.3} parent=0
    _
  %s16 = ssub.s32 1, %s14
  %s17 = scalar_select 0, %s16, %s14
  $region1: #{net_forward.3} parent=0
    #allocation3 [shape = 'u8[4096]{0}', space=vmem, size = 0x1000, scoped, tag = 'output window, operand 0, single buffered']
    #allocation4 [shape = 's32[2]{0}', space=sflag, size = 0x8, scoped, tag = 'scoped memory for net_forward.3']
    %18 = vsyncpa [#allocation4], 0
    loop: start=0, step=1, limit=6
    $region2: #{net_forward.3} parent=1 // loop_pre_header
      _
    $region3: #{net_forward.3} parent=1 // loop_header
      %s20 = sphi 0, %s24
      %p21 = scmp.ge.s32.totalorder %s20, 6
      %s28 = sphi 0, %s28
      %s30 = sphi 0, %s28
      %s31 = sphi 0, %s30
      %s45 = sphi 0, %s31
      %s51 = sphi 0, %s53
      %s54 = sphi 0, %s51
      %s55 = sphi 0, %s54
      %s71 = sphi 0, %s55
      %s75 = sphi 0, %s75
      %s77 = sphi 0, %s75
      %s78 = sphi 0, %s77
      %s92 = sphi 0, %s78
      %s96 = sphi 0, %s96
      %s98 = sphi 0, %s96
      %s99 = sphi 0, %s98
      %s113 = sphi 0, %s99
      %s117 = sphi 0, %s117
      %s119 = sphi 0, %s117
      %s120 = sphi 0, %s119
      %s134 = sphi 0, %s120
      %s138 = sphi 0, %s138
      %s140 = sphi 0, %s138
      %s141 = sphi 0, %s140
      %s155 = sphi 0, %s141
      %s159 = sphi 0, %s159
      %s161 = sphi 0, %s159
      %s162 = sphi 0, %s161
      %s176 = sphi 0, %s162
      %s180 = sphi 0, %s180
      %s182 = sphi 0, %s180
      %s183 = sphi 0, %s182
      %s197 = sphi 0, %s183
      %s201 = sphi 0, %s201
      %s203 = sphi 0, %s201
      %s204 = sphi 0, %s203
      %s218 = sphi 0, %s204
      %s222 = sphi 0, %s222
      %s224 = sphi 0, %s222
      %s225 = sphi 0, %s224
      %s239 = sphi 0, %s225
      %s243 = sphi 0, %s243
      %s245 = sphi 0, %s243
      %s246 = sphi 0, %s245
      %s260 = sphi 0, %s246
      %s264 = sphi 0, %s264
      %s266 = sphi 0, %s264
      %s267 = sphi 0, %s266
      %s281 = sphi 0, %s267
      %s285 = sphi 0, %s285
      %s287 = sphi 0, %s285
      %s288 = sphi 0, %s287
      %s302 = sphi 0, %s288
      %s306 = sphi 0, %s306
      %s308 = sphi 0, %s306
      %s309 = sphi 0, %s308
      %s323 = sphi 0, %s309
    $region4: #{net_forward.3} parent=1 // loop_header_branch
      %23 = sbr.rel (%p21) target = $region8
    $region5: #{net_forward.3} parent=1 // loop_body
      %s25 = ssub.s32 %s20, 1
      %s26 = ssub.s32 %s20, 2
      %s27 = sadd.s32 %s20, 1
      %s29 = sadd.s32 %s28, 1
      %p32 = scmp.eq.s32.totalorder %s20, 3
      %p33 = scmp.ne.s32.totalorder %s28, %s30
      %p34 = scmp.eq.s32.totalorder %s20, 0
      %p35 = por %p33, %p34
      %p36 = scmp.ne.s32.totalorder %s28, %s30
      %p37 = scmp.eq.s32.totalorder %s25, 3
      %p38 = por %p36, %p37
      %p39 = scmp.ne.s32.totalorder %s30, %s31
      %p40 = scmp.eq.s32.totalorder %s25, 0
      %p41 = por %p39, %p40
      %p42 = scmp.ne.s32.totalorder %s30, %s31
      %p43 = scmp.eq.s32.totalorder %s26, 3
      %p44 = por %p42, %p43
      %p46 = scmp.ne.s32.totalorder %s31, %s45
      %p47 = scmp.eq.s32.totalorder %s26, 0
      %p48 = por %p46, %p47
      %s49 = ssub.s32 %s20, %s27
      %p50 = scmp.eq.s32.totalorder %s49, 0
      %s52 = sadd.s32 %s51, 1
      %s53 = scalar_select %p50, %s51, %s52
      %p56 = pneg %p50
      %p57 = scmp.eq.s32.totalorder %s20, 3
      %p58 = por %p56, %p57
      %p59 = scmp.ne.s32.totalorder %s51, %s54
      %p60 = scmp.eq.s32.totalorder %s20, 0
      %p61 = por %p59, %p60
      %p62 = scmp.ne.s32.totalorder %s51, %s54
      %p63 = scmp.eq.s32.totalorder %s25, 3
      %p64 = por %p62, %p63
      %p65 = scmp.ne.s32.totalorder %s54, %s55
      %p66 = scmp.eq.s32.totalorder %s25, 0
      %p67 = por %p65, %p66
      %p68 = scmp.ne.s32.totalorder %s54, %s55
      %p69 = scmp.eq.s32.totalorder %s26, 3
      %p70 = por %p68, %p69
      %p72 = scmp.ne.s32.totalorder %s55, %s71
      %p73 = scmp.eq.s32.totalorder %s26, 0
      %p74 = por %p72, %p73
      %s76 = sadd.s32 %s75, 1
      %p79 = scmp.eq.s32.totalorder %s20, 3
      %p80 = scmp.ne.s32.totalorder %s75, %s77
      %p81 = scmp.eq.s32.totalorder %s20, 0
      %p82 = por %p80, %p81
      %p83 = scmp.ne.s32.totalorder %s75, %s77
      %p84 = scmp.eq.s32.totalorder %s25, 3
      %p85 = por %p83, %p84
      %p86 = scmp.ne.s32.totalorder %s77, %s78
      %p87 = scmp.eq.s32.totalorder %s25, 0
      %p88 = por %p86, %p87
      %p89 = scmp.ne.s32.totalorder %s77, %s78
      %p90 = scmp.eq.s32.totalorder %s26, 3
      %p91 = por %p89, %p90
      %p93 = scmp.ne.s32.totalorder %s78, %s92
      %p94 = scmp.eq.s32.totalorder %s26, 0
      %p95 = por %p93, %p94
      %s97 = sadd.s32 %s96, 1
      %p100 = scmp.eq.s32.totalorder %s20, 3
      %p101 = scmp.ne.s32.totalorder %s96, %s98
      %p102 = scmp.eq.s32.totalorder %s20, 0
      %p103 = por %p101, %p102
      %p104 = scmp.ne.s32.totalorder %s96, %s98
      %p105 = scmp.eq.s32.totalorder %s25, 3
      %p106 = por %p104, %p105
      %p107 = scmp.ne.s32.totalorder %s98, %s99
      %p108 = scmp.eq.s32.totalorder %s25, 0
      %p109 = por %p107, %p108
      %p110 = scmp.ne.s32.totalorder %s98, %s99
      %p111 = scmp.eq.s32.totalorder %s26, 3
      %p112 = por %p110, %p111
      %p114 = scmp.ne.s32.totalorder %s99, %s113
      %p115 = scmp.eq.s32.totalorder %s26, 0
      %p116 = por %p114, %p115
      %s118 = sadd.s32 %s117, 1
      %p121 = scmp.eq.s32.totalorder %s20, 3
      %p122 = scmp.ne.s32.totalorder %s117, %s119
      %p123 = scmp.eq.s32.totalorder %s20, 0
      %p124 = por %p122, %p123
      %p125 = scmp.ne.s32.totalorder %s117, %s119
      %p126 = scmp.eq.s32.totalorder %s25, 3
      %p127 = por %p125, %p126
      %p128 = scmp.ne.s32.totalorder %s119, %s120
      %p129 = scmp.eq.s32.totalorder %s25, 0
      %p130 = por %p128, %p129
      %p131 = scmp.ne.s32.totalorder %s119, %s120
      %p132 = scmp.eq.s32.totalorder %s26, 3
      %p133 = por %p131, %p132
      %p135 = scmp.ne.s32.totalorder %s120, %s134
      %p136 = scmp.eq.s32.totalorder %s26, 0
      %p137 = por %p135, %p136
      %s139 = sadd.s32 %s138, 1
      %p142 = scmp.eq.s32.totalorder %s20, 3
      %p143 = scmp.ne.s32.totalorder %s138, %s140
      %p144 = scmp.eq.s32.totalorder %s20, 0
      %p145 = por %p143, %p144
      %p146 = scmp.ne.s32.totalorder %s138, %s140
      %p147 = scmp.eq.s32.totalorder %s25, 3
      %p148 = por %p146, %p147
      %p149 = scmp.ne.s32.totalorder %s140, %s141
      %p150 = scmp.eq.s32.totalorder %s25, 0
      %p151 = por %p149, %p150
      %p152 = scmp.ne.s32.totalorder %s140, %s141
      %p153 = scmp.eq.s32.totalorder %s26, 3
      %p154 = por %p152, %p153
      %p156 = scmp.ne.s32.totalorder %s141, %s155
      %p157 = scmp.eq.s32.totalorder %s26, 0
      %p158 = por %p156, %p157
      %s160 = sadd.s32 %s159, 1
      %p163 = scmp.eq.s32.totalorder %s20, 3
      %p164 = scmp.ne.s32.totalorder %s159, %s161
      %p165 = scmp.eq.s32.totalorder %s20, 0
      %p166 = por %p164, %p165
      %p167 = scmp.ne.s32.totalorder %s159, %s161
      %p168 = scmp.eq.s32.totalorder %s25, 3
      %p169 = por %p167, %p168
      %p170 = scmp.ne.s32.totalorder %s161, %s162
      %p171 = scmp.eq.s32.totalorder %s25, 0
      %p172 = por %p170, %p171
      %p173 = scmp.ne.s32.totalorder %s161, %s162
      %p174 = scmp.eq.s32.totalorder %s26, 3
      %p175 = por %p173, %p174
      %p177 = scmp.ne.s32.totalorder %s162, %s176
      %p178 = scmp.eq.s32.totalorder %s26, 0
      %p179 = por %p177, %p178
      %s181 = sadd.s32 %s180, 1
      %p184 = scmp.eq.s32.totalorder %s20, 3
      %p185 = scmp.ne.s32.totalorder %s180, %s182
      %p186 = scmp.eq.s32.totalorder %s20, 0
      %p187 = por %p185, %p186
      %p188 = scmp.ne.s32.totalorder %s180, %s182
      %p189 = scmp.eq.s32.totalorder %s25, 3
      %p190 = por %p188, %p189
      %p191 = scmp.ne.s32.totalorder %s182, %s183
      %p192 = scmp.eq.s32.totalorder %s25, 0
      %p193 = por %p191, %p192
      %p194 = scmp.ne.s32.totalorder %s182, %s183
      %p195 = scmp.eq.s32.totalorder %s26, 3
      %p196 = por %p194, %p195
      %p198 = scmp.ne.s32.totalorder %s183, %s197
      %p199 = scmp.eq.s32.totalorder %s26, 0
      %p200 = por %p198, %p199
      %s202 = sadd.s32 %s201, 1
      %p205 = scmp.eq.s32.totalorder %s20, 3
      %p206 = scmp.ne.s32.totalorder %s201, %s203
      %p207 = scmp.eq.s32.totalorder %s20, 0
      %p208 = por %p206, %p207
      %p209 = scmp.ne.s32.totalorder %s201, %s203
      %p210 = scmp.eq.s32.totalorder %s25, 3
      %p211 = por %p209, %p210
      %p212 = scmp.ne.s32.totalorder %s203, %s204
      %p213 = scmp.eq.s32.totalorder %s25, 0
      %p214 = por %p212, %p213
      %p215 = scmp.ne.s32.totalorder %s203, %s204
      %p216 = scmp.eq.s32.totalorder %s26, 3
      %p217 = por %p215, %p216
      %p219 = scmp.ne.s32.totalorder %s204, %s218
      %p220 = scmp.eq.s32.totalorder %s26, 0
      %p221 = por %p219, %p220
      %s223 = sadd.s32 %s222, 1
      %p226 = scmp.eq.s32.totalorder %s20, 3
      %p227 = scmp.ne.s32.totalorder %s222, %s224
      %p228 = scmp.eq.s32.totalorder %s20, 0
      %p229 = por %p227, %p228
      %p230 = scmp.ne.s32.totalorder %s222, %s224
      %p231 = scmp.eq.s32.totalorder %s25, 3
      %p232 = por %p230, %p231
      %p233 = scmp.ne.s32.totalorder %s224, %s225
      %p234 = scmp.eq.s32.totalorder %s25, 0
      %p235 = por %p233, %p234
      %p236 = scmp.ne.s32.totalorder %s224, %s225
      %p237 = scmp.eq.s32.totalorder %s26, 3
      %p238 = por %p236, %p237
      %p240 = scmp.ne.s32.totalorder %s225, %s239
      %p241 = scmp.eq.s32.totalorder %s26, 0
      %p242 = por %p240, %p241
      %s244 = sadd.s32 %s243, 1
      %p247 = scmp.eq.s32.totalorder %s20, 3
      %p248 = scmp.ne.s32.totalorder %s243, %s245
      %p249 = scmp.eq.s32.totalorder %s20, 0
      %p250 = por %p248, %p249
      %p251 = scmp.ne.s32.totalorder %s243, %s245
      %p252 = scmp.eq.s32.totalorder %s25, 3
      %p253 = por %p251, %p252
      %p254 = scmp.ne.s32.totalorder %s245, %s246
      %p255 = scmp.eq.s32.totalorder %s25, 0
      %p256 = por %p254, %p255
      %p257 = scmp.ne.s32.totalorder %s245, %s246
      %p258 = scmp.eq.s32.totalorder %s26, 3
      %p259 = por %p257, %p258
      %p261 = scmp.ne.s32.totalorder %s246, %s260
      %p262 = scmp.eq.s32.totalorder %s26, 0
      %p263 = por %p261, %p262
      %s265 = sadd.s32 %s264, 1
      %p268 = scmp.eq.s32.totalorder %s20, 3
      %p269 = scmp.ne.s32.totalorder %s264, %s266
      %p270 = scmp.eq.s32.totalorder %s20, 0
      %p271 = por %p269, %p270
      %p272 = scmp.ne.s32.totalorder %s264, %s266
      %p273 = scmp.eq.s32.totalorder %s25, 3
      %p274 = por %p272, %p273
      %p275 = scmp.ne.s32.totalorder %s266, %s267
      %p276 = scmp.eq.s32.totalorder %s25, 0
      %p277 = por %p275, %p276
      %p278 = scmp.ne.s32.totalorder %s266, %s267
      %p279 = scmp.eq.s32.totalorder %s26, 3
      %p280 = por %p278, %p279
      %p282 = scmp.ne.s32.totalorder %s267, %s281
      %p283 = scmp.eq.s32.totalorder %s26, 0
      %p284 = por %p282, %p283
      %s286 = sadd.s32 %s285, 1
      %p289 = scmp.eq.s32.totalorder %s20, 3
      %p290 = scmp.ne.s32.totalorder %s285, %s287
      %p291 = scmp.eq.s32.totalorder %s20, 0
      %p292 = por %p290, %p291
      %p293 = scmp.ne.s32.totalorder %s285, %s287
      %p294 = scmp.eq.s32.totalorder %s25, 3
      %p295 = por %p293, %p294
      %p296 = scmp.ne.s32.totalorder %s287, %s288
      %p297 = scmp.eq.s32.totalorder %s25, 0
      %p298 = por %p296, %p297
      %p299 = scmp.ne.s32.totalorder %s287, %s288
      %p300 = scmp.eq.s32.totalorder %s26, 3
      %p301 = por %p299, %p300
      %p303 = scmp.ne.s32.totalorder %s288, %s302
      %p304 = scmp.eq.s32.totalorder %s26, 0
      %p305 = por %p303, %p304
      %s307 = sadd.s32 %s306, 1
      %p310 = scmp.eq.s32.totalorder %s20, 3
      %p311 = scmp.ne.s32.totalorder %s306, %s308
      %p312 = scmp.eq.s32.totalorder %s20, 0
      %p313 = por %p311, %p312
      %p314 = scmp.ne.s32.totalorder %s306, %s308
      %p315 = scmp.eq.s32.totalorder %s25, 3
      %p316 = por %p314, %p315
      %p317 = scmp.ne.s32.totalorder %s308, %s309
      %p318 = scmp.eq.s32.totalorder %s25, 0
      %p319 = por %p317, %p318
      %p320 = scmp.ne.s32.totalorder %s308, %s309
      %p321 = scmp.eq.s32.totalorder %s26, 3
      %p322 = por %p320, %p321
      %p324 = scmp.ne.s32.totalorder %s309, %s323
      %p325 = scmp.eq.s32.totalorder %s26, 0
      %p326 = por %p324, %p325
      %p327 = scmp.le.s32.totalorder 1, %s20
      %p328 = scmp.lt.s32.totalorder %s20, 5
      %p329 = pnand %p327, %p328
      %p330 = pneg %p329
      // Predicated region
      $region9: #{net_forward.3} parent=5 // pred_check
        _
      $region10: #{net_forward.3} parent=5 // pred_check_branch
        %332 = sbr.rel (%p329) target = $region12
      $region11: #{net_forward.3} parent=5 // pred_region
        %s333 = ssub.s32 %s20, 1
        // Predicated region
        $region13: #{net_forward.3} parent=11 // pred_check
          %p334 = pneg %p41
        $region14: #{net_forward.3} parent=11 // pred_check_branch
          %336 = sbr.rel (%p334) target = $region16
        $region15: #{net_forward.3} parent=11 // pred_region
          _
        $region16: #{net_forward.3} parent=11 // pred_fallthru
          _
        // Predicated region
        $region17: #{net_forward.3} parent=11 // pred_check
          %p337 = pneg %p88
        $region18: #{net_forward.3} parent=11 // pred_check_branch
          %339 = sbr.rel (%p337) target = $region20
        $region19: #{net_forward.3} parent=11 // pred_region
          _
        $region20: #{net_forward.3} parent=11 // pred_fallthru
          _
        // Predicated region
        $region21: #{net_forward.3} parent=11 // pred_check
          %p340 = pneg %p109
        $region22: #{net_forward.3} parent=11 // pred_check_branch
          %342 = sbr.rel (%p340) target = $region24
        $region23: #{net_forward.3} parent=11 // pred_region
          _
        $region24: #{net_forward.3} parent=11 // pred_fallthru
          _
        // Predicated region
        $region25: #{net_forward.3} parent=11 // pred_check
          %p343 = pneg %p130
        $region26: #{net_forward.3} parent=11 // pred_check_branch
          %345 = sbr.rel (%p343) target = $region28
        $region27: #{net_forward.3} parent=11 // pred_region
          _
        $region28: #{net_forward.3} parent=11 // pred_fallthru
          _
        // Predicated region
        $region29: #{net_forward.3} parent=11 // pred_check
          %p346 = pneg %p151
        $region30: #{net_forward.3} parent=11 // pred_check_branch
          %348 = sbr.rel (%p346) target = $region32
        $region31: #{net_forward.3} parent=11 // pred_region
          _
        $region32: #{net_forward.3} parent=11 // pred_fallthru
          _
        // Predicated region
        $region33: #{net_forward.3} parent=11 // pred_check
          %p349 = pneg %p172
        $region34: #{net_forward.3} parent=11 // pred_check_branch
          %351 = sbr.rel (%p349) target = $region36
        $region35: #{net_forward.3} parent=11 // pred_region
          _
        $region36: #{net_forward.3} parent=11 // pred_fallthru
          _
        // Predicated region
        $region37: #{net_forward.3} parent=11 // pred_check
          %p352 = pneg %p193
        $region38: #{net_forward.3} parent=11 // pred_check_branch
          %354 = sbr.rel (%p352) target = $region40
        $region39: #{net_forward.3} parent=11 // pred_region
          _
        $region40: #{net_forward.3} parent=11 // pred_fallthru
          _
        // Predicated region
        $region41: #{net_forward.3} parent=11 // pred_check
          %p355 = pneg %p214
        $region42: #{net_forward.3} parent=11 // pred_check_branch
          %357 = sbr.rel (%p355) target = $region44
        $region43: #{net_forward.3} parent=11 // pred_region
          _
        $region44: #{net_forward.3} parent=11 // pred_fallthru
          _
        // Predicated region
        $region45: #{net_forward.3} parent=11 // pred_check
          %p358 = pneg %p235
        $region46: #{net_forward.3} parent=11 // pred_check_branch
          %360 = sbr.rel (%p358) target = $region48
        $region47: #{net_forward.3} parent=11 // pred_region
          _
        $region48: #{net_forward.3} parent=11 // pred_fallthru
          _
        // Predicated region
        $region49: #{net_forward.3} parent=11 // pred_check
          %p361 = pneg %p256
        $region50: #{net_forward.3} parent=11 // pred_check_branch
          %363 = sbr.rel (%p361) target = $region52
        $region51: #{net_forward.3} parent=11 // pred_region
          _
        $region52: #{net_forward.3} parent=11 // pred_fallthru
          _
        // Predicated region
        $region53: #{net_forward.3} parent=11 // pred_check
          %p364 = pneg %p277
        $region54: #{net_forward.3} parent=11 // pred_check_branch
          %366 = sbr.rel (%p364) target = $region56
        $region55: #{net_forward.3} parent=11 // pred_region
          _
        $region56: #{net_forward.3} parent=11 // pred_fallthru
          _
        // Predicated region
        $region57: #{net_forward.3} parent=11 // pred_check
          %p367 = pneg %p298
        $region58: #{net_forward.3} parent=11 // pred_check_branch
          %369 = sbr.rel (%p367) target = $region60
        $region59: #{net_forward.3} parent=11 // pred_region
          _
        $region60: #{net_forward.3} parent=11 // pred_fallthru
          _
      $region12: #{net_forward.3} parent=5 // pred_fallthru
        _
      %p370 = scmp.lt.s32.totalorder %s20, 4
      // Predicated region
      $region61: #{net_forward.3} parent=5 // pred_check
        %p371 = pneg %p370
      $region62: #{net_forward.3} parent=5 // pred_check_branch
        %373 = sbr.rel (%p371) target = $region64
      $region63: #{net_forward.3} parent=5 // pred_region
        // Predicated region
        $region65: #{net_forward.3} parent=63 // pred_check
          %p374 = pneg %p61
        $region66: #{net_forward.3} parent=63 // pred_check_branch
          %376 = sbr.rel (%p374) target = $region68
        $region67: #{net_forward.3} parent=63 // pred_region
          %s377 = smul.u32 64, %s20
          %p378 = scmp.lt.s32.totalorder %s377, 255
          %s379 = scalar_select %p378, %s377, 255
          %s380 = smul.addr %s379, 8
          %s381 = smul.addr %s380, 4
          %s382 = scalar_lea.vmem %s1, %s381
          %s383 = smul.u32 64, %s20
        $region68: #{net_forward.3} parent=63 // pred_fallthru
          _
      $region64: #{net_forward.3} parent=5 // pred_fallthru
        _
      %p384 = scmp.le.s32.totalorder 1, %s20
      %p385 = scmp.lt.s32.totalorder %s20, 5
      %p386 = pnand %p384, %p385
      %p387 = pneg %p386
      // Predicated region
      $region69: #{net_forward.3} parent=5 // pred_check
        _
      $region70: #{net_forward.3} parent=5 // pred_check_branch
        %389 = sbr.rel (%p386) target = $region72
      $region71: #{net_forward.3} parent=5 // pred_region
        %s390 = ssub.s32 %s20, 1
        %p391 = pneg %p41
        %p392 = pneg %p38
        %s393 = smul.u32 64, %s25
        %p394 = scmp.lt.s32.totalorder %s393, 255
        %s395 = scalar_select %p394, %s393, 255
        %s396 = smul.addr %s395, 8
        %s397 = smul.addr %s396, 4
        %s398 = scalar_lea.vmem %s1, %s397
        %p399 = pneg %p67
        %p400 = pneg %p64
        %p401 = pneg %p88
        %p402 = pneg %p85
        %p403 = pneg %p109
        %p404 = pneg %p106
        %p405 = pneg %p130
        %p406 = pneg %p127
        %p407 = pneg %p151
        %p408 = pneg %p148
        %p409 = pneg %p172
        %p410 = pneg %p169
        %p411 = pneg %p193
        %p412 = pneg %p190
        %p413 = pneg %p214
        %p414 = pneg %p211
        %p415 = pneg %p235
        %p416 = pneg %p232
        %p417 = pneg %p256
        %p418 = pneg %p253
        %p419 = pneg %p277
        %p420 = pneg %p274
        %p421 = pneg %p298
        %p422 = pneg %p295
        %p423 = pneg %p319
        %p424 = pneg %p316
        %s425 = smul.u32 64, %s25
        %p426 = scmp.lt.s32.totalorder %s425, 255
        %s427 = scalar_select %p426, %s425, 255
        %s428 = smul.addr %s427, 8
        %s429 = smul.addr %s428, 4
        %s430 = scalar_lea.vmem %s1, %s429
        %s431 = smul.u32 64, %s25
        %p433 = scmp.eq.s32.totalorder %s25, 0
        // Predicated region
        $region73: #{net_forward.3} parent=71 // pred_check
          %p434 = pneg %p433
        $region74: #{net_forward.3} parent=71 // pred_check_branch
          %436 = sbr.rel (%p434) target = $region76
        $region75: #{net_forward.3} parent=71 // pred_region
          %v437 = vld [vmem:[%s2] sm:$0xff]
          %v439 = vlaneseq
          %v440 = vshrl.u32 %v439, 7
          %v441 = vsub.s32 0, %v440
          %v442 = vrot.slane %v437, %v441
          %v443 = vlaneseq
          %v444 = vshrl.u32 %v443, 7
          %v445 = vsub.s32 1, %v444
          %v446 = vrot.slane %v437, %v445
          %v447 = vlaneseq
          %v448 = vshrl.u32 %v447, 7
          %v449 = vsub.s32 2, %v448
          %v450 = vrot.slane %v437, %v449
          %v451 = vlaneseq
          %v452 = vshrl.u32 %v451, 7
          %v453 = vsub.s32 3, %v452
          %v454 = vrot.slane %v437, %v453
          %v455 = vlaneseq
          %v456 = vshrl.u32 %v455, 7
          %v457 = vsub.s32 4, %v456
          %v458 = vrot.slane %v437, %v457
          %v459 = vlaneseq
          %v460 = vshrl.u32 %v459, 7
          %v461 = vsub.s32 5, %v460
          %v462 = vrot.slane %v437, %v461
          %v463 = vlaneseq
          %v464 = vshrl.u32 %v463, 7
          %v465 = vsub.s32 6, %v464
          %v466 = vrot.slane %v437, %v465
          %v467 = vlaneseq
          %v468 = vshrl.u32 %v467, 7
          %v469 = vsub.s32 7, %v468
          %v470 = vrot.slane %v437, %v469
          %479 = vst [vmem:[#allocation2] sm:$0xff] %v442
          %480 = vst [vmem:[#allocation2 + $0x8] sm:$0xff] %v446
          %481 = vst [vmem:[#allocation2 + $0x10] sm:$0xff] %v450
          %482 = vst [vmem:[#allocation2 + $0x18] sm:$0xff] %v454
          %483 = vst [vmem:[#allocation2 + $0x20] sm:$0xff] %v458
          %484 = vst [vmem:[#allocation2 + $0x28] sm:$0xff] %v462
          %485 = vst [vmem:[#allocation2 + $0x30] sm:$0xff] %v466
          %486 = vst [vmem:[#allocation2 + $0x38] sm:$0xff] %v470
        $region76: #{net_forward.3} parent=71 // pred_fallthru
          _
        %s487 = smul.u32 %s25, 512
        %v488 = vld [vmem:[#allocation2] sm:$0xff]
        %v489 = vld [vmem:[#allocation2 + $0x8] sm:$0xff]
        %v490 = vld [vmem:[#allocation2 + $0x10] sm:$0xff]
        %v491 = vld [vmem:[#allocation2 + $0x18] sm:$0xff]
        %v492 = vld [vmem:[#allocation2 + $0x20] sm:$0xff]
        %v493 = vld [vmem:[#allocation2 + $0x28] sm:$0xff]
        %v494 = vld [vmem:[#allocation2 + $0x30] sm:$0xff]
        %v495 = vld [vmem:[#allocation2 + $0x38] sm:$0xff]
        %s496 = sshra.s32 %s487, 7
        %s497 = sand.u32 %s487, 127
        %s498 = smul.addr %s496, 8
        %s499 = scalar_lea.vmem %s0, %s498
        %v500 = vld [vmem:[%s499] sm:$0xff]
        %v501 = vld [vmem:[%s499 + $0x8] sm:$0xff]
        %v502 = vld [vmem:[%s499 + $0x10] sm:$0xff]
        %v503 = vld [vmem:[%s499 + $0x18] sm:$0xff]
        %v504 = vpack.c.bf16 %v500, %v500
        %v505 = vpack.c.bf16 %v501, %v501
        %v506 = vpack.c.bf16 %v502, %v502
        %v507 = vpack.c.bf16 %v503, %v503
        %v508 = vld [vmem:[%s430] sm:$0xff]
        %v509 = vld [vmem:[%s430 + $0x8] sm:$0xff]
        %v510 = vld [vmem:[%s430 + $0x10] sm:$0xff]
        %v511 = vld [vmem:[%s430 + $0x18] sm:$0xff]
        %v512 = vld [vmem:[%s430 + $0x20] sm:$0xff]
        %v513 = vld [vmem:[%s430 + $0x28] sm:$0xff]
        %v514 = vld [vmem:[%s430 + $0x30] sm:$0xff]
        %v515 = vld [vmem:[%s430 + $0x38] sm:$0xff]
        %v516 = vld [vmem:[%s430 + $0x40] sm:$0xff]
        %v517 = vld [vmem:[%s430 + $0x48] sm:$0xff]
        %v518 = vld [vmem:[%s430 + $0x50] sm:$0xff]
        %v519 = vld [vmem:[%s430 + $0x58] sm:$0xff]
        %v520 = vld [vmem:[%s430 + $0x60] sm:$0xff]
        %v521 = vld [vmem:[%s430 + $0x68] sm:$0xff]
        %v522 = vld [vmem:[%s430 + $0x70] sm:$0xff]
        %v523 = vld [vmem:[%s430 + $0x78] sm:$0xff]
        %v524 = vld [vmem:[%s430 + $0x80] sm:$0xff]
        %v525 = vld [vmem:[%s430 + $0x88] sm:$0xff]
        %v526 = vld [vmem:[%s430 + $0x90] sm:$0xff]
        %v527 = vld [vmem:[%s430 + $0x98] sm:$0xff]
        %v528 = vld [vmem:[%s430 + $0xa0] sm:$0xff]
        %v529 = vld [vmem:[%s430 + $0xa8] sm:$0xff]
        %v530 = vld [vmem:[%s430 + $0xb0] sm:$0xff]
        %v531 = vld [vmem:[%s430 + $0xb8] sm:$0xff]
        %v532 = vld [vmem:[%s430 + $0xc0] sm:$0xff]
        %v533 = vld [vmem:[%s430 + $0xc8] sm:$0xff]
        %v534 = vld [vmem:[%s430 + $0xd0] sm:$0xff]
        %v535 = vld [vmem:[%s430 + $0xd8] sm:$0xff]
        %v536 = vld [vmem:[%s430 + $0xe0] sm:$0xff]
        %v537 = vld [vmem:[%s430 + $0xe8] sm:$0xff]
        %v538 = vld [vmem:[%s430 + $0xf0] sm:$0xff]
        %v539 = vld [vmem:[%s430 + $0xf8] sm:$0xff]
        %v540 = vld [vmem:[%s430 + $0x100] sm:$0xff]
        %v541 = vld [vmem:[%s430 + $0x108] sm:$0xff]
        %v542 = vld [vmem:[%s430 + $0x110] sm:$0xff]
        %v543 = vld [vmem:[%s430 + $0x118] sm:$0xff]
        %v544 = vld [vmem:[%s430 + $0x120] sm:$0xff]
        %v545 = vld [vmem:[%s430 + $0x128] sm:$0xff]
        %v546 = vld [vmem:[%s430 + $0x130] sm:$0xff]
        %v547 = vld [vmem:[%s430 + $0x138] sm:$0xff]
        %v548 = vld [vmem:[%s430 + $0x140] sm:$0xff]
        %v549 = vld [vmem:[%s430 + $0x148] sm:$0xff]
        %v550 = vld [vmem:[%s430 + $0x150] sm:$0xff]
        %v551 = vld [vmem:[%s430 + $0x158] sm:$0xff]
        %v552 = vld [vmem:[%s430 + $0x160] sm:$0xff]
        %v553 = vld [vmem:[%s430 + $0x168] sm:$0xff]
        %v554 = vld [vmem:[%s430 + $0x170] sm:$0xff]
        %v555 = vld [vmem:[%s430 + $0x178] sm:$0xff]
        %v556 = vld [vmem:[%s430 + $0x180] sm:$0xff]
        %v557 = vld [vmem:[%s430 + $0x188] sm:$0xff]
        %v558 = vld [vmem:[%s430 + $0x190] sm:$0xff]
        %v559 = vld [vmem:[%s430 + $0x198] sm:$0xff]
        %v560 = vld [vmem:[%s430 + $0x1a0] sm:$0xff]
        %v561 = vld [vmem:[%s430 + $0x1a8] sm:$0xff]
        %v562 = vld [vmem:[%s430 + $0x1b0] sm:$0xff]
        %v563 = vld [vmem:[%s430 + $0x1b8] sm:$0xff]
        %v564 = vld [vmem:[%s430 + $0x1c0] sm:$0xff]
        %v565 = vld [vmem:[%s430 + $0x1c8] sm:$0xff]
        %v566 = vld [vmem:[%s430 + $0x1d0] sm:$0xff]
        %v567 = vld [vmem:[%s430 + $0x1d8] sm:$0xff]
        %v568 = vld [vmem:[%s430 + $0x1e0] sm:$0xff]
        %v569 = vld [vmem:[%s430 + $0x1e8] sm:$0xff]
        %v570 = vld [vmem:[%s430 + $0x1f0] sm:$0xff]
        %v571 = vld [vmem:[%s430 + $0x1f8] sm:$0xff]
        %v572 = vld [vmem:[%s430 + $0x200] sm:$0xff]
        %v573 = vld [vmem:[%s430 + $0x208] sm:$0xff]
        %v574 = vld [vmem:[%s430 + $0x210] sm:$0xff]
        %v575 = vld [vmem:[%s430 + $0x218] sm:$0xff]
        %v576 = vld [vmem:[%s430 + $0x220] sm:$0xff]
        %v577 = vld [vmem:[%s430 + $0x228] sm:$0xff]
        %v578 = vld [vmem:[%s430 + $0x230] sm:$0xff]
        %v579 = vld [vmem:[%s430 + $0x238] sm:$0xff]
        %v580 = vld [vmem:[%s430 + $0x240] sm:$0xff]
        %v581 = vld [vmem:[%s430 + $0x248] sm:$0xff]
        %v582 = vld [vmem:[%s430 + $0x250] sm:$0xff]
        %v583 = vld [vmem:[%s430 + $0x258] sm:$0xff]
        %v584 = vld [vmem:[%s430 + $0x260] sm:$0xff]
        %v585 = vld [vmem:[%s430 + $0x268] sm:$0xff]
        %v586 = vld [vmem:[%s430 + $0x270] sm:$0xff]
        %v587 = vld [vmem:[%s430 + $0x278] sm:$0xff]
        %v588 = vld [vmem:[%s430 + $0x280] sm:$0xff]
        %v589 = vld [vmem:[%s430 + $0x288] sm:$0xff]
        %v590 = vld [vmem:[%s430 + $0x290] sm:$0xff]
        %v591 = vld [vmem:[%s430 + $0x298] sm:$0xff]
        %v592 = vld [vmem:[%s430 + $0x2a0] sm:$0xff]
        %v593 = vld [vmem:[%s430 + $0x2a8] sm:$0xff]
        %v594 = vld [vmem:[%s430 + $0x2b0] sm:$0xff]
        %v595 = vld [vmem:[%s430 + $0x2b8] sm:$0xff]
        %v596 = vld [vmem:[%s430 + $0x2c0] sm:$0xff]
        %v597 = vld [vmem:[%s430 + $0x2c8] sm:$0xff]
        %v598 = vld [vmem:[%s430 + $0x2d0] sm:$0xff]
        %v599 = vld [vmem:[%s430 + $0x2d8] sm:$0xff]
        %v600 = vld [vmem:[%s430 + $0x2e0] sm:$0xff]
        %v601 = vld [vmem:[%s430 + $0x2e8] sm:$0xff]
        %v602 = vld [vmem:[%s430 + $0x2f0] sm:$0xff]
        %v603 = vld [vmem:[%s430 + $0x2f8] sm:$0xff]
        %v604 = vld [vmem:[%s430 + $0x300] sm:$0xff]
        %v605 = vld [vmem:[%s430 + $0x308] sm:$0xff]
        %v606 = vld [vmem:[%s430 + $0x310] sm:$0xff]
        %v607 = vld [vmem:[%s430 + $0x318] sm:$0xff]
        %v608 = vld [vmem:[%s430 + $0x320] sm:$0xff]
        %v609 = vld [vmem:[%s430 + $0x328] sm:$0xff]
        %v610 = vld [vmem:[%s430 + $0x330] sm:$0xff]
        %v611 = vld [vmem:[%s430 + $0x338] sm:$0xff]
        %v612 = vld [vmem:[%s430 + $0x340] sm:$0xff]
        %v613 = vld [vmem:[%s430 + $0x348] sm:$0xff]
        %v614 = vld [vmem:[%s430 + $0x350] sm:$0xff]
        %v615 = vld [vmem:[%s430 + $0x358] sm:$0xff]
        %v616 = vld [vmem:[%s430 + $0x360] sm:$0xff]
        %v617 = vld [vmem:[%s430 + $0x368] sm:$0xff]
        %v618 = vld [vmem:[%s430 + $0x370] sm:$0xff]
        %v619 = vld [vmem:[%s430 + $0x378] sm:$0xff]
        %v620 = vld [vmem:[%s430 + $0x380] sm:$0xff]
        %v621 = vld [vmem:[%s430 + $0x388] sm:$0xff]
        %v622 = vld [vmem:[%s430 + $0x390] sm:$0xff]
        %v623 = vld [vmem:[%s430 + $0x398] sm:$0xff]
        %v624 = vld [vmem:[%s430 + $0x3a0] sm:$0xff]
        %v625 = vld [vmem:[%s430 + $0x3a8] sm:$0xff]
        %v626 = vld [vmem:[%s430 + $0x3b0] sm:$0xff]
        %v627 = vld [vmem:[%s430 + $0x3b8] sm:$0xff]
        %v628 = vld [vmem:[%s430 + $0x3c0] sm:$0xff]
        %v629 = vld [vmem:[%s430 + $0x3c8] sm:$0xff]
        %v630 = vld [vmem:[%s430 + $0x3d0] sm:$0xff]
        %v631 = vld [vmem:[%s430 + $0x3d8] sm:$0xff]
        %v632 = vld [vmem:[%s430 + $0x3e0] sm:$0xff]
        %v633 = vld [vmem:[%s430 + $0x3e8] sm:$0xff]
        %v634 = vld [vmem:[%s430 + $0x3f0] sm:$0xff]
        %v635 = vld [vmem:[%s430 + $0x3f8] sm:$0xff]
        %v636 = vld [vmem:[%s430 + $0x400] sm:$0xff]
        %v637 = vld [vmem:[%s430 + $0x408] sm:$0xff]
        %v638 = vld [vmem:[%s430 + $0x410] sm:$0xff]
        %v639 = vld [vmem:[%s430 + $0x418] sm:$0xff]
        %v640 = vld [vmem:[%s430 + $0x420] sm:$0xff]
        %v641 = vld [vmem:[%s430 + $0x428] sm:$0xff]
        %v642 = vld [vmem:[%s430 + $0x430] sm:$0xff]
        %v643 = vld [vmem:[%s430 + $0x438] sm:$0xff]
        %v644 = vld [vmem:[%s430 + $0x440] sm:$0xff]
        %v645 = vld [vmem:[%s430 + $0x448] sm:$0xff]
        %v646 = vld [vmem:[%s430 + $0x450] sm:$0xff]
        %v647 = vld [vmem:[%s430 + $0x458] sm:$0xff]
        %v648 = vld [vmem:[%s430 + $0x460] sm:$0xff]
        %v649 = vld [vmem:[%s430 + $0x468] sm:$0xff]
        %v650 = vld [vmem:[%s430 + $0x470] sm:$0xff]
        %v651 = vld [vmem:[%s430 + $0x478] sm:$0xff]
        %v652 = vld [vmem:[%s430 + $0x480] sm:$0xff]
        %v653 = vld [vmem:[%s430 + $0x488] sm:$0xff]
        %v654 = vld [vmem:[%s430 + $0x490] sm:$0xff]
        %v655 = vld [vmem:[%s430 + $0x498] sm:$0xff]
        %v656 = vld [vmem:[%s430 + $0x4a0] sm:$0xff]
        %v657 = vld [vmem:[%s430 + $0x4a8] sm:$0xff]
        %v658 = vld [vmem:[%s430 + $0x4b0] sm:$0xff]
        %v659 = vld [vmem:[%s430 + $0x4b8] sm:$0xff]
        %v660 = vld [vmem:[%s430 + $0x4c0] sm:$0xff]
        %v661 = vld [vmem:[%s430 + $0x4c8] sm:$0xff]
        %v662 = vld [vmem:[%s430 + $0x4d0] sm:$0xff]
        %v663 = vld [vmem:[%s430 + $0x4d8] sm:$0xff]
        %v664 = vld [vmem:[%s430 + $0x4e0] sm:$0xff]
        %v665 = vld [vmem:[%s430 + $0x4e8] sm:$0xff]
        %v666 = vld [vmem:[%s430 + $0x4f0] sm:$0xff]
        %v667 = vld [vmem:[%s430 + $0x4f8] sm:$0xff]
        %v668 = vld [vmem:[%s430 + $0x500] sm:$0xff]
        %v669 = vld [vmem:[%s430 + $0x508] sm:$0xff]
        %v670 = vld [vmem:[%s430 + $0x510] sm:$0xff]
        %v671 = vld [vmem:[%s430 + $0x518] sm:$0xff]
        %v672 = vld [vmem:[%s430 + $0x520] sm:$0xff]
        %v673 = vld [vmem:[%s430 + $0x528] sm:$0xff]
        %v674 = vld [vmem:[%s430 + $0x530] sm:$0xff]
        %v675 = vld [vmem:[%s430 + $0x538] sm:$0xff]
        %v676 = vld [vmem:[%s430 + $0x540] sm:$0xff]
        %v677 = vld [vmem:[%s430 + $0x548] sm:$0xff]
        %v678 = vld [vmem:[%s430 + $0x550] sm:$0xff]
        %v679 = vld [vmem:[%s430 + $0x558] sm:$0xff]
        %v680 = vld [vmem:[%s430 + $0x560] sm:$0xff]
        %v681 = vld [vmem:[%s430 + $0x568] sm:$0xff]
        %v682 = vld [vmem:[%s430 + $0x570] sm:$0xff]
        %v683 = vld [vmem:[%s430 + $0x578] sm:$0xff]
        %v684 = vld [vmem:[%s430 + $0x580] sm:$0xff]
        %v685 = vld [vmem:[%s430 + $0x588] sm:$0xff]
        %v686 = vld [vmem:[%s430 + $0x590] sm:$0xff]
        %v687 = vld [vmem:[%s430 + $0x598] sm:$0xff]
        %v688 = vld [vmem:[%s430 + $0x5a0] sm:$0xff]
        %v689 = vld [vmem:[%s430 + $0x5a8] sm:$0xff]
        %v690 = vld [vmem:[%s430 + $0x5b0] sm:$0xff]
        %v691 = vld [vmem:[%s430 + $0x5b8] sm:$0xff]
        %v692 = vld [vmem:[%s430 + $0x5c0] sm:$0xff]
        %v693 = vld [vmem:[%s430 + $0x5c8] sm:$0xff]
        %v694 = vld [vmem:[%s430 + $0x5d0] sm:$0xff]
        %v695 = vld [vmem:[%s430 + $0x5d8] sm:$0xff]
        %v696 = vld [vmem:[%s430 + $0x5e0] sm:$0xff]
        %v697 = vld [vmem:[%s430 + $0x5e8] sm:$0xff]
        %v698 = vld [vmem:[%s430 + $0x5f0] sm:$0xff]
        %v699 = vld [vmem:[%s430 + $0x5f8] sm:$0xff]
        %v700 = vld [vmem:[%s430 + $0x600] sm:$0xff]
        %v701 = vld [vmem:[%s430 + $0x608] sm:$0xff]
        %v702 = vld [vmem:[%s430 + $0x610] sm:$0xff]
        %v703 = vld [vmem:[%s430 + $0x618] sm:$0xff]
        %v704 = vld [vmem:[%s430 + $0x620] sm:$0xff]
        %v705 = vld [vmem:[%s430 + $0x628] sm:$0xff]
        %v706 = vld [vmem:[%s430 + $0x630] sm:$0xff]
        %v707 = vld [vmem:[%s430 + $0x638] sm:$0xff]
        %v708 = vld [vmem:[%s430 + $0x640] sm:$0xff]
        %v709 = vld [vmem:[%s430 + $0x648] sm:$0xff]
        %v710 = vld [vmem:[%s430 + $0x650] sm:$0xff]
        %v711 = vld [vmem:[%s430 + $0x658] sm:$0xff]
        %v712 = vld [vmem:[%s430 + $0x660] sm:$0xff]
        %v713 = vld [vmem:[%s430 + $0x668] sm:$0xff]
        %v714 = vld [vmem:[%s430 + $0x670] sm:$0xff]
        %v715 = vld [vmem:[%s430 + $0x678] sm:$0xff]
        %v716 = vld [vmem:[%s430 + $0x680] sm:$0xff]
        %v717 = vld [vmem:[%s430 + $0x688] sm:$0xff]
        %v718 = vld [vmem:[%s430 + $0x690] sm:$0xff]
        %v719 = vld [vmem:[%s430 + $0x698] sm:$0xff]
        %v720 = vld [vmem:[%s430 + $0x6a0] sm:$0xff]
        %v721 = vld [vmem:[%s430 + $0x6a8] sm:$0xff]
        %v722 = vld [vmem:[%s430 + $0x6b0] sm:$0xff]
        %v723 = vld [vmem:[%s430 + $0x6b8] sm:$0xff]
        %v724 = vld [vmem:[%s430 + $0x6c0] sm:$0xff]
        %v725 = vld [vmem:[%s430 + $0x6c8] sm:$0xff]
        %v726 = vld [vmem:[%s430 + $0x6d0] sm:$0xff]
        %v727 = vld [vmem:[%s430 + $0x6d8] sm:$0xff]
        %v728 = vld [vmem:[%s430 + $0x6e0] sm:$0xff]
        %v729 = vld [vmem:[%s430 + $0x6e8] sm:$0xff]
        %v730 = vld [vmem:[%s430 + $0x6f0] sm:$0xff]
        %v731 = vld [vmem:[%s430 + $0x6f8] sm:$0xff]
        %v732 = vld [vmem:[%s430 + $0x700] sm:$0xff]
        %v733 = vld [vmem:[%s430 + $0x708] sm:$0xff]
        %v734 = vld [vmem:[%s430 + $0x710] sm:$0xff]
        %v735 = vld [vmem:[%s430 + $0x718] sm:$0xff]
        %v736 = vld [vmem:[%s430 + $0x720] sm:$0xff]
        %v737 = vld [vmem:[%s430 + $0x728] sm:$0xff]
        %v738 = vld [vmem:[%s430 + $0x730] sm:$0xff]
        %v739 = vld [vmem:[%s430 + $0x738] sm:$0xff]
        %v740 = vld [vmem:[%s430 + $0x740] sm:$0xff]
        %v741 = vld [vmem:[%s430 + $0x748] sm:$0xff]
        %v742 = vld [vmem:[%s430 + $0x750] sm:$0xff]
        %v743 = vld [vmem:[%s430 + $0x758] sm:$0xff]
        %v744 = vld [vmem:[%s430 + $0x760] sm:$0xff]
        %v745 = vld [vmem:[%s430 + $0x768] sm:$0xff]
        %v746 = vld [vmem:[%s430 + $0x770] sm:$0xff]
        %v747 = vld [vmem:[%s430 + $0x778] sm:$0xff]
        %v748 = vld [vmem:[%s430 + $0x780] sm:$0xff]
        %v749 = vld [vmem:[%s430 + $0x788] sm:$0xff]
        %v750 = vld [vmem:[%s430 + $0x790] sm:$0xff]
        %v751 = vld [vmem:[%s430 + $0x798] sm:$0xff]
        %v752 = vld [vmem:[%s430 + $0x7a0] sm:$0xff]
        %v753 = vld [vmem:[%s430 + $0x7a8] sm:$0xff]
        %v754 = vld [vmem:[%s430 + $0x7b0] sm:$0xff]
        %v755 = vld [vmem:[%s430 + $0x7b8] sm:$0xff]
        %v756 = vld [vmem:[%s430 + $0x7c0] sm:$0xff]
        %v757 = vld [vmem:[%s430 + $0x7c8] sm:$0xff]
        %v758 = vld [vmem:[%s430 + $0x7d0] sm:$0xff]
        %v759 = vld [vmem:[%s430 + $0x7d8] sm:$0xff]
        %v760 = vld [vmem:[%s430 + $0x7e0] sm:$0xff]
        %v761 = vld [vmem:[%s430 + $0x7e8] sm:$0xff]
        %v762 = vld [vmem:[%s430 + $0x7f0] sm:$0xff]
        %v763 = vld [vmem:[%s430 + $0x7f8] sm:$0xff]
        %v1020 = vunpack.c.l.b16 %v508
        %v1021 = vunpack.c.h.b16 %v508
        %v1022 = vunpack.c.l.b16 %v509
        %v1023 = vunpack.c.h.b16 %v509
        %v1024 = vunpack.c.l.b16 %v510
        %v1025 = vunpack.c.h.b16 %v510
        %v1026 = vunpack.c.l.b16 %v511
        %v1027 = vunpack.c.h.b16 %v511
        %v1028 = vunpack.c.l.b16 %v512
        %v1029 = vunpack.c.h.b16 %v512
        %v1030 = vunpack.c.l.b16 %v513
        %v1031 = vunpack.c.h.b16 %v513
        %v1032 = vunpack.c.l.b16 %v514
        %v1033 = vunpack.c.h.b16 %v514
        %v1034 = vunpack.c.l.b16 %v515
        %v1035 = vunpack.c.h.b16 %v515
        %v1036 = vunpack.c.l.b16 %v516
        %v1037 = vunpack.c.h.b16 %v516
        %v1038 = vunpack.c.l.b16 %v517
        %v1039 = vunpack.c.h.b16 %v517
        %v1040 = vunpack.c.l.b16 %v518
        %v1041 = vunpack.c.h.b16 %v518
        %v1042 = vunpack.c.l.b16 %v519
        %v1043 = vunpack.c.h.b16 %v519
        %v1044 = vunpack.c.l.b16 %v520
        %v1045 = vunpack.c.h.b16 %v520
        %v1046 = vunpack.c.l.b16 %v521
        %v1047 = vunpack.c.h.b16 %v521
        %v1048 = vunpack.c.l.b16 %v522
        %v1049 = vunpack.c.h.b16 %v522
        %v1050 = vunpack.c.l.b16 %v523
        %v1051 = vunpack.c.h.b16 %v523
        %v1052 = vunpack.c.l.b16 %v524
        %v1053 = vunpack.c.h.b16 %v524
        %v1054 = vunpack.c.l.b16 %v525
        %v1055 = vunpack.c.h.b16 %v525
        %v1056 = vunpack.c.l.b16 %v526
        %v1057 = vunpack.c.h.b16 %v526
        %v1058 = vunpack.c.l.b16 %v527
        %v1059 = vunpack.c.h.b16 %v527
        %v1060 = vunpack.c.l.b16 %v528
        %v1061 = vunpack.c.h.b16 %v528
        %v1062 = vunpack.c.l.b16 %v529
        %v1063 = vunpack.c.h.b16 %v529
        %v1064 = vunpack.c.l.b16 %v530
        %v1065 = vunpack.c.h.b16 %v530
        %v1066 = vunpack.c.l.b16 %v531
        %v1067 = vunpack.c.h.b16 %v531
        %v1068 = vunpack.c.l.b16 %v532
        %v1069 = vunpack.c.h.b16 %v532
        %v1070 = vunpack.c.l.b16 %v533
        %v1071 = vunpack.c.h.b16 %v533
        %v1072 = vunpack.c.l.b16 %v534
        %v1073 = vunpack.c.h.b16 %v534
        %v1074 = vunpack.c.l.b16 %v535
        %v1075 = vunpack.c.h.b16 %v535
        %v1076 = vunpack.c.l.b16 %v536
        %v1077 = vunpack.c.h.b16 %v536
        %v1078 = vunpack.c.l.b16 %v537
        %v1079 = vunpack.c.h.b16 %v537
        %v1080 = vunpack.c.l.b16 %v538
        %v1081 = vunpack.c.h.b16 %v538
        %v1082 = vunpack.c.l.b16 %v539
        %v1083 = vunpack.c.h.b16 %v539
        %v1084 = vunpack.c.l.b16 %v540
        %v1085 = vunpack.c.h.b16 %v540
        %v1086 = vunpack.c.l.b16 %v541
        %v1087 = vunpack.c.h.b16 %v541
        %v1088 = vunpack.c.l.b16 %v542
        %v1089 = vunpack.c.h.b16 %v542
        %v1090 = vunpack.c.l.b16 %v543
        %v1091 = vunpack.c.h.b16 %v543
        %v1092 = vunpack.c.l.b16 %v544
        %v1093 = vunpack.c.h.b16 %v544
        %v1094 = vunpack.c.l.b16 %v545
        %v1095 = vunpack.c.h.b16 %v545
        %v1096 = vunpack.c.l.b16 %v546
        %v1097 = vunpack.c.h.b16 %v546
        %v1098 = vunpack.c.l.b16 %v547
        %v1099 = vunpack.c.h.b16 %v547
        %v1100 = vunpack.c.l.b16 %v548
        %v1101 = vunpack.c.h.b16 %v548
        %v1102 = vunpack.c.l.b16 %v549
        %v1103 = vunpack.c.h.b16 %v549
        %v1104 = vunpack.c.l.b16 %v550
        %v1105 = vunpack.c.h.b16 %v550
        %v1106 = vunpack.c.l.b16 %v551
        %v1107 = vunpack.c.h.b16 %v551
        %v1108 = vunpack.c.l.b16 %v552
        %v1109 = vunpack.c.h.b16 %v552
        %v1110 = vunpack.c.l.b16 %v553
        %v1111 = vunpack.c.h.b16 %v553
        %v1112 = vunpack.c.l.b16 %v554
        %v1113 = vunpack.c.h.b16 %v554
        %v1114 = vunpack.c.l.b16 %v555
        %v1115 = vunpack.c.h.b16 %v555
        %v1116 = vunpack.c.l.b16 %v556
        %v1117 = vunpack.c.h.b16 %v556
        %v1118 = vunpack.c.l.b16 %v557
        %v1119 = vunpack.c.h.b16 %v557
        %v1120 = vunpack.c.l.b16 %v558
        %v1121 = vunpack.c.h.b16 %v558
        %v1122 = vunpack.c.l.b16 %v559
        %v1123 = vunpack.c.h.b16 %v559
        %v1124 = vunpack.c.l.b16 %v560
        %v1125 = vunpack.c.h.b16 %v560
        %v1126 = vunpack.c.l.b16 %v561
        %v1127 = vunpack.c.h.b16 %v561
        %v1128 = vunpack.c.l.b16 %v562
        %v1129 = vunpack.c.h.b16 %v562
        %v1130 = vunpack.c.l.b16 %v563
        %v1131 = vunpack.c.h.b16 %v563
        %v1132 = vunpack.c.l.b16 %v564
        %v1133 = vunpack.c.h.b16 %v564
        %v1134 = vunpack.c.l.b16 %v565
        %v1135 = vunpack.c.h.b16 %v565
        %v1136 = vunpack.c.l.b16 %v566
        %v1137 = vunpack.c.h.b16 %v566
        %v1138 = vunpack.c.l.b16 %v567
        %v1139 = vunpack.c.h.b16 %v567
        %v1140 = vunpack.c.l.b16 %v568
        %v1141 = vunpack.c.h.b16 %v568
        %v1142 = vunpack.c.l.b16 %v569
        %v1143 = vunpack.c.h.b16 %v569
        %v1144 = vunpack.c.l.b16 %v570
        %v1145 = vunpack.c.h.b16 %v570
        %v1146 = vunpack.c.l.b16 %v571
        %v1147 = vunpack.c.h.b16 %v571
        %v1148 = vunpack.c.l.b16 %v572
        %v1149 = vunpack.c.h.b16 %v572
        %v1150 = vunpack.c.l.b16 %v573
        %v1151 = vunpack.c.h.b16 %v573
        %v1152 = vunpack.c.l.b16 %v574
        %v1153 = vunpack.c.h.b16 %v574
        %v1154 = vunpack.c.l.b16 %v575
        %v1155 = vunpack.c.h.b16 %v575
        %v1156 = vunpack.c.l.b16 %v576
        %v1157 = vunpack.c.h.b16 %v576
        %v1158 = vunpack.c.l.b16 %v577
        %v1159 = vunpack.c.h.b16 %v577
        %v1160 = vunpack.c.l.b16 %v578
        %v1161 = vunpack.c.h.b16 %v578
        %v1162 = vunpack.c.l.b16 %v579
        %v1163 = vunpack.c.h.b16 %v579
        %v1164 = vunpack.c.l.b16 %v580
        %v1165 = vunpack.c.h.b16 %v580
        %v1166 = vunpack.c.l.b16 %v581
        %v1167 = vunpack.c.h.b16 %v581
        %v1168 = vunpack.c.l.b16 %v582
        %v1169 = vunpack.c.h.b16 %v582
        %v1170 = vunpack.c.l.b16 %v583
        %v1171 = vunpack.c.h.b16 %v583
        %v1172 = vunpack.c.l.b16 %v584
        %v1173 = vunpack.c.h.b16 %v584
        %v1174 = vunpack.c.l.b16 %v585
        %v1175 = vunpack.c.h.b16 %v585
        %v1176 = vunpack.c.l.b16 %v586
        %v1177 = vunpack.c.h.b16 %v586
        %v1178 = vunpack.c.l.b16 %v587
        %v1179 = vunpack.c.h.b16 %v587
        %v1180 = vunpack.c.l.b16 %v588
        %v1181 = vunpack.c.h.b16 %v588
        %v1182 = vunpack.c.l.b16 %v589
        %v1183 = vunpack.c.h.b16 %v589
        %v1184 = vunpack.c.l.b16 %v590
        %v1185 = vunpack.c.h.b16 %v590
        %v1186 = vunpack.c.l.b16 %v591
        %v1187 = vunpack.c.h.b16 %v591
        %v1188 = vunpack.c.l.b16 %v592
        %v1189 = vunpack.c.h.b16 %v592
        %v1190 = vunpack.c.l.b16 %v593
        %v1191 = vunpack.c.h.b16 %v593
        %v1192 = vunpack.c.l.b16 %v594
        %v1193 = vunpack.c.h.b16 %v594
        %v1194 = vunpack.c.l.b16 %v595
        %v1195 = vunpack.c.h.b16 %v595
        %v1196 = vunpack.c.l.b16 %v596
        %v1197 = vunpack.c.h.b16 %v596
        %v1198 = vunpack.c.l.b16 %v597
        %v1199 = vunpack.c.h.b16 %v597
        %v1200 = vunpack.c.l.b16 %v598
        %v1201 = vunpack.c.h.b16 %v598
        %v1202 = vunpack.c.l.b16 %v599
        %v1203 = vunpack.c.h.b16 %v599
        %v1204 = vunpack.c.l.b16 %v600
        %v1205 = vunpack.c.h.b16 %v600
        %v1206 = vunpack.c.l.b16 %v601
        %v1207 = vunpack.c.h.b16 %v601
        %v1208 = vunpack.c.l.b16 %v602
        %v1209 = vunpack.c.h.b16 %v602
        %v1210 = vunpack.c.l.b16 %v603
        %v1211 = vunpack.c.h.b16 %v603
        %v1212 = vunpack.c.l.b16 %v604
        %v1213 = vunpack.c.h.b16 %v604
        %v1214 = vunpack.c.l.b16 %v605
        %v1215 = vunpack.c.h.b16 %v605
        %v1216 = vunpack.c.l.b16 %v606
        %v1217 = vunpack.c.h.b16 %v606
        %v1218 = vunpack.c.l.b16 %v607
        %v1219 = vunpack.c.h.b16 %v607
        %v1220 = vunpack.c.l.b16 %v608
        %v1221 = vunpack.c.h.b16 %v608
        %v1222 = vunpack.c.l.b16 %v609
        %v1223 = vunpack.c.h.b16 %v609
        %v1224 = vunpack.c.l.b16 %v610
        %v1225 = vunpack.c.h.b16 %v610
        %v1226 = vunpack.c.l.b16 %v611
        %v1227 = vunpack.c.h.b16 %v611
        %v1228 = vunpack.c.l.b16 %v612
        %v1229 = vunpack.c.h.b16 %v612
        %v1230 = vunpack.c.l.b16 %v613
        %v1231 = vunpack.c.h.b16 %v613
        %v1232 = vunpack.c.l.b16 %v614
        %v1233 = vunpack.c.h.b16 %v614
        %v1234 = vunpack.c.l.b16 %v615
        %v1235 = vunpack.c.h.b16 %v615
        %v1236 = vunpack.c.l.b16 %v616
        %v1237 = vunpack.c.h.b16 %v616
        %v1238 = vunpack.c.l.b16 %v617
        %v1239 = vunpack.c.h.b16 %v617
        %v1240 = vunpack.c.l.b16 %v618
        %v1241 = vunpack.c.h.b16 %v618
        %v1242 = vunpack.c.l.b16 %v619
        %v1243 = vunpack.c.h.b16 %v619
        %v1244 = vunpack.c.l.b16 %v620
        %v1245 = vunpack.c.h.b16 %v620
        %v1246 = vunpack.c.l.b16 %v621
        %v1247 = vunpack.c.h.b16 %v621
        %v1248 = vunpack.c.l.b16 %v622
        %v1249 = vunpack.c.h.b16 %v622
        %v1250 = vunpack.c.l.b16 %v623
        %v1251 = vunpack.c.h.b16 %v623
        %v1252 = vunpack.c.l.b16 %v624
        %v1253 = vunpack.c.h.b16 %v624
        %v1254 = vunpack.c.l.b16 %v625
        %v1255 = vunpack.c.h.b16 %v625
        %v1256 = vunpack.c.l.b16 %v626
        %v1257 = vunpack.c.h.b16 %v626
        %v1258 = vunpack.c.l.b16 %v627
        %v1259 = vunpack.c.h.b16 %v627
        %v1260 = vunpack.c.l.b16 %v628
        %v1261 = vunpack.c.h.b16 %v628
        %v1262 = vunpack.c.l.b16 %v629
        %v1263 = vunpack.c.h.b16 %v629
        %v1264 = vunpack.c.l.b16 %v630
        %v1265 = vunpack.c.h.b16 %v630
        %v1266 = vunpack.c.l.b16 %v631
        %v1267 = vunpack.c.h.b16 %v631
        %v1268 = vunpack.c.l.b16 %v632
        %v1269 = vunpack.c.h.b16 %v632
        %v1270 = vunpack.c.l.b16 %v633
        %v1271 = vunpack.c.h.b16 %v633
        %v1272 = vunpack.c.l.b16 %v634
        %v1273 = vunpack.c.h.b16 %v634
        %v1274 = vunpack.c.l.b16 %v635
        %v1275 = vunpack.c.h.b16 %v635
        %v1276 = vunpack.c.l.b16 %v636
        %v1277 = vunpack.c.h.b16 %v636
        %v1278 = vunpack.c.l.b16 %v637
        %v1279 = vunpack.c.h.b16 %v637
        %v1280 = vunpack.c.l.b16 %v638
        %v1281 = vunpack.c.h.b16 %v638
        %v1282 = vunpack.c.l.b16 %v639
        %v1283 = vunpack.c.h.b16 %v639
        %v1284 = vunpack.c.l.b16 %v640
        %v1285 = vunpack.c.h.b16 %v640
        %v1286 = vunpack.c.l.b16 %v641
        %v1287 = vunpack.c.h.b16 %v641
        %v1288 = vunpack.c.l.b16 %v642
        %v1289 = vunpack.c.h.b16 %v642
        %v1290 = vunpack.c.l.b16 %v643
        %v1291 = vunpack.c.h.b16 %v643
        %v1292 = vunpack.c.l.b16 %v644
        %v1293 = vunpack.c.h.b16 %v644
        %v1294 = vunpack.c.l.b16 %v645
        %v1295 = vunpack.c.h.b16 %v645
        %v1296 = vunpack.c.l.b16 %v646
        %v1297 = vunpack.c.h.b16 %v646
        %v1298 = vunpack.c.l.b16 %v647
        %v1299 = vunpack.c.h.b16 %v647
        %v1300 = vunpack.c.l.b16 %v648
        %v1301 = vunpack.c.h.b16 %v648
        %v1302 = vunpack.c.l.b16 %v649
        %v1303 = vunpack.c.h.b16 %v649
        %v1304 = vunpack.c.l.b16 %v650
        %v1305 = vunpack.c.h.b16 %v650
        %v1306 = vunpack.c.l.b16 %v651
        %v1307 = vunpack.c.h.b16 %v651
        %v1308 = vunpack.c.l.b16 %v652
        %v1309 = vunpack.c.h.b16 %v652
        %v1310 = vunpack.c.l.b16 %v653
        %v1311 = vunpack.c.h.b16 %v653
        %v1312 = vunpack.c.l.b16 %v654
        %v1313 = vunpack.c.h.b16 %v654
        %v1314 = vunpack.c.l.b16 %v655
        %v1315 = vunpack.c.h.b16 %v655
        %v1316 = vunpack.c.l.b16 %v656
        %v1317 = vunpack.c.h.b16 %v656
        %v1318 = vunpack.c.l.b16 %v657
        %v1319 = vunpack.c.h.b16 %v657
        %v1320 = vunpack.c.l.b16 %v658
        %v1321 = vunpack.c.h.b16 %v658
        %v1322 = vunpack.c.l.b16 %v659
        %v1323 = vunpack.c.h.b16 %v659
        %v1324 = vunpack.c.l.b16 %v660
        %v1325 = vunpack.c.h.b16 %v660
        %v1326 = vunpack.c.l.b16 %v661
        %v1327 = vunpack.c.h.b16 %v661
        %v1328 = vunpack.c.l.b16 %v662
        %v1329 = vunpack.c.h.b16 %v662
        %v1330 = vunpack.c.l.b16 %v663
        %v1331 = vunpack.c.h.b16 %v663
        %v1332 = vunpack.c.l.b16 %v664
        %v1333 = vunpack.c.h.b16 %v664
        %v1334 = vunpack.c.l.b16 %v665
        %v1335 = vunpack.c.h.b16 %v665
        %v1336 = vunpack.c.l.b16 %v666
        %v1337 = vunpack.c.h.b16 %v666
        %v1338 = vunpack.c.l.b16 %v667
        %v1339 = vunpack.c.h.b16 %v667
        %v1340 = vunpack.c.l.b16 %v668
        %v1341 = vunpack.c.h.b16 %v668
        %v1342 = vunpack.c.l.b16 %v669
        %v1343 = vunpack.c.h.b16 %v669
        %v1344 = vunpack.c.l.b16 %v670
        %v1345 = vunpack.c.h.b16 %v670
        %v1346 = vunpack.c.l.b16 %v671
        %v1347 = vunpack.c.h.b16 %v671
        %v1348 = vunpack.c.l.b16 %v672
        %v1349 = vunpack.c.h.b16 %v672
        %v1350 = vunpack.c.l.b16 %v673
        %v1351 = vunpack.c.h.b16 %v673
        %v1352 = vunpack.c.l.b16 %v674
        %v1353 = vunpack.c.h.b16 %v674
        %v1354 = vunpack.c.l.b16 %v675
        %v1355 = vunpack.c.h.b16 %v675
        %v1356 = vunpack.c.l.b16 %v676
        %v1357 = vunpack.c.h.b16 %v676
        %v1358 = vunpack.c.l.b16 %v677
        %v1359 = vunpack.c.h.b16 %v677
        %v1360 = vunpack.c.l.b16 %v678
        %v1361 = vunpack.c.h.b16 %v678
        %v1362 = vunpack.c.l.b16 %v679
        %v1363 = vunpack.c.h.b16 %v679
        %v1364 = vunpack.c.l.b16 %v680
        %v1365 = vunpack.c.h.b16 %v680
        %v1366 = vunpack.c.l.b16 %v681
        %v1367 = vunpack.c.h.b16 %v681
        %v1368 = vunpack.c.l.b16 %v682
        %v1369 = vunpack.c.h.b16 %v682
        %v1370 = vunpack.c.l.b16 %v683
        %v1371 = vunpack.c.h.b16 %v683
        %v1372 = vunpack.c.l.b16 %v684
        %v1373 = vunpack.c.h.b16 %v684
        %v1374 = vunpack.c.l.b16 %v685
        %v1375 = vunpack.c.h.b16 %v685
        %v1376 = vunpack.c.l.b16 %v686
        %v1377 = vunpack.c.h.b16 %v686
        %v1378 = vunpack.c.l.b16 %v687
        %v1379 = vunpack.c.h.b16 %v687
        %v1380 = vunpack.c.l.b16 %v688
        %v1381 = vunpack.c.h.b16 %v688
        %v1382 = vunpack.c.l.b16 %v689
        %v1383 = vunpack.c.h.b16 %v689
        %v1384 = vunpack.c.l.b16 %v690
        %v1385 = vunpack.c.h.b16 %v690
        %v1386 = vunpack.c.l.b16 %v691
        %v1387 = vunpack.c.h.b16 %v691
        %v1388 = vunpack.c.l.b16 %v692
        %v1389 = vunpack.c.h.b16 %v692
        %v1390 = vunpack.c.l.b16 %v693
        %v1391 = vunpack.c.h.b16 %v693
        %v1392 = vunpack.c.l.b16 %v694
        %v1393 = vunpack.c.h.b16 %v694
        %v1394 = vunpack.c.l.b16 %v695
        %v1395 = vunpack.c.h.b16 %v695
        %v1396 = vunpack.c.l.b16 %v696
        %v1397 = vunpack.c.h.b16 %v696
        %v1398 = vunpack.c.l.b16 %v697
        %v1399 = vunpack.c.h.b16 %v697
        %v1400 = vunpack.c.l.b16 %v698
        %v1401 = vunpack.c.h.b16 %v698
        %v1402 = vunpack.c.l.b16 %v699
        %v1403 = vunpack.c.h.b16 %v699
        %v1404 = vunpack.c.l.b16 %v700
        %v1405 = vunpack.c.h.b16 %v700
        %v1406 = vunpack.c.l.b16 %v701
        %v1407 = vunpack.c.h.b16 %v701
        %v1408 = vunpack.c.l.b16 %v702
        %v1409 = vunpack.c.h.b16 %v702
        %v1410 = vunpack.c.l.b16 %v703
        %v1411 = vunpack.c.h.b16 %v703
        %v1412 = vunpack.c.l.b16 %v704
        %v1413 = vunpack.c.h.b16 %v704
        %v1414 = vunpack.c.l.b16 %v705
        %v1415 = vunpack.c.h.b16 %v705
        %v1416 = vunpack.c.l.b16 %v706
        %v1417 = vunpack.c.h.b16 %v706
        %v1418 = vunpack.c.l.b16 %v707
        %v1419 = vunpack.c.h.b16 %v707
        %v1420 = vunpack.c.l.b16 %v708
        %v1421 = vunpack.c.h.b16 %v708
        %v1422 = vunpack.c.l.b16 %v709
        %v1423 = vunpack.c.h.b16 %v709
        %v1424 = vunpack.c.l.b16 %v710
        %v1425 = vunpack.c.h.b16 %v710
        %v1426 = vunpack.c.l.b16 %v711
        %v1427 = vunpack.c.h.b16 %v711
        %v1428 = vunpack.c.l.b16 %v712
        %v1429 = vunpack.c.h.b16 %v712
        %v1430 = vunpack.c.l.b16 %v713
        %v1431 = vunpack.c.h.b16 %v713
        %v1432 = vunpack.c.l.b16 %v714
        %v1433 = vunpack.c.h.b16 %v714
        %v1434 = vunpack.c.l.b16 %v715
        %v1435 = vunpack.c.h.b16 %v715
        %v1436 = vunpack.c.l.b16 %v716
        %v1437 = vunpack.c.h.b16 %v716
        %v1438 = vunpack.c.l.b16 %v717
        %v1439 = vunpack.c.h.b16 %v717
        %v1440 = vunpack.c.l.b16 %v718
        %v1441 = vunpack.c.h.b16 %v718
        %v1442 = vunpack.c.l.b16 %v719
        %v1443 = vunpack.c.h.b16 %v719
        %v1444 = vunpack.c.l.b16 %v720
        %v1445 = vunpack.c.h.b16 %v720
        %v1446 = vunpack.c.l.b16 %v721
        %v1447 = vunpack.c.h.b16 %v721
        %v1448 = vunpack.c.l.b16 %v722
        %v1449 = vunpack.c.h.b16 %v722
        %v1450 = vunpack.c.l.b16 %v723
        %v1451 = vunpack.c.h.b16 %v723
        %v1452 = vunpack.c.l.b16 %v724
        %v1453 = vunpack.c.h.b16 %v724
        %v1454 = vunpack.c.l.b16 %v725
        %v1455 = vunpack.c.h.b16 %v725
        %v1456 = vunpack.c.l.b16 %v726
        %v1457 = vunpack.c.h.b16 %v726
        %v1458 = vunpack.c.l.b16 %v727
        %v1459 = vunpack.c.h.b16 %v727
        %v1460 = vunpack.c.l.b16 %v728
        %v1461 = vunpack.c.h.b16 %v728
        %v1462 = vunpack.c.l.b16 %v729
        %v1463 = vunpack.c.h.b16 %v729
        %v1464 = vunpack.c.l.b16 %v730
        %v1465 = vunpack.c.h.b16 %v730
        %v1466 = vunpack.c.l.b16 %v731
        %v1467 = vunpack.c.h.b16 %v731
        %v1468 = vunpack.c.l.b16 %v732
        %v1469 = vunpack.c.h.b16 %v732
        %v1470 = vunpack.c.l.b16 %v733
        %v1471 = vunpack.c.h.b16 %v733
        %v1472 = vunpack.c.l.b16 %v734
        %v1473 = vunpack.c.h.b16 %v734
        %v1474 = vunpack.c.l.b16 %v735
        %v1475 = vunpack.c.h.b16 %v735
        %v1476 = vunpack.c.l.b16 %v736
        %v1477 = vunpack.c.h.b16 %v736
        %v1478 = vunpack.c.l.b16 %v737
        %v1479 = vunpack.c.h.b16 %v737
        %v1480 = vunpack.c.l.b16 %v738
        %v1481 = vunpack.c.h.b16 %v738
        %v1482 = vunpack.c.l.b16 %v739
        %v1483 = vunpack.c.h.b16 %v739
        %v1484 = vunpack.c.l.b16 %v740
        %v1485 = vunpack.c.h.b16 %v740
        %v1486 = vunpack.c.l.b16 %v741
        %v1487 = vunpack.c.h.b16 %v741
        %v1488 = vunpack.c.l.b16 %v742
        %v1489 = vunpack.c.h.b16 %v742
        %v1490 = vunpack.c.l.b16 %v743
        %v1491 = vunpack.c.h.b16 %v743
        %v1492 = vunpack.c.l.b16 %v744
        %v1493 = vunpack.c.h.b16 %v744
        %v1494 = vunpack.c.l.b16 %v745
        %v1495 = vunpack.c.h.b16 %v745
        %v1496 = vunpack.c.l.b16 %v746
        %v1497 = vunpack.c.h.b16 %v746
        %v1498 = vunpack.c.l.b16 %v747
        %v1499 = vunpack.c.h.b16 %v747
        %v1500 = vunpack.c.l.b16 %v748
        %v1501 = vunpack.c.h.b16 %v748
        %v1502 = vunpack.c.l.b16 %v749
        %v1503 = vunpack.c.h.b16 %v749
        %v1504 = vunpack.c.l.b16 %v750
        %v1505 = vunpack.c.h.b16 %v750
        %v1506 = vunpack.c.l.b16 %v751
        %v1507 = vunpack.c.h.b16 %v751
        %v1508 = vunpack.c.l.b16 %v752
        %v1509 = vunpack.c.h.b16 %v752
        %v1510 = vunpack.c.l.b16 %v753
        %v1511 = vunpack.c.h.b16 %v753
        %v1512 = vunpack.c.l.b16 %v754
        %v1513 = vunpack.c.h.b16 %v754
        %v1514 = vunpack.c.l.b16 %v755
        %v1515 = vunpack.c.h.b16 %v755
        %v1516 = vunpack.c.l.b16 %v756
        %v1517 = vunpack.c.h.b16 %v756
        %v1518 = vunpack.c.l.b16 %v757
        %v1519 = vunpack.c.h.b16 %v757
        %v1520 = vunpack.c.l.b16 %v758
        %v1521 = vunpack.c.h.b16 %v758
        %v1522 = vunpack.c.l.b16 %v759
        %v1523 = vunpack.c.h.b16 %v759
        %v1524 = vunpack.c.l.b16 %v760
        %v1525 = vunpack.c.h.b16 %v760
        %v1526 = vunpack.c.l.b16 %v761
        %v1527 = vunpack.c.h.b16 %v761
        %v1528 = vunpack.c.l.b16 %v762
        %v1529 = vunpack.c.h.b16 %v762
        %v1530 = vunpack.c.l.b16 %v763
        %v1531 = vunpack.c.h.b16 %v763
        %v1532 = vpack.c.b16 %v1028, %v1020
        %v1533 = vpack.c.b16 %v1029, %v1021
        %v1534 = vpack.c.b16 %v1030, %v1022
        %v1535 = vpack.c.b16 %v1031, %v1023
        %v1536 = vpack.c.b16 %v1032, %v1024
        %v1537 = vpack.c.b16 %v1033, %v1025
        %v1538 = vpack.c.b16 %v1034, %v1026
        %v1539 = vpack.c.b16 %v1035, %v1027
        %v1540 = vpack.c.b16 %v1044, %v1036
        %v1541 = vpack.c.b16 %v1045, %v1037
        %v1542 = vpack.c.b16 %v1046, %v1038
        %v1543 = vpack.c.b16 %v1047, %v1039
        %v1544 = vpack.c.b16 %v1048, %v1040
        %v1545 = vpack.c.b16 %v1049, %v1041
        %v1546 = vpack.c.b16 %v1050, %v1042
        %v1547 = vpack.c.b16 %v1051, %v1043
        %v1548 = vpack.c.b16 %v1060, %v1052
        %v1549 = vpack.c.b16 %v1061, %v1053
        %v1550 = vpack.c.b16 %v1062, %v1054
        %v1551 = vpack.c.b16 %v1063, %v1055
        %v1552 = vpack.c.b16 %v1064, %v1056
        %v1553 = vpack.c.b16 %v1065, %v1057
        %v1554 = vpack.c.b16 %v1066, %v1058
        %v1555 = vpack.c.b16 %v1067, %v1059
        %v1556 = vpack.c.b16 %v1076, %v1068
        %v1557 = vpack.c.b16 %v1077, %v1069
        %v1558 = vpack.c.b16 %v1078, %v1070
        %v1559 = vpack.c.b16 %v1079, %v1071
        %v1560 = vpack.c.b16 %v1080, %v1072
        %v1561 = vpack.c.b16 %v1081, %v1073
        %v1562 = vpack.c.b16 %v1082, %v1074
        %v1563 = vpack.c.b16 %v1083, %v1075
        %v1564 = vpack.c.b16 %v1092, %v1084
        %v1565 = vpack.c.b16 %v1093, %v1085
        %v1566 = vpack.c.b16 %v1094, %v1086
        %v1567 = vpack.c.b16 %v1095, %v1087
        %v1568 = vpack.c.b16 %v1096, %v1088
        %v1569 = vpack.c.b16 %v1097, %v1089
        %v1570 = vpack.c.b16 %v1098, %v1090
        %v1571 = vpack.c.b16 %v1099, %v1091
        %v1572 = vpack.c.b16 %v1108, %v1100
        %v1573 = vpack.c.b16 %v1109, %v1101
        %v1574 = vpack.c.b16 %v1110, %v1102
        %v1575 = vpack.c.b16 %v1111, %v1103
        %v1576 = vpack.c.b16 %v1112, %v1104
        %v1577 = vpack.c.b16 %v1113, %v1105
        %v1578 = vpack.c.b16 %v1114, %v1106
        %v1579 = vpack.c.b16 %v1115, %v1107
        %v1580 = vpack.c.b16 %v1124, %v1116
        %v1581 = vpack.c.b16 %v1125, %v1117
        %v1582 = vpack.c.b16 %v1126, %v1118
        %v1583 = vpack.c.b16 %v1127, %v1119
        %v1584 = vpack.c.b16 %v1128, %v1120
        %v1585 = vpack.c.b16 %v1129, %v1121
        %v1586 = vpack.c.b16 %v1130, %v1122
        %v1587 = vpack.c.b16 %v1131, %v1123
        %v1588 = vpack.c.b16 %v1140, %v1132
        %v1589 = vpack.c.b16 %v1141, %v1133
        %v1590 = vpack.c.b16 %v1142, %v1134
        %v1591 = vpack.c.b16 %v1143, %v1135
        %v1592 = vpack.c.b16 %v1144, %v1136
        %v1593 = vpack.c.b16 %v1145, %v1137
        %v1594 = vpack.c.b16 %v1146, %v1138
        %v1595 = vpack.c.b16 %v1147, %v1139
        %v1596 = vpack.c.b16 %v1156, %v1148
        %v1597 = vpack.c.b16 %v1157, %v1149
        %v1598 = vpack.c.b16 %v1158, %v1150
        %v1599 = vpack.c.b16 %v1159, %v1151
        %v1600 = vpack.c.b16 %v1160, %v1152
        %v1601 = vpack.c.b16 %v1161, %v1153
        %v1602 = vpack.c.b16 %v1162, %v1154
        %v1603 = vpack.c.b16 %v1163, %v1155
        %v1604 = vpack.c.b16 %v1172, %v1164
        %v1605 = vpack.c.b16 %v1173, %v1165
        %v1606 = vpack.c.b16 %v1174, %v1166
        %v1607 = vpack.c.b16 %v1175, %v1167
        %v1608 = vpack.c.b16 %v1176, %v1168
        %v1609 = vpack.c.b16 %v1177, %v1169
        %v1610 = vpack.c.b16 %v1178, %v1170
        %v1611 = vpack.c.b16 %v1179, %v1171
        %v1612 = vpack.c.b16 %v1188, %v1180
        %v1613 = vpack.c.b16 %v1189, %v1181
        %v1614 = vpack.c.b16 %v1190, %v1182
        %v1615 = vpack.c.b16 %v1191, %v1183
        %v1616 = vpack.c.b16 %v1192, %v1184
        %v1617 = vpack.c.b16 %v1193, %v1185
        %v1618 = vpack.c.b16 %v1194, %v1186
        %v1619 = vpack.c.b16 %v1195, %v1187
        %v1620 = vpack.c.b16 %v1204, %v1196
        %v1621 = vpack.c.b16 %v1205, %v1197
        %v1622 = vpack.c.b16 %v1206, %v1198
        %v1623 = vpack.c.b16 %v1207, %v1199
        %v1624 = vpack.c.b16 %v1208, %v1200
        %v1625 = vpack.c.b16 %v1209, %v1201
        %v1626 = vpack.c.b16 %v1210, %v1202
        %v1627 = vpack.c.b16 %v1211, %v1203
        %v1628 = vpack.c.b16 %v1220, %v1212
        %v1629 = vpack.c.b16 %v1221, %v1213
        %v1630 = vpack.c.b16 %v1222, %v1214
        %v1631 = vpack.c.b16 %v1223, %v1215
        %v1632 = vpack.c.b16 %v1224, %v1216
        %v1633 = vpack.c.b16 %v1225, %v1217
        %v1634 = vpack.c.b16 %v1226, %v1218
        %v1635 = vpack.c.b16 %v1227, %v1219
        %v1636 = vpack.c.b16 %v1236, %v1228
        %v1637 = vpack.c.b16 %v1237, %v1229
        %v1638 = vpack.c.b16 %v1238, %v1230
        %v1639 = vpack.c.b16 %v1239, %v1231
        %v1640 = vpack.c.b16 %v1240, %v1232
        %v1641 = vpack.c.b16 %v1241, %v1233
        %v1642 = vpack.c.b16 %v1242, %v1234
        %v1643 = vpack.c.b16 %v1243, %v1235
        %v1644 = vpack.c.b16 %v1252, %v1244
        %v1645 = vpack.c.b16 %v1253, %v1245
        %v1646 = vpack.c.b16 %v1254, %v1246
        %v1647 = vpack.c.b16 %v1255, %v1247
        %v1648 = vpack.c.b16 %v1256, %v1248
        %v1649 = vpack.c.b16 %v1257, %v1249
        %v1650 = vpack.c.b16 %v1258, %v1250
        %v1651 = vpack.c.b16 %v1259, %v1251
        %v1652 = vpack.c.b16 %v1268, %v1260
        %v1653 = vpack.c.b16 %v1269, %v1261
        %v1654 = vpack.c.b16 %v1270, %v1262
        %v1655 = vpack.c.b16 %v1271, %v1263
        %v1656 = vpack.c.b16 %v1272, %v1264
        %v1657 = vpack.c.b16 %v1273, %v1265
        %v1658 = vpack.c.b16 %v1274, %v1266
        %v1659 = vpack.c.b16 %v1275, %v1267
        %v1660 = vpack.c.b16 %v1284, %v1276
        %v1661 = vpack.c.b16 %v1285, %v1277
        %v1662 = vpack.c.b16 %v1286, %v1278
        %v1663 = vpack.c.b16 %v1287, %v1279
        %v1664 = vpack.c.b16 %v1288, %v1280
        %v1665 = vpack.c.b16 %v1289, %v1281
        %v1666 = vpack.c.b16 %v1290, %v1282
        %v1667 = vpack.c.b16 %v1291, %v1283
        %v1668 = vpack.c.b16 %v1300, %v1292
        %v1669 = vpack.c.b16 %v1301, %v1293
        %v1670 = vpack.c.b16 %v1302, %v1294
        %v1671 = vpack.c.b16 %v1303, %v1295
        %v1672 = vpack.c.b16 %v1304, %v1296
        %v1673 = vpack.c.b16 %v1305, %v1297
        %v1674 = vpack.c.b16 %v1306, %v1298
        %v1675 = vpack.c.b16 %v1307, %v1299
        %v1676 = vpack.c.b16 %v1316, %v1308
        %v1677 = vpack.c.b16 %v1317, %v1309
        %v1678 = vpack.c.b16 %v1318, %v1310
        %v1679 = vpack.c.b16 %v1319, %v1311
        %v1680 = vpack.c.b16 %v1320, %v1312
        %v1681 = vpack.c.b16 %v1321, %v1313
        %v1682 = vpack.c.b16 %v1322, %v1314
        %v1683 = vpack.c.b16 %v1323, %v1315
        %v1684 = vpack.c.b16 %v1332, %v1324
        %v1685 = vpack.c.b16 %v1333, %v1325
        %v1686 = vpack.c.b16 %v1334, %v1326
        %v1687 = vpack.c.b16 %v1335, %v1327
        %v1688 = vpack.c.b16 %v1336, %v1328
        %v1689 = vpack.c.b16 %v1337, %v1329
        %v1690 = vpack.c.b16 %v1338, %v1330
        %v1691 = vpack.c.b16 %v1339, %v1331
        %v1692 = vpack.c.b16 %v1348, %v1340
        %v1693 = vpack.c.b16 %v1349, %v1341
        %v1694 = vpack.c.b16 %v1350, %v1342
        %v1695 = vpack.c.b16 %v1351, %v1343
        %v1696 = vpack.c.b16 %v1352, %v1344
        %v1697 = vpack.c.b16 %v1353, %v1345
        %v1698 = vpack.c.b16 %v1354, %v1346
        %v1699 = vpack.c.b16 %v1355, %v1347
        %v1700 = vpack.c.b16 %v1364, %v1356
        %v1701 = vpack.c.b16 %v1365, %v1357
        %v1702 = vpack.c.b16 %v1366, %v1358
        %v1703 = vpack.c.b16 %v1367, %v1359
        %v1704 = vpack.c.b16 %v1368, %v1360
        %v1705 = vpack.c.b16 %v1369, %v1361
        %v1706 = vpack.c.b16 %v1370, %v1362
        %v1707 = vpack.c.b16 %v1371, %v1363
        %v1708 = vpack.c.b16 %v1380, %v1372
        %v1709 = vpack.c.b16 %v1381, %v1373
        %v1710 = vpack.c.b16 %v1382, %v1374
        %v1711 = vpack.c.b16 %v1383, %v1375
        %v1712 = vpack.c.b16 %v1384, %v1376
        %v1713 = vpack.c.b16 %v1385, %v1377
        %v1714 = vpack.c.b16 %v1386, %v1378
        %v1715 = vpack.c.b16 %v1387, %v1379
        %v1716 = vpack.c.b16 %v1396, %v1388
        %v1717 = vpack.c.b16 %v1397, %v1389
        %v1718 = vpack.c.b16 %v1398, %v1390
        %v1719 = vpack.c.b16 %v1399, %v1391
        %v1720 = vpack.c.b16 %v1400, %v1392
        %v1721 = vpack.c.b16 %v1401, %v1393
        %v1722 = vpack.c.b16 %v1402, %v1394
        %v1723 = vpack.c.b16 %v1403, %v1395
        %v1724 = vpack.c.b16 %v1412, %v1404
        %v1725 = vpack.c.b16 %v1413, %v1405
        %v1726 = vpack.c.b16 %v1414, %v1406
        %v1727 = vpack.c.b16 %v1415, %v1407
        %v1728 = vpack.c.b16 %v1416, %v1408
        %v1729 = vpack.c.b16 %v1417, %v1409
        %v1730 = vpack.c.b16 %v1418, %v1410
        %v1731 = vpack.c.b16 %v1419, %v1411
        %v1732 = vpack.c.b16 %v1428, %v1420
        %v1733 = vpack.c.b16 %v1429, %v1421
        %v1734 = vpack.c.b16 %v1430, %v1422
        %v1735 = vpack.c.b16 %v1431, %v1423
        %v1736 = vpack.c.b16 %v1432, %v1424
        %v1737 = vpack.c.b16 %v1433, %v1425
        %v1738 = vpack.c.b16 %v1434, %v1426
        %v1739 = vpack.c.b16 %v1435, %v1427
        %v1740 = vpack.c.b16 %v1444, %v1436
        %v1741 = vpack.c.b16 %v1445, %v1437
        %v1742 = vpack.c.b16 %v1446, %v1438
        %v1743 = vpack.c.b16 %v1447, %v1439
        %v1744 = vpack.c.b16 %v1448, %v1440
        %v1745 = vpack.c.b16 %v1449, %v1441
        %v1746 = vpack.c.b16 %v1450, %v1442
        %v1747 = vpack.c.b16 %v1451, %v1443
        %v1748 = vpack.c.b16 %v1460, %v1452
        %v1749 = vpack.c.b16 %v1461, %v1453
        %v1750 = vpack.c.b16 %v1462, %v1454
        %v1751 = vpack.c.b16 %v1463, %v1455
        %v1752 = vpack.c.b16 %v1464, %v1456
        %v1753 = vpack.c.b16 %v1465, %v1457
        %v1754 = vpack.c.b16 %v1466, %v1458
        %v1755 = vpack.c.b16 %v1467, %v1459
        %v1756 = vpack.c.b16 %v1476, %v1468
        %v1757 = vpack.c.b16 %v1477, %v1469
        %v1758 = vpack.c.b16 %v1478, %v1470
        %v1759 = vpack.c.b16 %v1479, %v1471
        %v1760 = vpack.c.b16 %v1480, %v1472
        %v1761 = vpack.c.b16 %v1481, %v1473
        %v1762 = vpack.c.b16 %v1482, %v1474
        %v1763 = vpack.c.b16 %v1483, %v1475
        %v1764 = vpack.c.b16 %v1492, %v1484
        %v1765 = vpack.c.b16 %v1493, %v1485
        %v1766 = vpack.c.b16 %v1494, %v1486
        %v1767 = vpack.c.b16 %v1495, %v1487
        %v1768 = vpack.c.b16 %v1496, %v1488
        %v1769 = vpack.c.b16 %v1497, %v1489
        %v1770 = vpack.c.b16 %v1498, %v1490
        %v1771 = vpack.c.b16 %v1499, %v1491
        %v1772 = vpack.c.b16 %v1508, %v1500
        %v1773 = vpack.c.b16 %v1509, %v1501
        %v1774 = vpack.c.b16 %v1510, %v1502
        %v1775 = vpack.c.b16 %v1511, %v1503
        %v1776 = vpack.c.b16 %v1512, %v1504
        %v1777 = vpack.c.b16 %v1513, %v1505
        %v1778 = vpack.c.b16 %v1514, %v1506
        %v1779 = vpack.c.b16 %v1515, %v1507
        %v1780 = vpack.c.b16 %v1524, %v1516
        %v1781 = vpack.c.b16 %v1525, %v1517
        %v1782 = vpack.c.b16 %v1526, %v1518
        %v1783 = vpack.c.b16 %v1527, %v1519
        %v1784 = vpack.c.b16 %v1528, %v1520
        %v1785 = vpack.c.b16 %v1529, %v1521
        %v1786 = vpack.c.b16 %v1530, %v1522
        %v1787 = vpack.c.b16 %v1531, %v1523
        %2044 = vmatprep.subr.bf16.mxu0 %v1533
        %2045 = vmatpush1.bf16.msra.mxu0 %v1532
        %2046 = vmatprep.subr.bf16.mxu0 %v1541
        %2047 = vmatpush1.bf16.msra.mxu0 %v1540
        %2048 = vmatprep.subr.bf16.mxu0 %v1549
        %2049 = vmatpush1.bf16.msra.mxu0 %v1548
        %2050 = vmatprep.subr.bf16.mxu0 %v1557
        %2051 = vmatpush1.bf16.msra.mxu0 %v1556
        %2052 = vmatprep.subr.bf16.mxu0 %v1565
        %2053 = vmatpush1.bf16.msra.mxu0 %v1564
        %2054 = vmatprep.subr.bf16.mxu0 %v1573
        %2055 = vmatpush1.bf16.msra.mxu0 %v1572
        %2056 = vmatprep.subr.bf16.mxu0 %v1581
        %2057 = vmatpush1.bf16.msra.mxu0 %v1580
        %2058 = vmatprep.subr.bf16.mxu0 %v1589
        %2059 = vmatpush1.bf16.msra.mxu0 %v1588
        %2060 = vmatprep.subr.bf16.mxu0 %v1597
        %2061 = vmatpush1.bf16.msra.mxu0 %v1596
        %2062 = vmatprep.subr.bf16.mxu0 %v1605
        %2063 = vmatpush1.bf16.msra.mxu0 %v1604
        %2064 = vmatprep.subr.bf16.mxu0 %v1613
        %2065 = vmatpush1.bf16.msra.mxu0 %v1612
        %2066 = vmatprep.subr.bf16.mxu0 %v1621
        %2067 = vmatpush1.bf16.msra.mxu0 %v1620
        %2068 = vmatprep.subr.bf16.mxu0 %v1629
        %2069 = vmatpush1.bf16.msra.mxu0 %v1628
        %2070 = vmatprep.subr.bf16.mxu0 %v1637
        %2071 = vmatpush1.bf16.msra.mxu0 %v1636
        %2072 = vmatprep.subr.bf16.mxu0 %v1645
        %2073 = vmatpush1.bf16.msra.mxu0 %v1644
        %2074 = vmatprep.subr.bf16.mxu0 %v1653
        %2075 = vmatpush1.bf16.msra.mxu0 %v1652
        %2076 = vmatprep.mubr.bf16.mxu0 %v505
        %2077 = vmatmul.mubr.bf16.gmra.mrb[0].mxu0 %v504
        %v2078 = vpop.f32.mrb[0].mxu0
        %v2079 = vadd.f32 0.0, %v2078
        %v2080 = vpop.f32.mrb[0].mxu0
        %v2081 = vadd.f32 0.0, %v2080
        %v2082 = vpop.f32.mrb[0].mxu0
        %v2083 = vpop.f32.mrb[0].mxu0
        %2084 = vdwg.mxu0
        %2085 = vmatprep.subr.bf16.mxu0 %v1661
        %2086 = vmatpush1.bf16.msra.mxu0 %v1660
        %2087 = vmatprep.subr.bf16.mxu0 %v1669
        %2088 = vmatpush1.bf16.msra.mxu0 %v1668
        %2089 = vmatprep.subr.bf16.mxu0 %v1677
        %2090 = vmatpush1.bf16.msra.mxu0 %v1676
        %2091 = vmatprep.subr.bf16.mxu0 %v1685
        %2092 = vmatpush1.bf16.msra.mxu0 %v1684
        %2093 = vmatprep.subr.bf16.mxu0 %v1693
        %2094 = vmatpush1.bf16.msra.mxu0 %v1692
        %2095 = vmatprep.subr.bf16.mxu0 %v1701
        %2096 = vmatpush1.bf16.msra.mxu0 %v1700
        %2097 = vmatprep.subr.bf16.mxu0 %v1709
        %2098 = vmatpush1.bf16.msra.mxu0 %v1708
        %2099 = vmatprep.subr.bf16.mxu0 %v1717
        %2100 = vmatpush1.bf16.msra.mxu0 %v1716
        %2101 = vmatprep.subr.bf16.mxu0 %v1725
        %2102 = vmatpush1.bf16.msra.mxu0 %v1724
        %2103 = vmatprep.subr.bf16.mxu0 %v1733
        %2104 = vmatpush1.bf16.msra.mxu0 %v1732
        %2105 = vmatprep.subr.bf16.mxu0 %v1741
        %2106 = vmatpush1.bf16.msra.mxu0 %v1740
        %2107 = vmatprep.subr.bf16.mxu0 %v1749
        %2108 = vmatpush1.bf16.msra.mxu0 %v1748
        %2109 = vmatprep.subr.bf16.mxu0 %v1757
        %2110 = vmatpush1.bf16.msra.mxu0 %v1756
        %2111 = vmatprep.subr.bf16.mxu0 %v1765
        %2112 = vmatpush1.bf16.msra.mxu0 %v1764
        %2113 = vmatprep.subr.bf16.mxu0 %v1773
        %2114 = vmatpush1.bf16.msra.mxu0 %v1772
        %2115 = vmatprep.subr.bf16.mxu0 %v1781
        %2116 = vmatpush1.bf16.msra.mxu0 %v1780
        %2117 = vmatprep.mubr.bf16.mxu0 %v507
        %2118 = vmatmul.mubr.bf16.gmra.mrb[0].mxu0 %v506
        %v2119 = vpop.f32.mrb[0].mxu0
        %v2120 = vadd.f32 %v2079, %v2119
        %v2121 = vpop.f32.mrb[0].mxu0
        %v2122 = vadd.f32 %v2081, %v2121
        %v2123 = vpop.f32.mrb[0].mxu0
        %v2124 = vpop.f32.mrb[0].mxu0
        %2125 = vdwg.mxu0
        %2126 = vmatprep.subr.bf16.mxu0 %v1535
        %2127 = vmatpush1.bf16.msra.mxu0 %v1534
        %2128 = vmatprep.subr.bf16.mxu0 %v1543
        %2129 = vmatpush1.bf16.msra.mxu0 %v1542
        %2130 = vmatprep.subr.bf16.mxu0 %v1551
        %2131 = vmatpush1.bf16.msra.mxu0 %v1550
        %2132 = vmatprep.subr.bf16.mxu0 %v1559
        %2133 = vmatpush1.bf16.msra.mxu0 %v1558
        %2134 = vmatprep.subr.bf16.mxu0 %v1567
        %2135 = vmatpush1.bf16.msra.mxu0 %v1566
        %2136 = vmatprep.subr.bf16.mxu0 %v1575
        %2137 = vmatpush1.bf16.msra.mxu0 %v1574
        %2138 = vmatprep.subr.bf16.mxu0 %v1583
        %2139 = vmatpush1.bf16.msra.mxu0 %v1582
        %2140 = vmatprep.subr.bf16.mxu0 %v1591
        %2141 = vmatpush1.bf16.msra.mxu0 %v1590
        %2142 = vmatprep.subr.bf16.mxu0 %v1599
        %2143 = vmatpush1.bf16.msra.mxu0 %v1598
        %2144 = vmatprep.subr.bf16.mxu0 %v1607
        %2145 = vmatpush1.bf16.msra.mxu0 %v1606
        %2146 = vmatprep.subr.bf16.mxu0 %v1615
        %2147 = vmatpush1.bf16.msra.mxu0 %v1614
        %2148 = vmatprep.subr.bf16.mxu0 %v1623
        %2149 = vmatpush1.bf16.msra.mxu0 %v1622
        %2150 = vmatprep.subr.bf16.mxu0 %v1631
        %2151 = vmatpush1.bf16.msra.mxu0 %v1630
        %2152 = vmatprep.subr.bf16.mxu0 %v1639
        %2153 = vmatpush1.bf16.msra.mxu0 %v1638
        %2154 = vmatprep.subr.bf16.mxu0 %v1647
        %2155 = vmatpush1.bf16.msra.mxu0 %v1646
        %2156 = vmatprep.subr.bf16.mxu0 %v1655
        %2157 = vmatpush1.bf16.msra.mxu0 %v1654
        %2158 = vmatprep.mubr.bf16.mxu0 %v505
        %2159 = vmatmul.mubr.bf16.gmra.mrb[0].mxu0 %v504
        %v2160 = vpop.f32.mrb[0].mxu0
        %v2161 = vadd.f32 0.0, %v2160
        %v2162 = vpop.f32.mrb[0].mxu0
        %v2163 = vadd.f32 0.0, %v2162
        %v2164 = vpop.f32.mrb[0].mxu0
        %v2165 = vpop.f32.mrb[0].mxu0
        %2166 = vdwg.mxu0
        %2167 = vmatprep.subr.bf16.mxu0 %v1663
        %2168 = vmatpush1.bf16.msra.mxu0 %v1662
        %2169 = vmatprep.subr.bf16.mxu0 %v1671
        %2170 = vmatpush1.bf16.msra.mxu0 %v1670
        %2171 = vmatprep.subr.bf16.mxu0 %v1679
        %2172 = vmatpush1.bf16.msra.mxu0 %v1678
        %2173 = vmatprep.subr.bf16.mxu0 %v1687
        %2174 = vmatpush1.bf16.msra.mxu0 %v1686
        %2175 = vmatprep.subr.bf16.mxu0 %v1695
        %2176 = vmatpush1.bf16.msra.mxu0 %v1694
        %2177 = vmatprep.subr.bf16.mxu0 %v1703
        %2178 = vmatpush1.bf16.msra.mxu0 %v1702
        %2179 = vmatprep.subr.bf16.mxu0 %v1711
        %2180 = vmatpush1.bf16.msra.mxu0 %v1710
        %2181 = vmatprep.subr.bf16.mxu0 %v1719
        %2182 = vmatpush1.bf16.msra.mxu0 %v1718
        %2183 = vmatprep.subr.bf16.mxu0 %v1727
        %2184 = vmatpush1.bf16.msra.mxu0 %v1726
        %2185 = vmatprep.subr.bf16.mxu0 %v1735
        %2186 = vmatpush1.bf16.msra.mxu0 %v1734
        %2187 = vmatprep.subr.bf16.mxu0 %v1743
        %2188 = vmatpush1.bf16.msra.mxu0 %v1742
        %2189 = vmatprep.subr.bf16.mxu0 %v1751
        %2190 = vmatpush1.bf16.msra.mxu0 %v1750
        %2191 = vmatprep.subr.bf16.mxu0 %v1759
        %2192 = vmatpush1.bf16.msra.mxu0 %v1758
        %2193 = vmatprep.subr.bf16.mxu0 %v1767
        %2194 = vmatpush1.bf16.msra.mxu0 %v1766
        %2195 = vmatprep.subr.bf16.mxu0 %v1775
        %2196 = vmatpush1.bf16.msra.mxu0 %v1774
        %2197 = vmatprep.subr.bf16.mxu0 %v1783
        %2198 = vmatpush1.bf16.msra.mxu0 %v1782
        %2199 = vmatprep.mubr.bf16.mxu0 %v507
        %2200 = vmatmul.mubr.bf16.gmra.mrb[0].mxu0 %v506
        %v2201 = vpop.f32.mrb[0].mxu0
        %v2202 = vadd.f32 %v2161, %v2201
        %v2203 = vpop.f32.mrb[0].mxu0
        %v2204 = vadd.f32 %v2163, %v2203
        %v2205 = vpop.f32.mrb[0].mxu0
        %v2206 = vpop.f32.mrb[0].mxu0
        %2207 = vdwg.mxu0
        %2208 = vmatprep.subr.bf16.mxu0 %v1537
        %2209 = vmatpush1.bf16.msra.mxu0 %v1536
        %2210 = vmatprep.subr.bf16.mxu0 %v1545
        %2211 = vmatpush1.bf16.msra.mxu0 %v1544
        %2212 = vmatprep.subr.bf16.mxu0 %v1553
        %2213 = vmatpush1.bf16.msra.mxu0 %v1552
        %2214 = vmatprep.subr.bf16.mxu0 %v1561
        %2215 = vmatpush1.bf16.msra.mxu0 %v1560
        %2216 = vmatprep.subr.bf16.mxu0 %v1569
        %2217 = vmatpush1.bf16.msra.mxu0 %v1568
        %2218 = vmatprep.subr.bf16.mxu0 %v1577
        %2219 = vmatpush1.bf16.msra.mxu0 %v1576
        %2220 = vmatprep.subr.bf16.mxu0 %v1585
        %2221 = vmatpush1.bf16.msra.mxu0 %v1584
        %2222 = vmatprep.subr.bf16.mxu0 %v1593
        %2223 = vmatpush1.bf16.msra.mxu0 %v1592
        %2224 = vmatprep.subr.bf16.mxu0 %v1601
        %2225 = vmatpush1.bf16.msra.mxu0 %v1600
        %2226 = vmatprep.subr.bf16.mxu0 %v1609
        %2227 = vmatpush1.bf16.msra.mxu0 %v1608
        %2228 = vmatprep.subr.bf16.mxu0 %v1617
        %2229 = vmatpush1.bf16.msra.mxu0 %v1616
        %2230 = vmatprep.subr.bf16.mxu0 %v1625
        %2231 = vmatpush1.bf16.msra.mxu0 %v1624
        %2232 = vmatprep.subr.bf16.mxu0 %v1633
        %2233 = vmatpush1.bf16.msra.mxu0 %v1632
        %2234 = vmatprep.subr.bf16.mxu0 %v1641
        %2235 = vmatpush1.bf16.msra.mxu0 %v1640
        %2236 = vmatprep.subr.bf16.mxu0 %v1649
        %2237 = vmatpush1.bf16.msra.mxu0 %v1648
        %2238 = vmatprep.subr.bf16.mxu0 %v1657
        %2239 = vmatpush1.bf16.msra.mxu0 %v1656
        %2240 = vmatprep.mubr.bf16.mxu0 %v505
        %2241 = vmatmul.mubr.bf16.gmra.mrb[0].mxu0 %v504
        %v2242 = vpop.f32.mrb[0].mxu0
        %v2243 = vadd.f32 0.0, %v2242
        %v2244 = vpop.f32.mrb[0].mxu0
        %v2245 = vadd.f32 0.0, %v2244
        %v2246 = vpop.f32.mrb[0].mxu0
        %v2247 = vpop.f32.mrb[0].mxu0
        %2248 = vdwg.mxu0
        %2249 = vmatprep.subr.bf16.mxu0 %v1665
        %2250 = vmatpush1.bf16.msra.mxu0 %v1664
        %2251 = vmatprep.subr.bf16.mxu0 %v1673
        %2252 = vmatpush1.bf16.msra.mxu0 %v1672
        %2253 = vmatprep.subr.bf16.mxu0 %v1681
        %2254 = vmatpush1.bf16.msra.mxu0 %v1680
        %2255 = vmatprep.subr.bf16.mxu0 %v1689
        %2256 = vmatpush1.bf16.msra.mxu0 %v1688
        %2257 = vmatprep.subr.bf16.mxu0 %v1697
        %2258 = vmatpush1.bf16.msra.mxu0 %v1696
        %2259 = vmatprep.subr.bf16.mxu0 %v1705
        %2260 = vmatpush1.bf16.msra.mxu0 %v1704
        %2261 = vmatprep.subr.bf16.mxu0 %v1713
        %2262 = vmatpush1.bf16.msra.mxu0 %v1712
        %2263 = vmatprep.subr.bf16.mxu0 %v1721
        %2264 = vmatpush1.bf16.msra.mxu0 %v1720
        %2265 = vmatprep.subr.bf16.mxu0 %v1729
        %2266 = vmatpush1.bf16.msra.mxu0 %v1728
        %2267 = vmatprep.subr.bf16.mxu0 %v1737
        %2268 = vmatpush1.bf16.msra.mxu0 %v1736
        %2269 = vmatprep.subr.bf16.mxu0 %v1745
        %2270 = vmatpush1.bf16.msra.mxu0 %v1744
        %2271 = vmatprep.subr.bf16.mxu0 %v1753
        %2272 = vmatpush1.bf16.msra.mxu0 %v1752
        %2273 = vmatprep.subr.bf16.mxu0 %v1761
        %2274 = vmatpush1.bf16.msra.mxu0 %v1760
        %2275 = vmatprep.subr.bf16.mxu0 %v1769
        %2276 = vmatpush1.bf16.msra.mxu0 %v1768
        %2277 = vmatprep.subr.bf16.mxu0 %v1777
        %2278 = vmatpush1.bf16.msra.mxu0 %v1776
        %2279 = vmatprep.subr.bf16.mxu0 %v1785
        %2280 = vmatpush1.bf16.msra.mxu0 %v1784
        %2281 = vmatprep.mubr.bf16.mxu0 %v507
        %2282 = vmatmul.mubr.bf16.gmra.mrb[0].mxu0 %v506
        %v2283 = vpop.f32.mrb[0].mxu0
        %v2284 = vadd.f32 %v2243, %v2283
        %v2285 = vpop.f32.mrb[0].mxu0
        %v2286 = vadd.f32 %v2245, %v2285
        %v2287 = vpop.f32.mrb[0].mxu0
        %v2288 = vpop.f32.mrb[0].mxu0
        %2289 = vdwg.mxu0
        %2290 = vmatprep.subr.bf16.mxu0 %v1539
        %2291 = vmatpush1.bf16.msra.mxu0 %v1538
        %2292 = vmatprep.subr.bf16.mxu0 %v1547
        %2293 = vmatpush1.bf16.msra.mxu0 %v1546
        %2294 = vmatprep.subr.bf16.mxu0 %v1555
        %2295 = vmatpush1.bf16.msra.mxu0 %v1554
        %2296 = vmatprep.subr.bf16.mxu0 %v1563
        %2297 = vmatpush1.bf16.msra.mxu0 %v1562
        %2298 = vmatprep.subr.bf16.mxu0 %v1571
        %2299 = vmatpush1.bf16.msra.mxu0 %v1570
        %2300 = vmatprep.subr.bf16.mxu0 %v1579
        %2301 = vmatpush1.bf16.msra.mxu0 %v1578
        %2302 = vmatprep.subr.bf16.mxu0 %v1587
        %2303 = vmatpush1.bf16.msra.mxu0 %v1586
        %2304 = vmatprep.subr.bf16.mxu0 %v1595
        %2305 = vmatpush1.bf16.msra.mxu0 %v1594
        %2306 = vmatprep.subr.bf16.mxu0 %v1603
        %2307 = vmatpush1.bf16.msra.mxu0 %v1602
        %2308 = vmatprep.subr.bf16.mxu0 %v1611
        %2309 = vmatpush1.bf16.msra.mxu0 %v1610
        %2310 = vmatprep.subr.bf16.mxu0 %v1619
        %2311 = vmatpush1.bf16.msra.mxu0 %v1618
        %2312 = vmatprep.subr.bf16.mxu0 %v1627
        %2313 = vmatpush1.bf16.msra.mxu0 %v1626
        %2314 = vmatprep.subr.bf16.mxu0 %v1635
        %2315 = vmatpush1.bf16.msra.mxu0 %v1634
        %2316 = vmatprep.subr.bf16.mxu0 %v1643
        %2317 = vmatpush1.bf16.msra.mxu0 %v1642
        %2318 = vmatprep.subr.bf16.mxu0 %v1651
        %2319 = vmatpush1.bf16.msra.mxu0 %v1650
        %2320 = vmatprep.subr.bf16.mxu0 %v1659
        %2321 = vmatpush1.bf16.msra.mxu0 %v1658
        %2322 = vmatprep.mubr.bf16.mxu0 %v505
        %2323 = vmatmul.mubr.bf16.gmra.mrb[0].mxu0 %v504
        %v2324 = vpop.f32.mrb[0].mxu0
        %v2325 = vadd.f32 0.0, %v2324
        %v2326 = vpop.f32.mrb[0].mxu0
        %v2327 = vadd.f32 0.0, %v2326
        %v2328 = vpop.f32.mrb[0].mxu0
        %v2329 = vpop.f32.mrb[0].mxu0
        %2330 = vdwg.mxu0
        %2331 = vmatprep.subr.bf16.mxu0 %v1667
        %2332 = vmatpush1.bf16.msra.mxu0 %v1666
        %2333 = vmatprep.subr.bf16.mxu0 %v1675
        %2334 = vmatpush1.bf16.msra.mxu0 %v1674
        %2335 = vmatprep.subr.bf16.mxu0 %v1683
        %2336 = vmatpush1.bf16.msra.mxu0 %v1682
        %2337 = vmatprep.subr.bf16.mxu0 %v1691
        %2338 = vmatpush1.bf16.msra.mxu0 %v1690
        %2339 = vmatprep.subr.bf16.mxu0 %v1699
        %2340 = vmatpush1.bf16.msra.mxu0 %v1698
        %2341 = vmatprep.subr.bf16.mxu0 %v1707
        %2342 = vmatpush1.bf16.msra.mxu0 %v1706
        %2343 = vmatprep.subr.bf16.mxu0 %v1715
        %2344 = vmatpush1.bf16.msra.mxu0 %v1714
        %2345 = vmatprep.subr.bf16.mxu0 %v1723
        %2346 = vmatpush1.bf16.msra.mxu0 %v1722
        %2347 = vmatprep.subr.bf16.mxu0 %v1731
        %2348 = vmatpush1.bf16.msra.mxu0 %v1730
        %2349 = vmatprep.subr.bf16.mxu0 %v1739
        %2350 = vmatpush1.bf16.msra.mxu0 %v1738
        %2351 = vmatprep.subr.bf16.mxu0 %v1747
        %2352 = vmatpush1.bf16.msra.mxu0 %v1746
        %2353 = vmatprep.subr.bf16.mxu0 %v1755
        %2354 = vmatpush1.bf16.msra.mxu0 %v1754
        %2355 = vmatprep.subr.bf16.mxu0 %v1763
        %2356 = vmatpush1.bf16.msra.mxu0 %v1762
        %2357 = vmatprep.subr.bf16.mxu0 %v1771
        %2358 = vmatpush1.bf16.msra.mxu0 %v1770
        %2359 = vmatprep.subr.bf16.mxu0 %v1779
        %2360 = vmatpush1.bf16.msra.mxu0 %v1778
        %2361 = vmatprep.subr.bf16.mxu0 %v1787
        %2362 = vmatpush1.bf16.msra.mxu0 %v1786
        %2363 = vmatprep.mubr.bf16.mxu0 %v507
        %2364 = vmatmul.mubr.bf16.gmra.mrb[0].mxu0 %v506
        %v2365 = vpop.f32.mrb[0].mxu0
        %v2366 = vadd.f32 %v2325, %v2365
        %v2367 = vpop.f32.mrb[0].mxu0
        %v2368 = vadd.f32 %v2327, %v2367
        %v2369 = vpop.f32.mrb[0].mxu0
        %v2370 = vpop.f32.mrb[0].mxu0
        %2371 = vdwg.mxu0
        %v2372 = vadd.f32 %v488, %v2120
        %v2373 = vadd.f32 %v489, %v2122
        %v2374 = vadd.f32 %v490, %v2202
        %v2375 = vadd.f32 %v491, %v2204
        %v2376 = vadd.f32 %v492, %v2284
        %v2377 = vadd.f32 %v493, %v2286
        %v2378 = vadd.f32 %v494, %v2366
        %v2379 = vadd.f32 %v495, %v2368
        %2380 = vst [vmem:[#allocation2] sm:$0xff] %v2372
        %2381 = vst [vmem:[#allocation2 + $0x8] sm:$0xff] %v2373
        %2382 = vst [vmem:[#allocation2 + $0x10] sm:$0xff] %v2374
        %2383 = vst [vmem:[#allocation2 + $0x18] sm:$0xff] %v2375
        %2384 = vst [vmem:[#allocation2 + $0x20] sm:$0xff] %v2376
        %2385 = vst [vmem:[#allocation2 + $0x28] sm:$0xff] %v2377
        %2386 = vst [vmem:[#allocation2 + $0x30] sm:$0xff] %v2378
        %2387 = vst [vmem:[#allocation2 + $0x38] sm:$0xff] %v2379
        %p2388 = scmp.eq.s32.totalorder %s25, 3
        // Predicated region
        $region77: #{net_forward.3} parent=71 // pred_check
          %p2389 = pneg %p2388
        $region78: #{net_forward.3} parent=71 // pred_check_branch
          %2391 = sbr.rel (%p2389) target = $region80
        $region79: #{net_forward.3} parent=71 // pred_region
          %v2392 = vld [vmem:[#allocation2] sm:$0xff]
          %v2393 = vld [vmem:[#allocation2 + $0x8] sm:$0xff]
          %v2394 = vld [vmem:[#allocation2 + $0x10] sm:$0xff]
          %v2395 = vld [vmem:[#allocation2 + $0x18] sm:$0xff]
          %v2396 = vld [vmem:[#allocation2 + $0x20] sm:$0xff]
          %v2397 = vld [vmem:[#allocation2 + $0x28] sm:$0xff]
          %v2398 = vld [vmem:[#allocation2 + $0x30] sm:$0xff]
          %v2399 = vld [vmem:[#allocation2 + $0x38] sm:$0xff]
          %v2400 = vmax.f32 %v2392, 0.0
          %v2401 = vmax.f32 %v2393, 0.0
          %v2402 = vmax.f32 %v2394, 0.0
          %v2403 = vmax.f32 %v2395, 0.0
          %v2404 = vmax.f32 %v2396, 0.0
          %v2405 = vmax.f32 %v2397, 0.0
          %v2406 = vmax.f32 %v2398, 0.0
          %v2407 = vmax.f32 %v2399, 0.0
          %v2408 = vpack.c.bf16 %v2400, %v2400
          %v2409 = vpack.c.bf16 %v2401, %v2401
          %v2410 = vpack.c.bf16 %v2402, %v2402
          %v2411 = vpack.c.bf16 %v2403, %v2403
          %v2412 = vpack.c.bf16 %v2404, %v2404
          %v2413 = vpack.c.bf16 %v2405, %v2405
          %v2414 = vpack.c.bf16 %v2406, %v2406
          %v2415 = vpack.c.bf16 %v2407, %v2407
          %v2416 = vld [vmem:[%s3] sm:$0xff]
          %v2417 = vld [vmem:[%s3 + $0x8] sm:$0xff]
          %v2418 = vld [vmem:[%s3 + $0x10] sm:$0xff]
          %v2419 = vld [vmem:[%s3 + $0x18] sm:$0xff]
          %v2420 = vld [vmem:[%s3 + $0x20] sm:$0xff]
          %v2421 = vld [vmem:[%s3 + $0x28] sm:$0xff]
          %v2422 = vld [vmem:[%s3 + $0x30] sm:$0xff]
          %v2423 = vld [vmem:[%s3 + $0x38] sm:$0xff]
          %v2424 = vld [vmem:[%s3 + $0x40] sm:$0xff]
          %v2425 = vld [vmem:[%s3 + $0x48] sm:$0xff]
          %v2426 = vld [vmem:[%s3 + $0x50] sm:$0xff]
          %v2427 = vld [vmem:[%s3 + $0x58] sm:$0xff]
          %v2428 = vld [vmem:[%s3 + $0x60] sm:$0xff]
          %v2429 = vld [vmem:[%s3 + $0x68] sm:$0xff]
          %v2430 = vld [vmem:[%s3 + $0x70] sm:$0xff]
          %v2431 = vld [vmem:[%s3 + $0x78] sm:$0xff]
          %v2432 = vld [vmem:[%s3 + $0x80] sm:$0xff]
          %v2433 = vld [vmem:[%s3 + $0x88] sm:$0xff]
          %v2434 = vld [vmem:[%s3 + $0x90] sm:$0xff]
          %v2435 = vld [vmem:[%s3 + $0x98] sm:$0xff]
          %v2436 = vld [vmem:[%s3 + $0xa0] sm:$0xff]
          %v2437 = vld [vmem:[%s3 + $0xa8] sm:$0xff]
          %v2438 = vld [vmem:[%s3 + $0xb0] sm:$0xff]
          %v2439 = vld [vmem:[%s3 + $0xb8] sm:$0xff]
          %v2440 = vld [vmem:[%s3 + $0xc0] sm:$0xff]
          %v2441 = vld [vmem:[%s3 + $0xc8] sm:$0xff]
          %v2442 = vld [vmem:[%s3 + $0xd0] sm:$0xff]
          %v2443 = vld [vmem:[%s3 + $0xd8] sm:$0xff]
          %v2444 = vld [vmem:[%s3 + $0xe0] sm:$0xff]
          %v2445 = vld [vmem:[%s3 + $0xe8] sm:$0xff]
          %v2446 = vld [vmem:[%s3 + $0xf0] sm:$0xff]
          %v2447 = vld [vmem:[%s3 + $0xf8] sm:$0xff]
          %v2448 = vld [vmem:[%s3 + $0x100] sm:$0xff]
          %v2449 = vld [vmem:[%s3 + $0x108] sm:$0xff]
          %v2450 = vld [vmem:[%s3 + $0x110] sm:$0xff]
          %v2451 = vld [vmem:[%s3 + $0x118] sm:$0xff]
          %v2452 = vld [vmem:[%s3 + $0x120] sm:$0xff]
          %v2453 = vld [vmem:[%s3 + $0x128] sm:$0xff]
          %v2454 = vld [vmem:[%s3 + $0x130] sm:$0xff]
          %v2455 = vld [vmem:[%s3 + $0x138] sm:$0xff]
          %v2456 = vld [vmem:[%s3 + $0x140] sm:$0xff]
          %v2457 = vld [vmem:[%s3 + $0x148] sm:$0xff]
          %v2458 = vld [vmem:[%s3 + $0x150] sm:$0xff]
          %v2459 = vld [vmem:[%s3 + $0x158] sm:$0xff]
          %v2460 = vld [vmem:[%s3 + $0x160] sm:$0xff]
          %v2461 = vld [vmem:[%s3 + $0x168] sm:$0xff]
          %v2462 = vld [vmem:[%s3 + $0x170] sm:$0xff]
          %v2463 = vld [vmem:[%s3 + $0x178] sm:$0xff]
          %v2464 = vld [vmem:[%s3 + $0x180] sm:$0xff]
          %v2465 = vld [vmem:[%s3 + $0x188] sm:$0xff]
          %v2466 = vld [vmem:[%s3 + $0x190] sm:$0xff]
          %v2467 = vld [vmem:[%s3 + $0x198] sm:$0xff]
          %v2468 = vld [vmem:[%s3 + $0x1a0] sm:$0xff]
          %v2469 = vld [vmem:[%s3 + $0x1a8] sm:$0xff]
          %v2470 = vld [vmem:[%s3 + $0x1b0] sm:$0xff]
          %v2471 = vld [vmem:[%s3 + $0x1b8] sm:$0xff]
          %v2472 = vld [vmem:[%s3 + $0x1c0] sm:$0xff]
          %v2473 = vld [vmem:[%s3 + $0x1c8] sm:$0xff]
          %v2474 = vld [vmem:[%s3 + $0x1d0] sm:$0xff]
          %v2475 = vld [vmem:[%s3 + $0x1d8] sm:$0xff]
          %v2476 = vld [vmem:[%s3 + $0x1e0] sm:$0xff]
          %v2477 = vld [vmem:[%s3 + $0x1e8] sm:$0xff]
          %v2478 = vld [vmem:[%s3 + $0x1f0] sm:$0xff]
          %v2479 = vld [vmem:[%s3 + $0x1f8] sm:$0xff]
          %v2480 = vld [vmem:[%s3 + $0x200] sm:$0xff]
          %v2481 = vld [vmem:[%s3 + $0x208] sm:$0xff]
          %v2482 = vld [vmem:[%s3 + $0x210] sm:$0xff]
          %v2483 = vld [vmem:[%s3 + $0x218] sm:$0xff]
          %v2484 = vld [vmem:[%s3 + $0x220] sm:$0xff]
          %v2485 = vld [vmem:[%s3 + $0x228] sm:$0xff]
          %v2486 = vld [vmem:[%s3 + $0x230] sm:$0xff]
          %v2487 = vld [vmem:[%s3 + $0x238] sm:$0xff]
          %v2488 = vld [vmem:[%s3 + $0x240] sm:$0xff]
          %v2489 = vld [vmem:[%s3 + $0x248] sm:$0xff]
          %v2490 = vld [vmem:[%s3 + $0x250] sm:$0xff]
          %v2491 = vld [vmem:[%s3 + $0x258] sm:$0xff]
          %v2492 = vld [vmem:[%s3 + $0x260] sm:$0xff]
          %v2493 = vld [vmem:[%s3 + $0x268] sm:$0xff]
          %v2494 = vld [vmem:[%s3 + $0x270] sm:$0xff]
          %v2495 = vld [vmem:[%s3 + $0x278] sm:$0xff]
          %v2496 = vld [vmem:[%s3 + $0x280] sm:$0xff]
          %v2497 = vld [vmem:[%s3 + $0x288] sm:$0xff]
          %v2498 = vld [vmem:[%s3 + $0x290] sm:$0xff]
          %v2499 = vld [vmem:[%s3 + $0x298] sm:$0xff]
          %v2500 = vld [vmem:[%s3 + $0x2a0] sm:$0xff]
          %v2501 = vld [vmem:[%s3 + $0x2a8] sm:$0xff]
          %v2502 = vld [vmem:[%s3 + $0x2b0] sm:$0xff]
          %v2503 = vld [vmem:[%s3 + $0x2b8] sm:$0xff]
          %v2504 = vld [vmem:[%s3 + $0x2c0] sm:$0xff]
          %v2505 = vld [vmem:[%s3 + $0x2c8] sm:$0xff]
          %v2506 = vld [vmem:[%s3 + $0x2d0] sm:$0xff]
          %v2507 = vld [vmem:[%s3 + $0x2d8] sm:$0xff]
          %v2508 = vld [vmem:[%s3 + $0x2e0] sm:$0xff]
          %v2509 = vld [vmem:[%s3 + $0x2e8] sm:$0xff]
          %v2510 = vld [vmem:[%s3 + $0x2f0] sm:$0xff]
          %v2511 = vld [vmem:[%s3 + $0x2f8] sm:$0xff]
          %v2512 = vld [vmem:[%s3 + $0x300] sm:$0xff]
          %v2513 = vld [vmem:[%s3 + $0x308] sm:$0xff]
          %v2514 = vld [vmem:[%s3 + $0x310] sm:$0xff]
          %v2515 = vld [vmem:[%s3 + $0x318] sm:$0xff]
          %v2516 = vld [vmem:[%s3 + $0x320] sm:$0xff]
          %v2517 = vld [vmem:[%s3 + $0x328] sm:$0xff]
          %v2518 = vld [vmem:[%s3 + $0x330] sm:$0xff]
          %v2519 = vld [vmem:[%s3 + $0x338] sm:$0xff]
          %v2520 = vld [vmem:[%s3 + $0x340] sm:$0xff]
          %v2521 = vld [vmem:[%s3 + $0x348] sm:$0xff]
          %v2522 = vld [vmem:[%s3 + $0x350] sm:$0xff]
          %v2523 = vld [vmem:[%s3 + $0x358] sm:$0xff]
          %v2524 = vld [vmem:[%s3 + $0x360] sm:$0xff]
          %v2525 = vld [vmem:[%s3 + $0x368] sm:$0xff]
          %v2526 = vld [vmem:[%s3 + $0x370] sm:$0xff]
          %v2527 = vld [vmem:[%s3 + $0x378] sm:$0xff]
          %v2528 = vld [vmem:[%s3 + $0x380] sm:$0xff]
          %v2529 = vld [vmem:[%s3 + $0x388] sm:$0xff]
          %v2530 = vld [vmem:[%s3 + $0x390] sm:$0xff]
          %v2531 = vld [vmem:[%s3 + $0x398] sm:$0xff]
          %v2532 = vld [vmem:[%s3 + $0x3a0] sm:$0xff]
          %v2533 = vld [vmem:[%s3 + $0x3a8] sm:$0xff]
          %v2534 = vld [vmem:[%s3 + $0x3b0] sm:$0xff]
          %v2535 = vld [vmem:[%s3 + $0x3b8] sm:$0xff]
          %v2536 = vld [vmem:[%s3 + $0x3c0] sm:$0xff]
          %v2537 = vld [vmem:[%s3 + $0x3c8] sm:$0xff]
          %v2538 = vld [vmem:[%s3 + $0x3d0] sm:$0xff]
          %v2539 = vld [vmem:[%s3 + $0x3d8] sm:$0xff]
          %v2540 = vld [vmem:[%s3 + $0x3e0] sm:$0xff]
          %v2541 = vld [vmem:[%s3 + $0x3e8] sm:$0xff]
          %v2542 = vld [vmem:[%s3 + $0x3f0] sm:$0xff]
          %v2543 = vld [vmem:[%s3 + $0x3f8] sm:$0xff]
          %v2544 = vld [vmem:[%s3 + $0x400] sm:$0xff]
          %v2545 = vld [vmem:[%s3 + $0x408] sm:$0xff]
          %v2546 = vld [vmem:[%s3 + $0x410] sm:$0xff]
          %v2547 = vld [vmem:[%s3 + $0x418] sm:$0xff]
          %v2548 = vld [vmem:[%s3 + $0x420] sm:$0xff]
          %v2549 = vld [vmem:[%s3 + $0x428] sm:$0xff]
          %v2550 = vld [vmem:[%s3 + $0x430] sm:$0xff]
          %v2551 = vld [vmem:[%s3 + $0x438] sm:$0xff]
          %v2552 = vld [vmem:[%s3 + $0x440] sm:$0xff]
          %v2553 = vld [vmem:[%s3 + $0x448] sm:$0xff]
          %v2554 = vld [vmem:[%s3 + $0x450] sm:$0xff]
          %v2555 = vld [vmem:[%s3 + $0x458] sm:$0xff]
          %v2556 = vld [vmem:[%s3 + $0x460] sm:$0xff]
          %v2557 = vld [vmem:[%s3 + $0x468] sm:$0xff]
          %v2558 = vld [vmem:[%s3 + $0x470] sm:$0xff]
          %v2559 = vld [vmem:[%s3 + $0x478] sm:$0xff]
          %v2560 = vld [vmem:[%s3 + $0x480] sm:$0xff]
          %v2561 = vld [vmem:[%s3 + $0x488] sm:$0xff]
          %v2562 = vld [vmem:[%s3 + $0x490] sm:$0xff]
          %v2563 = vld [vmem:[%s3 + $0x498] sm:$0xff]
          %v2564 = vld [vmem:[%s3 + $0x4a0] sm:$0xff]
          %v2565 = vld [vmem:[%s3 + $0x4a8] sm:$0xff]
          %v2566 = vld [vmem:[%s3 + $0x4b0] sm:$0xff]
          %v2567 = vld [vmem:[%s3 + $0x4b8] sm:$0xff]
          %v2568 = vld [vmem:[%s3 + $0x4c0] sm:$0xff]
          %v2569 = vld [vmem:[%s3 + $0x4c8] sm:$0xff]
          %v2570 = vld [vmem:[%s3 + $0x4d0] sm:$0xff]
          %v2571 = vld [vmem:[%s3 + $0x4d8] sm:$0xff]
          %v2572 = vld [vmem:[%s3 + $0x4e0] sm:$0xff]
          %v2573 = vld [vmem:[%s3 + $0x4e8] sm:$0xff]
          %v2574 = vld [vmem:[%s3 + $0x4f0] sm:$0xff]
          %v2575 = vld [vmem:[%s3 + $0x4f8] sm:$0xff]
          %v2576 = vld [vmem:[%s3 + $0x500] sm:$0xff]
          %v2577 = vld [vmem:[%s3 + $0x508] sm:$0xff]
          %v2578 = vld [vmem:[%s3 + $0x510] sm:$0xff]
          %v2579 = vld [vmem:[%s3 + $0x518] sm:$0xff]
          %v2580 = vld [vmem:[%s3 + $0x520] sm:$0xff]
          %v2581 = vld [vmem:[%s3 + $0x528] sm:$0xff]
          %v2582 = vld [vmem:[%s3 + $0x530] sm:$0xff]
          %v2583 = vld [vmem:[%s3 + $0x538] sm:$0xff]
          %v2584 = vld [vmem:[%s3 + $0x540] sm:$0xff]
          %v2585 = vld [vmem:[%s3 + $0x548] sm:$0xff]
          %v2586 = vld [vmem:[%s3 + $0x550] sm:$0xff]
          %v2587 = vld [vmem:[%s3 + $0x558] sm:$0xff]
          %v2588 = vld [vmem:[%s3 + $0x560] sm:$0xff]
          %v2589 = vld [vmem:[%s3 + $0x568] sm:$0xff]
          %v2590 = vld [vmem:[%s3 + $0x570] sm:$0xff]
          %v2591 = vld [vmem:[%s3 + $0x578] sm:$0xff]
          %v2592 = vld [vmem:[%s3 + $0x580] sm:$0xff]
          %v2593 = vld [vmem:[%s3 + $0x588] sm:$0xff]
          %v2594 = vld [vmem:[%s3 + $0x590] sm:$0xff]
          %v2595 = vld [vmem:[%s3 + $0x598] sm:$0xff]
          %v2596 = vld [vmem:[%s3 + $0x5a0] sm:$0xff]
          %v2597 = vld [vmem:[%s3 + $0x5a8] sm:$0xff]
          %v2598 = vld [vmem:[%s3 + $0x5b0] sm:$0xff]
          %v2599 = vld [vmem:[%s3 + $0x5b8] sm:$0xff]
          %v2600 = vld [vmem:[%s3 + $0x5c0] sm:$0xff]
          %v2601 = vld [vmem:[%s3 + $0x5c8] sm:$0xff]
          %v2602 = vld [vmem:[%s3 + $0x5d0] sm:$0xff]
          %v2603 = vld [vmem:[%s3 + $0x5d8] sm:$0xff]
          %v2604 = vld [vmem:[%s3 + $0x5e0] sm:$0xff]
          %v2605 = vld [vmem:[%s3 + $0x5e8] sm:$0xff]
          %v2606 = vld [vmem:[%s3 + $0x5f0] sm:$0xff]
          %v2607 = vld [vmem:[%s3 + $0x5f8] sm:$0xff]
          %v2608 = vld [vmem:[%s3 + $0x600] sm:$0xff]
          %v2609 = vld [vmem:[%s3 + $0x608] sm:$0xff]
          %v2610 = vld [vmem:[%s3 + $0x610] sm:$0xff]
          %v2611 = vld [vmem:[%s3 + $0x618] sm:$0xff]
          %v2612 = vld [vmem:[%s3 + $0x620] sm:$0xff]
          %v2613 = vld [vmem:[%s3 + $0x628] sm:$0xff]
          %v2614 = vld [vmem:[%s3 + $0x630] sm:$0xff]
          %v2615 = vld [vmem:[%s3 + $0x638] sm:$0xff]
          %v2616 = vld [vmem:[%s3 + $0x640] sm:$0xff]
          %v2617 = vld [vmem:[%s3 + $0x648] sm:$0xff]
          %v2618 = vld [vmem:[%s3 + $0x650] sm:$0xff]
          %v2619 = vld [vmem:[%s3 + $0x658] sm:$0xff]
          %v2620 = vld [vmem:[%s3 + $0x660] sm:$0xff]
          %v2621 = vld [vmem:[%s3 + $0x668] sm:$0xff]
          %v2622 = vld [vmem:[%s3 + $0x670] sm:$0xff]
          %v2623 = vld [vmem:[%s3 + $0x678] sm:$0xff]
          %v2624 = vld [vmem:[%s3 + $0x680] sm:$0xff]
          %v2625 = vld [vmem:[%s3 + $0x688] sm:$0xff]
          %v2626 = vld [vmem:[%s3 + $0x690] sm:$0xff]
          %v2627 = vld [vmem:[%s3 + $0x698] sm:$0xff]
          %v2628 = vld [vmem:[%s3 + $0x6a0] sm:$0xff]
          %v2629 = vld [vmem:[%s3 + $0x6a8] sm:$0xff]
          %v2630 = vld [vmem:[%s3 + $0x6b0] sm:$0xff]
          %v2631 = vld [vmem:[%s3 + $0x6b8] sm:$0xff]
          %v2632 = vld [vmem:[%s3 + $0x6c0] sm:$0xff]
          %v2633 = vld [vmem:[%s3 + $0x6c8] sm:$0xff]
          %v2634 = vld [vmem:[%s3 + $0x6d0] sm:$0xff]
          %v2635 = vld [vmem:[%s3 + $0x6d8] sm:$0xff]
          %v2636 = vld [vmem:[%s3 + $0x6e0] sm:$0xff]
          %v2637 = vld [vmem:[%s3 + $0x6e8] sm:$0xff]
          %v2638 = vld [vmem:[%s3 + $0x6f0] sm:$0xff]
          %v2639 = vld [vmem:[%s3 + $0x6f8] sm:$0xff]
          %v2640 = vld [vmem:[%s3 + $0x700] sm:$0xff]
          %v2641 = vld [vmem:[%s3 + $0x708] sm:$0xff]
          %v2642 = vld [vmem:[%s3 + $0x710] sm:$0xff]
          %v2643 = vld [vmem:[%s3 + $0x718] sm:$0xff]
          %v2644 = vld [vmem:[%s3 + $0x720] sm:$0xff]
          %v2645 = vld [vmem:[%s3 + $0x728] sm:$0xff]
          %v2646 = vld [vmem:[%s3 + $0x730] sm:$0xff]
          %v2647 = vld [vmem:[%s3 + $0x738] sm:$0xff]
          %v2648 = vld [vmem:[%s3 + $0x740] sm:$0xff]
          %v2649 = vld [vmem:[%s3 + $0x748] sm:$0xff]
          %v2650 = vld [vmem:[%s3 + $0x750] sm:$0xff]
          %v2651 = vld [vmem:[%s3 + $0x758] sm:$0xff]
          %v2652 = vld [vmem:[%s3 + $0x760] sm:$0xff]
          %v2653 = vld [vmem:[%s3 + $0x768] sm:$0xff]
          %v2654 = vld [vmem:[%s3 + $0x770] sm:$0xff]
          %v2655 = vld [vmem:[%s3 + $0x778] sm:$0xff]
          %v2656 = vld [vmem:[%s3 + $0x780] sm:$0xff]
          %v2657 = vld [vmem:[%s3 + $0x788] sm:$0xff]
          %v2658 = vld [vmem:[%s3 + $0x790] sm:$0xff]
          %v2659 = vld [vmem:[%s3 + $0x798] sm:$0xff]
          %v2660 = vld [vmem:[%s3 + $0x7a0] sm:$0xff]
          %v2661 = vld [vmem:[%s3 + $0x7a8] sm:$0xff]
          %v2662 = vld [vmem:[%s3 + $0x7b0] sm:$0xff]
          %v2663 = vld [vmem:[%s3 + $0x7b8] sm:$0xff]
          %v2664 = vld [vmem:[%s3 + $0x7c0] sm:$0xff]
          %v2665 = vld [vmem:[%s3 + $0x7c8] sm:$0xff]
          %v2666 = vld [vmem:[%s3 + $0x7d0] sm:$0xff]
          %v2667 = vld [vmem:[%s3 + $0x7d8] sm:$0xff]
          %v2668 = vld [vmem:[%s3 + $0x7e0] sm:$0xff]
          %v2669 = vld [vmem:[%s3 + $0x7e8] sm:$0xff]
          %v2670 = vld [vmem:[%s3 + $0x7f0] sm:$0xff]
          %v2671 = vld [vmem:[%s3 + $0x7f8] sm:$0xff]
          %v2672 = vld [vmem:[%s4] sm:$0xf]
          %v2674 = vlaneseq
          %v2675 = vshrl.u32 %v2674, 7
          %v2676 = vsub.s32 0, %v2675
          %v2677 = vrot.slane %v2672, %v2676
          %v2678 = vlaneseq
          %v2679 = vshrl.u32 %v2678, 7
          %v2680 = vsub.s32 1, %v2679
          %v2681 = vrot.slane %v2672, %v2680
          %v2682 = vlaneseq
          %v2683 = vshrl.u32 %v2682, 7
          %v2684 = vsub.s32 2, %v2683
          %v2685 = vrot.slane %v2672, %v2684
          %v2686 = vlaneseq
          %v2687 = vshrl.u32 %v2686, 7
          %v2688 = vsub.s32 3, %v2687
          %v2689 = vrot.slane %v2672, %v2688
          %v2950 = vunpack.c.l.b16 %v2416
          %v2951 = vunpack.c.h.b16 %v2416
          %v2952 = vunpack.c.l.b16 %v2417
          %v2953 = vunpack.c.h.b16 %v2417
          %v2954 = vunpack.c.l.b16 %v2418
          %v2955 = vunpack.c.h.b16 %v2418
          %v2956 = vunpack.c.l.b16 %v2419
          %v2957 = vunpack.c.h.b16 %v2419
          %v2958 = vunpack.c.l.b16 %v2420
          %v2959 = vunpack.c.h.b16 %v2420
          %v2960 = vunpack.c.l.b16 %v2421
          %v2961 = vunpack.c.h.b16 %v2421
          %v2962 = vunpack.c.l.b16 %v2422
          %v2963 = vunpack.c.h.b16 %v2422
          %v2964 = vunpack.c.l.b16 %v2423
          %v2965 = vunpack.c.h.b16 %v2423
          %v2966 = vunpack.c.l.b16 %v2424
          %v2967 = vunpack.c.h.b16 %v2424
          %v2968 = vunpack.c.l.b16 %v2425
          %v2969 = vunpack.c.h.b16 %v2425
          %v2970 = vunpack.c.l.b16 %v2426
          %v2971 = vunpack.c.h.b16 %v2426
          %v2972 = vunpack.c.l.b16 %v2427
          %v2973 = vunpack.c.h.b16 %v2427
          %v2974 = vunpack.c.l.b16 %v2428
          %v2975 = vunpack.c.h.b16 %v2428
          %v2976 = vunpack.c.l.b16 %v2429
          %v2977 = vunpack.c.h.b16 %v2429
          %v2978 = vunpack.c.l.b16 %v2430
          %v2979 = vunpack.c.h.b16 %v2430
          %v2980 = vunpack.c.l.b16 %v2431
          %v2981 = vunpack.c.h.b16 %v2431
          %v2982 = vunpack.c.l.b16 %v2432
          %v2983 = vunpack.c.h.b16 %v2432
          %v2984 = vunpack.c.l.b16 %v2433
          %v2985 = vunpack.c.h.b16 %v2433
          %v2986 = vunpack.c.l.b16 %v2434
          %v2987 = vunpack.c.h.b16 %v2434
          %v2988 = vunpack.c.l.b16 %v2435
          %v2989 = vunpack.c.h.b16 %v2435
          %v2990 = vunpack.c.l.b16 %v2436
          %v2991 = vunpack.c.h.b16 %v2436
          %v2992 = vunpack.c.l.b16 %v2437
          %v2993 = vunpack.c.h.b16 %v2437
          %v2994 = vunpack.c.l.b16 %v2438
          %v2995 = vunpack.c.h.b16 %v2438
          %v2996 = vunpack.c.l.b16 %v2439
          %v2997 = vunpack.c.h.b16 %v2439
          %v2998 = vunpack.c.l.b16 %v2440
          %v2999 = vunpack.c.h.b16 %v2440
          %v3000 = vunpack.c.l.b16 %v2441
          %v3001 = vunpack.c.h.b16 %v2441
          %v3002 = vunpack.c.l.b16 %v2442
          %v3003 = vunpack.c.h.b16 %v2442
          %v3004 = vunpack.c.l.b16 %v2443
          %v3005 = vunpack.c.h.b16 %v2443
          %v3006 = vunpack.c.l.b16 %v2444
          %v3007 = vunpack.c.h.b16 %v2444
          %v3008 = vunpack.c.l.b16 %v2445
          %v3009 = vunpack.c.h.b16 %v2445
          %v3010 = vunpack.c.l.b16 %v2446
          %v3011 = vunpack.c.h.b16 %v2446
          %v3012 = vunpack.c.l.b16 %v2447
          %v3013 = vunpack.c.h.b16 %v2447
          %v3014 = vunpack.c.l.b16 %v2448
          %v3015 = vunpack.c.h.b16 %v2448
          %v3016 = vunpack.c.l.b16 %v2449
          %v3017 = vunpack.c.h.b16 %v2449
          %v3018 = vunpack.c.l.b16 %v2450
          %v3019 = vunpack.c.h.b16 %v2450
          %v3020 = vunpack.c.l.b16 %v2451
          %v3021 = vunpack.c.h.b16 %v2451
          %v3022 = vunpack.c.l.b16 %v2452
          %v3023 = vunpack.c.h.b16 %v2452
          %v3024 = vunpack.c.l.b16 %v2453
          %v3025 = vunpack.c.h.b16 %v2453
          %v3026 = vunpack.c.l.b16 %v2454
          %v3027 = vunpack.c.h.b16 %v2454
          %v3028 = vunpack.c.l.b16 %v2455
          %v3029 = vunpack.c.h.b16 %v2455
          %v3030 = vunpack.c.l.b16 %v2456
          %v3031 = vunpack.c.h.b16 %v2456
          %v3032 = vunpack.c.l.b16 %v2457
          %v3033 = vunpack.c.h.b16 %v2457
          %v3034 = vunpack.c.l.b16 %v2458
          %v3035 = vunpack.c.h.b16 %v2458
          %v3036 = vunpack.c.l.b16 %v2459
          %v3037 = vunpack.c.h.b16 %v2459
          %v3038 = vunpack.c.l.b16 %v2460
          %v3039 = vunpack.c.h.b16 %v2460
          %v3040 = vunpack.c.l.b16 %v2461
          %v3041 = vunpack.c.h.b16 %v2461
          %v3042 = vunpack.c.l.b16 %v2462
          %v3043 = vunpack.c.h.b16 %v2462
          %v3044 = vunpack.c.l.b16 %v2463
          %v3045 = vunpack.c.h.b16 %v2463
          %v3046 = vunpack.c.l.b16 %v2464
          %v3047 = vunpack.c.h.b16 %v2464
          %v3048 = vunpack.c.l.b16 %v2465
          %v3049 = vunpack.c.h.b16 %v2465
          %v3050 = vunpack.c.l.b16 %v2466
          %v3051 = vunpack.c.h.b16 %v2466
          %v3052 = vunpack.c.l.b16 %v2467
          %v3053 = vunpack.c.h.b16 %v2467
          %v3054 = vunpack.c.l.b16 %v2468
          %v3055 = vunpack.c.h.b16 %v2468
          %v3056 = vunpack.c.l.b16 %v2469
          %v3057 = vunpack.c.h.b16 %v2469
          %v3058 = vunpack.c.l.b16 %v2470
          %v3059 = vunpack.c.h.b16 %v2470
          %v3060 = vunpack.c.l.b16 %v2471
          %v3061 = vunpack.c.h.b16 %v2471
          %v3062 = vunpack.c.l.b16 %v2472
          %v3063 = vunpack.c.h.b16 %v2472
          %v3064 = vunpack.c.l.b16 %v2473
          %v3065 = vunpack.c.h.b16 %v2473
          %v3066 = vunpack.c.l.b16 %v2474
          %v3067 = vunpack.c.h.b16 %v2474
          %v3068 = vunpack.c.l.b16 %v2475
          %v3069 = vunpack.c.h.b16 %v2475
          %v3070 = vunpack.c.l.b16 %v2476
          %v3071 = vunpack.c.h.b16 %v2476
          %v3072 = vunpack.c.l.b16 %v2477
          %v3073 = vunpack.c.h.b16 %v2477
          %v3074 = vunpack.c.l.b16 %v2478
          %v3075 = vunpack.c.h.b16 %v2478
          %v3076 = vunpack.c.l.b16 %v2479
          %v3077 = vunpack.c.h.b16 %v2479
          %v3078 = vunpack.c.l.b16 %v2480
          %v3079 = vunpack.c.h.b16 %v2480
          %v3080 = vunpack.c.l.b16 %v2481
          %v3081 = vunpack.c.h.b16 %v2481
          %v3082 = vunpack.c.l.b16 %v2482
          %v3083 = vunpack.c.h.b16 %v2482
          %v3084 = vunpack.c.l.b16 %v2483
          %v3085 = vunpack.c.h.b16 %v2483
          %v3086 = vunpack.c.l.b16 %v2484
          %v3087 = vunpack.c.h.b16 %v2484
          %v3088 = vunpack.c.l.b16 %v2485
          %v3089 = vunpack.c.h.b16 %v2485
          %v3090 = vunpack.c.l.b16 %v2486
          %v3091 = vunpack.c.h.b16 %v2486
          %v3092 = vunpack.c.l.b16 %v2487
          %v3093 = vunpack.c.h.b16 %v2487
          %v3094 = vunpack.c.l.b16 %v2488
          %v3095 = vunpack.c.h.b16 %v2488
          %v3096 = vunpack.c.l.b16 %v2489
          %v3097 = vunpack.c.h.b16 %v2489
          %v3098 = vunpack.c.l.b16 %v2490
          %v3099 = vunpack.c.h.b16 %v2490
          %v3100 = vunpack.c.l.b16 %v2491
          %v3101 = vunpack.c.h.b16 %v2491
          %v3102 = vunpack.c.l.b16 %v2492
          %v3103 = vunpack.c.h.b16 %v2492
          %v3104 = vunpack.c.l.b16 %v2493
          %v3105 = vunpack.c.h.b16 %v2493
          %v3106 = vunpack.c.l.b16 %v2494
          %v3107 = vunpack.c.h.b16 %v2494
          %v3108 = vunpack.c.l.b16 %v2495
          %v3109 = vunpack.c.h.b16 %v2495
          %v3110 = vunpack.c.l.b16 %v2496
          %v3111 = vunpack.c.h.b16 %v2496
          %v3112 = vunpack.c.l.b16 %v2497
          %v3113 = vunpack.c.h.b16 %v2497
          %v3114 = vunpack.c.l.b16 %v2498
          %v3115 = vunpack.c.h.b16 %v2498
          %v3116 = vunpack.c.l.b16 %v2499
          %v3117 = vunpack.c.h.b16 %v2499
          %v3118 = vunpack.c.l.b16 %v2500
          %v3119 = vunpack.c.h.b16 %v2500
          %v3120 = vunpack.c.l.b16 %v2501
          %v3121 = vunpack.c.h.b16 %v2501
          %v3122 = vunpack.c.l.b16 %v2502
          %v3123 = vunpack.c.h.b16 %v2502
          %v3124 = vunpack.c.l.b16 %v2503
          %v3125 = vunpack.c.h.b16 %v2503
          %v3126 = vunpack.c.l.b16 %v2504
          %v3127 = vunpack.c.h.b16 %v2504
          %v3128 = vunpack.c.l.b16 %v2505
          %v3129 = vunpack.c.h.b16 %v2505
          %v3130 = vunpack.c.l.b16 %v2506
          %v3131 = vunpack.c.h.b16 %v2506
          %v3132 = vunpack.c.l.b16 %v2507
          %v3133 = vunpack.c.h.b16 %v2507
          %v3134 = vunpack.c.l.b16 %v2508
          %v3135 = vunpack.c.h.b16 %v2508
          %v3136 = vunpack.c.l.b16 %v2509
          %v3137 = vunpack.c.h.b16 %v2509
          %v3138 = vunpack.c.l.b16 %v2510
          %v3139 = vunpack.c.h.b16 %v2510
          %v3140 = vunpack.c.l.b16 %v2511
          %v3141 = vunpack.c.h.b16 %v2511
          %v3142 = vunpack.c.l.b16 %v2512
          %v3143 = vunpack.c.h.b16 %v2512
          %v3144 = vunpack.c.l.b16 %v2513
          %v3145 = vunpack.c.h.b16 %v2513
          %v3146 = vunpack.c.l.b16 %v2514
          %v3147 = vunpack.c.h.b16 %v2514
          %v3148 = vunpack.c.l.b16 %v2515
          %v3149 = vunpack.c.h.b16 %v2515
          %v3150 = vunpack.c.l.b16 %v2516
          %v3151 = vunpack.c.h.b16 %v2516
          %v3152 = vunpack.c.l.b16 %v2517
          %v3153 = vunpack.c.h.b16 %v2517
          %v3154 = vunpack.c.l.b16 %v2518
          %v3155 = vunpack.c.h.b16 %v2518
          %v3156 = vunpack.c.l.b16 %v2519
          %v3157 = vunpack.c.h.b16 %v2519
          %v3158 = vunpack.c.l.b16 %v2520
          %v3159 = vunpack.c.h.b16 %v2520
          %v3160 = vunpack.c.l.b16 %v2521
          %v3161 = vunpack.c.h.b16 %v2521
          %v3162 = vunpack.c.l.b16 %v2522
          %v3163 = vunpack.c.h.b16 %v2522
          %v3164 = vunpack.c.l.b16 %v2523
          %v3165 = vunpack.c.h.b16 %v2523
          %v3166 = vunpack.c.l.b16 %v2524
          %v3167 = vunpack.c.h.b16 %v2524
          %v3168 = vunpack.c.l.b16 %v2525
          %v3169 = vunpack.c.h.b16 %v2525
          %v3170 = vunpack.c.l.b16 %v2526
          %v3171 = vunpack.c.h.b16 %v2526
          %v3172 = vunpack.c.l.b16 %v2527
          %v3173 = vunpack.c.h.b16 %v2527
          %v3174 = vunpack.c.l.b16 %v2528
          %v3175 = vunpack.c.h.b16 %v2528
          %v3176 = vunpack.c.l.b16 %v2529
          %v3177 = vunpack.c.h.b16 %v2529
          %v3178 = vunpack.c.l.b16 %v2530
          %v3179 = vunpack.c.h.b16 %v2530
          %v3180 = vunpack.c.l.b16 %v2531
          %v3181 = vunpack.c.h.b16 %v2531
          %v3182 = vunpack.c.l.b16 %v2532
          %v3183 = vunpack.c.h.b16 %v2532
          %v3184 = vunpack.c.l.b16 %v2533
          %v3185 = vunpack.c.h.b16 %v2533
          %v3186 = vunpack.c.l.b16 %v2534
          %v3187 = vunpack.c.h.b16 %v2534
          %v3188 = vunpack.c.l.b16 %v2535
          %v3189 = vunpack.c.h.b16 %v2535
          %v3190 = vunpack.c.l.b16 %v2536
          %v3191 = vunpack.c.h.b16 %v2536
          %v3192 = vunpack.c.l.b16 %v2537
          %v3193 = vunpack.c.h.b16 %v2537
          %v3194 = vunpack.c.l.b16 %v2538
          %v3195 = vunpack.c.h.b16 %v2538
          %v3196 = vunpack.c.l.b16 %v2539
          %v3197 = vunpack.c.h.b16 %v2539
          %v3198 = vunpack.c.l.b16 %v2540
          %v3199 = vunpack.c.h.b16 %v2540
          %v3200 = vunpack.c.l.b16 %v2541
          %v3201 = vunpack.c.h.b16 %v2541
          %v3202 = vunpack.c.l.b16 %v2542
          %v3203 = vunpack.c.h.b16 %v2542
          %v3204 = vunpack.c.l.b16 %v2543
          %v3205 = vunpack.c.h.b16 %v2543
          %v3206 = vunpack.c.l.b16 %v2544
          %v3207 = vunpack.c.h.b16 %v2544
          %v3208 = vunpack.c.l.b16 %v2545
          %v3209 = vunpack.c.h.b16 %v2545
          %v3210 = vunpack.c.l.b16 %v2546
          %v3211 = vunpack.c.h.b16 %v2546
          %v3212 = vunpack.c.l.b16 %v2547
          %v3213 = vunpack.c.h.b16 %v2547
          %v3214 = vunpack.c.l.b16 %v2548
          %v3215 = vunpack.c.h.b16 %v2548
          %v3216 = vunpack.c.l.b16 %v2549
          %v3217 = vunpack.c.h.b16 %v2549
          %v3218 = vunpack.c.l.b16 %v2550
          %v3219 = vunpack.c.h.b16 %v2550
          %v3220 = vunpack.c.l.b16 %v2551
          %v3221 = vunpack.c.h.b16 %v2551
          %v3222 = vunpack.c.l.b16 %v2552
          %v3223 = vunpack.c.h.b16 %v2552
          %v3224 = vunpack.c.l.b16 %v2553
          %v3225 = vunpack.c.h.b16 %v2553
          %v3226 = vunpack.c.l.b16 %v2554
          %v3227 = vunpack.c.h.b16 %v2554
          %v3228 = vunpack.c.l.b16 %v2555
          %v3229 = vunpack.c.h.b16 %v2555
          %v3230 = vunpack.c.l.b16 %v2556
          %v3231 = vunpack.c.h.b16 %v2556
          %v3232 = vunpack.c.l.b16 %v2557
          %v3233 = vunpack.c.h.b16 %v2557
          %v3234 = vunpack.c.l.b16 %v2558
          %v3235 = vunpack.c.h.b16 %v2558
          %v3236 = vunpack.c.l.b16 %v2559
          %v3237 = vunpack.c.h.b16 %v2559
          %v3238 = vunpack.c.l.b16 %v2560
          %v3239 = vunpack.c.h.b16 %v2560
          %v3240 = vunpack.c.l.b16 %v2561
          %v3241 = vunpack.c.h.b16 %v2561
          %v3242 = vunpack.c.l.b16 %v2562
          %v3243 = vunpack.c.h.b16 %v2562
          %v3244 = vunpack.c.l.b16 %v2563
          %v3245 = vunpack.c.h.b16 %v2563
          %v3246 = vunpack.c.l.b16 %v2564
          %v3247 = vunpack.c.h.b16 %v2564
          %v3248 = vunpack.c.l.b16 %v2565
          %v3249 = vunpack.c.h.b16 %v2565
          %v3250 = vunpack.c.l.b16 %v2566
          %v3251 = vunpack.c.h.b16 %v2566
          %v3252 = vunpack.c.l.b16 %v2567
          %v3253 = vunpack.c.h.b16 %v2567
          %v3254 = vunpack.c.l.b16 %v2568
          %v3255 = vunpack.c.h.b16 %v2568
          %v3256 = vunpack.c.l.b16 %v2569
          %v3257 = vunpack.c.h.b16 %v2569
          %v3258 = vunpack.c.l.b16 %v2570
          %v3259 = vunpack.c.h.b16 %v2570
          %v3260 = vunpack.c.l.b16 %v2571
          %v3261 = vunpack.c.h.b16 %v2571
          %v3262 = vunpack.c.l.b16 %v2572
          %v3263 = vunpack.c.h.b16 %v2572
          %v3264 = vunpack.c.l.b16 %v2573
          %v3265 = vunpack.c.h.b16 %v2573
          %v3266 = vunpack.c.l.b16 %v2574
          %v3267 = vunpack.c.h.b16 %v2574
          %v3268 = vunpack.c.l.b16 %v2575
          %v3269 = vunpack.c.h.b16 %v2575
          %v3270 = vunpack.c.l.b16 %v2576
          %v3271 = vunpack.c.h.b16 %v2576
          %v3272 = vunpack.c.l.b16 %v2577
          %v3273 = vunpack.c.h.b16 %v2577
          %v3274 = vunpack.c.l.b16 %v2578
          %v3275 = vunpack.c.h.b16 %v2578
          %v3276 = vunpack.c.l.b16 %v2579
          %v3277 = vunpack.c.h.b16 %v2579
          %v3278 = vunpack.c.l.b16 %v2580
          %v3279 = vunpack.c.h.b16 %v2580
          %v3280 = vunpack.c.l.b16 %v2581
          %v3281 = vunpack.c.h.b16 %v2581
          %v3282 = vunpack.c.l.b16 %v2582
          %v3283 = vunpack.c.h.b16 %v2582
          %v3284 = vunpack.c.l.b16 %v2583
          %v3285 = vunpack.c.h.b16 %v2583
          %v3286 = vunpack.c.l.b16 %v2584
          %v3287 = vunpack.c.h.b16 %v2584
          %v3288 = vunpack.c.l.b16 %v2585
          %v3289 = vunpack.c.h.b16 %v2585
          %v3290 = vunpack.c.l.b16 %v2586
          %v3291 = vunpack.c.h.b16 %v2586
          %v3292 = vunpack.c.l.b16 %v2587
          %v3293 = vunpack.c.h.b16 %v2587
          %v3294 = vunpack.c.l.b16 %v2588
          %v3295 = vunpack.c.h.b16 %v2588
          %v3296 = vunpack.c.l.b16 %v2589
          %v3297 = vunpack.c.h.b16 %v2589
          %v3298 = vunpack.c.l.b16 %v2590
          %v3299 = vunpack.c.h.b16 %v2590
          %v3300 = vunpack.c.l.b16 %v2591
          %v3301 = vunpack.c.h.b16 %v2591
          %v3302 = vunpack.c.l.b16 %v2592
          %v3303 = vunpack.c.h.b16 %v2592
          %v3304 = vunpack.c.l.b16 %v2593
          %v3305 = vunpack.c.h.b16 %v2593
          %v3306 = vunpack.c.l.b16 %v2594
          %v3307 = vunpack.c.h.b16 %v2594
          %v3308 = vunpack.c.l.b16 %v2595
          %v3309 = vunpack.c.h.b16 %v2595
          %v3310 = vunpack.c.l.b16 %v2596
          %v3311 = vunpack.c.h.b16 %v2596
          %v3312 = vunpack.c.l.b16 %v2597
          %v3313 = vunpack.c.h.b16 %v2597
          %v3314 = vunpack.c.l.b16 %v2598
          %v3315 = vunpack.c.h.b16 %v2598
          %v3316 = vunpack.c.l.b16 %v2599
          %v3317 = vunpack.c.h.b16 %v2599
          %v3318 = vunpack.c.l.b16 %v2600
          %v3319 = vunpack.c.h.b16 %v2600
          %v3320 = vunpack.c.l.b16 %v2601
          %v3321 = vunpack.c.h.b16 %v2601
          %v3322 = vunpack.c.l.b16 %v2602
          %v3323 = vunpack.c.h.b16 %v2602
          %v3324 = vunpack.c.l.b16 %v2603
          %v3325 = vunpack.c.h.b16 %v2603
          %v3326 = vunpack.c.l.b16 %v2604
          %v3327 = vunpack.c.h.b16 %v2604
          %v3328 = vunpack.c.l.b16 %v2605
          %v3329 = vunpack.c.h.b16 %v2605
          %v3330 = vunpack.c.l.b16 %v2606
          %v3331 = vunpack.c.h.b16 %v2606
          %v3332 = vunpack.c.l.b16 %v2607
          %v3333 = vunpack.c.h.b16 %v2607
          %v3334 = vunpack.c.l.b16 %v2608
          %v3335 = vunpack.c.h.b16 %v2608
          %v3336 = vunpack.c.l.b16 %v2609
          %v3337 = vunpack.c.h.b16 %v2609
          %v3338 = vunpack.c.l.b16 %v2610
          %v3339 = vunpack.c.h.b16 %v2610
          %v3340 = vunpack.c.l.b16 %v2611
          %v3341 = vunpack.c.h.b16 %v2611
          %v3342 = vunpack.c.l.b16 %v2612
          %v3343 = vunpack.c.h.b16 %v2612
          %v3344 = vunpack.c.l.b16 %v2613
          %v3345 = vunpack.c.h.b16 %v2613
          %v3346 = vunpack.c.l.b16 %v2614
          %v3347 = vunpack.c.h.b16 %v2614
          %v3348 = vunpack.c.l.b16 %v2615
          %v3349 = vunpack.c.h.b16 %v2615
          %v3350 = vunpack.c.l.b16 %v2616
          %v3351 = vunpack.c.h.b16 %v2616
          %v3352 = vunpack.c.l.b16 %v2617
          %v3353 = vunpack.c.h.b16 %v2617
          %v3354 = vunpack.c.l.b16 %v2618
          %v3355 = vunpack.c.h.b16 %v2618
          %v3356 = vunpack.c.l.b16 %v2619
          %v3357 = vunpack.c.h.b16 %v2619
          %v3358 = vunpack.c.l.b16 %v2620
          %v3359 = vunpack.c.h.b16 %v2620
          %v3360 = vunpack.c.l.b16 %v2621
          %v3361 = vunpack.c.h.b16 %v2621
          %v3362 = vunpack.c.l.b16 %v2622
          %v3363 = vunpack.c.h.b16 %v2622
          %v3364 = vunpack.c.l.b16 %v2623
          %v3365 = vunpack.c.h.b16 %v2623
          %v3366 = vunpack.c.l.b16 %v2624
          %v3367 = vunpack.c.h.b16 %v2624
          %v3368 = vunpack.c.l.b16 %v2625
          %v3369 = vunpack.c.h.b16 %v2625
          %v3370 = vunpack.c.l.b16 %v2626
          %v3371 = vunpack.c.h.b16 %v2626
          %v3372 = vunpack.c.l.b16 %v2627
          %v3373 = vunpack.c.h.b16 %v2627
          %v3374 = vunpack.c.l.b16 %v2628
          %v3375 = vunpack.c.h.b16 %v2628
          %v3376 = vunpack.c.l.b16 %v2629
          %v3377 = vunpack.c.h.b16 %v2629
          %v3378 = vunpack.c.l.b16 %v2630
          %v3379 = vunpack.c.h.b16 %v2630
          %v3380 = vunpack.c.l.b16 %v2631
          %v3381 = vunpack.c.h.b16 %v2631
          %v3382 = vunpack.c.l.b16 %v2632
          %v3383 = vunpack.c.h.b16 %v2632
          %v3384 = vunpack.c.l.b16 %v2633
          %v3385 = vunpack.c.h.b16 %v2633
          %v3386 = vunpack.c.l.b16 %v2634
          %v3387 = vunpack.c.h.b16 %v2634
          %v3388 = vunpack.c.l.b16 %v2635
          %v3389 = vunpack.c.h.b16 %v2635
          %v3390 = vunpack.c.l.b16 %v2636
          %v3391 = vunpack.c.h.b16 %v2636
          %v3392 = vunpack.c.l.b16 %v2637
          %v3393 = vunpack.c.h.b16 %v2637
          %v3394 = vunpack.c.l.b16 %v2638
          %v3395 = vunpack.c.h.b16 %v2638
          %v3396 = vunpack.c.l.b16 %v2639
          %v3397 = vunpack.c.h.b16 %v2639
          %v3398 = vunpack.c.l.b16 %v2640
          %v3399 = vunpack.c.h.b16 %v2640
          %v3400 = vunpack.c.l.b16 %v2641
          %v3401 = vunpack.c.h.b16 %v2641
          %v3402 = vunpack.c.l.b16 %v2642
          %v3403 = vunpack.c.h.b16 %v2642
          %v3404 = vunpack.c.l.b16 %v2643
          %v3405 = vunpack.c.h.b16 %v2643
          %v3406 = vunpack.c.l.b16 %v2644
          %v3407 = vunpack.c.h.b16 %v2644
          %v3408 = vunpack.c.l.b16 %v2645
          %v3409 = vunpack.c.h.b16 %v2645
          %v3410 = vunpack.c.l.b16 %v2646
          %v3411 = vunpack.c.h.b16 %v2646
          %v3412 = vunpack.c.l.b16 %v2647
          %v3413 = vunpack.c.h.b16 %v2647
          %v3414 = vunpack.c.l.b16 %v2648
          %v3415 = vunpack.c.h.b16 %v2648
          %v3416 = vunpack.c.l.b16 %v2649
          %v3417 = vunpack.c.h.b16 %v2649
          %v3418 = vunpack.c.l.b16 %v2650
          %v3419 = vunpack.c.h.b16 %v2650
          %v3420 = vunpack.c.l.b16 %v2651
          %v3421 = vunpack.c.h.b16 %v2651
          %v3422 = vunpack.c.l.b16 %v2652
          %v3423 = vunpack.c.h.b16 %v2652
          %v3424 = vunpack.c.l.b16 %v2653
          %v3425 = vunpack.c.h.b16 %v2653
          %v3426 = vunpack.c.l.b16 %v2654
          %v3427 = vunpack.c.h.b16 %v2654
          %v3428 = vunpack.c.l.b16 %v2655
          %v3429 = vunpack.c.h.b16 %v2655
          %v3430 = vunpack.c.l.b16 %v2656
          %v3431 = vunpack.c.h.b16 %v2656
          %v3432 = vunpack.c.l.b16 %v2657
          %v3433 = vunpack.c.h.b16 %v2657
          %v3434 = vunpack.c.l.b16 %v2658
          %v3435 = vunpack.c.h.b16 %v2658
          %v3436 = vunpack.c.l.b16 %v2659
          %v3437 = vunpack.c.h.b16 %v2659
          %v3438 = vunpack.c.l.b16 %v2660
          %v3439 = vunpack.c.h.b16 %v2660
          %v3440 = vunpack.c.l.b16 %v2661
          %v3441 = vunpack.c.h.b16 %v2661
          %v3442 = vunpack.c.l.b16 %v2662
          %v3443 = vunpack.c.h.b16 %v2662
          %v3444 = vunpack.c.l.b16 %v2663
          %v3445 = vunpack.c.h.b16 %v2663
          %v3446 = vunpack.c.l.b16 %v2664
          %v3447 = vunpack.c.h.b16 %v2664
          %v3448 = vunpack.c.l.b16 %v2665
          %v3449 = vunpack.c.h.b16 %v2665
          %v3450 = vunpack.c.l.b16 %v2666
          %v3451 = vunpack.c.h.b16 %v2666
          %v3452 = vunpack.c.l.b16 %v2667
          %v3453 = vunpack.c.h.b16 %v2667
          %v3454 = vunpack.c.l.b16 %v2668
          %v3455 = vunpack.c.h.b16 %v2668
          %v3456 = vunpack.c.l.b16 %v2669
          %v3457 = vunpack.c.h.b16 %v2669
          %v3458 = vunpack.c.l.b16 %v2670
          %v3459 = vunpack.c.h.b16 %v2670
          %v3460 = vunpack.c.l.b16 %v2671
          %v3461 = vunpack.c.h.b16 %v2671
          %v3462 = vpack.c.b16 %v2954, %v2950
          %v3463 = vpack.c.b16 %v2955, %v2951
          %v3464 = vpack.c.b16 %v2956, %v2952
          %v3465 = vpack.c.b16 %v2957, %v2953
          %v3466 = vpack.c.b16 %v2962, %v2958
          %v3467 = vpack.c.b16 %v2963, %v2959
          %v3468 = vpack.c.b16 %v2964, %v2960
          %v3469 = vpack.c.b16 %v2965, %v2961
          %v3470 = vpack.c.b16 %v2970, %v2966
          %v3471 = vpack.c.b16 %v2971, %v2967
          %v3472 = vpack.c.b16 %v2972, %v2968
          %v3473 = vpack.c.b16 %v2973, %v2969
          %v3474 = vpack.c.b16 %v2978, %v2974
          %v3475 = vpack.c.b16 %v2979, %v2975
          %v3476 = vpack.c.b16 %v2980, %v2976
          %v3477 = vpack.c.b16 %v2981, %v2977
          %v3478 = vpack.c.b16 %v2986, %v2982
          %v3479 = vpack.c.b16 %v2987, %v2983
          %v3480 = vpack.c.b16 %v2988, %v2984
          %v3481 = vpack.c.b16 %v2989, %v2985
          %v3482 = vpack.c.b16 %v2994, %v2990
          %v3483 = vpack.c.b16 %v2995, %v2991
          %v3484 = vpack.c.b16 %v2996, %v2992
          %v3485 = vpack.c.b16 %v2997, %v2993
          %v3486 = vpack.c.b16 %v3002, %v2998
          %v3487 = vpack.c.b16 %v3003, %v2999
          %v3488 = vpack.c.b16 %v3004, %v3000
          %v3489 = vpack.c.b16 %v3005, %v3001
          %v3490 = vpack.c.b16 %v3010, %v3006
          %v3491 = vpack.c.b16 %v3011, %v3007
          %v3492 = vpack.c.b16 %v3012, %v3008
          %v3493 = vpack.c.b16 %v3013, %v3009
          %v3494 = vpack.c.b16 %v3018, %v3014
          %v3495 = vpack.c.b16 %v3019, %v3015
          %v3496 = vpack.c.b16 %v3020, %v3016
          %v3497 = vpack.c.b16 %v3021, %v3017
          %v3498 = vpack.c.b16 %v3026, %v3022
          %v3499 = vpack.c.b16 %v3027, %v3023
          %v3500 = vpack.c.b16 %v3028, %v3024
          %v3501 = vpack.c.b16 %v3029, %v3025
          %v3502 = vpack.c.b16 %v3034, %v3030
          %v3503 = vpack.c.b16 %v3035, %v3031
          %v3504 = vpack.c.b16 %v3036, %v3032
          %v3505 = vpack.c.b16 %v3037, %v3033
          %v3506 = vpack.c.b16 %v3042, %v3038
          %v3507 = vpack.c.b16 %v3043, %v3039
          %v3508 = vpack.c.b16 %v3044, %v3040
          %v3509 = vpack.c.b16 %v3045, %v3041
          %v3510 = vpack.c.b16 %v3050, %v3046
          %v3511 = vpack.c.b16 %v3051, %v3047
          %v3512 = vpack.c.b16 %v3052, %v3048
          %v3513 = vpack.c.b16 %v3053, %v3049
          %v3514 = vpack.c.b16 %v3058, %v3054
          %v3515 = vpack.c.b16 %v3059, %v3055
          %v3516 = vpack.c.b16 %v3060, %v3056
          %v3517 = vpack.c.b16 %v3061, %v3057
          %v3518 = vpack.c.b16 %v3066, %v3062
          %v3519 = vpack.c.b16 %v3067, %v3063
          %v3520 = vpack.c.b16 %v3068, %v3064
          %v3521 = vpack.c.b16 %v3069, %v3065
          %v3522 = vpack.c.b16 %v3074, %v3070
          %v3523 = vpack.c.b16 %v3075, %v3071
          %v3524 = vpack.c.b16 %v3076, %v3072
          %v3525 = vpack.c.b16 %v3077, %v3073
          %v3526 = vpack.c.b16 %v3082, %v3078
          %v3527 = vpack.c.b16 %v3083, %v3079
          %v3528 = vpack.c.b16 %v3084, %v3080
          %v3529 = vpack.c.b16 %v3085, %v3081
          %v3530 = vpack.c.b16 %v3090, %v3086
          %v3531 = vpack.c.b16 %v3091, %v3087
          %v3532 = vpack.c.b16 %v3092, %v3088
          %v3533 = vpack.c.b16 %v3093, %v3089
          %v3534 = vpack.c.b16 %v3098, %v3094
          %v3535 = vpack.c.b16 %v3099, %v3095
          %v3536 = vpack.c.b16 %v3100, %v3096
          %v3537 = vpack.c.b16 %v3101, %v3097
          %v3538 = vpack.c.b16 %v3106, %v3102
          %v3539 = vpack.c.b16 %v3107, %v3103
          %v3540 = vpack.c.b16 %v3108, %v3104
          %v3541 = vpack.c.b16 %v3109, %v3105
          %v3542 = vpack.c.b16 %v3114, %v3110
          %v3543 = vpack.c.b16 %v3115, %v3111
          %v3544 = vpack.c.b16 %v3116, %v3112
          %v3545 = vpack.c.b16 %v3117, %v3113
          %v3546 = vpack.c.b16 %v3122, %v3118
          %v3547 = vpack.c.b16 %v3123, %v3119
          %v3548 = vpack.c.b16 %v3124, %v3120
          %v3549 = vpack.c.b16 %v3125, %v3121
          %v3550 = vpack.c.b16 %v3130, %v3126
          %v3551 = vpack.c.b16 %v3131, %v3127
          %v3552 = vpack.c.b16 %v3132, %v3128
          %v3553 = vpack.c.b16 %v3133, %v3129
          %v3554 = vpack.c.b16 %v3138, %v3134
          %v3555 = vpack.c.b16 %v3139, %v3135
          %v3556 = vpack.c.b16 %v3140, %v3136
          %v3557 = vpack.c.b16 %v3141, %v3137
          %v3558 = vpack.c.b16 %v3146, %v3142
          %v3559 = vpack.c.b16 %v3147, %v3143
          %v3560 = vpack.c.b16 %v3148, %v3144
          %v3561 = vpack.c.b16 %v3149, %v3145
          %v3562 = vpack.c.b16 %v3154, %v3150
          %v3563 = vpack.c.b16 %v3155, %v3151
          %v3564 = vpack.c.b16 %v3156, %v3152
          %v3565 = vpack.c.b16 %v3157, %v3153
          %v3566 = vpack.c.b16 %v3162, %v3158
          %v3567 = vpack.c.b16 %v3163, %v3159
          %v3568 = vpack.c.b16 %v3164, %v3160
          %v3569 = vpack.c.b16 %v3165, %v3161
          %v3570 = vpack.c.b16 %v3170, %v3166
          %v3571 = vpack.c.b16 %v3171, %v3167
          %v3572 = vpack.c.b16 %v3172, %v3168
          %v3573 = vpack.c.b16 %v3173, %v3169
          %v3574 = vpack.c.b16 %v3178, %v3174
          %v3575 = vpack.c.b16 %v3179, %v3175
          %v3576 = vpack.c.b16 %v3180, %v3176
          %v3577 = vpack.c.b16 %v3181, %v3177
          %v3578 = vpack.c.b16 %v3186, %v3182
          %v3579 = vpack.c.b16 %v3187, %v3183
          %v3580 = vpack.c.b16 %v3188, %v3184
          %v3581 = vpack.c.b16 %v3189, %v3185
          %v3582 = vpack.c.b16 %v3194, %v3190
          %v3583 = vpack.c.b16 %v3195, %v3191
          %v3584 = vpack.c.b16 %v3196, %v3192
          %v3585 = vpack.c.b16 %v3197, %v3193
          %v3586 = vpack.c.b16 %v3202, %v3198
          %v3587 = vpack.c.b16 %v3203, %v3199
          %v3588 = vpack.c.b16 %v3204, %v3200
          %v3589 = vpack.c.b16 %v3205, %v3201
          %v3590 = vpack.c.b16 %v3210, %v3206
          %v3591 = vpack.c.b16 %v3211, %v3207
          %v3592 = vpack.c.b16 %v3212, %v3208
          %v3593 = vpack.c.b16 %v3213, %v3209
          %v3594 = vpack.c.b16 %v3218, %v3214
          %v3595 = vpack.c.b16 %v3219, %v3215
          %v3596 = vpack.c.b16 %v3220, %v3216
          %v3597 = vpack.c.b16 %v3221, %v3217
          %v3598 = vpack.c.b16 %v3226, %v3222
          %v3599 = vpack.c.b16 %v3227, %v3223
          %v3600 = vpack.c.b16 %v3228, %v3224
          %v3601 = vpack.c.b16 %v3229, %v3225
          %v3602 = vpack.c.b16 %v3234, %v3230
          %v3603 = vpack.c.b16 %v3235, %v3231
          %v3604 = vpack.c.b16 %v3236, %v3232
          %v3605 = vpack.c.b16 %v3237, %v3233
          %v3606 = vpack.c.b16 %v3242, %v3238
          %v3607 = vpack.c.b16 %v3243, %v3239
          %v3608 = vpack.c.b16 %v3244, %v3240
          %v3609 = vpack.c.b16 %v3245, %v3241
          %v3610 = vpack.c.b16 %v3250, %v3246
          %v3611 = vpack.c.b16 %v3251, %v3247
          %v3612 = vpack.c.b16 %v3252, %v3248
          %v3613 = vpack.c.b16 %v3253, %v3249
          %v3614 = vpack.c.b16 %v3258, %v3254
          %v3615 = vpack.c.b16 %v3259, %v3255
          %v3616 = vpack.c.b16 %v3260, %v3256
          %v3617 = vpack.c.b16 %v3261, %v3257
          %v3618 = vpack.c.b16 %v3266, %v3262
          %v3619 = vpack.c.b16 %v3267, %v3263
          %v3620 = vpack.c.b16 %v3268, %v3264
          %v3621 = vpack.c.b16 %v3269, %v3265
          %v3622 = vpack.c.b16 %v3274, %v3270
          %v3623 = vpack.c.b16 %v3275, %v3271
          %v3624 = vpack.c.b16 %v3276, %v3272
          %v3625 = vpack.c.b16 %v3277, %v3273
          %v3626 = vpack.c.b16 %v3282, %v3278
          %v3627 = vpack.c.b16 %v3283, %v3279
          %v3628 = vpack.c.b16 %v3284, %v3280
          %v3629 = vpack.c.b16 %v3285, %v3281
          %v3630 = vpack.c.b16 %v3290, %v3286
          %v3631 = vpack.c.b16 %v3291, %v3287
          %v3632 = vpack.c.b16 %v3292, %v3288
          %v3633 = vpack.c.b16 %v3293, %v3289
          %v3634 = vpack.c.b16 %v3298, %v3294
          %v3635 = vpack.c.b16 %v3299, %v3295
          %v3636 = vpack.c.b16 %v3300, %v3296
          %v3637 = vpack.c.b16 %v3301, %v3297
          %v3638 = vpack.c.b16 %v3306, %v3302
          %v3639 = vpack.c.b16 %v3307, %v3303
          %v3640 = vpack.c.b16 %v3308, %v3304
          %v3641 = vpack.c.b16 %v3309, %v3305
          %v3642 = vpack.c.b16 %v3314, %v3310
          %v3643 = vpack.c.b16 %v3315, %v3311
          %v3644 = vpack.c.b16 %v3316, %v3312
          %v3645 = vpack.c.b16 %v3317, %v3313
          %v3646 = vpack.c.b16 %v3322, %v3318
          %v3647 = vpack.c.b16 %v3323, %v3319
          %v3648 = vpack.c.b16 %v3324, %v3320
          %v3649 = vpack.c.b16 %v3325, %v3321
          %v3650 = vpack.c.b16 %v3330, %v3326
          %v3651 = vpack.c.b16 %v3331, %v3327
          %v3652 = vpack.c.b16 %v3332, %v3328
          %v3653 = vpack.c.b16 %v3333, %v3329
          %v3654 = vpack.c.b16 %v3338, %v3334
          %v3655 = vpack.c.b16 %v3339, %v3335
          %v3656 = vpack.c.b16 %v3340, %v3336
          %v3657 = vpack.c.b16 %v3341, %v3337
          %v3658 = vpack.c.b16 %v3346, %v3342
          %v3659 = vpack.c.b16 %v3347, %v3343
          %v3660 = vpack.c.b16 %v3348, %v3344
          %v3661 = vpack.c.b16 %v3349, %v3345
          %v3662 = vpack.c.b16 %v3354, %v3350
          %v3663 = vpack.c.b16 %v3355, %v3351
          %v3664 = vpack.c.b16 %v3356, %v3352
          %v3665 = vpack.c.b16 %v3357, %v3353
          %v3666 = vpack.c.b16 %v3362, %v3358
          %v3667 = vpack.c.b16 %v3363, %v3359
          %v3668 = vpack.c.b16 %v3364, %v3360
          %v3669 = vpack.c.b16 %v3365, %v3361
          %v3670 = vpack.c.b16 %v3370, %v3366
          %v3671 = vpack.c.b16 %v3371, %v3367
          %v3672 = vpack.c.b16 %v3372, %v3368
          %v3673 = vpack.c.b16 %v3373, %v3369
          %v3674 = vpack.c.b16 %v3378, %v3374
          %v3675 = vpack.c.b16 %v3379, %v3375
          %v3676 = vpack.c.b16 %v3380, %v3376
          %v3677 = vpack.c.b16 %v3381, %v3377
          %v3678 = vpack.c.b16 %v3386, %v3382
          %v3679 = vpack.c.b16 %v3387, %v3383
          %v3680 = vpack.c.b16 %v3388, %v3384
          %v3681 = vpack.c.b16 %v3389, %v3385
          %v3682 = vpack.c.b16 %v3394, %v3390
          %v3683 = vpack.c.b16 %v3395, %v3391
          %v3684 = vpack.c.b16 %v3396, %v3392
          %v3685 = vpack.c.b16 %v3397, %v3393
          %v3686 = vpack.c.b16 %v3402, %v3398
          %v3687 = vpack.c.b16 %v3403, %v3399
          %v3688 = vpack.c.b16 %v3404, %v3400
          %v3689 = vpack.c.b16 %v3405, %v3401
          %v3690 = vpack.c.b16 %v3410, %v3406
          %v3691 = vpack.c.b16 %v3411, %v3407
          %v3692 = vpack.c.b16 %v3412, %v3408
          %v3693 = vpack.c.b16 %v3413, %v3409
          %v3694 = vpack.c.b16 %v3418, %v3414
          %v3695 = vpack.c.b16 %v3419, %v3415
          %v3696 = vpack.c.b16 %v3420, %v3416
          %v3697 = vpack.c.b16 %v3421, %v3417
          %v3698 = vpack.c.b16 %v3426, %v3422
          %v3699 = vpack.c.b16 %v3427, %v3423
          %v3700 = vpack.c.b16 %v3428, %v3424
          %v3701 = vpack.c.b16 %v3429, %v3425
          %v3702 = vpack.c.b16 %v3434, %v3430
          %v3703 = vpack.c.b16 %v3435, %v3431
          %v3704 = vpack.c.b16 %v3436, %v3432
          %v3705 = vpack.c.b16 %v3437, %v3433
          %v3706 = vpack.c.b16 %v3442, %v3438
          %v3707 = vpack.c.b16 %v3443, %v3439
          %v3708 = vpack.c.b16 %v3444, %v3440
          %v3709 = vpack.c.b16 %v3445, %v3441
          %v3710 = vpack.c.b16 %v3450, %v3446
          %v3711 = vpack.c.b16 %v3451, %v3447
          %v3712 = vpack.c.b16 %v3452, %v3448
          %v3713 = vpack.c.b16 %v3453, %v3449
          %v3714 = vpack.c.b16 %v3458, %v3454
          %v3715 = vpack.c.b16 %v3459, %v3455
          %v3716 = vpack.c.b16 %v3460, %v3456
          %v3717 = vpack.c.b16 %v3461, %v3457
          %3974 = vmatprep.subr.bf16.mxu0 %v3463
          %3975 = vmatpush1.bf16.msra.mxu0 %v3462
          %3976 = vmatprep.subr.bf16.mxu0 %v3467
          %3977 = vmatpush1.bf16.msra.mxu0 %v3466
          %3978 = vmatprep.subr.bf16.mxu0 %v3471
          %3979 = vmatpush1.bf16.msra.mxu0 %v3470
          %3980 = vmatprep.subr.bf16.mxu0 %v3475
          %3981 = vmatpush1.bf16.msra.mxu0 %v3474
          %3982 = vmatprep.subr.bf16.mxu0 %v3479
          %3983 = vmatpush1.bf16.msra.mxu0 %v3478
          %3984 = vmatprep.subr.bf16.mxu0 %v3483
          %3985 = vmatpush1.bf16.msra.mxu0 %v3482
          %3986 = vmatprep.subr.bf16.mxu0 %v3487
          %3987 = vmatpush1.bf16.msra.mxu0 %v3486
          %3988 = vmatprep.subr.bf16.mxu0 %v3491
          %3989 = vmatpush1.bf16.msra.mxu0 %v3490
          %3990 = vmatprep.subr.bf16.mxu0 %v3495
          %3991 = vmatpush1.bf16.msra.mxu0 %v3494
          %3992 = vmatprep.subr.bf16.mxu0 %v3499
          %3993 = vmatpush1.bf16.msra.mxu0 %v3498
          %3994 = vmatprep.subr.bf16.mxu0 %v3503
          %3995 = vmatpush1.bf16.msra.mxu0 %v3502
          %3996 = vmatprep.subr.bf16.mxu0 %v3507
          %3997 = vmatpush1.bf16.msra.mxu0 %v3506
          %3998 = vmatprep.subr.bf16.mxu0 %v3511
          %3999 = vmatpush1.bf16.msra.mxu0 %v3510
          %4000 = vmatprep.subr.bf16.mxu0 %v3515
          %4001 = vmatpush1.bf16.msra.mxu0 %v3514
          %4002 = vmatprep.subr.bf16.mxu0 %v3519
          %4003 = vmatpush1.bf16.msra.mxu0 %v3518
          %4004 = vmatprep.subr.bf16.mxu0 %v3523
          %4005 = vmatpush1.bf16.msra.mxu0 %v3522
          %4006 = vmatprep.mubr.bf16.mxu0 %v2409
          %4007 = vmatmul.mubr.bf16.gmra.mrb[0].mxu0 %v2408
          %v4008 = vpop.f32.mrb[0].mxu0
          %v4009 = vadd.f32 %v2677, %v4008
          %v4010 = vpop.f32.mrb[0].mxu0
          %v4011 = vadd.f32 %v2681, %v4010
          %v4012 = vpop.f32.mrb[0].mxu0
          %v4013 = vpop.f32.mrb[0].mxu0
          %4014 = vdwg.mxu0
          %4015 = vmatprep.subr.bf16.mxu0 %v3527
          %4016 = vmatpush1.bf16.msra.mxu0 %v3526
          %4017 = vmatprep.subr.bf16.mxu0 %v3531
          %4018 = vmatpush1.bf16.msra.mxu0 %v3530
          %4019 = vmatprep.subr.bf16.mxu0 %v3535
          %4020 = vmatpush1.bf16.msra.mxu0 %v3534
          %4021 = vmatprep.subr.bf16.mxu0 %v3539
          %4022 = vmatpush1.bf16.msra.mxu0 %v3538
          %4023 = vmatprep.subr.bf16.mxu0 %v3543
          %4024 = vmatpush1.bf16.msra.mxu0 %v3542
          %4025 = vmatprep.subr.bf16.mxu0 %v3547
          %4026 = vmatpush1.bf16.msra.mxu0 %v3546
          %4027 = vmatprep.subr.bf16.mxu0 %v3551
          %4028 = vmatpush1.bf16.msra.mxu0 %v3550
          %4029 = vmatprep.subr.bf16.mxu0 %v3555
          %4030 = vmatpush1.bf16.msra.mxu0 %v3554
          %4031 = vmatprep.subr.bf16.mxu0 %v3559
          %4032 = vmatpush1.bf16.msra.mxu0 %v3558
          %4033 = vmatprep.subr.bf16.mxu0 %v3563
          %4034 = vmatpush1.bf16.msra.mxu0 %v3562
          %4035 = vmatprep.subr.bf16.mxu0 %v3567
          %4036 = vmatpush1.bf16.msra.mxu0 %v3566
          %4037 = vmatprep.subr.bf16.mxu0 %v3571
          %4038 = vmatpush1.bf16.msra.mxu0 %v3570
          %4039 = vmatprep.subr.bf16.mxu0 %v3575
          %4040 = vmatpush1.bf16.msra.mxu0 %v3574
          %4041 = vmatprep.subr.bf16.mxu0 %v3579
          %4042 = vmatpush1.bf16.msra.mxu0 %v3578
          %4043 = vmatprep.subr.bf16.mxu0 %v3583
          %4044 = vmatpush1.bf16.msra.mxu0 %v3582
          %4045 = vmatprep.subr.bf16.mxu0 %v3587
          %4046 = vmatpush1.bf16.msra.mxu0 %v3586
          %4047 = vmatprep.mubr.bf16.mxu0 %v2411
          %4048 = vmatmul.mubr.bf16.gmra.mrb[0].mxu0 %v2410
          %v4049 = vpop.f32.mrb[0].mxu0
          %v4050 = vadd.f32 %v4009, %v4049
          %v4051 = vpop.f32.mrb[0].mxu0
          %v4052 = vadd.f32 %v4011, %v4051
          %v4053 = vpop.f32.mrb[0].mxu0
          %v4054 = vpop.f32.mrb[0].mxu0
          %4055 = vdwg.mxu0
          %4056 = vmatprep.subr.bf16.mxu0 %v3591
          %4057 = vmatpush1.bf16.msra.mxu0 %v3590
          %4058 = vmatprep.subr.bf16.mxu0 %v3595
          %4059 = vmatpush1.bf16.msra.mxu0 %v3594
          %4060 = vmatprep.subr.bf16.mxu0 %v3599
          %4061 = vmatpush1.bf16.msra.mxu0 %v3598
          %4062 = vmatprep.subr.bf16.mxu0 %v3603
          %4063 = vmatpush1.bf16.msra.mxu0 %v3602
          %4064 = vmatprep.subr.bf16.mxu0 %v3607
          %4065 = vmatpush1.bf16.msra.mxu0 %v3606
          %4066 = vmatprep.subr.bf16.mxu0 %v3611
          %4067 = vmatpush1.bf16.msra.mxu0 %v3610
          %4068 = vmatprep.subr.bf16.mxu0 %v3615
          %4069 = vmatpush1.bf16.msra.mxu0 %v3614
          %4070 = vmatprep.subr.bf16.mxu0 %v3619
          %4071 = vmatpush1.bf16.msra.mxu0 %v3618
          %4072 = vmatprep.subr.bf16.mxu0 %v3623
          %4073 = vmatpush1.bf16.msra.mxu0 %v3622
          %4074 = vmatprep.subr.bf16.mxu0 %v3627
          %4075 = vmatpush1.bf16.msra.mxu0 %v3626
          %4076 = vmatprep.subr.bf16.mxu0 %v3631
          %4077 = vmatpush1.bf16.msra.mxu0 %v3630
          %4078 = vmatprep.subr.bf16.mxu0 %v3635
          %4079 = vmatpush1.bf16.msra.mxu0 %v3634
          %4080 = vmatprep.subr.bf16.mxu0 %v3639
          %4081 = vmatpush1.bf16.msra.mxu0 %v3638
          %4082 = vmatprep.subr.bf16.mxu0 %v3643
          %4083 = vmatpush1.bf16.msra.mxu0 %v3642
          %4084 = vmatprep.subr.bf16.mxu0 %v3647
          %4085 = vmatpush1.bf16.msra.mxu0 %v3646
          %4086 = vmatprep.subr.bf16.mxu0 %v3651
          %4087 = vmatpush1.bf16.msra.mxu0 %v3650
          %4088 = vmatprep.mubr.bf16.mxu0 %v2413
          %4089 = vmatmul.mubr.bf16.gmra.mrb[0].mxu0 %v2412
          %v4090 = vpop.f32.mrb[0].mxu0
          %v4091 = vadd.f32 %v4050, %v4090
          %v4092 = vpop.f32.mrb[0].mxu0
          %v4093 = vadd.f32 %v4052, %v4092
          %v4094 = vpop.f32.mrb[0].mxu0
          %v4095 = vpop.f32.mrb[0].mxu0
          %4096 = vdwg.mxu0
          %4097 = vmatprep.subr.bf16.mxu0 %v3655
          %4098 = vmatpush1.bf16.msra.mxu0 %v3654
          %4099 = vmatprep.subr.bf16.mxu0 %v3659
          %4100 = vmatpush1.bf16.msra.mxu0 %v3658
          %4101 = vmatprep.subr.bf16.mxu0 %v3663
          %4102 = vmatpush1.bf16.msra.mxu0 %v3662
          %4103 = vmatprep.subr.bf16.mxu0 %v3667
          %4104 = vmatpush1.bf16.msra.mxu0 %v3666
          %4105 = vmatprep.subr.bf16.mxu0 %v3671
          %4106 = vmatpush1.bf16.msra.mxu0 %v3670
          %4107 = vmatprep.subr.bf16.mxu0 %v3675
          %4108 = vmatpush1.bf16.msra.mxu0 %v3674
          %4109 = vmatprep.subr.bf16.mxu0 %v3679
          %4110 = vmatpush1.bf16.msra.mxu0 %v3678
          %4111 = vmatprep.subr.bf16.mxu0 %v3683
          %4112 = vmatpush1.bf16.msra.mxu0 %v3682
          %4113 = vmatprep.subr.bf16.mxu0 %v3687
          %4114 = vmatpush1.bf16.msra.mxu0 %v3686
          %4115 = vmatprep.subr.bf16.mxu0 %v3691
          %4116 = vmatpush1.bf16.msra.mxu0 %v3690
          %4117 = vmatprep.subr.bf16.mxu0 %v3695
          %4118 = vmatpush1.bf16.msra.mxu0 %v3694
          %4119 = vmatprep.subr.bf16.mxu0 %v3699
          %4120 = vmatpush1.bf16.msra.mxu0 %v3698
          %4121 = vmatprep.subr.bf16.mxu0 %v3703
          %4122 = vmatpush1.bf16.msra.mxu0 %v3702
          %4123 = vmatprep.subr.bf16.mxu0 %v3707
          %4124 = vmatpush1.bf16.msra.mxu0 %v3706
          %4125 = vmatprep.subr.bf16.mxu0 %v3711
          %4126 = vmatpush1.bf16.msra.mxu0 %v3710
          %4127 = vmatprep.subr.bf16.mxu0 %v3715
          %4128 = vmatpush1.bf16.msra.mxu0 %v3714
          %4129 = vmatprep.mubr.bf16.mxu0 %v2415
          %4130 = vmatmul.mubr.bf16.gmra.mrb[0].mxu0 %v2414
          %v4131 = vpop.f32.mrb[0].mxu0
          %v4132 = vadd.f32 %v4091, %v4131
          %v4133 = vpop.f32.mrb[0].mxu0
          %v4134 = vadd.f32 %v4093, %v4133
          %v4135 = vpop.f32.mrb[0].mxu0
          %v4136 = vpop.f32.mrb[0].mxu0
          %4137 = vdwg.mxu0
          %4138 = vmatprep.subr.bf16.mxu0 %v3465
          %4139 = vmatpush1.bf16.msra.mxu0 %v3464
          %4140 = vmatprep.subr.bf16.mxu0 %v3469
          %4141 = vmatpush1.bf16.msra.mxu0 %v3468
          %4142 = vmatprep.subr.bf16.mxu0 %v3473
          %4143 = vmatpush1.bf16.msra.mxu0 %v3472
          %4144 = vmatprep.subr.bf16.mxu0 %v3477
          %4145 = vmatpush1.bf16.msra.mxu0 %v3476
          %4146 = vmatprep.subr.bf16.mxu0 %v3481
          %4147 = vmatpush1.bf16.msra.mxu0 %v3480
          %4148 = vmatprep.subr.bf16.mxu0 %v3485
          %4149 = vmatpush1.bf16.msra.mxu0 %v3484
          %4150 = vmatprep.subr.bf16.mxu0 %v3489
          %4151 = vmatpush1.bf16.msra.mxu0 %v3488
          %4152 = vmatprep.subr.bf16.mxu0 %v3493
          %4153 = vmatpush1.bf16.msra.mxu0 %v3492
          %4154 = vmatprep.subr.bf16.mxu0 %v3497
          %4155 = vmatpush1.bf16.msra.mxu0 %v3496
          %4156 = vmatprep.subr.bf16.mxu0 %v3501
          %4157 = vmatpush1.bf16.msra.mxu0 %v3500
          %4158 = vmatprep.subr.bf16.mxu0 %v3505
          %4159 = vmatpush1.bf16.msra.mxu0 %v3504
          %4160 = vmatprep.subr.bf16.mxu0 %v3509
          %4161 = vmatpush1.bf16.msra.mxu0 %v3508
          %4162 = vmatprep.subr.bf16.mxu0 %v3513
          %4163 = vmatpush1.bf16.msra.mxu0 %v3512
          %4164 = vmatprep.subr.bf16.mxu0 %v3517
          %4165 = vmatpush1.bf16.msra.mxu0 %v3516
          %4166 = vmatprep.subr.bf16.mxu0 %v3521
          %4167 = vmatpush1.bf16.msra.mxu0 %v3520
          %4168 = vmatprep.subr.bf16.mxu0 %v3525
          %4169 = vmatpush1.bf16.msra.mxu0 %v3524
          %4170 = vmatprep.mubr.bf16.mxu0 %v2409
          %4171 = vmatmul.mubr.bf16.gmra.mrb[0].mxu0 %v2408
          %v4172 = vpop.f32.mrb[0].mxu0
          %v4173 = vadd.f32 %v2685, %v4172
          %v4174 = vpop.f32.mrb[0].mxu0
          %v4175 = vadd.f32 %v2689, %v4174
          %v4176 = vpop.f32.mrb[0].mxu0
          %v4177 = vpop.f32.mrb[0].mxu0
          %4178 = vdwg.mxu0
          %4179 = vmatprep.subr.bf16.mxu0 %v3529
          %4180 = vmatpush1.bf16.msra.mxu0 %v3528
          %4181 = vmatprep.subr.bf16.mxu0 %v3533
          %4182 = vmatpush1.bf16.msra.mxu0 %v3532
          %4183 = vmatprep.subr.bf16.mxu0 %v3537
          %4184 = vmatpush1.bf16.msra.mxu0 %v3536
          %4185 = vmatprep.subr.bf16.mxu0 %v3541
          %4186 = vmatpush1.bf16.msra.mxu0 %v3540
          %4187 = vmatprep.subr.bf16.mxu0 %v3545
          %4188 = vmatpush1.bf16.msra.mxu0 %v3544
          %4189 = vmatprep.subr.bf16.mxu0 %v3549
          %4190 = vmatpush1.bf16.msra.mxu0 %v3548
          %4191 = vmatprep.subr.bf16.mxu0 %v3553
          %4192 = vmatpush1.bf16.msra.mxu0 %v3552
          %4193 = vmatprep.subr.bf16.mxu0 %v3557
          %4194 = vmatpush1.bf16.msra.mxu0 %v3556
          %4195 = vmatprep.subr.bf16.mxu0 %v3561
          %4196 = vmatpush1.bf16.msra.mxu0 %v3560
          %4197 = vmatprep.subr.bf16.mxu0 %v3565
          %4198 = vmatpush1.bf16.msra.mxu0 %v3564
          %4199 = vmatprep.subr.bf16.mxu0 %v3569
          %4200 = vmatpush1.bf16.msra.mxu0 %v3568
          %4201 = vmatprep.subr.bf16.mxu0 %v3573
          %4202 = vmatpush1.bf16.msra.mxu0 %v3572
          %4203 = vmatprep.subr.bf16.mxu0 %v3577
          %4204 = vmatpush1.bf16.msra.mxu0 %v3576
          %4205 = vmatprep.subr.bf16.mxu0 %v3581
          %4206 = vmatpush1.bf16.msra.mxu0 %v3580
          %4207 = vmatprep.subr.bf16.mxu0 %v3585
          %4208 = vmatpush1.bf16.msra.mxu0 %v3584
          %4209 = vmatprep.subr.bf16.mxu0 %v3589
          %4210 = vmatpush1.bf16.msra.mxu0 %v3588
          %4211 = vmatprep.mubr.bf16.mxu0 %v2411
          %4212 = vmatmul.mubr.bf16.gmra.mrb[0].mxu0 %v2410
          %v4213 = vpop.f32.mrb[0].mxu0
          %v4214 = vadd.f32 %v4173, %v4213
          %v4215 = vpop.f32.mrb[0].mxu0
          %v4216 = vadd.f32 %v4175, %v4215
          %v4217 = vpop.f32.mrb[0].mxu0
          %v4218 = vpop.f32.mrb[0].mxu0
          %4219 = vdwg.mxu0
          %4220 = vmatprep.subr.bf16.mxu0 %v3593
          %4221 = vmatpush1.bf16.msra.mxu0 %v3592
          %4222 = vmatprep.subr.bf16.mxu0 %v3597
          %4223 = vmatpush1.bf16.msra.mxu0 %v3596
          %4224 = vmatprep.subr.bf16.mxu0 %v3601
          %4225 = vmatpush1.bf16.msra.mxu0 %v3600
          %4226 = vmatprep.subr.bf16.mxu0 %v3605
          %4227 = vmatpush1.bf16.msra.mxu0 %v3604
          %4228 = vmatprep.subr.bf16.mxu0 %v3609
          %4229 = vmatpush1.bf16.msra.mxu0 %v3608
          %4230 = vmatprep.subr.bf16.mxu0 %v3613
          %4231 = vmatpush1.bf16.msra.mxu0 %v3612
          %4232 = vmatprep.subr.bf16.mxu0 %v3617
          %4233 = vmatpush1.bf16.msra.mxu0 %v3616
          %4234 = vmatprep.subr.bf16.mxu0 %v3621
          %4235 = vmatpush1.bf16.msra.mxu0 %v3620
          %4236 = vmatprep.subr.bf16.mxu0 %v3625
          %4237 = vmatpush1.bf16.msra.mxu0 %v3624
          %4238 = vmatprep.subr.bf16.mxu0 %v3629
          %4239 = vmatpush1.bf16.msra.mxu0 %v3628
          %4240 = vmatprep.subr.bf16.mxu0 %v3633
          %4241 = vmatpush1.bf16.msra.mxu0 %v3632
          %4242 = vmatprep.subr.bf16.mxu0 %v3637
          %4243 = vmatpush1.bf16.msra.mxu0 %v3636
          %4244 = vmatprep.subr.bf16.mxu0 %v3641
          %4245 = vmatpush1.bf16.msra.mxu0 %v3640
          %4246 = vmatprep.subr.bf16.mxu0 %v3645
          %4247 = vmatpush1.bf16.msra.mxu0 %v3644
          %4248 = vmatprep.subr.bf16.mxu0 %v3649
          %4249 = vmatpush1.bf16.msra.mxu0 %v3648
          %4250 = vmatprep.subr.bf16.mxu0 %v3653
          %4251 = vmatpush1.bf16.msra.mxu0 %v3652
          %4252 = vmatprep.mubr.bf16.mxu0 %v2413
          %4253 = vmatmul.mubr.bf16.gmra.mrb[0].mxu0 %v2412
          %v4254 = vpop.f32.mrb[0].mxu0
          %v4255 = vadd.f32 %v4214, %v4254
          %v4256 = vpop.f32.mrb[0].mxu0
          %v4257 = vadd.f32 %v4216, %v4256
          %v4258 = vpop.f32.mrb[0].mxu0
          %v4259 = vpop.f32.mrb[0].mxu0
          %4260 = vdwg.mxu0
          %4261 = vmatprep.subr.bf16.mxu0 %v3657
          %4262 = vmatpush1.bf16.msra.mxu0 %v3656
          %4263 = vmatprep.subr.bf16.mxu0 %v3661
          %4264 = vmatpush1.bf16.msra.mxu0 %v3660
          %4265 = vmatprep.subr.bf16.mxu0 %v3665
          %4266 = vmatpush1.bf16.msra.mxu0 %v3664
          %4267 = vmatprep.subr.bf16.mxu0 %v3669
          %4268 = vmatpush1.bf16.msra.mxu0 %v3668
          %4269 = vmatprep.subr.bf16.mxu0 %v3673
          %4270 = vmatpush1.bf16.msra.mxu0 %v3672
          %4271 = vmatprep.subr.bf16.mxu0 %v3677
          %4272 = vmatpush1.bf16.msra.mxu0 %v3676
          %4273 = vmatprep.subr.bf16.mxu0 %v3681
          %4274 = vmatpush1.bf16.msra.mxu0 %v3680
          %4275 = vmatprep.subr.bf16.mxu0 %v3685
          %4276 = vmatpush1.bf16.msra.mxu0 %v3684
          %4277 = vmatprep.subr.bf16.mxu0 %v3689
          %4278 = vmatpush1.bf16.msra.mxu0 %v3688
          %4279 = vmatprep.subr.bf16.mxu0 %v3693
          %4280 = vmatpush1.bf16.msra.mxu0 %v3692
          %4281 = vmatprep.subr.bf16.mxu0 %v3697
          %4282 = vmatpush1.bf16.msra.mxu0 %v3696
          %4283 = vmatprep.subr.bf16.mxu0 %v3701
          %4284 = vmatpush1.bf16.msra.mxu0 %v3700
          %4285 = vmatprep.subr.bf16.mxu0 %v3705
          %4286 = vmatpush1.bf16.msra.mxu0 %v3704
          %4287 = vmatprep.subr.bf16.mxu0 %v3709
          %4288 = vmatpush1.bf16.msra.mxu0 %v3708
          %4289 = vmatprep.subr.bf16.mxu0 %v3713
          %4290 = vmatpush1.bf16.msra.mxu0 %v3712
          %4291 = vmatprep.subr.bf16.mxu0 %v3717
          %4292 = vmatpush1.bf16.msra.mxu0 %v3716
          %4293 = vmatprep.mubr.bf16.mxu0 %v2415
          %4294 = vmatmul.mubr.bf16.gmra.mrb[0].mxu0 %v2414
          %v4295 = vpop.f32.mrb[0].mxu0
          %v4296 = vadd.f32 %v4255, %v4295
          %v4297 = vpop.f32.mrb[0].mxu0
          %v4298 = vadd.f32 %v4257, %v4297
          %v4299 = vpop.f32.mrb[0].mxu0
          %v4300 = vpop.f32.mrb[0].mxu0
          %4301 = vdwg.mxu0
          %v4302 = vmax.f32 %v4132, 0.0
          %v4303 = vmax.f32 %v4134, 0.0
          %v4304 = vmax.f32 %v4296, 0.0
          %v4305 = vmax.f32 %v4298, 0.0
          %v4306 = vpack.c.bf16 %v4302, %v4302
          %v4307 = vpack.c.bf16 %v4303, %v4303
          %v4308 = vpack.c.bf16 %v4304, %v4304
          %v4309 = vpack.c.bf16 %v4305, %v4305
          %v4310 = vld [vmem:[%s5] sm:$0xff]
          %v4311 = vld [vmem:[%s5 + $0x8] sm:$0xff]
          %v4312 = vld [vmem:[%s5 + $0x10] sm:$0xff]
          %v4313 = vld [vmem:[%s5 + $0x18] sm:$0xff]
          %v4314 = vld [vmem:[%s5 + $0x20] sm:$0xff]
          %v4315 = vld [vmem:[%s5 + $0x28] sm:$0xff]
          %v4316 = vld [vmem:[%s5 + $0x30] sm:$0xff]
          %v4317 = vld [vmem:[%s5 + $0x38] sm:$0xff]
          %v4318 = vld [vmem:[%s5 + $0x40] sm:$0xff]
          %v4319 = vld [vmem:[%s5 + $0x48] sm:$0xff]
          %v4320 = vld [vmem:[%s5 + $0x50] sm:$0xff]
          %v4321 = vld [vmem:[%s5 + $0x58] sm:$0xff]
          %v4322 = vld [vmem:[%s5 + $0x60] sm:$0xff]
          %v4323 = vld [vmem:[%s5 + $0x68] sm:$0xff]
          %v4324 = vld [vmem:[%s5 + $0x70] sm:$0xff]
          %v4325 = vld [vmem:[%s5 + $0x78] sm:$0xff]
          %v4326 = vld [vmem:[%s5 + $0x80] sm:$0xff]
          %v4327 = vld [vmem:[%s5 + $0x88] sm:$0xff]
          %v4328 = vld [vmem:[%s5 + $0x90] sm:$0xff]
          %v4329 = vld [vmem:[%s5 + $0x98] sm:$0xff]
          %v4330 = vld [vmem:[%s5 + $0xa0] sm:$0xff]
          %v4331 = vld [vmem:[%s5 + $0xa8] sm:$0xff]
          %v4332 = vld [vmem:[%s5 + $0xb0] sm:$0xff]
          %v4333 = vld [vmem:[%s5 + $0xb8] sm:$0xff]
          %v4334 = vld [vmem:[%s5 + $0xc0] sm:$0xff]
          %v4335 = vld [vmem:[%s5 + $0xc8] sm:$0xff]
          %v4336 = vld [vmem:[%s5 + $0xd0] sm:$0xff]
          %v4337 = vld [vmem:[%s5 + $0xd8] sm:$0xff]
          %v4338 = vld [vmem:[%s5 + $0xe0] sm:$0xff]
          %v4339 = vld [vmem:[%s5 + $0xe8] sm:$0xff]
          %v4340 = vld [vmem:[%s5 + $0xf0] sm:$0xff]
          %v4341 = vld [vmem:[%s5 + $0xf8] sm:$0xff]
          %v4342 = vld [vmem:[%s5 + $0x100] sm:$0xff]
          %v4343 = vld [vmem:[%s5 + $0x108] sm:$0xff]
          %v4344 = vld [vmem:[%s5 + $0x110] sm:$0xff]
          %v4345 = vld [vmem:[%s5 + $0x118] sm:$0xff]
          %v4346 = vld [vmem:[%s5 + $0x120] sm:$0xff]
          %v4347 = vld [vmem:[%s5 + $0x128] sm:$0xff]
          %v4348 = vld [vmem:[%s5 + $0x130] sm:$0xff]
          %v4349 = vld [vmem:[%s5 + $0x138] sm:$0xff]
          %v4350 = vld [vmem:[%s5 + $0x140] sm:$0xff]
          %v4351 = vld [vmem:[%s5 + $0x148] sm:$0xff]
          %v4352 = vld [vmem:[%s5 + $0x150] sm:$0xff]
          %v4353 = vld [vmem:[%s5 + $0x158] sm:$0xff]
          %v4354 = vld [vmem:[%s5 + $0x160] sm:$0xff]
          %v4355 = vld [vmem:[%s5 + $0x168] sm:$0xff]
          %v4356 = vld [vmem:[%s5 + $0x170] sm:$0xff]
          %v4357 = vld [vmem:[%s5 + $0x178] sm:$0xff]
          %v4358 = vld [vmem:[%s5 + $0x180] sm:$0xff]
          %v4359 = vld [vmem:[%s5 + $0x188] sm:$0xff]
          %v4360 = vld [vmem:[%s5 + $0x190] sm:$0xff]
          %v4361 = vld [vmem:[%s5 + $0x198] sm:$0xff]
          %v4362 = vld [vmem:[%s5 + $0x1a0] sm:$0xff]
          %v4363 = vld [vmem:[%s5 + $0x1a8] sm:$0xff]
          %v4364 = vld [vmem:[%s5 + $0x1b0] sm:$0xff]
          %v4365 = vld [vmem:[%s5 + $0x1b8] sm:$0xff]
          %v4366 = vld [vmem:[%s5 + $0x1c0] sm:$0xff]
          %v4367 = vld [vmem:[%s5 + $0x1c8] sm:$0xff]
          %v4368 = vld [vmem:[%s5 + $0x1d0] sm:$0xff]
          %v4369 = vld [vmem:[%s5 + $0x1d8] sm:$0xff]
          %v4370 = vld [vmem:[%s5 + $0x1e0] sm:$0xff]
          %v4371 = vld [vmem:[%s5 + $0x1e8] sm:$0xff]
          %v4372 = vld [vmem:[%s5 + $0x1f0] sm:$0xff]
          %v4373 = vld [vmem:[%s5 + $0x1f8] sm:$0xff]
          %v4374 = vld [vmem:[%s6] sm:$0x3]
          %v4376 = vlaneseq
          %v4377 = vshrl.u32 %v4376, 7
          %v4378 = vsub.s32 0, %v4377
          %v4379 = vrot.slane %v4374, %v4378
          %v4380 = vlaneseq
          %v4381 = vshrl.u32 %v4380, 7
          %v4382 = vsub.s32 1, %v4381
          %v4383 = vrot.slane %v4374, %v4382
          %v4450 = vunpack.c.l.b16 %v4310
          %v4451 = vunpack.c.h.b16 %v4310
          %v4452 = vunpack.c.l.b16 %v4311
          %v4453 = vunpack.c.h.b16 %v4311
          %v4454 = vunpack.c.l.b16 %v4312
          %v4455 = vunpack.c.h.b16 %v4312
          %v4456 = vunpack.c.l.b16 %v4313
          %v4457 = vunpack.c.h.b16 %v4313
          %v4458 = vunpack.c.l.b16 %v4314
          %v4459 = vunpack.c.h.b16 %v4314
          %v4460 = vunpack.c.l.b16 %v4315
          %v4461 = vunpack.c.h.b16 %v4315
          %v4462 = vunpack.c.l.b16 %v4316
          %v4463 = vunpack.c.h.b16 %v4316
          %v4464 = vunpack.c.l.b16 %v4317
          %v4465 = vunpack.c.h.b16 %v4317
          %v4466 = vunpack.c.l.b16 %v4318
          %v4467 = vunpack.c.h.b16 %v4318
          %v4468 = vunpack.c.l.b16 %v4319
          %v4469 = vunpack.c.h.b16 %v4319
          %v4470 = vunpack.c.l.b16 %v4320
          %v4471 = vunpack.c.h.b16 %v4320
          %v4472 = vunpack.c.l.b16 %v4321
          %v4473 = vunpack.c.h.b16 %v4321
          %v4474 = vunpack.c.l.b16 %v4322
          %v4475 = vunpack.c.h.b16 %v4322
          %v4476 = vunpack.c.l.b16 %v4323
          %v4477 = vunpack.c.h.b16 %v4323
          %v4478 = vunpack.c.l.b16 %v4324
          %v4479 = vunpack.c.h.b16 %v4324
          %v4480 = vunpack.c.l.b16 %v4325
          %v4481 = vunpack.c.h.b16 %v4325
          %v4482 = vunpack.c.l.b16 %v4326
          %v4483 = vunpack.c.h.b16 %v4326
          %v4484 = vunpack.c.l.b16 %v4327
          %v4485 = vunpack.c.h.b16 %v4327
          %v4486 = vunpack.c.l.b16 %v4328
          %v4487 = vunpack.c.h.b16 %v4328
          %v4488 = vunpack.c.l.b16 %v4329
          %v4489 = vunpack.c.h.b16 %v4329
          %v4490 = vunpack.c.l.b16 %v4330
          %v4491 = vunpack.c.h.b16 %v4330
          %v4492 = vunpack.c.l.b16 %v4331
          %v4493 = vunpack.c.h.b16 %v4331
          %v4494 = vunpack.c.l.b16 %v4332
          %v4495 = vunpack.c.h.b16 %v4332
          %v4496 = vunpack.c.l.b16 %v4333
          %v4497 = vunpack.c.h.b16 %v4333
          %v4498 = vunpack.c.l.b16 %v4334
          %v4499 = vunpack.c.h.b16 %v4334
          %v4500 = vunpack.c.l.b16 %v4335
          %v4501 = vunpack.c.h.b16 %v4335
          %v4502 = vunpack.c.l.b16 %v4336
          %v4503 = vunpack.c.h.b16 %v4336
          %v4504 = vunpack.c.l.b16 %v4337
          %v4505 = vunpack.c.h.b16 %v4337
          %v4506 = vunpack.c.l.b16 %v4338
          %v4507 = vunpack.c.h.b16 %v4338
          %v4508 = vunpack.c.l.b16 %v4339
          %v4509 = vunpack.c.h.b16 %v4339
          %v4510 = vunpack.c.l.b16 %v4340
          %v4511 = vunpack.c.h.b16 %v4340
          %v4512 = vunpack.c.l.b16 %v4341
          %v4513 = vunpack.c.h.b16 %v4341
          %v4514 = vunpack.c.l.b16 %v4342
          %v4515 = vunpack.c.h.b16 %v4342
          %v4516 = vunpack.c.l.b16 %v4343
          %v4517 = vunpack.c.h.b16 %v4343
          %v4518 = vunpack.c.l.b16 %v4344
          %v4519 = vunpack.c.h.b16 %v4344
          %v4520 = vunpack.c.l.b16 %v4345
          %v4521 = vunpack.c.h.b16 %v4345
          %v4522 = vunpack.c.l.b16 %v4346
          %v4523 = vunpack.c.h.b16 %v4346
          %v4524 = vunpack.c.l.b16 %v4347
          %v4525 = vunpack.c.h.b16 %v4347
          %v4526 = vunpack.c.l.b16 %v4348
          %v4527 = vunpack.c.h.b16 %v4348
          %v4528 = vunpack.c.l.b16 %v4349
          %v4529 = vunpack.c.h.b16 %v4349
          %v4530 = vunpack.c.l.b16 %v4350
          %v4531 = vunpack.c.h.b16 %v4350
          %v4532 = vunpack.c.l.b16 %v4351
          %v4533 = vunpack.c.h.b16 %v4351
          %v4534 = vunpack.c.l.b16 %v4352
          %v4535 = vunpack.c.h.b16 %v4352
          %v4536 = vunpack.c.l.b16 %v4353
          %v4537 = vunpack.c.h.b16 %v4353
          %v4538 = vunpack.c.l.b16 %v4354
          %v4539 = vunpack.c.h.b16 %v4354
          %v4540 = vunpack.c.l.b16 %v4355
          %v4541 = vunpack.c.h.b16 %v4355
          %v4542 = vunpack.c.l.b16 %v4356
          %v4543 = vunpack.c.h.b16 %v4356
          %v4544 = vunpack.c.l.b16 %v4357
          %v4545 = vunpack.c.h.b16 %v4357
          %v4546 = vunpack.c.l.b16 %v4358
          %v4547 = vunpack.c.h.b16 %v4358
          %v4548 = vunpack.c.l.b16 %v4359
          %v4549 = vunpack.c.h.b16 %v4359
          %v4550 = vunpack.c.l.b16 %v4360
          %v4551 = vunpack.c.h.b16 %v4360
          %v4552 = vunpack.c.l.b16 %v4361
          %v4553 = vunpack.c.h.b16 %v4361
          %v4554 = vunpack.c.l.b16 %v4362
          %v4555 = vunpack.c.h.b16 %v4362
          %v4556 = vunpack.c.l.b16 %v4363
          %v4557 = vunpack.c.h.b16 %v4363
          %v4558 = vunpack.c.l.b16 %v4364
          %v4559 = vunpack.c.h.b16 %v4364
          %v4560 = vunpack.c.l.b16 %v4365
          %v4561 = vunpack.c.h.b16 %v4365
          %v4562 = vunpack.c.l.b16 %v4366
          %v4563 = vunpack.c.h.b16 %v4366
          %v4564 = vunpack.c.l.b16 %v4367
          %v4565 = vunpack.c.h.b16 %v4367
          %v4566 = vunpack.c.l.b16 %v4368
          %v4567 = vunpack.c.h.b16 %v4368
          %v4568 = vunpack.c.l.b16 %v4369
          %v4569 = vunpack.c.h.b16 %v4369
          %v4570 = vunpack.c.l.b16 %v4370
          %v4571 = vunpack.c.h.b16 %v4370
          %v4572 = vunpack.c.l.b16 %v4371
          %v4573 = vunpack.c.h.b16 %v4371
          %v4574 = vunpack.c.l.b16 %v4372
          %v4575 = vunpack.c.h.b16 %v4372
          %v4576 = vunpack.c.l.b16 %v4373
          %v4577 = vunpack.c.h.b16 %v4373
          %v4578 = vpack.c.b16 %v4452, %v4450
          %v4579 = vpack.c.b16 %v4453, %v4451
          %v4580 = vpack.c.b16 %v4456, %v4454
          %v4581 = vpack.c.b16 %v4457, %v4455
          %v4582 = vpack.c.b16 %v4460, %v4458
          %v4583 = vpack.c.b16 %v4461, %v4459
          %v4584 = vpack.c.b16 %v4464, %v4462
          %v4585 = vpack.c.b16 %v4465, %v4463
          %v4586 = vpack.c.b16 %v4468, %v4466
          %v4587 = vpack.c.b16 %v4469, %v4467
          %v4588 = vpack.c.b16 %v4472, %v4470
          %v4589 = vpack.c.b16 %v4473, %v4471
          %v4590 = vpack.c.b16 %v4476, %v4474
          %v4591 = vpack.c.b16 %v4477, %v4475
          %v4592 = vpack.c.b16 %v4480, %v4478
          %v4593 = vpack.c.b16 %v4481, %v4479
          %v4594 = vpack.c.b16 %v4484, %v4482
          %v4595 = vpack.c.b16 %v4485, %v4483
          %v4596 = vpack.c.b16 %v4488, %v4486
          %v4597 = vpack.c.b16 %v4489, %v4487
          %v4598 = vpack.c.b16 %v4492, %v4490
          %v4599 = vpack.c.b16 %v4493, %v4491
          %v4600 = vpack.c.b16 %v4496, %v4494
          %v4601 = vpack.c.b16 %v4497, %v4495
          %v4602 = vpack.c.b16 %v4500, %v4498
          %v4603 = vpack.c.b16 %v4501, %v4499
          %v4604 = vpack.c.b16 %v4504, %v4502
          %v4605 = vpack.c.b16 %v4505, %v4503
          %v4606 = vpack.c.b16 %v4508, %v4506
          %v4607 = vpack.c.b16 %v4509, %v4507
          %v4608 = vpack.c.b16 %v4512, %v4510
          %v4609 = vpack.c.b16 %v4513, %v4511
          %v4610 = vpack.c.b16 %v4516, %v4514
          %v4611 = vpack.c.b16 %v4517, %v4515
          %v4612 = vpack.c.b16 %v4520, %v4518
          %v4613 = vpack.c.b16 %v4521, %v4519
          %v4614 = vpack.c.b16 %v4524, %v4522
          %v4615 = vpack.c.b16 %v4525, %v4523
          %v4616 = vpack.c.b16 %v4528, %v4526
          %v4617 = vpack.c.b16 %v4529, %v4527
          %v4618 = vpack.c.b16 %v4532, %v4530
          %v4619 = vpack.c.b16 %v4533, %v4531
          %v4620 = vpack.c.b16 %v4536, %v4534
          %v4621 = vpack.c.b16 %v4537, %v4535
          %v4622 = vpack.c.b16 %v4540, %v4538
          %v4623 = vpack.c.b16 %v4541, %v4539
          %v4624 = vpack.c.b16 %v4544, %v4542
          %v4625 = vpack.c.b16 %v4545, %v4543
          %v4626 = vpack.c.b16 %v4548, %v4546
          %v4627 = vpack.c.b16 %v4549, %v4547
          %v4628 = vpack.c.b16 %v4552, %v4550
          %v4629 = vpack.c.b16 %v4553, %v4551
          %v4630 = vpack.c.b16 %v4556, %v4554
          %v4631 = vpack.c.b16 %v4557, %v4555
          %v4632 = vpack.c.b16 %v4560, %v4558
          %v4633 = vpack.c.b16 %v4561, %v4559
          %v4634 = vpack.c.b16 %v4564, %v4562
          %v4635 = vpack.c.b16 %v4565, %v4563
          %v4636 = vpack.c.b16 %v4568, %v4566
          %v4637 = vpack.c.b16 %v4569, %v4567
          %v4638 = vpack.c.b16 %v4572, %v4570
          %v4639 = vpack.c.b16 %v4573, %v4571
          %v4640 = vpack.c.b16 %v4576, %v4574
          %v4641 = vpack.c.b16 %v4577, %v4575
          %4706 = vmatprep.subr.bf16.mxu0 %v4579
          %4707 = vmatpush1.bf16.msra.mxu0 %v4578
          %4708 = vmatprep.subr.bf16.mxu0 %v4581
          %4709 = vmatpush1.bf16.msra.mxu0 %v4580
          %4710 = vmatprep.subr.bf16.mxu0 %v4583
          %4711 = vmatpush1.bf16.msra.mxu0 %v4582
          %4712 = vmatprep.subr.bf16.mxu0 %v4585
          %4713 = vmatpush1.bf16.msra.mxu0 %v4584
          %4714 = vmatprep.subr.bf16.mxu0 %v4587
          %4715 = vmatpush1.bf16.msra.mxu0 %v4586
          %4716 = vmatprep.subr.bf16.mxu0 %v4589
          %4717 = vmatpush1.bf16.msra.mxu0 %v4588
          %4718 = vmatprep.subr.bf16.mxu0 %v4591
          %4719 = vmatpush1.bf16.msra.mxu0 %v4590
          %4720 = vmatprep.subr.bf16.mxu0 %v4593
          %4721 = vmatpush1.bf16.msra.mxu0 %v4592
          %4722 = vmatprep.subr.bf16.mxu0 %v4595
          %4723 = vmatpush1.bf16.msra.mxu0 %v4594
          %4724 = vmatprep.subr.bf16.mxu0 %v4597
          %4725 = vmatpush1.bf16.msra.mxu0 %v4596
          %4726 = vmatprep.subr.bf16.mxu0 %v4599
          %4727 = vmatpush1.bf16.msra.mxu0 %v4598
          %4728 = vmatprep.subr.bf16.mxu0 %v4601
          %4729 = vmatpush1.bf16.msra.mxu0 %v4600
          %4730 = vmatprep.subr.bf16.mxu0 %v4603
          %4731 = vmatpush1.bf16.msra.mxu0 %v4602
          %4732 = vmatprep.subr.bf16.mxu0 %v4605
          %4733 = vmatpush1.bf16.msra.mxu0 %v4604
          %4734 = vmatprep.subr.bf16.mxu0 %v4607
          %4735 = vmatpush1.bf16.msra.mxu0 %v4606
          %4736 = vmatprep.subr.bf16.mxu0 %v4609
          %4737 = vmatpush1.bf16.msra.mxu0 %v4608
          %4738 = vmatprep.mubr.bf16.mxu0 %v4307
          %4739 = vmatmul.mubr.bf16.gmra.mrb[0].mxu0 %v4306
          %v4740 = vpop.f32.mrb[0].mxu0
          %v4741 = vadd.f32 %v4379, %v4740
          %v4742 = vpop.f32.mrb[0].mxu0
          %v4743 = vadd.f32 %v4383, %v4742
          %v4744 = vpop.f32.mrb[0].mxu0
          %v4745 = vpop.f32.mrb[0].mxu0
          %4746 = vdwg.mxu0
          %4747 = vmatprep.subr.bf16.mxu0 %v4611
          %4748 = vmatpush1.bf16.msra.mxu0 %v4610
          %4749 = vmatprep.subr.bf16.mxu0 %v4613
          %4750 = vmatpush1.bf16.msra.mxu0 %v4612
          %4751 = vmatprep.subr.bf16.mxu0 %v4615
          %4752 = vmatpush1.bf16.msra.mxu0 %v4614
          %4753 = vmatprep.subr.bf16.mxu0 %v4617
          %4754 = vmatpush1.bf16.msra.mxu0 %v4616
          %4755 = vmatprep.subr.bf16.mxu0 %v4619
          %4756 = vmatpush1.bf16.msra.mxu0 %v4618
          %4757 = vmatprep.subr.bf16.mxu0 %v4621
          %4758 = vmatpush1.bf16.msra.mxu0 %v4620
          %4759 = vmatprep.subr.bf16.mxu0 %v4623
          %4760 = vmatpush1.bf16.msra.mxu0 %v4622
          %4761 = vmatprep.subr.bf16.mxu0 %v4625
          %4762 = vmatpush1.bf16.msra.mxu0 %v4624
          %4763 = vmatprep.subr.bf16.mxu0 %v4627
          %4764 = vmatpush1.bf16.msra.mxu0 %v4626
          %4765 = vmatprep.subr.bf16.mxu0 %v4629
          %4766 = vmatpush1.bf16.msra.mxu0 %v4628
          %4767 = vmatprep.subr.bf16.mxu0 %v4631
          %4768 = vmatpush1.bf16.msra.mxu0 %v4630
          %4769 = vmatprep.subr.bf16.mxu0 %v4633
          %4770 = vmatpush1.bf16.msra.mxu0 %v4632
          %4771 = vmatprep.subr.bf16.mxu0 %v4635
          %4772 = vmatpush1.bf16.msra.mxu0 %v4634
          %4773 = vmatprep.subr.bf16.mxu0 %v4637
          %4774 = vmatpush1.bf16.msra.mxu0 %v4636
          %4775 = vmatprep.subr.bf16.mxu0 %v4639
          %4776 = vmatpush1.bf16.msra.mxu0 %v4638
          %4777 = vmatprep.subr.bf16.mxu0 %v4641
          %4778 = vmatpush1.bf16.msra.mxu0 %v4640
          %4779 = vmatprep.mubr.bf16.mxu0 %v4309
          %4780 = vmatmul.mubr.bf16.gmra.mrb[0].mxu0 %v4308
          %v4781 = vpop.f32.mrb[0].mxu0
          %v4782 = vadd.f32 %v4741, %v4781
          %v4783 = vpop.f32.mrb[0].mxu0
          %v4784 = vadd.f32 %v4743, %v4783
          %v4785 = vpop.f32.mrb[0].mxu0
          %v4786 = vpop.f32.mrb[0].mxu0
          %4787 = vdwg.mxu0
          %v4788 = vmax.f32 %v4782, 0.0
          %v4789 = vmax.f32 %v4784, 0.0
          %v4790 = vpack.c.bf16 %v4788, %v4788
          %v4791 = vpack.c.bf16 %v4789, %v4789
          %v4792 = vld [vmem:[%s7] sm:$0xf]
          %v4793 = vld [vmem:[%s7 + $0x4] sm:$0xf]
          %v4794 = vld [vmem:[%s7 + $0x8] sm:$0xf]
          %v4795 = vld [vmem:[%s7 + $0xc] sm:$0xf]
          %v4796 = vld [vmem:[%s7 + $0x10] sm:$0xf]
          %v4797 = vld [vmem:[%s7 + $0x14] sm:$0xf]
          %v4798 = vld [vmem:[%s7 + $0x18] sm:$0xf]
          %v4799 = vld [vmem:[%s7 + $0x1c] sm:$0xf]
          %v4800 = vld [vmem:[%s7 + $0x20] sm:$0xf]
          %v4801 = vld [vmem:[%s7 + $0x24] sm:$0xf]
          %v4802 = vld [vmem:[%s7 + $0x28] sm:$0xf]
          %v4803 = vld [vmem:[%s7 + $0x2c] sm:$0xf]
          %v4804 = vld [vmem:[%s7 + $0x30] sm:$0xf]
          %v4805 = vld [vmem:[%s7 + $0x34] sm:$0xf]
          %v4806 = vld [vmem:[%s7 + $0x38] sm:$0xf]
          %v4807 = vld [vmem:[%s7 + $0x3c] sm:$0xf]
          %v4808 = vld [vmem:[%s7 + $0x40] sm:$0xf]
          %v4809 = vld [vmem:[%s7 + $0x44] sm:$0xf]
          %v4810 = vld [vmem:[%s7 + $0x48] sm:$0xf]
          %v4811 = vld [vmem:[%s7 + $0x4c] sm:$0xf]
          %v4812 = vld [vmem:[%s7 + $0x50] sm:$0xf]
          %v4813 = vld [vmem:[%s7 + $0x54] sm:$0xf]
          %v4814 = vld [vmem:[%s7 + $0x58] sm:$0xf]
          %v4815 = vld [vmem:[%s7 + $0x5c] sm:$0xf]
          %v4816 = vld [vmem:[%s7 + $0x60] sm:$0xf]
          %v4817 = vld [vmem:[%s7 + $0x64] sm:$0xf]
          %v4818 = vld [vmem:[%s7 + $0x68] sm:$0xf]
          %v4819 = vld [vmem:[%s7 + $0x6c] sm:$0xf]
          %v4820 = vld [vmem:[%s7 + $0x70] sm:$0xf]
          %v4821 = vld [vmem:[%s7 + $0x74] sm:$0xf]
          %v4822 = vld [vmem:[%s7 + $0x78] sm:$0xf]
          %v4823 = vld [vmem:[%s7 + $0x7c] sm:$0xf]
          %v4824 = vld [vmem:[%s8] sm:$0x1]
          %v4826 = vlaneseq
          %v4827 = vshrl.u32 %v4826, 7
          %v4828 = vsub.s32 0, %v4827
          %v4829 = vrot.slane %v4824, %v4828
          %v4863 = vunpack.c.l.b16 %v4792
          %v4864 = vunpack.c.l.b16 %v4793
          %v4865 = vunpack.c.l.b16 %v4794
          %v4866 = vunpack.c.l.b16 %v4795
          %v4867 = vunpack.c.l.b16 %v4796
          %v4868 = vunpack.c.l.b16 %v4797
          %v4869 = vunpack.c.l.b16 %v4798
          %v4870 = vunpack.c.l.b16 %v4799
          %v4871 = vunpack.c.l.b16 %v4800
          %v4872 = vunpack.c.l.b16 %v4801
          %v4873 = vunpack.c.l.b16 %v4802
          %v4874 = vunpack.c.l.b16 %v4803
          %v4875 = vunpack.c.l.b16 %v4804
          %v4876 = vunpack.c.l.b16 %v4805
          %v4877 = vunpack.c.l.b16 %v4806
          %v4878 = vunpack.c.l.b16 %v4807
          %v4879 = vunpack.c.l.b16 %v4808
          %v4880 = vunpack.c.l.b16 %v4809
          %v4881 = vunpack.c.l.b16 %v4810
          %v4882 = vunpack.c.l.b16 %v4811
          %v4883 = vunpack.c.l.b16 %v4812
          %v4884 = vunpack.c.l.b16 %v4813
          %v4885 = vunpack.c.l.b16 %v4814
          %v4886 = vunpack.c.l.b16 %v4815
          %v4887 = vunpack.c.l.b16 %v4816
          %v4888 = vunpack.c.l.b16 %v4817
          %v4889 = vunpack.c.l.b16 %v4818
          %v4890 = vunpack.c.l.b16 %v4819
          %v4891 = vunpack.c.l.b16 %v4820
          %v4892 = vunpack.c.l.b16 %v4821
          %v4893 = vunpack.c.l.b16 %v4822
          %v4894 = vunpack.c.l.b16 %v4823
          %v4895 = vpack.c.b16 %v4864, %v4863
          %v4896 = vpack.c.b16 %v4866, %v4865
          %v4897 = vpack.c.b16 %v4868, %v4867
          %v4898 = vpack.c.b16 %v4870, %v4869
          %v4899 = vpack.c.b16 %v4872, %v4871
          %v4900 = vpack.c.b16 %v4874, %v4873
          %v4901 = vpack.c.b16 %v4876, %v4875
          %v4902 = vpack.c.b16 %v4878, %v4877
          %v4903 = vpack.c.b16 %v4880, %v4879
          %v4904 = vpack.c.b16 %v4882, %v4881
          %v4905 = vpack.c.b16 %v4884, %v4883
          %v4906 = vpack.c.b16 %v4886, %v4885
          %v4907 = vpack.c.b16 %v4888, %v4887
          %v4908 = vpack.c.b16 %v4890, %v4889
          %v4909 = vpack.c.b16 %v4892, %v4891
          %v4910 = vpack.c.b16 %v4894, %v4893
          %4927 = vmatprep.subr.bf16.mxu0 0
          %4928 = vmatpush1.bf16.msra.mxu0 %v4895
          %4929 = vmatprep.subr.bf16.mxu0 0
          %4930 = vmatpush1.bf16.msra.mxu0 %v4896
          %4931 = vmatprep.subr.bf16.mxu0 0
          %4932 = vmatpush1.bf16.msra.mxu0 %v4897
          %4933 = vmatprep.subr.bf16.mxu0 0
          %4934 = vmatpush1.bf16.msra.mxu0 %v4898
          %4935 = vmatprep.subr.bf16.mxu0 0
          %4936 = vmatpush1.bf16.msra.mxu0 %v4899
          %4937 = vmatprep.subr.bf16.mxu0 0
          %4938 = vmatpush1.bf16.msra.mxu0 %v4900
          %4939 = vmatprep.subr.bf16.mxu0 0
          %4940 = vmatpush1.bf16.msra.mxu0 %v4901
          %4941 = vmatprep.subr.bf16.mxu0 0
          %4942 = vmatpush1.bf16.msra.mxu0 %v4902
          %4943 = vmatprep.subr.bf16.mxu0 0
          %4944 = vmatpush1.bf16.msra.mxu0 %v4903
          %4945 = vmatprep.subr.bf16.mxu0 0
          %4946 = vmatpush1.bf16.msra.mxu0 %v4904
          %4947 = vmatprep.subr.bf16.mxu0 0
          %4948 = vmatpush1.bf16.msra.mxu0 %v4905
          %4949 = vmatprep.subr.bf16.mxu0 0
          %4950 = vmatpush1.bf16.msra.mxu0 %v4906
          %4951 = vmatprep.subr.bf16.mxu0 0
          %4952 = vmatpush1.bf16.msra.mxu0 %v4907
          %4953 = vmatprep.subr.bf16.mxu0 0
          %4954 = vmatpush1.bf16.msra.mxu0 %v4908
          %4955 = vmatprep.subr.bf16.mxu0 0
          %4956 = vmatpush1.bf16.msra.mxu0 %v4909
          %4957 = vmatprep.subr.bf16.mxu0 0
          %4958 = vmatpush1.bf16.msra.mxu0 %v4910
          %4959 = vmatprep.mubr.bf16.mxu0 %v4791
          %4960 = vmatmul.mubr.bf16.gmra.mrb[0].mxu0 %v4790
          %v4961 = vpop.f32.mrb[0].mxu0
          %v4962 = vadd.f32 %v4829, %v4961
          %v4963 = vpop.f32.mrb[0].mxu0
          %v4964 = vpop.f32.mrb[0].mxu0
          %v4965 = vpop.f32.mrb[0].mxu0
          %4966 = vdwg.mxu0
          %v4967 = vmax.f32 %v4962, 0.0
          %v4968 = vpack.c.bf16 %v4967, %v4967
          %v4969 = vld [vmem:[%s9] sm:$0xf]
          %v4970 = vld [vmem:[%s9 + $0x4] sm:$0xf]
          %v4971 = vld [vmem:[%s9 + $0x8] sm:$0xf]
          %v4972 = vld [vmem:[%s9 + $0xc] sm:$0xf]
          %v4973 = vld [vmem:[%s9 + $0x10] sm:$0xf]
          %v4974 = vld [vmem:[%s9 + $0x14] sm:$0xf]
          %v4975 = vld [vmem:[%s9 + $0x18] sm:$0xf]
          %v4976 = vld [vmem:[%s9 + $0x1c] sm:$0xf]
          %v4977 = vld [vmem:[%s9 + $0x20] sm:$0xf]
          %v4978 = vld [vmem:[%s9 + $0x24] sm:$0xf]
          %v4979 = vld [vmem:[%s9 + $0x28] sm:$0xf]
          %v4980 = vld [vmem:[%s9 + $0x2c] sm:$0xf]
          %v4981 = vld [vmem:[%s9 + $0x30] sm:$0xf]
          %v4982 = vld [vmem:[%s9 + $0x34] sm:$0xf]
          %v4983 = vld [vmem:[%s9 + $0x38] sm:$0xf]
          %v4984 = vld [vmem:[%s9 + $0x3c] sm:$0xf]
          %v4985 = vld [vmem:[%s10] sm:$0x1]
          %v4987 = vlaneseq
          %v4988 = vshrl.u32 %v4987, 7
          %v4989 = vsub.s32 0, %v4988
          %v4990 = vrot.slane %v4985, %v4989
          %v5008 = vunpack.c.l.b16 %v4969
          %v5009 = vunpack.c.l.b16 %v4970
          %v5010 = vunpack.c.l.b16 %v4971
          %v5011 = vunpack.c.l.b16 %v4972
          %v5012 = vunpack.c.l.b16 %v4973
          %v5013 = vunpack.c.l.b16 %v4974
          %v5014 = vunpack.c.l.b16 %v4975
          %v5015 = vunpack.c.l.b16 %v4976
          %v5016 = vunpack.c.l.b16 %v4977
          %v5017 = vunpack.c.l.b16 %v4978
          %v5018 = vunpack.c.l.b16 %v4979
          %v5019 = vunpack.c.l.b16 %v4980
          %v5020 = vunpack.c.l.b16 %v4981
          %v5021 = vunpack.c.l.b16 %v4982
          %v5022 = vunpack.c.l.b16 %v4983
          %v5023 = vunpack.c.l.b16 %v4984
          %v5024 = vpack.c.b16 %v5009, %v5008
          %v5025 = vpack.c.b16 %v5011, %v5010
          %v5026 = vpack.c.b16 %v5013, %v5012
          %v5027 = vpack.c.b16 %v5015, %v5014
          %v5028 = vpack.c.b16 %v5017, %v5016
          %v5029 = vpack.c.b16 %v5019, %v5018
          %v5030 = vpack.c.b16 %v5021, %v5020
          %v5031 = vpack.c.b16 %v5023, %v5022
          %5040 = vmatprep.subr.bf16.mxu0 0
          %5041 = vmatpush1.bf16.msra.mxu0 %v5024
          %5042 = vmatprep.subr.bf16.mxu0 0
          %5043 = vmatpush1.bf16.msra.mxu0 %v5025
          %5044 = vmatprep.subr.bf16.mxu0 0
          %5045 = vmatpush1.bf16.msra.mxu0 %v5026
          %5046 = vmatprep.subr.bf16.mxu0 0
          %5047 = vmatpush1.bf16.msra.mxu0 %v5027
          %5048 = vmatprep.subr.bf16.mxu0 0
          %5049 = vmatpush1.bf16.msra.mxu0 %v5028
          %5050 = vmatprep.subr.bf16.mxu0 0
          %5051 = vmatpush1.bf16.msra.mxu0 %v5029
          %5052 = vmatprep.subr.bf16.mxu0 0
          %5053 = vmatpush1.bf16.msra.mxu0 %v5030
          %5054 = vmatprep.subr.bf16.mxu0 0
          %5055 = vmatpush1.bf16.msra.mxu0 %v5031
          %5056 = vmatprep.subr.bf16.mxu0 0
          %5057 = vmatpush1.bf16.msra.mxu0 0
          %5058 = vmatprep.subr.bf16.mxu0 0
          %5059 = vmatpush1.bf16.msra.mxu0 0
          %5060 = vmatprep.subr.bf16.mxu0 0
          %5061 = vmatpush1.bf16.msra.mxu0 0
          %5062 = vmatprep.subr.bf16.mxu0 0
          %5063 = vmatpush1.bf16.msra.mxu0 0
          %5064 = vmatprep.subr.bf16.mxu0 0
          %5065 = vmatpush1.bf16.msra.mxu0 0
          %5066 = vmatprep.subr.bf16.mxu0 0
          %5067 = vmatpush1.bf16.msra.mxu0 0
          %5068 = vmatprep.subr.bf16.mxu0 0
          %5069 = vmatpush1.bf16.msra.mxu0 0
          %5070 = vmatprep.subr.bf16.mxu0 0
          %5071 = vmatpush1.bf16.msra.mxu0 0
          %5072 = vmatprep.mubr.bf16.mxu0 0
          %5073 = vmatmul.mubr.bf16.gmra.mrb[0].mxu0 %v4968
          %v5074 = vpop.f32.mrb[0].mxu0
          %v5075 = vadd.f32 %v4990, %v5074
          %v5076 = vpop.f32.mrb[0].mxu0
          %v5077 = vpop.f32.mrb[0].mxu0
          %v5078 = vpop.f32.mrb[0].mxu0
          %5079 = vdwg.mxu0
          %v5080 = vmax.f32 %v5075, 0.0
          %v5081 = vpack.c.bf16 %v5080, %v5080
          %v5082 = vld [vmem:[%s11] sm:$0xf]
          %v5083 = vld [vmem:[%s11 + $0x4] sm:$0xf]
          %v5084 = vld [vmem:[%s11 + $0x8] sm:$0xf]
          %v5085 = vld [vmem:[%s11 + $0xc] sm:$0xf]
          %v5086 = vld [vmem:[%s11 + $0x10] sm:$0xf]
          %v5087 = vld [vmem:[%s11 + $0x14] sm:$0xf]
          %v5088 = vld [vmem:[%s11 + $0x18] sm:$0xf]
          %v5089 = vld [vmem:[%s11 + $0x1c] sm:$0xf]
          %v5090 = vld [vmem:[%s12] sm:$0x1]
          %v5092 = vlaneseq
          %v5093 = vshrl.u32 %v5092, 7
          %v5094 = vsub.s32 0, %v5093
          %v5095 = vrot.slane %v5090, %v5094
          %v5105 = vunpack.c.l.b16 %v5082
          %v5106 = vunpack.c.l.b16 %v5083
          %v5107 = vunpack.c.l.b16 %v5084
          %v5108 = vunpack.c.l.b16 %v5085
          %v5109 = vunpack.c.l.b16 %v5086
          %v5110 = vunpack.c.l.b16 %v5087
          %v5111 = vunpack.c.l.b16 %v5088
          %v5112 = vunpack.c.l.b16 %v5089
          %v5113 = vpack.c.b16 %v5106, %v5105
          %v5114 = vpack.c.b16 %v5108, %v5107
          %v5115 = vpack.c.b16 %v5110, %v5109
          %v5116 = vpack.c.b16 %v5112, %v5111
          %vm5121 = vcmask 523264
          %v5123 = vsel %vm5121, %v5081, 0
          %5125 = vmatprep.subr.bf16.mxu0 0
          %5126 = vmatpush1.bf16.msra.mxu0 %v5113
          %5127 = vmatprep.subr.bf16.mxu0 0
          %5128 = vmatpush1.bf16.msra.mxu0 %v5114
          %5129 = vmatprep.subr.bf16.mxu0 0
          %5130 = vmatpush1.bf16.msra.mxu0 %v5115
          %5131 = vmatprep.subr.bf16.mxu0 0
          %5132 = vmatpush1.bf16.msra.mxu0 %v5116
          %5133 = vmatprep.subr.bf16.mxu0 0
          %5134 = vmatpush1.bf16.msra.mxu0 0
          %5135 = vmatprep.subr.bf16.mxu0 0
          %5136 = vmatpush1.bf16.msra.mxu0 0
          %5137 = vmatprep.subr.bf16.mxu0 0
          %5138 = vmatpush1.bf16.msra.mxu0 0
          %5139 = vmatprep.subr.bf16.mxu0 0
          %5140 = vmatpush1.bf16.msra.mxu0 0
          %5141 = vmatprep.subr.bf16.mxu0 0
          %5142 = vmatpush1.bf16.msra.mxu0 0
          %5143 = vmatprep.subr.bf16.mxu0 0
          %5144 = vmatpush1.bf16.msra.mxu0 0
          %5145 = vmatprep.subr.bf16.mxu0 0
          %5146 = vmatpush1.bf16.msra.mxu0 0
          %5147 = vmatprep.subr.bf16.mxu0 0
          %5148 = vmatpush1.bf16.msra.mxu0 0
          %5149 = vmatprep.subr.bf16.mxu0 0
          %5150 = vmatpush1.bf16.msra.mxu0 0
          %5151 = vmatprep.subr.bf16.mxu0 0
          %5152 = vmatpush1.bf16.msra.mxu0 0
          %5153 = vmatprep.subr.bf16.mxu0 0
          %5154 = vmatpush1.bf16.msra.mxu0 0
          %5155 = vmatprep.subr.bf16.mxu0 0
          %5156 = vmatpush1.bf16.msra.mxu0 0
          %5157 = vmatprep.mubr.bf16.mxu0 0
          %5158 = vmatmul.mubr.bf16.gmra.mrb[0].mxu0 %v5123
          %v5159 = vpop.f32.mrb[0].mxu0
          %v5160 = vadd.f32 %v5095, %v5159
          %v5161 = vpop.f32.mrb[0].mxu0
          %v5162 = vpop.f32.mrb[0].mxu0
          %v5163 = vpop.f32.mrb[0].mxu0
          %5164 = vdwg.mxu0
          %v5165 = vmax.f32 %v5160, 0.0
          %vm5166 = vcmask 64512
          %5167 = vst.msk [vmem:[#allocation3] sm:$0xff] %vm5166, %v5165
        $region80: #{net_forward.3} parent=71 // pred_fallthru
          _
        // Predicated region
        $region81: #{net_forward.3} parent=71 // pred_check
          %p5168 = pneg %p316
        $region82: #{net_forward.3} parent=71 // pred_check_branch
          %5170 = sbr.rel (%p5168) target = $region84
        $region83: #{net_forward.3} parent=71 // pred_region
          %s5172 = ssub.s32 128, 128
          %5173 = vsyncadd [#allocation4], %s5172
          %s5175 = sshll.u32 [#allocation3], 4
          %s5176 = int_to_ptr.vmem [resolvable:$true] %s5175
          %5178 = dma.vmem_to_hbm [thread:$0]  %s5176, 128, %s13, [#allocation4]
        $region84: #{net_forward.3} parent=71 // pred_fallthru
          _
        // Predicated region
        $region85: #{net_forward.3} parent=71 // pred_check
          %p5179 = pneg %p316
        $region86: #{net_forward.3} parent=71 // pred_check_branch
          %5181 = sbr.rel (%p5179) target = $region88
        $region87: #{net_forward.3} parent=71 // pred_region
          %5182 = dma.done [#allocation4], 128
        $region88: #{net_forward.3} parent=71 // pred_fallthru
          _
      $region72: #{net_forward.3} parent=5 // pred_fallthru
        _
      %p5183 = scmp.le.s32.totalorder 2, %s20
      // Predicated region
      $region89: #{net_forward.3} parent=5 // pred_check
        %p5184 = pneg %p5183
      $region90: #{net_forward.3} parent=5 // pred_check_branch
        %5186 = sbr.rel (%p5184) target = $region92
      $region91: #{net_forward.3} parent=5 // pred_region
        %s5187 = ssub.s32 %s20, 2
      $region92: #{net_forward.3} parent=5 // pred_fallthru
        _
    $region6: #{net_forward.3} parent=1 // loop_footer
      %s24 = sadd.s32 1, %s20
    $region7: #{net_forward.3} parent=1 // loop_footer_branch
      %19 = sbr.rel target = $region3
    $region8: #{net_forward.3} parent=1 // loop_exit
      _
    %5188 = vsyncpa [#allocation4], 1
    %s5189 = scalar_lea.sflag [#allocation4], 1
    %5190 = vsyncpa %s5189, 1

// kernel: net_forward.2
$region0: #{net_forward.2}
  #allocation0 [shape = 'u32[]', space=smem, size = 0x4, offset = 0x4, fixed_abs, tag = 'smem constant byte address 0x4 - core index']
  #allocation1 [shape = 'u32[144,128]{1,0:T(1,128)}', space=vmem, size = 0x12000, scoped, tag = 'internal scratch']
  #allocation2 [shape = 'bf16[8,4096]{1,0:T(8,128)(2,1)}', space=vmem, size = 0x10000, scoped, tag = 'scratch operand']
  %s0 = inlined_call_operand.vmem [shape: bf16[8,32], index: 0, kind: input, shape index: {}]
  %s1 = inlined_call_operand.hbm [shape: bf16[32,4096], index: 1, kind: input, shape index: {}]
  %s2 = inlined_call_operand.hbm [shape: f32[1,4096], index: 2, kind: input, shape index: {}]
  %s3 = inlined_call_operand.hbm [shape: bf16[4096,2048], index: 3, kind: input, shape index: {}]
  %s4 = inlined_call_operand.hbm [shape: f32[1,2048], index: 4, kind: input, shape index: {}]
  %s5 = inlined_call_operand.vmem [shape: f32[8,2048], index: 5, kind: output, shape index: {}]
  %s6 = sld [smem:[#allocation0]]
  $region77: #{net_forward.2} parent=0
    _
  %s8 = ssub.s32 1, %s6
  %s9 = scalar_select 0, %s8, %s6
  $region1: #{net_forward.2} parent=0
    #allocation3 [shape = 'u8[262144]{0}', space=vmem, size = 0x40000, scoped, tag = 'input window, operand 1, single buffered']
    #allocation4 [shape = 's32[2]{0}', space=sflag, size = 0x8, scoped, tag = 'scoped memory for net_forward.2']
    #allocation5 [shape = 'u8[16384]{0}', space=vmem, size = 0x4000, scoped, tag = 'input window, operand 2, single buffered']
    #allocation6 [shape = 's32[1]{0}', space=sflag, size = 0x4, scoped, tag = 'scoped memory for net_forward.2']
    #allocation7 [shape = 'u8[4194304]{0}', space=vmem, size = 0x400000, scoped, tag = 'input window, operand 3']
    #allocation8 [shape = 'u8[8192]{0}', space=vmem, size = 0x2000, scoped, tag = 'input window, operand 4']
    %10 = vsyncpa [#allocation4], 0
    %11 = vsyncpa [#allocation6], 0
    loop: start=0, step=1, limit=10
    $region2: #{net_forward.2} parent=1 // loop_pre_header
      _
    $region3: #{net_forward.2} parent=1 // loop_header
      %s13 = sphi 0, %s17
      %p14 = scmp.ge.s32.totalorder %s13, 10
      %s20 = sphi 0, %s32
      %s21 = sphi 0, %s28
      %s22 = sphi 0, %s20
      %s23 = sphi 0, %s21
      %s24 = sphi 0, %s22
      %s25 = sphi 0, %s23
      %s33 = sphi 0, %s33
      %s35 = sphi 0, %s33
      %s36 = sphi 0, %s35
      %s50 = sphi 0, %s36
      %s54 = sphi 0, %s54
      %s56 = sphi 0, %s54
      %s57 = sphi 0, %s56
      %s71 = sphi 0, %s57
      %s75 = sphi 0, %s75
      %s77 = sphi 0, %s75
      %s78 = sphi 0, %s77
      %s92 = sphi 0, %s78
      %s100 = sphi 0, %s102
      %s103 = sphi 0, %s100
      %s104 = sphi 0, %s103
      %s120 = sphi 0, %s104
      %s126 = sphi 0, %s128
      %s129 = sphi 0, %s126
      %s130 = sphi 0, %s129
      %s146 = sphi 0, %s130
      %s152 = sphi 0, %s154
      %s155 = sphi 0, %s152
      %s156 = sphi 0, %s155
      %s172 = sphi 0, %s156
    $region4: #{net_forward.2} parent=1 // loop_header_branch
      %16 = sbr.rel (%p14) target = $region8
    $region5: #{net_forward.2} parent=1 // loop_body
      %s18 = ssub.s32 %s13, 1
      %s19 = ssub.s32 %s13, 2
      %s26 = sadd.s32 1, %s21
      %p27 = scmp.ge.s32.totalorder %s26, 4
      %s28 = scalar_select %p27, 0, %s26
      %s29 = sadd.s32 1, %s20
      %s30 = scalar_select %p27, %s29, %s20
      %p31 = scmp.ge.s32.totalorder %s30, 2
      %s32 = scalar_select %p31, 0, %s30
      %s34 = sadd.s32 %s33, 1
      %p37 = scmp.eq.s32.totalorder %s13, 7
      %p38 = scmp.ne.s32.totalorder %s33, %s35
      %p39 = scmp.eq.s32.totalorder %s13, 0
      %p40 = por %p38, %p39
      %p41 = scmp.ne.s32.totalorder %s33, %s35
      %p42 = scmp.eq.s32.totalorder %s18, 7
      %p43 = por %p41, %p42
      %p44 = scmp.ne.s32.totalorder %s35, %s36
      %p45 = scmp.eq.s32.totalorder %s18, 0
      %p46 = por %p44, %p45
      %p47 = scmp.ne.s32.totalorder %s35, %s36
      %p48 = scmp.eq.s32.totalorder %s19, 7
      %p49 = por %p47, %p48
      %p51 = scmp.ne.s32.totalorder %s36, %s50
      %p52 = scmp.eq.s32.totalorder %s19, 0
      %p53 = por %p51, %p52
      %s55 = sadd.s32 %s54, 1
      %p58 = scmp.eq.s32.totalorder %s13, 7
      %p59 = scmp.ne.s32.totalorder %s54, %s56
      %p60 = scmp.eq.s32.totalorder %s13, 0
      %p61 = por %p59, %p60
      %p62 = scmp.ne.s32.totalorder %s54, %s56
      %p63 = scmp.eq.s32.totalorder %s18, 7
      %p64 = por %p62, %p63
      %p65 = scmp.ne.s32.totalorder %s56, %s57
      %p66 = scmp.eq.s32.totalorder %s18, 0
      %p67 = por %p65, %p66
      %p68 = scmp.ne.s32.totalorder %s56, %s57
      %p69 = scmp.eq.s32.totalorder %s19, 7
      %p70 = por %p68, %p69
      %p72 = scmp.ne.s32.totalorder %s57, %s71
      %p73 = scmp.eq.s32.totalorder %s19, 0
      %p74 = por %p72, %p73
      %s76 = sadd.s32 %s75, 1
      %p79 = scmp.eq.s32.totalorder %s13, 7
      %p80 = scmp.ne.s32.totalorder %s75, %s77
      %p81 = scmp.eq.s32.totalorder %s13, 0
      %p82 = por %p80, %p81
      %p83 = scmp.ne.s32.totalorder %s75, %s77
      %p84 = scmp.eq.s32.totalorder %s18, 7
      %p85 = por %p83, %p84
      %p86 = scmp.ne.s32.totalorder %s77, %s78
      %p87 = scmp.eq.s32.totalorder %s18, 0
      %p88 = por %p86, %p87
      %p89 = scmp.ne.s32.totalorder %s77, %s78
      %p90 = scmp.eq.s32.totalorder %s19, 7
      %p91 = por %p89, %p90
      %p93 = scmp.ne.s32.totalorder %s78, %s92
      %p94 = scmp.eq.s32.totalorder %s19, 0
      %p95 = por %p93, %p94
      %s96 = ssub.s32 %s21, %s28
      %s97 = ssub.s32 %s20, %s32
      %s98 = sor.u32 %s96, %s97
      %p99 = scmp.eq.s32.totalorder %s98, 0
      %s101 = sadd.s32 %s100, 1
      %s102 = scalar_select %p99, %s100, %s101
      %p105 = pneg %p99
      %p106 = scmp.eq.s32.totalorder %s13, 7
      %p107 = por %p105, %p106
      %p108 = scmp.ne.s32.totalorder %s100, %s103
      %p109 = scmp.eq.s32.totalorder %s13, 0
      %p110 = por %p108, %p109
      %p111 = scmp.ne.s32.totalorder %s100, %s103
      %p112 = scmp.eq.s32.totalorder %s18, 7
      %p113 = por %p111, %p112
      %p114 = scmp.ne.s32.totalorder %s103, %s104
      %p115 = scmp.eq.s32.totalorder %s18, 0
      %p116 = por %p114, %p115
      %p117 = scmp.ne.s32.totalorder %s103, %s104
      %p118 = scmp.eq.s32.totalorder %s19, 7
      %p119 = por %p117, %p118
      %p121 = scmp.ne.s32.totalorder %s104, %s120
      %p122 = scmp.eq.s32.totalorder %s19, 0
      %p123 = por %p121, %p122
      %s124 = ssub.s32 %s20, %s32
      %p125 = scmp.eq.s32.totalorder %s124, 0
      %s127 = sadd.s32 %s126, 1
      %s128 = scalar_select %p125, %s126, %s127
      %p131 = pneg %p125
      %p132 = scmp.eq.s32.totalorder %s13, 7
      %p133 = por %p131, %p132
      %p134 = scmp.ne.s32.totalorder %s126, %s129
      %p135 = scmp.eq.s32.totalorder %s13, 0
      %p136 = por %p134, %p135
      %p137 = scmp.ne.s32.totalorder %s126, %s129
      %p138 = scmp.eq.s32.totalorder %s18, 7
      %p139 = por %p137, %p138
      %p140 = scmp.ne.s32.totalorder %s129, %s130
      %p141 = scmp.eq.s32.totalorder %s18, 0
      %p142 = por %p140, %p141
      %p143 = scmp.ne.s32.totalorder %s129, %s130
      %p144 = scmp.eq.s32.totalorder %s19, 7
      %p145 = por %p143, %p144
      %p147 = scmp.ne.s32.totalorder %s130, %s146
      %p148 = scmp.eq.s32.totalorder %s19, 0
      %p149 = por %p147, %p148
      %s150 = ssub.s32 %s20, %s32
      %p151 = scmp.eq.s32.totalorder %s150, 0
      %s153 = sadd.s32 %s152, 1
      %s154 = scalar_select %p151, %s152, %s153
      %p157 = pneg %p151
      %p158 = scmp.eq.s32.totalorder %s13, 7
      %p159 = por %p157, %p158
      %p160 = scmp.ne.s32.totalorder %s152, %s155
      %p161 = scmp.eq.s32.totalorder %s13, 0
      %p162 = por %p160, %p161
      %p163 = scmp.ne.s32.totalorder %s152, %s155
      %p164 = scmp.eq.s32.totalorder %s18, 7
      %p165 = por %p163, %p164
      %p166 = scmp.ne.s32.totalorder %s155, %s156
      %p167 = scmp.eq.s32.totalorder %s18, 0
      %p168 = por %p166, %p167
      %p169 = scmp.ne.s32.totalorder %s155, %s156
      %p170 = scmp.eq.s32.totalorder %s19, 7
      %p171 = por %p169, %p170
      %p173 = scmp.ne.s32.totalorder %s156, %s172
      %p174 = scmp.eq.s32.totalorder %s19, 0
      %p175 = por %p173, %p174
      %p176 = scmp.le.s32.totalorder 1, %s13
      %p177 = scmp.lt.s32.totalorder %s13, 9
      %p178 = pnand %p176, %p177
      %p179 = pneg %p178
      // Predicated region
      $region9: #{net_forward.2} parent=5 // pred_check
        _
      $region10: #{net_forward.2} parent=5 // pred_check_branch
        %181 = sbr.rel (%p178) target = $region12
      $region11: #{net_forward.2} parent=5 // pred_region
        %s182 = ssub.s32 %s13, 1
        // Predicated region
        $region13: #{net_forward.2} parent=11 // pred_check
          %p183 = pneg %p46
        $region14: #{net_forward.2} parent=11 // pred_check_branch
          %185 = sbr.rel (%p183) target = $region16
        $region15: #{net_forward.2} parent=11 // pred_region
          _
        $region16: #{net_forward.2} parent=11 // pred_fallthru
          _
        // Predicated region
        $region17: #{net_forward.2} parent=11 // pred_check
          %p186 = pneg %p67
        $region18: #{net_forward.2} parent=11 // pred_check_branch
          %188 = sbr.rel (%p186) target = $region20
        $region19: #{net_forward.2} parent=11 // pred_region
          %s190 = ssub.s32 8192, 8192
          %191 = vsyncadd [#allocation4], %s190
          %s192 = sshll.u32 [#allocation3], 4
          %s193 = int_to_ptr.vmem [resolvable:$true] %s192
          %198 = dma.hbm_to_vmem [thread:$0]  %s1, 8192, %s193, [#allocation4], 2048, 2048, 128
        $region20: #{net_forward.2} parent=11 // pred_fallthru
          _
        // Predicated region
        $region21: #{net_forward.2} parent=11 // pred_check
          %p199 = pneg %p88
        $region22: #{net_forward.2} parent=11 // pred_check_branch
          %201 = sbr.rel (%p199) target = $region24
        $region23: #{net_forward.2} parent=11 // pred_region
          %s203 = ssub.s32 512, 512
          %204 = vsyncadd [#allocation6], %s203
          %s206 = sshll.u32 [#allocation5], 4
          %s207 = int_to_ptr.vmem [resolvable:$true] %s206
          %209 = dma.hbm_to_vmem [thread:$0]  %s2, 512, %s207, [#allocation6]
        $region24: #{net_forward.2} parent=11 // pred_fallthru
          _
      $region12: #{net_forward.2} parent=5 // pred_fallthru
        _
      %p210 = scmp.lt.s32.totalorder %s13, 8
      // Predicated region
      $region25: #{net_forward.2} parent=5 // pred_check
        %p211 = pneg %p210
      $region26: #{net_forward.2} parent=5 // pred_check_branch
        %213 = sbr.rel (%p211) target = $region28
      $region27: #{net_forward.2} parent=5 // pred_region
        // Predicated region
        $region29: #{net_forward.2} parent=27 // pred_check
          %p214 = pneg %p110
        $region30: #{net_forward.2} parent=27 // pred_check_branch
          %216 = sbr.rel (%p214) target = $region32
        $region31: #{net_forward.2} parent=27 // pred_region
          %s217 = sand.u32 %s13, 1
          %s218 = scalar_lea.sflag [#allocation4], %s217
          %s219 = sand.u32 %s100, 1
          %s220 = smul.addr %s219, 4096
          %s221 = scalar_lea.vmem [#allocation7], %s220
          %s222 = smul.u32 128, %s21
          %s223 = smul.u32 8, %s20
          %s225 = ssub.s32 65536, 65536
          %226 = vsyncadd %s218, %s225
          %s227 = smul.addr %s222, 16
          %s228 = sadd.s32 %s223, %s227
          %s229 = smul.addr %s228, 64
          %s230 = scalar_lea.hbm %s3, %s229
          %s231 = sshll.u32 %s221, 4
          %s232 = int_to_ptr.vmem [resolvable:$true] %s231
          %237 = dma.hbm_to_vmem [thread:$0]  %s230, 65536, %s232, %s218, 1024, 512, 32
        $region32: #{net_forward.2} parent=27 // pred_fallthru
          _
        // Predicated region
        $region33: #{net_forward.2} parent=27 // pred_check
          %p238 = pneg %p136
        $region34: #{net_forward.2} parent=27 // pred_check_branch
          %240 = sbr.rel (%p238) target = $region36
        $region35: #{net_forward.2} parent=27 // pred_region
          %s241 = sand.u32 %s13, 1
          %s242 = scalar_lea.sflag [#allocation4], %s241
          %s243 = sand.u32 %s126, 1
          %s244 = smul.addr %s243, 8
          %s245 = scalar_lea.vmem [#allocation8], %s244
          %s246 = smul.u32 8, %s20
          %s248 = ssub.s32 128, 128
          %249 = vsyncadd %s242, %s248
          %s250 = smul.addr %s246, 16
          %s251 = scalar_lea.hbm %s4, %s250
          %s253 = sshll.u32 %s245, 4
          %s254 = int_to_ptr.vmem [resolvable:$true] %s253
          %256 = dma.hbm_to_vmem [thread:$0]  %s251, 128, %s254, %s242
        $region36: #{net_forward.2} parent=27 // pred_fallthru
          _
      $region28: #{net_forward.2} parent=5 // pred_fallthru
        _
      %p257 = scmp.le.s32.totalorder 1, %s13
      %p258 = scmp.lt.s32.totalorder %s13, 9
      %p259 = pnand %p257, %p258
      %p260 = pneg %p259
      // Predicated region
      $region37: #{net_forward.2} parent=5 // pred_check
        _
      $region38: #{net_forward.2} parent=5 // pred_check_branch
        %262 = sbr.rel (%p259) target = $region40
      $region39: #{net_forward.2} parent=5 // pred_region
        %s263 = ssub.s32 %s13, 1
        // Predicated region
        $region41: #{net_forward.2} parent=39 // pred_check
          %p264 = pneg %p67
        $region42: #{net_forward.2} parent=39 // pred_check_branch
          %266 = sbr.rel (%p264) target = $region44
        $region43: #{net_forward.2} parent=39 // pred_region
          %267 = dma.done [#allocation4], 8192
        $region44: #{net_forward.2} parent=39 // pred_fallthru
          _
        // Predicated region
        $region45: #{net_forward.2} parent=39 // pred_check
          %p268 = pneg %p88
        $region46: #{net_forward.2} parent=39 // pred_check_branch
          %270 = sbr.rel (%p268) target = $region48
        $region47: #{net_forward.2} parent=39 // pred_region
          %271 = dma.done [#allocation6], 512
        $region48: #{net_forward.2} parent=39 // pred_fallthru
          _
        %s272 = sand.u32 %s18, 1
        %s273 = scalar_lea.sflag [#allocation4], %s272
        %s274 = sand.u32 %s103, 1
        %s275 = smul.addr %s274, 4096
        %s276 = scalar_lea.vmem [#allocation7], %s275
        // Predicated region
        $region49: #{net_forward.2} parent=39 // pred_check
          %p277 = pneg %p116
        $region50: #{net_forward.2} parent=39 // pred_check_branch
          %279 = sbr.rel (%p277) target = $region52
        $region51: #{net_forward.2} parent=39 // pred_region
          %280 = dma.done %s273, 65536
        $region52: #{net_forward.2} parent=39 // pred_fallthru
          _
        %s281 = sand.u32 %s18, 1
        %s282 = scalar_lea.sflag [#allocation4], %s281
        %s283 = sand.u32 %s129, 1
        %s284 = smul.addr %s283, 8
        %s285 = scalar_lea.vmem [#allocation8], %s284
        // Predicated region
        $region53: #{net_forward.2} parent=39 // pred_check
          %p286 = pneg %p142
        $region54: #{net_forward.2} parent=39 // pred_check_branch
          %288 = sbr.rel (%p286) target = $region56
        $region55: #{net_forward.2} parent=39 // pred_region
          %289 = dma.done %s282, 128
        $region56: #{net_forward.2} parent=39 // pred_fallthru
          _
        %p290 = pneg %p46
        %p291 = pneg %p43
        %p292 = pneg %p67
        %p293 = pneg %p64
        %p294 = pneg %p88
        %p295 = pneg %p85
        %s296 = sand.u32 %s18, 1
        %s297 = scalar_lea.sflag [#allocation4], %s296
        %s298 = sand.u32 %s103, 1
        %s299 = smul.addr %s298, 4096
        %s300 = scalar_lea.vmem [#allocation7], %s299
        %p301 = pneg %p116
        %p302 = pneg %p113
        %s303 = sand.u32 %s18, 1
        %s304 = scalar_lea.sflag [#allocation4], %s303
        %s305 = sand.u32 %s129, 1
        %s306 = smul.addr %s305, 8
        %s307 = scalar_lea.vmem [#allocation8], %s306
        %p308 = pneg %p142
        %p309 = pneg %p139
        %p310 = pneg %p168
        %p311 = pneg %p165
        %s312 = smul.u32 8, %s22
        %p313 = scmp.lt.s32.totalorder %s312, 15
        %s314 = scalar_select %p313, %s312, 15
        %s315 = smul.addr %s314, 8
        %s316 = scalar_lea.vmem %s5, %s315
        %s317 = smul.u32 128, %s23
        %s318 = smul.u32 8, %s22
        %s319 = smul.u32 8, %s22
        %s320 = smul.u32 8, %s22
        %p321 = scmp.lt.s32.totalorder %s320, 15
        %s322 = scalar_select %p321, %s320, 15
        %s323 = smul.addr %s322, 8
        %s324 = scalar_lea.vmem %s5, %s323
        %s325 = smul.u32 8, %s22
        %p327 = scmp.eq.s32.totalorder %s23, 0
        // Predicated region
        $region57: #{net_forward.2} parent=39 // pred_check
          %p328 = pneg %p327
        $region58: #{net_forward.2} parent=39 // pred_check_branch
          %330 = sbr.rel (%p328) target = $region60
        $region59: #{net_forward.2} parent=39 // pred_region
          %v331 = vld [vmem:[%s0] sm:$0xf]
          %v332 = vld [vmem:[#allocation3] sm:$0xff]
          %v333 = vld [vmem:[#allocation3 + $0x8] sm:$0xff]
          %v334 = vld [vmem:[#allocation3 + $0x10] sm:$0xff]
          %v335 = vld [vmem:[#allocation3 + $0x18] sm:$0xff]
          %v336 = vld [vmem:[#allocation3 + $0x20] sm:$0xff]
          %v337 = vld [vmem:[#allocation3 + $0x28] sm:$0xff]
          %v338 = vld [vmem:[#allocation3 + $0x30] sm:$0xff]
          %v339 = vld [vmem:[#allocation3 + $0x38] sm:$0xff]
          %v340 = vld [vmem:[#allocation3 + $0x40] sm:$0xff]
          %v341 = vld [vmem:[#allocation3 + $0x48] sm:$0xff]
          %v342 = vld [vmem:[#allocation3 + $0x50] sm:$0xff]
          %v343 = vld [vmem:[#allocation3 + $0x58] sm:$0xff]
          %v344 = vld [vmem:[#allocation3 + $0x60] sm:$0xff]
          %v345 = vld [vmem:[#allocation3 + $0x68] sm:$0xff]
          %v346 = vld [vmem:[#allocation3 + $0x70] sm:$0xff]
          %v347 = vld [vmem:[#allocation3 + $0x78] sm:$0xff]
          %v348 = vld [vmem:[#allocation3 + $0x80] sm:$0xff]
          %v349 = vld [vmem:[#allocation3 + $0x88] sm:$0xff]
          %v350 = vld [vmem:[#allocation3 + $0x90] sm:$0xff]
          %v351 = vld [vmem:[#allocation3 + $0x98] sm:$0xff]
          %v352 = vld [vmem:[#allocation3 + $0xa0] sm:$0xff]
          %v353 = vld [vmem:[#allocation3 + $0xa8] sm:$0xff]
          %v354 = vld [vmem:[#allocation3 + $0xb0] sm:$0xff]
          %v355 = vld [vmem:[#allocation3 + $0xb8] sm:$0xff]
          %v356 = vld [vmem:[#allocation3 + $0xc0] sm:$0xff]
          %v357 = vld [vmem:[#allocation3 + $0xc8] sm:$0xff]
          %v358 = vld [vmem:[#allocation3 + $0xd0] sm:$0xff]
          %v359 = vld [vmem:[#allocation3 + $0xd8] sm:$0xff]
          %v360 = vld [vmem:[#allocation3 + $0xe0] sm:$0xff]
          %v361 = vld [vmem:[#allocation3 + $0xe8] sm:$0xff]
          %v362 = vld [vmem:[#allocation3 + $0xf0] sm:$0xff]
          %v363 = vld [vmem:[#allocation3 + $0xf8] sm:$0xff]
          %v364 = vld [vmem:[#allocation3 + $0x100] sm:$0xff]
          %v365 = vld [vmem:[#allocation3 + $0x108] sm:$0xff]
          %v366 = vld [vmem:[#allocation3 + $0x110] sm:$0xff]
          %v367 = vld [vmem:[#allocation3 + $0x118] sm:$0xff]
          %v368 = vld [vmem:[#allocation3 + $0x120] sm:$0xff]
          %v369 = vld [vmem:[#allocation3 + $0x128] sm:$0xff]
          %v370 = vld [vmem:[#allocation3 + $0x130] sm:$0xff]
          %v371 = vld [vmem:[#allocation3 + $0x138] sm:$0xff]
          %v372 = vld [vmem:[#allocation3 + $0x140] sm:$0xff]
          %v373 = vld [vmem:[#allocation3 + $0x148] sm:$0xff]
          %v374 = vld [vmem:[#allocation3 + $0x150] sm:$0xff]
          %v375 = vld [vmem:[#allocation3 + $0x158] sm:$0xff]
          %v376 = vld [vmem:[#allocation3 + $0x160] sm:$0xff]
          %v377 = vld [vmem:[#allocation3 + $0x168] sm:$0xff]
          %v378 = vld [vmem:[#allocation3 + $0x170] sm:$0xff]
          %v379 = vld [vmem:[#allocation3 + $0x178] sm:$0xff]
          %v380 = vld [vmem:[#allocation3 + $0x180] sm:$0xff]
          %v381 = vld [vmem:[#allocation3 + $0x188] sm:$0xff]
          %v382 = vld [vmem:[#allocation3 + $0x190] sm:$0xff]
          %v383 = vld [vmem:[#allocation3 + $0x198] sm:$0xff]
          %v384 = vld [vmem:[#allocation3 + $0x1a0] sm:$0xff]
          %v385 = vld [vmem:[#allocation3 + $0x1a8] sm:$0xff]
          %v386 = vld [vmem:[#allocation3 + $0x1b0] sm:$0xff]
          %v387 = vld [vmem:[#allocation3 + $0x1b8] sm:$0xff]
          %v388 = vld [vmem:[#allocation3 + $0x1c0] sm:$0xff]
          %v389 = vld [vmem:[#allocation3 + $0x1c8] sm:$0xff]
          %v390 = vld [vmem:[#allocation3 + $0x1d0] sm:$0xff]
          %v391 = vld [vmem:[#allocation3 + $0x1d8] sm:$0xff]
          %v392 = vld [vmem:[#allocation3 + $0x1e0] sm:$0xff]
          %v393 = vld [vmem:[#allocation3 + $0x1e8] sm:$0xff]
          %v394 = vld [vmem:[#allocation3 + $0x1f0] sm:$0xff]
          %v395 = vld [vmem:[#allocation3 + $0x1f8] sm:$0xff]
          %v396 = vld [vmem:[#allocation5] sm:$0xff]
          %v397 = vld [vmem:[#allocation5 + $0x8] sm:$0xff]
          %v398 = vld [vmem:[#allocation5 + $0x10] sm:$0xff]
          %v399 = vld [vmem:[#allocation5 + $0x18] sm:$0xff]
          %v404 = vlaneseq
          %v405 = vshrl.u32 %v404, 7
          %v406 = vsub.s32 0, %v405
          %v407 = vrot.slane %v396, %v406
          %v408 = vlaneseq
          %v409 = vshrl.u32 %v408, 7
          %v410 = vsub.s32 1, %v409
          %v411 = vrot.slane %v396, %v410
          %v412 = vlaneseq
          %v413 = vshrl.u32 %v412, 7
          %v414 = vsub.s32 2, %v413
          %v415 = vrot.slane %v396, %v414
          %v416 = vlaneseq
          %v417 = vshrl.u32 %v416, 7
          %v418 = vsub.s32 3, %v417
          %v419 = vrot.slane %v396, %v418
          %v420 = vlaneseq
          %v421 = vshrl.u32 %v420, 7
          %v422 = vsub.s32 4, %v421
          %v423 = vrot.slane %v396, %v422
          %v424 = vlaneseq
          %v425 = vshrl.u32 %v424, 7
          %v426 = vsub.s32 5, %v425
          %v427 = vrot.slane %v396, %v426
          %v428 = vlaneseq
          %v429 = vshrl.u32 %v428, 7
          %v430 = vsub.s32 6, %v429
          %v431 = vrot.slane %v396, %v430
          %v432 = vlaneseq
          %v433 = vshrl.u32 %v432, 7
          %v434 = vsub.s32 7, %v433
          %v435 = vrot.slane %v396, %v434
          %v436 = vlaneseq
          %v437 = vshrl.u32 %v436, 7
          %v438 = vsub.s32 0, %v437
          %v439 = vrot.slane %v397, %v438
          %v440 = vlaneseq
          %v441 = vshrl.u32 %v440, 7
          %v442 = vsub.s32 1, %v441
          %v443 = vrot.slane %v397, %v442
          %v444 = vlaneseq
          %v445 = vshrl.u32 %v444, 7
          %v446 = vsub.s32 2, %v445
          %v447 = vrot.slane %v397, %v446
          %v448 = vlaneseq
          %v449 = vshrl.u32 %v448, 7
          %v450 = vsub.s32 3, %v449
          %v451 = vrot.slane %v397, %v450
          %v452 = vlaneseq
          %v453 = vshrl.u32 %v452, 7
          %v454 = vsub.s32 4, %v453
          %v455 = vrot.slane %v397, %v454
          %v456 = vlaneseq
          %v457 = vshrl.u32 %v456, 7
          %v458 = vsub.s32 5, %v457
          %v459 = vrot.slane %v397, %v458
          %v460 = vlaneseq
          %v461 = vshrl.u32 %v460, 7
          %v462 = vsub.s32 6, %v461
          %v463 = vrot.slane %v397, %v462
          %v464 = vlaneseq
          %v465 = vshrl.u32 %v464, 7
          %v466 = vsub.s32 7, %v465
          %v467 = vrot.slane %v397, %v466
          %v468 = vlaneseq
          %v469 = vshrl.u32 %v468, 7
          %v470 = vsub.s32 0, %v469
          %v471 = vrot.slane %v398, %v470
          %v472 = vlaneseq
          %v473 = vshrl.u32 %v472, 7
          %v474 = vsub.s32 1, %v473
          %v475 = vrot.slane %v398, %v474
          %v476 = vlaneseq
          %v477 = vshrl.u32 %v476, 7
          %v478 = vsub.s32 2, %v477
          %v479 = vrot.slane %v398, %v478
          %v480 = vlaneseq
          %v481 = vshrl.u32 %v480, 7
          %v482 = vsub.s32 3, %v481
          %v483 = vrot.slane %v398, %v482
          %v484 = vlaneseq
          %v485 = vshrl.u32 %v484, 7
          %v486 = vsub.s32 4, %v485
          %v487 = vrot.slane %v398, %v486
          %v488 = vlaneseq
          %v489 = vshrl.u32 %v488, 7
          %v490 = vsub.s32 5, %v489
          %v491 = vrot.slane %v398, %v490
          %v492 = vlaneseq
          %v493 = vshrl.u32 %v492, 7
          %v494 = vsub.s32 6, %v493
          %v495 = vrot.slane %v398, %v494
          %v496 = vlaneseq
          %v497 = vshrl.u32 %v496, 7
          %v498 = vsub.s32 7, %v497
          %v499 = vrot.slane %v398, %v498
          %v500 = vlaneseq
          %v501 = vshrl.u32 %v500, 7
          %v502 = vsub.s32 0, %v501
          %v503 = vrot.slane %v399, %v502
          %v504 = vlaneseq
          %v505 = vshrl.u32 %v504, 7
          %v506 = vsub.s32 1, %v505
          %v507 = vrot.slane %v399, %v506
          %v508 = vlaneseq
          %v509 = vshrl.u32 %v508, 7
          %v510 = vsub.s32 2, %v509
          %v511 = vrot.slane %v399, %v510
          %v512 = vlaneseq
          %v513 = vshrl.u32 %v512, 7
          %v514 = vsub.s32 3, %v513
          %v515 = vrot.slane %v399, %v514
          %v516 = vlaneseq
          %v517 = vshrl.u32 %v516, 7
          %v518 = vsub.s32 4, %v517
          %v519 = vrot.slane %v399, %v518
          %v520 = vlaneseq
          %v521 = vshrl.u32 %v520, 7
          %v522 = vsub.s32 5, %v521
          %v523 = vrot.slane %v399, %v522
          %v524 = vlaneseq
          %v525 = vshrl.u32 %v524, 7
          %v526 = vsub.s32 6, %v525
          %v527 = vrot.slane %v399, %v526
          %v528 = vlaneseq
          %v529 = vshrl.u32 %v528, 7
          %v530 = vsub.s32 7, %v529
          %v531 = vrot.slane %v399, %v530
          %v628 = vunpack.c.l.b16 %v332
          %v629 = vunpack.c.h.b16 %v332
          %v630 = vunpack.c.l.b16 %v333
          %v631 = vunpack.c.h.b16 %v333
          %v632 = vunpack.c.l.b16 %v334
          %v633 = vunpack.c.h.b16 %v334
          %v634 = vunpack.c.l.b16 %v335
          %v635 = vunpack.c.h.b16 %v335
          %v636 = vunpack.c.l.b16 %v336
          %v637 = vunpack.c.h.b16 %v336
          %v638 = vunpack.c.l.b16 %v337
          %v639 = vunpack.c.h.b16 %v337
          %v640 = vunpack.c.l.b16 %v338
          %v641 = vunpack.c.h.b16 %v338
          %v642 = vunpack.c.l.b16 %v339
          %v643 = vunpack.c.h.b16 %v339
          %v644 = vunpack.c.l.b16 %v340
          %v645 = vunpack.c.h.b16 %v340
          %v646 = vunpack.c.l.b16 %v341
          %v647 = vunpack.c.h.b16 %v341
          %v648 = vunpack.c.l.b16 %v342
          %v649 = vunpack.c.h.b16 %v342
          %v650 = vunpack.c.l.b16 %v343
          %v651 = vunpack.c.h.b16 %v343
          %v652 = vunpack.c.l.b16 %v344
          %v653 = vunpack.c.h.b16 %v344
          %v654 = vunpack.c.l.b16 %v345
          %v655 = vunpack.c.h.b16 %v345
          %v656 = vunpack.c.l.b16 %v346
          %v657 = vunpack.c.h.b16 %v346
          %v658 = vunpack.c.l.b16 %v347
          %v659 = vunpack.c.h.b16 %v347
          %v660 = vunpack.c.l.b16 %v348
          %v661 = vunpack.c.h.b16 %v348
          %v662 = vunpack.c.l.b16 %v349
          %v663 = vunpack.c.h.b16 %v349
          %v664 = vunpack.c.l.b16 %v350
          %v665 = vunpack.c.h.b16 %v350
          %v666 = vunpack.c.l.b16 %v351
          %v667 = vunpack.c.h.b16 %v351
          %v668 = vunpack.c.l.b16 %v352
          %v669 = vunpack.c.h.b16 %v352
          %v670 = vunpack.c.l.b16 %v353
          %v671 = vunpack.c.h.b16 %v353
          %v672 = vunpack.c.l.b16 %v354
          %v673 = vunpack.c.h.b16 %v354
          %v674 = vunpack.c.l.b16 %v355
          %v675 = vunpack.c.h.b16 %v355
          %v676 = vunpack.c.l.b16 %v356
          %v677 = vunpack.c.h.b16 %v356
          %v678 = vunpack.c.l.b16 %v357
          %v679 = vunpack.c.h.b16 %v357
          %v680 = vunpack.c.l.b16 %v358
          %v681 = vunpack.c.h.b16 %v358
          %v682 = vunpack.c.l.b16 %v359
          %v683 = vunpack.c.h.b16 %v359
          %v684 = vunpack.c.l.b16 %v360
          %v685 = vunpack.c.h.b16 %v360
          %v686 = vunpack.c.l.b16 %v361
          %v687 = vunpack.c.h.b16 %v361
          %v688 = vunpack.c.l.b16 %v362
          %v689 = vunpack.c.h.b16 %v362
          %v690 = vunpack.c.l.b16 %v363
          %v691 = vunpack.c.h.b16 %v363
          %v692 = vunpack.c.l.b16 %v364
          %v693 = vunpack.c.h.b16 %v364
          %v694 = vunpack.c.l.b16 %v365
          %v695 = vunpack.c.h.b16 %v365
          %v696 = vunpack.c.l.b16 %v366
          %v697 = vunpack.c.h.b16 %v366
          %v698 = vunpack.c.l.b16 %v367
          %v699 = vunpack.c.h.b16 %v367
          %v700 = vunpack.c.l.b16 %v368
          %v701 = vunpack.c.h.b16 %v368
          %v702 = vunpack.c.l.b16 %v369
          %v703 = vunpack.c.h.b16 %v369
          %v704 = vunpack.c.l.b16 %v370
          %v705 = vunpack.c.h.b16 %v370
          %v706 = vunpack.c.l.b16 %v371
          %v707 = vunpack.c.h.b16 %v371
          %v708 = vunpack.c.l.b16 %v372
          %v709 = vunpack.c.h.b16 %v372
          %v710 = vunpack.c.l.b16 %v373
          %v711 = vunpack.c.h.b16 %v373
          %v712 = vunpack.c.l.b16 %v374
          %v713 = vunpack.c.h.b16 %v374
          %v714 = vunpack.c.l.b16 %v375
          %v715 = vunpack.c.h.b16 %v375
          %v716 = vunpack.c.l.b16 %v376
          %v717 = vunpack.c.h.b16 %v376
          %v718 = vunpack.c.l.b16 %v377
          %v719 = vunpack.c.h.b16 %v377
          %v720 = vunpack.c.l.b16 %v378
          %v721 = vunpack.c.h.b16 %v378
          %v722 = vunpack.c.l.b16 %v379
          %v723 = vunpack.c.h.b16 %v379
          %v724 = vunpack.c.l.b16 %v380
          %v725 = vunpack.c.h.b16 %v380
          %v726 = vunpack.c.l.b16 %v381
          %v727 = vunpack.c.h.b16 %v381
          %v728 = vunpack.c.l.b16 %v382
          %v729 = vunpack.c.h.b16 %v382
          %v730 = vunpack.c.l.b16 %v383
          %v731 = vunpack.c.h.b16 %v383
          %v732 = vunpack.c.l.b16 %v384
          %v733 = vunpack.c.h.b16 %v384
          %v734 = vunpack.c.l.b16 %v385
          %v735 = vunpack.c.h.b16 %v385
          %v736 = vunpack.c.l.b16 %v386
          %v737 = vunpack.c.h.b16 %v386
          %v738 = vunpack.c.l.b16 %v387
          %v739 = vunpack.c.h.b16 %v387
          %v740 = vunpack.c.l.b16 %v388
          %v741 = vunpack.c.h.b16 %v388
          %v742 = vunpack.c.l.b16 %v389
          %v743 = vunpack.c.h.b16 %v389
          %v744 = vunpack.c.l.b16 %v390
          %v745 = vunpack.c.h.b16 %v390
          %v746 = vunpack.c.l.b16 %v391
          %v747 = vunpack.c.h.b16 %v391
          %v748 = vunpack.c.l.b16 %v392
          %v749 = vunpack.c.h.b16 %v392
          %v750 = vunpack.c.l.b16 %v393
          %v751 = vunpack.c.h.b16 %v393
          %v752 = vunpack.c.l.b16 %v394
          %v753 = vunpack.c.h.b16 %v394
          %v754 = vunpack.c.l.b16 %v395
          %v755 = vunpack.c.h.b16 %v395
          %v756 = vpack.c.b16 %v660, %v628
          %v757 = vpack.c.b16 %v661, %v629
          %v758 = vpack.c.b16 %v662, %v630
          %v759 = vpack.c.b16 %v663, %v631
          %v760 = vpack.c.b16 %v664, %v632
          %v761 = vpack.c.b16 %v665, %v633
          %v762 = vpack.c.b16 %v666, %v634
          %v763 = vpack.c.b16 %v667, %v635
          %v764 = vpack.c.b16 %v668, %v636
          %v765 = vpack.c.b16 %v669, %v637
          %v766 = vpack.c.b16 %v670, %v638
          %v767 = vpack.c.b16 %v671, %v639
          %v768 = vpack.c.b16 %v672, %v640
          %v769 = vpack.c.b16 %v673, %v641
          %v770 = vpack.c.b16 %v674, %v642
          %v771 = vpack.c.b16 %v675, %v643
          %v772 = vpack.c.b16 %v676, %v644
          %v773 = vpack.c.b16 %v677, %v645
          %v774 = vpack.c.b16 %v678, %v646
          %v775 = vpack.c.b16 %v679, %v647
          %v776 = vpack.c.b16 %v680, %v648
          %v777 = vpack.c.b16 %v681, %v649
          %v778 = vpack.c.b16 %v682, %v650
          %v779 = vpack.c.b16 %v683, %v651
          %v780 = vpack.c.b16 %v684, %v652
          %v781 = vpack.c.b16 %v685, %v653
          %v782 = vpack.c.b16 %v686, %v654
          %v783 = vpack.c.b16 %v687, %v655
          %v784 = vpack.c.b16 %v688, %v656
          %v785 = vpack.c.b16 %v689, %v657
          %v786 = vpack.c.b16 %v690, %v658
          %v787 = vpack.c.b16 %v691, %v659
          %v788 = vpack.c.b16 %v724, %v692
          %v789 = vpack.c.b16 %v725, %v693
          %v790 = vpack.c.b16 %v726, %v694
          %v791 = vpack.c.b16 %v727, %v695
          %v792 = vpack.c.b16 %v728, %v696
          %v793 = vpack.c.b16 %v729, %v697
          %v794 = vpack.c.b16 %v730, %v698
          %v795 = vpack.c.b16 %v731, %v699
          %v796 = vpack.c.b16 %v732, %v700
          %v797 = vpack.c.b16 %v733, %v701
          %v798 = vpack.c.b16 %v734, %v702
          %v799 = vpack.c.b16 %v735, %v703
          %v800 = vpack.c.b16 %v736, %v704
          %v801 = vpack.c.b16 %v737, %v705
          %v802 = vpack.c.b16 %v738, %v706
          %v803 = vpack.c.b16 %v739, %v707
          %v804 = vpack.c.b16 %v740, %v708
          %v805 = vpack.c.b16 %v741, %v709
          %v806 = vpack.c.b16 %v742, %v710
          %v807 = vpack.c.b16 %v743, %v711
          %v808 = vpack.c.b16 %v744, %v712
          %v809 = vpack.c.b16 %v745, %v713
          %v810 = vpack.c.b16 %v746, %v714
          %v811 = vpack.c.b16 %v747, %v715
          %v812 = vpack.c.b16 %v748, %v716
          %v813 = vpack.c.b16 %v749, %v717
          %v814 = vpack.c.b16 %v750, %v718
          %v815 = vpack.c.b16 %v751, %v719
          %v816 = vpack.c.b16 %v752, %v720
          %v817 = vpack.c.b16 %v753, %v721
          %v818 = vpack.c.b16 %v754, %v722
          %v819 = vpack.c.b16 %v755, %v723
          %vm884 = vcmask 261120
          %v886 = vsel %vm884, %v331, 0
          %888 = vmatprep.subr.bf16.mxu0 %v757
          %889 = vmatpush1.bf16.msra.mxu0 %v756
          %890 = vmatprep.subr.bf16.mxu0 %v789
          %891 = vmatpush1.bf16.msra.mxu0 %v788
          %892 = vmatprep.subr.bf16.mxu0 0
          %893 = vmatpush1.bf16.msra.mxu0 0
          %894 = vmatprep.subr.bf16.mxu0 0
          %895 = vmatpush1.bf16.msra.mxu0 0
          %896 = vmatprep.subr.bf16.mxu0 0
          %897 = vmatpush1.bf16.msra.mxu0 0
          %898 = vmatprep.subr.bf16.mxu0 0
          %899 = vmatpush1.bf16.msra.mxu0 0
          %900 = vmatprep.subr.bf16.mxu0 0
          %901 = vmatpush1.bf16.msra.mxu0 0
          %902 = vmatprep.subr.bf16.mxu0 0
          %903 = vmatpush1.bf16.msra.mxu0 0
          %904 = vmatprep.subr.bf16.mxu0 0
          %905 = vmatpush1.bf16.msra.mxu0 0
          %906 = vmatprep.subr.bf16.mxu0 0
          %907 = vmatpush1.bf16.msra.mxu0 0
          %908 = vmatprep.subr.bf16.mxu0 0
          %909 = vmatpush1.bf16.msra.mxu0 0
          %910 = vmatprep.subr.bf16.mxu0 0
          %911 = vmatpush1.bf16.msra.mxu0 0
          %912 = vmatprep.subr.bf16.mxu0 0
          %913 = vmatpush1.bf16.msra.mxu0 0
          %914 = vmatprep.subr.bf16.mxu0 0
          %915 = vmatpush1.bf16.msra.mxu0 0
          %916 = vmatprep.subr.bf16.mxu0 0
          %917 = vmatpush1.bf16.msra.mxu0 0
          %918 = vmatprep.subr.bf16.mxu0 0
          %919 = vmatpush1.bf16.msra.mxu0 0
          %920 = vmatprep.mubr.bf16.mxu0 0
          %921 = vmatmul.mubr.bf16.gmra.mrb[0].mxu0 %v886
          %v922 = vpop.f32.mrb[0].mxu0
          %v923 = vadd.f32 %v407, %v922
          %v924 = vpop.f32.mrb[0].mxu0
          %v925 = vadd.f32 %v411, %v924
          %v926 = vpop.f32.mrb[0].mxu0
          %v927 = vpop.f32.mrb[0].mxu0
          %928 = vdwg.mxu0
          %929 = vmatprep.subr.bf16.mxu0 %v759
          %930 = vmatpush1.bf16.msra.mxu0 %v758
          %931 = vmatprep.subr.bf16.mxu0 %v791
          %932 = vmatpush1.bf16.msra.mxu0 %v790
          %933 = vmatprep.subr.bf16.mxu0 0
          %934 = vmatpush1.bf16.msra.mxu0 0
          %935 = vmatprep.subr.bf16.mxu0 0
          %936 = vmatpush1.bf16.msra.mxu0 0
          %937 = vmatprep.subr.bf16.mxu0 0
          %938 = vmatpush1.bf16.msra.mxu0 0
          %939 = vmatprep.subr.bf16.mxu0 0
          %940 = vmatpush1.bf16.msra.mxu0 0
          %941 = vmatprep.subr.bf16.mxu0 0
          %942 = vmatpush1.bf16.msra.mxu0 0
          %943 = vmatprep.subr.bf16.mxu0 0
          %944 = vmatpush1.bf16.msra.mxu0 0
          %945 = vmatprep.subr.bf16.mxu0 0
          %946 = vmatpush1.bf16.msra.mxu0 0
          %947 = vmatprep.subr.bf16.mxu0 0
          %948 = vmatpush1.bf16.msra.mxu0 0
          %949 = vmatprep.subr.bf16.mxu0 0
          %950 = vmatpush1.bf16.msra.mxu0 0
          %951 = vmatprep.subr.bf16.mxu0 0
          %952 = vmatpush1.bf16.msra.mxu0 0
          %953 = vmatprep.subr.bf16.mxu0 0
          %954 = vmatpush1.bf16.msra.mxu0 0
          %955 = vmatprep.subr.bf16.mxu0 0
          %956 = vmatpush1.bf16.msra.mxu0 0
          %957 = vmatprep.subr.bf16.mxu0 0
          %958 = vmatpush1.bf16.msra.mxu0 0
          %959 = vmatprep.subr.bf16.mxu0 0
          %960 = vmatpush1.bf16.msra.mxu0 0
          %961 = vmatprep.mubr.bf16.mxu0 0
          %962 = vmatmul.mubr.bf16.gmra.mrb[0].mxu0 %v886
          %v963 = vpop.f32.mrb[0].mxu0
          %v964 = vadd.f32 %v415, %v963
          %v965 = vpop.f32.mrb[0].mxu0
          %v966 = vadd.f32 %v419, %v965
          %v967 = vpop.f32.mrb[0].mxu0
          %v968 = vpop.f32.mrb[0].mxu0
          %969 = vdwg.mxu0
          %970 = vmatprep.subr.bf16.mxu0 %v761
          %971 = vmatpush1.bf16.msra.mxu0 %v760
          %972 = vmatprep.subr.bf16.mxu0 %v793
          %973 = vmatpush1.bf16.msra.mxu0 %v792
          %974 = vmatprep.subr.bf16.mxu0 0
          %975 = vmatpush1.bf16.msra.mxu0 0
          %976 = vmatprep.subr.bf16.mxu0 0
          %977 = vmatpush1.bf16.msra.mxu0 0
          %978 = vmatprep.subr.bf16.mxu0 0
          %979 = vmatpush1.bf16.msra.mxu0 0
          %980 = vmatprep.subr.bf16.mxu0 0
          %981 = vmatpush1.bf16.msra.mxu0 0
          %982 = vmatprep.subr.bf16.mxu0 0
          %983 = vmatpush1.bf16.msra.mxu0 0
          %984 = vmatprep.subr.bf16.mxu0 0
          %985 = vmatpush1.bf16.msra.mxu0 0
          %986 = vmatprep.subr.bf16.mxu0 0
          %987 = vmatpush1.bf16.msra.mxu0 0
          %988 = vmatprep.subr.bf16.mxu0 0
          %989 = vmatpush1.bf16.msra.mxu0 0
          %990 = vmatprep.subr.bf16.mxu0 0
          %991 = vmatpush1.bf16.msra.mxu0 0
          %992 = vmatprep.subr.bf16.mxu0 0
          %993 = vmatpush1.bf16.msra.mxu0 0
          %994 = vmatprep.subr.bf16.mxu0 0
          %995 = vmatpush1.bf16.msra.mxu0 0
          %996 = vmatprep.subr.bf16.mxu0 0
          %997 = vmatpush1.bf16.msra.mxu0 0
          %998 = vmatprep.subr.bf16.mxu0 0
          %999 = vmatpush1.bf16.msra.mxu0 0
          %1000 = vmatprep.subr.bf16.mxu0 0
          %1001 = vmatpush1.bf16.msra.mxu0 0
          %1002 = vmatprep.mubr.bf16.mxu0 0
          %1003 = vmatmul.mubr.bf16.gmra.mrb[0].mxu0 %v886
          %v1004 = vpop.f32.mrb[0].mxu0
          %v1005 = vadd.f32 %v423, %v1004
          %v1006 = vpop.f32.mrb[0].mxu0
          %v1007 = vadd.f32 %v427, %v1006
          %v1008 = vpop.f32.mrb[0].mxu0
          %v1009 = vpop.f32.mrb[0].mxu0
          %1010 = vdwg.mxu0
          %1011 = vmatprep.subr.bf16.mxu0 %v763
          %1012 = vmatpush1.bf16.msra.mxu0 %v762
          %1013 = vmatprep.subr.bf16.mxu0 %v795
          %1014 = vmatpush1.bf16.msra.mxu0 %v794
          %1015 = vmatprep.subr.bf16.mxu0 0
          %1016 = vmatpush1.bf16.msra.mxu0 0
          %1017 = vmatprep.subr.bf16.mxu0 0
          %1018 = vmatpush1.bf16.msra.mxu0 0
          %1019 = vmatprep.subr.bf16.mxu0 0
          %1020 = vmatpush1.bf16.msra.mxu0 0
          %1021 = vmatprep.subr.bf16.mxu0 0
          %1022 = vmatpush1.bf16.msra.mxu0 0
          %1023 = vmatprep.subr.bf16.mxu0 0
          %1024 = vmatpush1.bf16.msra.mxu0 0
          %1025 = vmatprep.subr.bf16.mxu0 0
          %1026 = vmatpush1.bf16.msra.mxu0 0
          %1027 = vmatprep.subr.bf16.mxu0 0
          %1028 = vmatpush1.bf16.msra.mxu0 0
          %1029 = vmatprep.subr.bf16.mxu0 0
          %1030 = vmatpush1.bf16.msra.mxu0 0
          %1031 = vmatprep.subr.bf16.mxu0 0
          %1032 = vmatpush1.bf16.msra.mxu0 0
          %1033 = vmatprep.subr.bf16.mxu0 0
          %1034 = vmatpush1.bf16.msra.mxu0 0
          %1035 = vmatprep.subr.bf16.mxu0 0
          %1036 = vmatpush1.bf16.msra.mxu0 0
          %1037 = vmatprep.subr.bf16.mxu0 0
          %1038 = vmatpush1.bf16.msra.mxu0 0
          %1039 = vmatprep.subr.bf16.mxu0 0
          %1040 = vmatpush1.bf16.msra.mxu0 0
          %1041 = vmatprep.subr.bf16.mxu0 0
          %1042 = vmatpush1.bf16.msra.mxu0 0
          %1043 = vmatprep.mubr.bf16.mxu0 0
          %1044 = vmatmul.mubr.bf16.gmra.mrb[0].mxu0 %v886
          %v1045 = vpop.f32.mrb[0].mxu0
          %v1046 = vadd.f32 %v431, %v1045
          %v1047 = vpop.f32.mrb[0].mxu0
          %v1048 = vadd.f32 %v435, %v1047
          %v1049 = vpop.f32.mrb[0].mxu0
          %v1050 = vpop.f32.mrb[0].mxu0
          %1051 = vdwg.mxu0
          %1052 = vmatprep.subr.bf16.mxu0 %v765
          %1053 = vmatpush1.bf16.msra.mxu0 %v764
          %1054 = vmatprep.subr.bf16.mxu0 %v797
          %1055 = vmatpush1.bf16.msra.mxu0 %v796
          %1056 = vmatprep.subr.bf16.mxu0 0
          %1057 = vmatpush1.bf16.msra.mxu0 0
          %1058 = vmatprep.subr.bf16.mxu0 0
          %1059 = vmatpush1.bf16.msra.mxu0 0
          %1060 = vmatprep.subr.bf16.mxu0 0
          %1061 = vmatpush1.bf16.msra.mxu0 0
          %1062 = vmatprep.subr.bf16.mxu0 0
          %1063 = vmatpush1.bf16.msra.mxu0 0
          %1064 = vmatprep.subr.bf16.mxu0 0
          %1065 = vmatpush1.bf16.msra.mxu0 0
          %1066 = vmatprep.subr.bf16.mxu0 0
          %1067 = vmatpush1.bf16.msra.mxu0 0
          %1068 = vmatprep.subr.bf16.mxu0 0
          %1069 = vmatpush1.bf16.msra.mxu0 0
          %1070 = vmatprep.subr.bf16.mxu0 0
          %1071 = vmatpush1.bf16.msra.mxu0 0
          %1072 = vmatprep.subr.bf16.mxu0 0
          %1073 = vmatpush1.bf16.msra.mxu0 0
          %1074 = vmatprep.subr.bf16.mxu0 0
          %1075 = vmatpush1.bf16.msra.mxu0 0
          %1076 = vmatprep.subr.bf16.mxu0 0
          %1077 = vmatpush1.bf16.msra.mxu0 0
          %1078 = vmatprep.subr.bf16.mxu0 0
          %1079 = vmatpush1.bf16.msra.mxu0 0
          %1080 = vmatprep.subr.bf16.mxu0 0
          %1081 = vmatpush1.bf16.msra.mxu0 0
          %1082 = vmatprep.subr.bf16.mxu0 0
          %1083 = vmatpush1.bf16.msra.mxu0 0
          %1084 = vmatprep.mubr.bf16.mxu0 0
          %1085 = vmatmul.mubr.bf16.gmra.mrb[0].mxu0 %v886
          %v1086 = vpop.f32.mrb[0].mxu0
          %v1087 = vadd.f32 %v439, %v1086
          %v1088 = vpop.f32.mrb[0].mxu0
          %v1089 = vadd.f32 %v443, %v1088
          %v1090 = vpop.f32.mrb[0].mxu0
          %v1091 = vpop.f32.mrb[0].mxu0
          %1092 = vdwg.mxu0
          %1093 = vmatprep.subr.bf16.mxu0 %v767
          %1094 = vmatpush1.bf16.msra.mxu0 %v766
          %1095 = vmatprep.subr.bf16.mxu0 %v799
          %1096 = vmatpush1.bf16.msra.mxu0 %v798
          %1097 = vmatprep.subr.bf16.mxu0 0
          %1098 = vmatpush1.bf16.msra.mxu0 0
          %1099 = vmatprep.subr.bf16.mxu0 0
          %1100 = vmatpush1.bf16.msra.mxu0 0
          %1101 = vmatprep.subr.bf16.mxu0 0
          %1102 = vmatpush1.bf16.msra.mxu0 0
          %1103 = vmatprep.subr.bf16.mxu0 0
          %1104 = vmatpush1.bf16.msra.mxu0 0
          %1105 = vmatprep.subr.bf16.mxu0 0
          %1106 = vmatpush1.bf16.msra.mxu0 0
          %1107 = vmatprep.subr.bf16.mxu0 0
          %1108 = vmatpush1.bf16.msra.mxu0 0
          %1109 = vmatprep.subr.bf16.mxu0 0
          %1110 = vmatpush1.bf16.msra.mxu0 0
          %1111 = vmatprep.subr.bf16.mxu0 0
          %1112 = vmatpush1.bf16.msra.mxu0 0
          %1113 = vmatprep.subr.bf16.mxu0 0
          %1114 = vmatpush1.bf16.msra.mxu0 0
          %1115 = vmatprep.subr.bf16.mxu0 0
          %1116 = vmatpush1.bf16.msra.mxu0 0
          %1117 = vmatprep.subr.bf16.mxu0 0
          %1118 = vmatpush1.bf16.msra.mxu0 0
          %1119 = vmatprep.subr.bf16.mxu0 0
          %1120 = vmatpush1.bf16.msra.mxu0 0
          %1121 = vmatprep.subr.bf16.mxu0 0
          %1122 = vmatpush1.bf16.msra.mxu0 0
          %1123 = vmatprep.subr.bf16.mxu0 0
          %1124 = vmatpush1.bf16.msra.mxu0 0
          %1125 = vmatprep.mubr.bf16.mxu0 0
          %1126 = vmatmul.mubr.bf16.gmra.mrb[0].mxu0 %v886
          %v1127 = vpop.f32.mrb[0].mxu0
          %v1128 = vadd.f32 %v447, %v1127
          %v1129 = vpop.f32.mrb[0].mxu0
          %v1130 = vadd.f32 %v451, %v1129
          %v1131 = vpop.f32.mrb[0].mxu0
          %v1132 = vpop.f32.mrb[0].mxu0
          %1133 = vdwg.mxu0
          %1134 = vmatprep.subr.bf16.mxu0 %v769
          %1135 = vmatpush1.bf16.msra.mxu0 %v768
          %1136 = vmatprep.subr.bf16.mxu0 %v801
          %1137 = vmatpush1.bf16.msra.mxu0 %v800
          %1138 = vmatprep.subr.bf16.mxu0 0
          %1139 = vmatpush1.bf16.msra.mxu0 0
          %1140 = vmatprep.subr.bf16.mxu0 0
          %1141 = vmatpush1.bf16.msra.mxu0 0
          %1142 = vmatprep.subr.bf16.mxu0 0
          %1143 = vmatpush1.bf16.msra.mxu0 0
          %1144 = vmatprep.subr.bf16.mxu0 0
          %1145 = vmatpush1.bf16.msra.mxu0 0
          %1146 = vmatprep.subr.bf16.mxu0 0
          %1147 = vmatpush1.bf16.msra.mxu0 0
          %1148 = vmatprep.subr.bf16.mxu0 0
          %1149 = vmatpush1.bf16.msra.mxu0 0
          %1150 = vmatprep.subr.bf16.mxu0 0
          %1151 = vmatpush1.bf16.msra.mxu0 0
          %1152 = vmatprep.subr.bf16.mxu0 0
          %1153 = vmatpush1.bf16.msra.mxu0 0
          %1154 = vmatprep.subr.bf16.mxu0 0
          %1155 = vmatpush1.bf16.msra.mxu0 0
          %1156 = vmatprep.subr.bf16.mxu0 0
          %1157 = vmatpush1.bf16.msra.mxu0 0
          %1158 = vmatprep.subr.bf16.mxu0 0
          %1159 = vmatpush1.bf16.msra.mxu0 0
          %1160 = vmatprep.subr.bf16.mxu0 0
          %1161 = vmatpush1.bf16.msra.mxu0 0
          %1162 = vmatprep.subr.bf16.mxu0 0
          %1163 = vmatpush1.bf16.msra.mxu0 0
          %1164 = vmatprep.subr.bf16.mxu0 0
          %1165 = vmatpush1.bf16.msra.mxu0 0
          %1166 = vmatprep.mubr.bf16.mxu0 0
          %1167 = vmatmul.mubr.bf16.gmra.mrb[0].mxu0 %v886
          %v1168 = vpop.f32.mrb[0].mxu0
          %v1169 = vadd.f32 %v455, %v1168
          %v1170 = vpop.f32.mrb[0].mxu0
          %v1171 = vadd.f32 %v459, %v1170
          %v1172 = vpop.f32.mrb[0].mxu0
          %v1173 = vpop.f32.mrb[0].mxu0
          %1174 = vdwg.mxu0
          %1175 = vmatprep.subr.bf16.mxu0 %v771
          %1176 = vmatpush1.bf16.msra.mxu0 %v770
          %1177 = vmatprep.subr.bf16.mxu0 %v803
          %1178 = vmatpush1.bf16.msra.mxu0 %v802
          %1179 = vmatprep.subr.bf16.mxu0 0
          %1180 = vmatpush1.bf16.msra.mxu0 0
          %1181 = vmatprep.subr.bf16.mxu0 0
          %1182 = vmatpush1.bf16.msra.mxu0 0
          %1183 = vmatprep.subr.bf16.mxu0 0
          %1184 = vmatpush1.bf16.msra.mxu0 0
          %1185 = vmatprep.subr.bf16.mxu0 0
          %1186 = vmatpush1.bf16.msra.mxu0 0
          %1187 = vmatprep.subr.bf16.mxu0 0
          %1188 = vmatpush1.bf16.msra.mxu0 0
          %1189 = vmatprep.subr.bf16.mxu0 0
          %1190 = vmatpush1.bf16.msra.mxu0 0
          %1191 = vmatprep.subr.bf16.mxu0 0
          %1192 = vmatpush1.bf16.msra.mxu0 0
          %1193 = vmatprep.subr.bf16.mxu0 0
          %1194 = vmatpush1.bf16.msra.mxu0 0
          %1195 = vmatprep.subr.bf16.mxu0 0
          %1196 = vmatpush1.bf16.msra.mxu0 0
          %1197 = vmatprep.subr.bf16.mxu0 0
          %1198 = vmatpush1.bf16.msra.mxu0 0
          %1199 = vmatprep.subr.bf16.mxu0 0
          %1200 = vmatpush1.bf16.msra.mxu0 0
          %1201 = vmatprep.subr.bf16.mxu0 0
          %1202 = vmatpush1.bf16.msra.mxu0 0
          %1203 = vmatprep.subr.bf16.mxu0 0
          %1204 = vmatpush1.bf16.msra.mxu0 0
          %1205 = vmatprep.subr.bf16.mxu0 0
          %1206 = vmatpush1.bf16.msra.mxu0 0
          %1207 = vmatprep.mubr.bf16.mxu0 0
          %1208 = vmatmul.mubr.bf16.gmra.mrb[0].mxu0 %v886
          %v1209 = vpop.f32.mrb[0].mxu0
          %v1210 = vadd.f32 %v463, %v1209
          %v1211 = vpop.f32.mrb[0].mxu0
          %v1212 = vadd.f32 %v467, %v1211
          %v1213 = vpop.f32.mrb[0].mxu0
          %v1214 = vpop.f32.mrb[0].mxu0
          %1215 = vdwg.mxu0
          %1216 = vmatprep.subr.bf16.mxu0 %v773
          %1217 = vmatpush1.bf16.msra.mxu0 %v772
          %1218 = vmatprep.subr.bf16.mxu0 %v805
          %1219 = vmatpush1.bf16.msra.mxu0 %v804
          %1220 = vmatprep.subr.bf16.mxu0 0
          %1221 = vmatpush1.bf16.msra.mxu0 0
          %1222 = vmatprep.subr.bf16.mxu0 0
          %1223 = vmatpush1.bf16.msra.mxu0 0
          %1224 = vmatprep.subr.bf16.mxu0 0
          %1225 = vmatpush1.bf16.msra.mxu0 0
          %1226 = vmatprep.subr.bf16.mxu0 0
          %1227 = vmatpush1.bf16.msra.mxu0 0
          %1228 = vmatprep.subr.bf16.mxu0 0
          %1229 = vmatpush1.bf16.msra.mxu0 0
          %1230 = vmatprep.subr.bf16.mxu0 0
          %1231 = vmatpush1.bf16.msra.mxu0 0
          %1232 = vmatprep.subr.bf16.mxu0 0
          %1233 = vmatpush1.bf16.msra.mxu0 0
          %1234 = vmatprep.subr.bf16.mxu0 0
          %1235 = vmatpush1.bf16.msra.mxu0 0
          %1236 = vmatprep.subr.bf16.mxu0 0
          %1237 = vmatpush1.bf16.msra.mxu0 0
          %1238 = vmatprep.subr.bf16.mxu0 0
          %1239 = vmatpush1.bf16.msra.mxu0 0
          %1240 = vmatprep.subr.bf16.mxu0 0
          %1241 = vmatpush1.bf16.msra.mxu0 0
          %1242 = vmatprep.subr.bf16.mxu0 0
          %1243 = vmatpush1.bf16.msra.mxu0 0
          %1244 = vmatprep.subr.bf16.mxu0 0
          %1245 = vmatpush1.bf16.msra.mxu0 0
          %1246 = vmatprep.subr.bf16.mxu0 0
          %1247 = vmatpush1.bf16.msra.mxu0 0
          %1248 = vmatprep.mubr.bf16.mxu0 0
          %1249 = vmatmul.mubr.bf16.gmra.mrb[0].mxu0 %v886
          %v1250 = vpop.f32.mrb[0].mxu0
          %v1251 = vadd.f32 %v471, %v1250
          %v1252 = vpop.f32.mrb[0].mxu0
          %v1253 = vadd.f32 %v475, %v1252
          %v1254 = vpop.f32.mrb[0].mxu0
          %v1255 = vpop.f32.mrb[0].mxu0
          %1256 = vdwg.mxu0
          %1257 = vmatprep.subr.bf16.mxu0 %v775
          %1258 = vmatpush1.bf16.msra.mxu0 %v774
          %1259 = vmatprep.subr.bf16.mxu0 %v807
          %1260 = vmatpush1.bf16.msra.mxu0 %v806
          %1261 = vmatprep.subr.bf16.mxu0 0
          %1262 = vmatpush1.bf16.msra.mxu0 0
          %1263 = vmatprep.subr.bf16.mxu0 0
          %1264 = vmatpush1.bf16.msra.mxu0 0
          %1265 = vmatprep.subr.bf16.mxu0 0
          %1266 = vmatpush1.bf16.msra.mxu0 0
          %1267 = vmatprep.subr.bf16.mxu0 0
          %1268 = vmatpush1.bf16.msra.mxu0 0
          %1269 = vmatprep.subr.bf16.mxu0 0
          %1270 = vmatpush1.bf16.msra.mxu0 0
          %1271 = vmatprep.subr.bf16.mxu0 0
          %1272 = vmatpush1.bf16.msra.mxu0 0
          %1273 = vmatprep.subr.bf16.mxu0 0
          %1274 = vmatpush1.bf16.msra.mxu0 0
          %1275 = vmatprep.subr.bf16.mxu0 0
          %1276 = vmatpush1.bf16.msra.mxu0 0
          %1277 = vmatprep.subr.bf16.mxu0 0
          %1278 = vmatpush1.bf16.msra.mxu0 0
          %1279 = vmatprep.subr.bf16.mxu0 0
          %1280 = vmatpush1.bf16.msra.mxu0 0
          %1281 = vmatprep.subr.bf16.mxu0 0
          %1282 = vmatpush1.bf16.msra.mxu0 0
          %1283 = vmatprep.subr.bf16.mxu0 0
          %1284 = vmatpush1.bf16.msra.mxu0 0
          %1285 = vmatprep.subr.bf16.mxu0 0
          %1286 = vmatpush1.bf16.msra.mxu0 0
          %1287 = vmatprep.subr.bf16.mxu0 0
          %1288 = vmatpush1.bf16.msra.mxu0 0
          %1289 = vmatprep.mubr.bf16.mxu0 0
          %1290 = vmatmul.mubr.bf16.gmra.mrb[0].mxu0 %v886
          %v1291 = vpop.f32.mrb[0].mxu0
          %v1292 = vadd.f32 %v479, %v1291
          %v1293 = vpop.f32.mrb[0].mxu0
          %v1294 = vadd.f32 %v483, %v1293
          %v1295 = vpop.f32.mrb[0].mxu0
          %v1296 = vpop.f32.mrb[0].mxu0
          %1297 = vdwg.mxu0
          %1298 = vmatprep.subr.bf16.mxu0 %v777
          %1299 = vmatpush1.bf16.msra.mxu0 %v776
          %1300 = vmatprep.subr.bf16.mxu0 %v809
          %1301 = vmatpush1.bf16.msra.mxu0 %v808
          %1302 = vmatprep.subr.bf16.mxu0 0
          %1303 = vmatpush1.bf16.msra.mxu0 0
          %1304 = vmatprep.subr.bf16.mxu0 0
          %1305 = vmatpush1.bf16.msra.mxu0 0
          %1306 = vmatprep.subr.bf16.mxu0 0
          %1307 = vmatpush1.bf16.msra.mxu0 0
          %1308 = vmatprep.subr.bf16.mxu0 0
          %1309 = vmatpush1.bf16.msra.mxu0 0
          %1310 = vmatprep.subr.bf16.mxu0 0
          %1311 = vmatpush1.bf16.msra.mxu0 0
          %1312 = vmatprep.subr.bf16.mxu0 0
          %1313 = vmatpush1.bf16.msra.mxu0 0
          %1314 = vmatprep.subr.bf16.mxu0 0
          %1315 = vmatpush1.bf16.msra.mxu0 0
          %1316 = vmatprep.subr.bf16.mxu0 0
          %1317 = vmatpush1.bf16.msra.mxu0 0
          %1318 = vmatprep.subr.bf16.mxu0 0
          %1319 = vmatpush1.bf16.msra.mxu0 0
          %1320 = vmatprep.subr.bf16.mxu0 0
          %1321 = vmatpush1.bf16.msra.mxu0 0
          %1322 = vmatprep.subr.bf16.mxu0 0
          %1323 = vmatpush1.bf16.msra.mxu0 0
          %1324 = vmatprep.subr.bf16.mxu0 0
          %1325 = vmatpush1.bf16.msra.mxu0 0
          %1326 = vmatprep.subr.bf16.mxu0 0
          %1327 = vmatpush1.bf16.msra.mxu0 0
          %1328 = vmatprep.subr.bf16.mxu0 0
          %1329 = vmatpush1.bf16.msra.mxu0 0
          %1330 = vmatprep.mubr.bf16.mxu0 0
          %1331 = vmatmul.mubr.bf16.gmra.mrb[0].mxu0 %v886
          %v1332 = vpop.f32.mrb[0].mxu0
          %v1333 = vadd.f32 %v487, %v1332
          %v1334 = vpop.f32.mrb[0].mxu0
          %v1335 = vadd.f32 %v491, %v1334
          %v1336 = vpop.f32.mrb[0].mxu0
          %v1337 = vpop.f32.mrb[0].mxu0
          %1338 = vdwg.mxu0
          %1339 = vmatprep.subr.bf16.mxu0 %v779
          %1340 = vmatpush1.bf16.msra.mxu0 %v778
          %1341 = vmatprep.subr.bf16.mxu0 %v811
          %1342 = vmatpush1.bf16.msra.mxu0 %v810
          %1343 = vmatprep.subr.bf16.mxu0 0
          %1344 = vmatpush1.bf16.msra.mxu0 0
          %1345 = vmatprep.subr.bf16.mxu0 0
          %1346 = vmatpush1.bf16.msra.mxu0 0
          %1347 = vmatprep.subr.bf16.mxu0 0
          %1348 = vmatpush1.bf16.msra.mxu0 0
          %1349 = vmatprep.subr.bf16.mxu0 0
          %1350 = vmatpush1.bf16.msra.mxu0 0
          %1351 = vmatprep.subr.bf16.mxu0 0
          %1352 = vmatpush1.bf16.msra.mxu0 0
          %1353 = vmatprep.subr.bf16.mxu0 0
          %1354 = vmatpush1.bf16.msra.mxu0 0
          %1355 = vmatprep.subr.bf16.mxu0 0
          %1356 = vmatpush1.bf16.msra.mxu0 0
          %1357 = vmatprep.subr.bf16.mxu0 0
          %1358 = vmatpush1.bf16.msra.mxu0 0
          %1359 = vmatprep.subr.bf16.mxu0 0
          %1360 = vmatpush1.bf16.msra.mxu0 0
          %1361 = vmatprep.subr.bf16.mxu0 0
          %1362 = vmatpush1.bf16.msra.mxu0 0
          %1363 = vmatprep.subr.bf16.mxu0 0
          %1364 = vmatpush1.bf16.msra.mxu0 0
          %1365 = vmatprep.subr.bf16.mxu0 0
          %1366 = vmatpush1.bf16.msra.mxu0 0
          %1367 = vmatprep.subr.bf16.mxu0 0
          %1368 = vmatpush1.bf16.msra.mxu0 0
          %1369 = vmatprep.subr.bf16.mxu0 0
          %1370 = vmatpush1.bf16.msra.mxu0 0
          %1371 = vmatprep.mubr.bf16.mxu0 0
          %1372 = vmatmul.mubr.bf16.gmra.mrb[0].mxu0 %v886
          %v1373 = vpop.f32.mrb[0].mxu0
          %v1374 = vadd.f32 %v495, %v1373
          %v1375 = vpop.f32.mrb[0].mxu0
          %v1376 = vadd.f32 %v499, %v1375
          %v1377 = vpop.f32.mrb[0].mxu0
          %v1378 = vpop.f32.mrb[0].mxu0
          %1379 = vdwg.mxu0
          %1380 = vmatprep.subr.bf16.mxu0 %v781
          %1381 = vmatpush1.bf16.msra.mxu0 %v780
          %1382 = vmatprep.subr.bf16.mxu0 %v813
          %1383 = vmatpush1.bf16.msra.mxu0 %v812
          %1384 = vmatprep.subr.bf16.mxu0 0
          %1385 = vmatpush1.bf16.msra.mxu0 0
          %1386 = vmatprep.subr.bf16.mxu0 0
          %1387 = vmatpush1.bf16.msra.mxu0 0
          %1388 = vmatprep.subr.bf16.mxu0 0
          %1389 = vmatpush1.bf16.msra.mxu0 0
          %1390 = vmatprep.subr.bf16.mxu0 0
          %1391 = vmatpush1.bf16.msra.mxu0 0
          %1392 = vmatprep.subr.bf16.mxu0 0
          %1393 = vmatpush1.bf16.msra.mxu0 0
          %1394 = vmatprep.subr.bf16.mxu0 0
          %1395 = vmatpush1.bf16.msra.mxu0 0
          %1396 = vmatprep.subr.bf16.mxu0 0
          %1397 = vmatpush1.bf16.msra.mxu0 0
          %1398 = vmatprep.subr.bf16.mxu0 0
          %1399 = vmatpush1.bf16.msra.mxu0 0
          %1400 = vmatprep.subr.bf16.mxu0 0
          %1401 = vmatpush1.bf16.msra.mxu0 0
          %1402 = vmatprep.subr.bf16.mxu0 0
          %1403 = vmatpush1.bf16.msra.mxu0 0
          %1404 = vmatprep.subr.bf16.mxu0 0
          %1405 = vmatpush1.bf16.msra.mxu0 0
          %1406 = vmatprep.subr.bf16.mxu0 0
          %1407 = vmatpush1.bf16.msra.mxu0 0
          %1408 = vmatprep.subr.bf16.mxu0 0
          %1409 = vmatpush1.bf16.msra.mxu0 0
          %1410 = vmatprep.subr.bf16.mxu0 0
          %1411 = vmatpush1.bf16.msra.mxu0 0
          %1412 = vmatprep.mubr.bf16.mxu0 0
          %1413 = vmatmul.mubr.bf16.gmra.mrb[0].mxu0 %v886
          %v1414 = vpop.f32.mrb[0].mxu0
          %v1415 = vadd.f32 %v503, %v1414
          %v1416 = vpop.f32.mrb[0].mxu0
          %v1417 = vadd.f32 %v507, %v1416
          %v1418 = vpop.f32.mrb[0].mxu0
          %v1419 = vpop.f32.mrb[0].mxu0
          %1420 = vdwg.mxu0
          %1421 = vmatprep.subr.bf16.mxu0 %v783
          %1422 = vmatpush1.bf16.msra.mxu0 %v782
          %1423 = vmatprep.subr.bf16.mxu0 %v815
          %1424 = vmatpush1.bf16.msra.mxu0 %v814
          %1425 = vmatprep.subr.bf16.mxu0 0
          %1426 = vmatpush1.bf16.msra.mxu0 0
          %1427 = vmatprep.subr.bf16.mxu0 0
          %1428 = vmatpush1.bf16.msra.mxu0 0
          %1429 = vmatprep.subr.bf16.mxu0 0
          %1430 = vmatpush1.bf16.msra.mxu0 0
          %1431 = vmatprep.subr.bf16.mxu0 0
          %1432 = vmatpush1.bf16.msra.mxu0 0
          %1433 = vmatprep.subr.bf16.mxu0 0
          %1434 = vmatpush1.bf16.msra.mxu0 0
          %1435 = vmatprep.subr.bf16.mxu0 0
          %1436 = vmatpush1.bf16.msra.mxu0 0
          %1437 = vmatprep.subr.bf16.mxu0 0
          %1438 = vmatpush1.bf16.msra.mxu0 0
          %1439 = vmatprep.subr.bf16.mxu0 0
          %1440 = vmatpush1.bf16.msra.mxu0 0
          %1441 = vmatprep.subr.bf16.mxu0 0
          %1442 = vmatpush1.bf16.msra.mxu0 0
          %1443 = vmatprep.subr.bf16.mxu0 0
          %1444 = vmatpush1.bf16.msra.mxu0 0
          %1445 = vmatprep.subr.bf16.mxu0 0
          %1446 = vmatpush1.bf16.msra.mxu0 0
          %1447 = vmatprep.subr.bf16.mxu0 0
          %1448 = vmatpush1.bf16.msra.mxu0 0
          %1449 = vmatprep.subr.bf16.mxu0 0
          %1450 = vmatpush1.bf16.msra.mxu0 0
          %1451 = vmatprep.subr.bf16.mxu0 0
          %1452 = vmatpush1.bf16.msra.mxu0 0
          %1453 = vmatprep.mubr.bf16.mxu0 0
          %1454 = vmatmul.mubr.bf16.gmra.mrb[0].mxu0 %v886
          %v1455 = vpop.f32.mrb[0].mxu0
          %v1456 = vadd.f32 %v511, %v1455
          %v1457 = vpop.f32.mrb[0].mxu0
          %v1458 = vadd.f32 %v515, %v1457
          %v1459 = vpop.f32.mrb[0].mxu0
          %v1460 = vpop.f32.mrb[0].mxu0
          %1461 = vdwg.mxu0
          %1462 = vmatprep.subr.bf16.mxu0 %v785
          %1463 = vmatpush1.bf16.msra.mxu0 %v784
          %1464 = vmatprep.subr.bf16.mxu0 %v817
          %1465 = vmatpush1.bf16.msra.mxu0 %v816
          %1466 = vmatprep.subr.bf16.mxu0 0
          %1467 = vmatpush1.bf16.msra.mxu0 0
          %1468 = vmatprep.subr.bf16.mxu0 0
          %1469 = vmatpush1.bf16.msra.mxu0 0
          %1470 = vmatprep.subr.bf16.mxu0 0
          %1471 = vmatpush1.bf16.msra.mxu0 0
          %1472 = vmatprep.subr.bf16.mxu0 0
          %1473 = vmatpush1.bf16.msra.mxu0 0
          %1474 = vmatprep.subr.bf16.mxu0 0
          %1475 = vmatpush1.bf16.msra.mxu0 0
          %1476 = vmatprep.subr.bf16.mxu0 0
          %1477 = vmatpush1.bf16.msra.mxu0 0
          %1478 = vmatprep.subr.bf16.mxu0 0
          %1479 = vmatpush1.bf16.msra.mxu0 0
          %1480 = vmatprep.subr.bf16.mxu0 0
          %1481 = vmatpush1.bf16.msra.mxu0 0
          %1482 = vmatprep.subr.bf16.mxu0 0
          %1483 = vmatpush1.bf16.msra.mxu0 0
          %1484 = vmatprep.subr.bf16.mxu0 0
          %1485 = vmatpush1.bf16.msra.mxu0 0
          %1486 = vmatprep.subr.bf16.mxu0 0
          %1487 = vmatpush1.bf16.msra.mxu0 0
          %1488 = vmatprep.subr.bf16.mxu0 0
          %1489 = vmatpush1.bf16.msra.mxu0 0
          %1490 = vmatprep.subr.bf16.mxu0 0
          %1491 = vmatpush1.bf16.msra.mxu0 0
          %1492 = vmatprep.subr.bf16.mxu0 0
          %1493 = vmatpush1.bf16.msra.mxu0 0
          %1494 = vmatprep.mubr.bf16.mxu0 0
          %1495 = vmatmul.mubr.bf16.gmra.mrb[0].mxu0 %v886
          %v1496 = vpop.f32.mrb[0].mxu0
          %v1497 = vadd.f32 %v519, %v1496
          %v1498 = vpop.f32.mrb[0].mxu0
          %v1499 = vadd.f32 %v523, %v1498
          %v1500 = vpop.f32.mrb[0].mxu0
          %v1501 = vpop.f32.mrb[0].mxu0
          %1502 = vdwg.mxu0
          %1503 = vmatprep.subr.bf16.mxu0 %v787
          %1504 = vmatpush1.bf16.msra.mxu0 %v786
          %1505 = vmatprep.subr.bf16.mxu0 %v819
          %1506 = vmatpush1.bf16.msra.mxu0 %v818
          %1507 = vmatprep.subr.bf16.mxu0 0
          %1508 = vmatpush1.bf16.msra.mxu0 0
          %1509 = vmatprep.subr.bf16.mxu0 0
          %1510 = vmatpush1.bf16.msra.mxu0 0
          %1511 = vmatprep.subr.bf16.mxu0 0
          %1512 = vmatpush1.bf16.msra.mxu0 0
          %1513 = vmatprep.subr.bf16.mxu0 0
          %1514 = vmatpush1.bf16.msra.mxu0 0
          %1515 = vmatprep.subr.bf16.mxu0 0
          %1516 = vmatpush1.bf16.msra.mxu0 0
          %1517 = vmatprep.subr.bf16.mxu0 0
          %1518 = vmatpush1.bf16.msra.mxu0 0
          %1519 = vmatprep.subr.bf16.mxu0 0
          %1520 = vmatpush1.bf16.msra.mxu0 0
          %1521 = vmatprep.subr.bf16.mxu0 0
          %1522 = vmatpush1.bf16.msra.mxu0 0
          %1523 = vmatprep.subr.bf16.mxu0 0
          %1524 = vmatpush1.bf16.msra.mxu0 0
          %1525 = vmatprep.subr.bf16.mxu0 0
          %1526 = vmatpush1.bf16.msra.mxu0 0
          %1527 = vmatprep.subr.bf16.mxu0 0
          %1528 = vmatpush1.bf16.msra.mxu0 0
          %1529 = vmatprep.subr.bf16.mxu0 0
          %1530 = vmatpush1.bf16.msra.mxu0 0
          %1531 = vmatprep.subr.bf16.mxu0 0
          %1532 = vmatpush1.bf16.msra.mxu0 0
          %1533 = vmatprep.subr.bf16.mxu0 0
          %1534 = vmatpush1.bf16.msra.mxu0 0
          %1535 = vmatprep.mubr.bf16.mxu0 0
          %1536 = vmatmul.mubr.bf16.gmra.mrb[0].mxu0 %v886
          %v1537 = vpop.f32.mrb[0].mxu0
          %v1538 = vadd.f32 %v527, %v1537
          %v1539 = vpop.f32.mrb[0].mxu0
          %v1540 = vadd.f32 %v531, %v1539
          %v1541 = vpop.f32.mrb[0].mxu0
          %v1542 = vpop.f32.mrb[0].mxu0
          %1543 = vdwg.mxu0
          %v1544 = vmax.f32 %v923, 0.0
          %v1545 = vmax.f32 %v925, 0.0
          %v1546 = vmax.f32 %v964, 0.0
          %v1547 = vmax.f32 %v966, 0.0
          %v1548 = vmax.f32 %v1005, 0.0
          %v1549 = vmax.f32 %v1007, 0.0
          %v1550 = vmax.f32 %v1046, 0.0
          %v1551 = vmax.f32 %v1048, 0.0
          %v1552 = vmax.f32 %v1087, 0.0
          %v1553 = vmax.f32 %v1089, 0.0
          %v1554 = vmax.f32 %v1128, 0.0
          %v1555 = vmax.f32 %v1130, 0.0
          %v1556 = vmax.f32 %v1169, 0.0
          %v1557 = vmax.f32 %v1171, 0.0
          %v1558 = vmax.f32 %v1210, 0.0
          %v1559 = vmax.f32 %v1212, 0.0
          %v1560 = vmax.f32 %v1251, 0.0
          %v1561 = vmax.f32 %v1253, 0.0
          %v1562 = vmax.f32 %v1292, 0.0
          %v1563 = vmax.f32 %v1294, 0.0
          %v1564 = vmax.f32 %v1333, 0.0
          %v1565 = vmax.f32 %v1335, 0.0
          %v1566 = vmax.f32 %v1374, 0.0
          %v1567 = vmax.f32 %v1376, 0.0
          %v1568 = vmax.f32 %v1415, 0.0
          %v1569 = vmax.f32 %v1417, 0.0
          %v1570 = vmax.f32 %v1456, 0.0
          %v1571 = vmax.f32 %v1458, 0.0
          %v1572 = vmax.f32 %v1497, 0.0
          %v1573 = vmax.f32 %v1499, 0.0
          %v1574 = vmax.f32 %v1538, 0.0
          %v1575 = vmax.f32 %v1540, 0.0
          %v1576 = vpack.c.bf16 %v1544, %v1544
          %v1577 = vpack.c.bf16 %v1545, %v1545
          %v1578 = vpack.c.bf16 %v1546, %v1546
          %v1579 = vpack.c.bf16 %v1547, %v1547
          %v1580 = vpack.c.bf16 %v1548, %v1548
          %v1581 = vpack.c.bf16 %v1549, %v1549
          %v1582 = vpack.c.bf16 %v1550, %v1550
          %v1583 = vpack.c.bf16 %v1551, %v1551
          %v1584 = vpack.c.bf16 %v1552, %v1552
          %v1585 = vpack.c.bf16 %v1553, %v1553
          %v1586 = vpack.c.bf16 %v1554, %v1554
          %v1587 = vpack.c.bf16 %v1555, %v1555
          %v1588 = vpack.c.bf16 %v1556, %v1556
          %v1589 = vpack.c.bf16 %v1557, %v1557
          %v1590 = vpack.c.bf16 %v1558, %v1558
          %v1591 = vpack.c.bf16 %v1559, %v1559
          %v1592 = vpack.c.bf16 %v1560, %v1560
          %v1593 = vpack.c.bf16 %v1561, %v1561
          %v1594 = vpack.c.bf16 %v1562, %v1562
          %v1595 = vpack.c.bf16 %v1563, %v1563
          %v1596 = vpack.c.bf16 %v1564, %v1564
          %v1597 = vpack.c.bf16 %v1565, %v1565
          %v1598 = vpack.c.bf16 %v1566, %v1566
          %v1599 = vpack.c.bf16 %v1567, %v1567
          %v1600 = vpack.c.bf16 %v1568, %v1568
          %v1601 = vpack.c.bf16 %v1569, %v1569
          %v1602 = vpack.c.bf16 %v1570, %v1570
          %v1603 = vpack.c.bf16 %v1571, %v1571
          %v1604 = vpack.c.bf16 %v1572, %v1572
          %v1605 = vpack.c.bf16 %v1573, %v1573
          %v1606 = vpack.c.bf16 %v1574, %v1574
          %v1607 = vpack.c.bf16 %v1575, %v1575
          %v1640 = vunpack.c.l.b16 %v1576
          %v1641 = vunpack.c.l.b16 %v1577
          %v1642 = vunpack.c.l.b16 %v1578
          %v1643 = vunpack.c.l.b16 %v1579
          %v1644 = vunpack.c.l.b16 %v1580
          %v1645 = vunpack.c.l.b16 %v1581
          %v1646 = vunpack.c.l.b16 %v1582
          %v1647 = vunpack.c.l.b16 %v1583
          %v1648 = vunpack.c.l.b16 %v1584
          %v1649 = vunpack.c.l.b16 %v1585
          %v1650 = vunpack.c.l.b16 %v1586
          %v1651 = vunpack.c.l.b16 %v1587
          %v1652 = vunpack.c.l.b16 %v1588
          %v1653 = vunpack.c.l.b16 %v1589
          %v1654 = vunpack.c.l.b16 %v1590
          %v1655 = vunpack.c.l.b16 %v1591
          %v1656 = vunpack.c.l.b16 %v1592
          %v1657 = vunpack.c.l.b16 %v1593
          %v1658 = vunpack.c.l.b16 %v1594
          %v1659 = vunpack.c.l.b16 %v1595
          %v1660 = vunpack.c.l.b16 %v1596
          %v1661 = vunpack.c.l.b16 %v1597
          %v1662 = vunpack.c.l.b16 %v1598
          %v1663 = vunpack.c.l.b16 %v1599
          %v1664 = vunpack.c.l.b16 %v1600
          %v1665 = vunpack.c.l.b16 %v1601
          %v1666 = vunpack.c.l.b16 %v1602
          %v1667 = vunpack.c.l.b16 %v1603
          %v1668 = vunpack.c.l.b16 %v1604
          %v1669 = vunpack.c.l.b16 %v1605
          %v1670 = vunpack.c.l.b16 %v1606
          %v1671 = vunpack.c.l.b16 %v1607
          %v1672 = vpack.c.b16 %v1641, %v1640
          %v1673 = vpack.c.b16 %v1643, %v1642
          %v1674 = vpack.c.b16 %v1645, %v1644
          %v1675 = vpack.c.b16 %v1647, %v1646
          %v1676 = vpack.c.b16 %v1649, %v1648
          %v1677 = vpack.c.b16 %v1651, %v1650
          %v1678 = vpack.c.b16 %v1653, %v1652
          %v1679 = vpack.c.b16 %v1655, %v1654
          %v1680 = vpack.c.b16 %v1657, %v1656
          %v1681 = vpack.c.b16 %v1659, %v1658
          %v1682 = vpack.c.b16 %v1661, %v1660
          %v1683 = vpack.c.b16 %v1663, %v1662
          %v1684 = vpack.c.b16 %v1665, %v1664
          %v1685 = vpack.c.b16 %v1667, %v1666
          %v1686 = vpack.c.b16 %v1669, %v1668
          %v1687 = vpack.c.b16 %v1671, %v1670
          %1704 = vst [vmem:[#allocation2] sm:$0xff] %v1672
          %1705 = vst [vmem:[#allocation2 + $0x8] sm:$0xff] %v1673
          %1706 = vst [vmem:[#allocation2 + $0x10] sm:$0xff] %v1674
          %1707 = vst [vmem:[#allocation2 + $0x18] sm:$0xff] %v1675
          %1708 = vst [vmem:[#allocation2 + $0x20] sm:$0xff] %v1676
          %1709 = vst [vmem:[#allocation2 + $0x28] sm:$0xff] %v1677
          %1710 = vst [vmem:[#allocation2 + $0x30] sm:$0xff] %v1678
          %1711 = vst [vmem:[#allocation2 + $0x38] sm:$0xff] %v1679
          %1712 = vst [vmem:[#allocation2 + $0x40] sm:$0xff] %v1680
          %1713 = vst [vmem:[#allocation2 + $0x48] sm:$0xff] %v1681
          %1714 = vst [vmem:[#allocation2 + $0x50] sm:$0xff] %v1682
          %1715 = vst [vmem:[#allocation2 + $0x58] sm:$0xff] %v1683
          %1716 = vst [vmem:[#allocation2 + $0x60] sm:$0xff] %v1684
          %1717 = vst [vmem:[#allocation2 + $0x68] sm:$0xff] %v1685
          %1718 = vst [vmem:[#allocation2 + $0x70] sm:$0xff] %v1686
          %1719 = vst [vmem:[#allocation2 + $0x78] sm:$0xff] %v1687
          %v1720 = vld [vmem:[%s285] sm:$0xff]
          %v1722 = vlaneseq
          %v1723 = vshrl.u32 %v1722, 7
          %v1724 = vsub.s32 0, %v1723
          %v1725 = vrot.slane %v1720, %v1724
          %v1726 = vlaneseq
          %v1727 = vshrl.u32 %v1726, 7
          %v1728 = vsub.s32 1, %v1727
          %v1729 = vrot.slane %v1720, %v1728
          %v1730 = vlaneseq
          %v1731 = vshrl.u32 %v1730, 7
          %v1732 = vsub.s32 2, %v1731
          %v1733 = vrot.slane %v1720, %v1732
          %v1734 = vlaneseq
          %v1735 = vshrl.u32 %v1734, 7
          %v1736 = vsub.s32 3, %v1735
          %v1737 = vrot.slane %v1720, %v1736
          %v1738 = vlaneseq
          %v1739 = vshrl.u32 %v1738, 7
          %v1740 = vsub.s32 4, %v1739
          %v1741 = vrot.slane %v1720, %v1740
          %v1742 = vlaneseq
          %v1743 = vshrl.u32 %v1742, 7
          %v1744 = vsub.s32 5, %v1743
          %v1745 = vrot.slane %v1720, %v1744
          %v1746 = vlaneseq
          %v1747 = vshrl.u32 %v1746, 7
          %v1748 = vsub.s32 6, %v1747
          %v1749 = vrot.slane %v1720, %v1748
          %v1750 = vlaneseq
          %v1751 = vshrl.u32 %v1750, 7
          %v1752 = vsub.s32 7, %v1751
          %v1753 = vrot.slane %v1720, %v1752
          %1762 = vst [vmem:[%s324] sm:$0xff] %v1725
          %1763 = vst [vmem:[%s324 + $0x8] sm:$0xff] %v1729
          %1764 = vst [vmem:[%s324 + $0x10] sm:$0xff] %v1733
          %1765 = vst [vmem:[%s324 + $0x18] sm:$0xff] %v1737
          %1766 = vst [vmem:[%s324 + $0x20] sm:$0xff] %v1741
          %1767 = vst [vmem:[%s324 + $0x28] sm:$0xff] %v1745
          %1768 = vst [vmem:[%s324 + $0x30] sm:$0xff] %v1749
          %1769 = vst [vmem:[%s324 + $0x38] sm:$0xff] %v1753
        $region60: #{net_forward.2} parent=39 // pred_fallthru
          _
        %s1770 = smul.u32 %s23, 1024
        %v1771 = vld [vmem:[%s324] sm:$0xff]
        %v1772 = vld [vmem:[%s324 + $0x8] sm:$0xff]
        %v1773 = vld [vmem:[%s324 + $0x10] sm:$0xff]
        %v1774 = vld [vmem:[%s324 + $0x18] sm:$0xff]
        %v1775 = vld [vmem:[%s324 + $0x20] sm:$0xff]
        %v1776 = vld [vmem:[%s324 + $0x28] sm:$0xff]
        %v1777 = vld [vmem:[%s324 + $0x30] sm:$0xff]
        %v1778 = vld [vmem:[%s324 + $0x38] sm:$0xff]
        %s1779 = sshra.s32 %s1770, 7
        %s1780 = sand.u32 %s1770, 127
        %s1781 = smul.addr %s1779, 4
        %s1782 = scalar_lea.vmem [#allocation2], %s1781
        %v1783 = vld [vmem:[%s1782] sm:$0xff]
        %v1784 = vld [vmem:[%s1782 + $0x8] sm:$0xff]
        %v1785 = vld [vmem:[%s1782 + $0x10] sm:$0xff]
        %v1786 = vld [vmem:[%s1782 + $0x18] sm:$0xff]
        %v1787 = vld [vmem:[%s276] sm:$0xff]
        %v1788 = vld [vmem:[%s276 + $0x8] sm:$0xff]
        %v1789 = vld [vmem:[%s276 + $0x10] sm:$0xff]
        %v1790 = vld [vmem:[%s276 + $0x18] sm:$0xff]
        %v1791 = vld [vmem:[%s276 + $0x20] sm:$0xff]
        %v1792 = vld [vmem:[%s276 + $0x28] sm:$0xff]
        %v1793 = vld [vmem:[%s276 + $0x30] sm:$0xff]
        %v1794 = vld [vmem:[%s276 + $0x38] sm:$0xff]
        %v1795 = vld [vmem:[%s276 + $0x40] sm:$0xff]
        %v1796 = vld [vmem:[%s276 + $0x48] sm:$0xff]
        %v1797 = vld [vmem:[%s276 + $0x50] sm:$0xff]
        %v1798 = vld [vmem:[%s276 + $0x58] sm:$0xff]
        %v1799 = vld [vmem:[%s276 + $0x60] sm:$0xff]
        %v1800 = vld [vmem:[%s276 + $0x68] sm:$0xff]
        %v1801 = vld [vmem:[%s276 + $0x70] sm:$0xff]
        %v1802 = vld [vmem:[%s276 + $0x78] sm:$0xff]
        %v1803 = vld [vmem:[%s276 + $0x80] sm:$0xff]
        %v1804 = vld [vmem:[%s276 + $0x88] sm:$0xff]
        %v1805 = vld [vmem:[%s276 + $0x90] sm:$0xff]
        %v1806 = vld [vmem:[%s276 + $0x98] sm:$0xff]
        %v1807 = vld [vmem:[%s276 + $0xa0] sm:$0xff]
        %v1808 = vld [vmem:[%s276 + $0xa8] sm:$0xff]
        %v1809 = vld [vmem:[%s276 + $0xb0] sm:$0xff]
        %v1810 = vld [vmem:[%s276 + $0xb8] sm:$0xff]
        %v1811 = vld [vmem:[%s276 + $0xc0] sm:$0xff]
        %v1812 = vld [vmem:[%s276 + $0xc8] sm:$0xff]
        %v1813 = vld [vmem:[%s276 + $0xd0] sm:$0xff]
        %v1814 = vld [vmem:[%s276 + $0xd8] sm:$0xff]
        %v1815 = vld [vmem:[%s276 + $0xe0] sm:$0xff]
        %v1816 = vld [vmem:[%s276 + $0xe8] sm:$0xff]
        %v1817 = vld [vmem:[%s276 + $0xf0] sm:$0xff]
        %v1818 = vld [vmem:[%s276 + $0xf8] sm:$0xff]
        %v1819 = vld [vmem:[%s276 + $0x100] sm:$0xff]
        %v1820 = vld [vmem:[%s276 + $0x108] sm:$0xff]
        %v1821 = vld [vmem:[%s276 + $0x110] sm:$0xff]
        %v1822 = vld [vmem:[%s276 + $0x118] sm:$0xff]
        %v1823 = vld [vmem:[%s276 + $0x120] sm:$0xff]
        %v1824 = vld [vmem:[%s276 + $0x128] sm:$0xff]
        %v1825 = vld [vmem:[%s276 + $0x130] sm:$0xff]
        %v1826 = vld [vmem:[%s276 + $0x138] sm:$0xff]
        %v1827 = vld [vmem:[%s276 + $0x140] sm:$0xff]
        %v1828 = vld [vmem:[%s276 + $0x148] sm:$0xff]
        %v1829 = vld [vmem:[%s276 + $0x150] sm:$0xff]
        %v1830 = vld [vmem:[%s276 + $0x158] sm:$0xff]
        %v1831 = vld [vmem:[%s276 + $0x160] sm:$0xff]
        %v1832 = vld [vmem:[%s276 + $0x168] sm:$0xff]
        %v1833 = vld [vmem:[%s276 + $0x170] sm:$0xff]
        %v1834 = vld [vmem:[%s276 + $0x178] sm:$0xff]
        %v1835 = vld [vmem:[%s276 + $0x180] sm:$0xff]
        %v1836 = vld [vmem:[%s276 + $0x188] sm:$0xff]
        %v1837 = vld [vmem:[%s276 + $0x190] sm:$0xff]
        %v1838 = vld [vmem:[%s276 + $0x198] sm:$0xff]
        %v1839 = vld [vmem:[%s276 + $0x1a0] sm:$0xff]
        %v1840 = vld [vmem:[%s276 + $0x1a8] sm:$0xff]
        %v1841 = vld [vmem:[%s276 + $0x1b0] sm:$0xff]
        %v1842 = vld [vmem:[%s276 + $0x1b8] sm:$0xff]
        %v1843 = vld [vmem:[%s276 + $0x1c0] sm:$0xff]
        %v1844 = vld [vmem:[%s276 + $0x1c8] sm:$0xff]
        %v1845 = vld [vmem:[%s276 + $0x1d0] sm:$0xff]
        %v1846 = vld [vmem:[%s276 + $0x1d8] sm:$0xff]
        %v1847 = vld [vmem:[%s276 + $0x1e0] sm:$0xff]
        %v1848 = vld [vmem:[%s276 + $0x1e8] sm:$0xff]
        %v1849 = vld [vmem:[%s276 + $0x1f0] sm:$0xff]
        %v1850 = vld [vmem:[%s276 + $0x1f8] sm:$0xff]
        %v1851 = vld [vmem:[%s276 + $0x200] sm:$0xff]
        %v1852 = vld [vmem:[%s276 + $0x208] sm:$0xff]
        %v1853 = vld [vmem:[%s276 + $0x210] sm:$0xff]
        %v1854 = vld [vmem:[%s276 + $0x218] sm:$0xff]
        %v1855 = vld [vmem:[%s276 + $0x220] sm:$0xff]
        %v1856 = vld [vmem:[%s276 + $0x228] sm:$0xff]
        %v1857 = vld [vmem:[%s276 + $0x230] sm:$0xff]
        %v1858 = vld [vmem:[%s276 + $0x238] sm:$0xff]
        %v1859 = vld [vmem:[%s276 + $0x240] sm:$0xff]
        %v1860 = vld [vmem:[%s276 + $0x248] sm:$0xff]
        %v1861 = vld [vmem:[%s276 + $0x250] sm:$0xff]
        %v1862 = vld [vmem:[%s276 + $0x258] sm:$0xff]
        %v1863 = vld [vmem:[%s276 + $0x260] sm:$0xff]
        %v1864 = vld [vmem:[%s276 + $0x268] sm:$0xff]
        %v1865 = vld [vmem:[%s276 + $0x270] sm:$0xff]
        %v1866 = vld [vmem:[%s276 + $0x278] sm:$0xff]
        %v1867 = vld [vmem:[%s276 + $0x280] sm:$0xff]
        %v1868 = vld [vmem:[%s276 + $0x288] sm:$0xff]
        %v1869 = vld [vmem:[%s276 + $0x290] sm:$0xff]
        %v1870 = vld [vmem:[%s276 + $0x298] sm:$0xff]
        %v1871 = vld [vmem:[%s276 + $0x2a0] sm:$0xff]
        %v1872 = vld [vmem:[%s276 + $0x2a8] sm:$0xff]
        %v1873 = vld [vmem:[%s276 + $0x2b0] sm:$0xff]
        %v1874 = vld [vmem:[%s276 + $0x2b8] sm:$0xff]
        %v1875 = vld [vmem:[%s276 + $0x2c0] sm:$0xff]
        %v1876 = vld [vmem:[%s276 + $0x2c8] sm:$0xff]
        %v1877 = vld [vmem:[%s276 + $0x2d0] sm:$0xff]
        %v1878 = vld [vmem:[%s276 + $0x2d8] sm:$0xff]
        %v1879 = vld [vmem:[%s276 + $0x2e0] sm:$0xff]
        %v1880 = vld [vmem:[%s276 + $0x2e8] sm:$0xff]
        %v1881 = vld [vmem:[%s276 + $0x2f0] sm:$0xff]
        %v1882 = vld [vmem:[%s276 + $0x2f8] sm:$0xff]
        %v1883 = vld [vmem:[%s276 + $0x300] sm:$0xff]
        %v1884 = vld [vmem:[%s276 + $0x308] sm:$0xff]
        %v1885 = vld [vmem:[%s276 + $0x310] sm:$0xff]
        %v1886 = vld [vmem:[%s276 + $0x318] sm:$0xff]
        %v1887 = vld [vmem:[%s276 + $0x320] sm:$0xff]
        %v1888 = vld [vmem:[%s276 + $0x328] sm:$0xff]
        %v1889 = vld [vmem:[%s276 + $0x330] sm:$0xff]
        %v1890 = vld [vmem:[%s276 + $0x338] sm:$0xff]
        %v1891 = vld [vmem:[%s276 + $0x340] sm:$0xff]
        %v1892 = vld [vmem:[%s276 + $0x348] sm:$0xff]
        %v1893 = vld [vmem:[%s276 + $0x350] sm:$0xff]
        %v1894 = vld [vmem:[%s276 + $0x358] sm:$0xff]
        %v1895 = vld [vmem:[%s276 + $0x360] sm:$0xff]
        %v1896 = vld [vmem:[%s276 + $0x368] sm:$0xff]
        %v1897 = vld [vmem:[%s276 + $0x370] sm:$0xff]
        %v1898 = vld [vmem:[%s276 + $0x378] sm:$0xff]
        %v1899 = vld [vmem:[%s276 + $0x380] sm:$0xff]
        %v1900 = vld [vmem:[%s276 + $0x388] sm:$0xff]
        %v1901 = vld [vmem:[%s276 + $0x390] sm:$0xff]
        %v1902 = vld [vmem:[%s276 + $0x398] sm:$0xff]
        %v1903 = vld [vmem:[%s276 + $0x3a0] sm:$0xff]
        %v1904 = vld [vmem:[%s276 + $0x3a8] sm:$0xff]
        %v1905 = vld [vmem:[%s276 + $0x3b0] sm:$0xff]
        %v1906 = vld [vmem:[%s276 + $0x3b8] sm:$0xff]
        %v1907 = vld [vmem:[%s276 + $0x3c0] sm:$0xff]
        %v1908 = vld [vmem:[%s276 + $0x3c8] sm:$0xff]
        %v1909 = vld [vmem:[%s276 + $0x3d0] sm:$0xff]
        %v1910 = vld [vmem:[%s276 + $0x3d8] sm:$0xff]
        %v1911 = vld [vmem:[%s276 + $0x3e0] sm:$0xff]
        %v1912 = vld [vmem:[%s276 + $0x3e8] sm:$0xff]
        %v1913 = vld [vmem:[%s276 + $0x3f0] sm:$0xff]
        %v1914 = vld [vmem:[%s276 + $0x3f8] sm:$0xff]
        %v1915 = vld [vmem:[%s276 + $0x400] sm:$0xff]
        %v1916 = vld [vmem:[%s276 + $0x408] sm:$0xff]
        %v1917 = vld [vmem:[%s276 + $0x410] sm:$0xff]
        %v1918 = vld [vmem:[%s276 + $0x418] sm:$0xff]
        %v1919 = vld [vmem:[%s276 + $0x420] sm:$0xff]
        %v1920 = vld [vmem:[%s276 + $0x428] sm:$0xff]
        %v1921 = vld [vmem:[%s276 + $0x430] sm:$0xff]
        %v1922 = vld [vmem:[%s276 + $0x438] sm:$0xff]
        %v1923 = vld [vmem:[%s276 + $0x440] sm:$0xff]
        %v1924 = vld [vmem:[%s276 + $0x448] sm:$0xff]
        %v1925 = vld [vmem:[%s276 + $0x450] sm:$0xff]
        %v1926 = vld [vmem:[%s276 + $0x458] sm:$0xff]
        %v1927 = vld [vmem:[%s276 + $0x460] sm:$0xff]
        %v1928 = vld [vmem:[%s276 + $0x468] sm:$0xff]
        %v1929 = vld [vmem:[%s276 + $0x470] sm:$0xff]
        %v1930 = vld [vmem:[%s276 + $0x478] sm:$0xff]
        %v1931 = vld [vmem:[%s276 + $0x480] sm:$0xff]
        %v1932 = vld [vmem:[%s276 + $0x488] sm:$0xff]
        %v1933 = vld [vmem:[%s276 + $0x490] sm:$0xff]
        %v1934 = vld [vmem:[%s276 + $0x498] sm:$0xff]
        %v1935 = vld [vmem:[%s276 + $0x4a0] sm:$0xff]
        %v1936 = vld [vmem:[%s276 + $0x4a8] sm:$0xff]
        %v1937 = vld [vmem:[%s276 + $0x4b0] sm:$0xff]
        %v1938 = vld [vmem:[%s276 + $0x4b8] sm:$0xff]
        %v1939 = vld [vmem:[%s276 + $0x4c0] sm:$0xff]
        %v1940 = vld [vmem:[%s276 + $0x4c8] sm:$0xff]
        %v1941 = vld [vmem:[%s276 + $0x4d0] sm:$0xff]
        %v1942 = vld [vmem:[%s276 + $0x4d8] sm:$0xff]
        %v1943 = vld [vmem:[%s276 + $0x4e0] sm:$0xff]
        %v1944 = vld [vmem:[%s276 + $0x4e8] sm:$0xff]
        %v1945 = vld [vmem:[%s276 + $0x4f0] sm:$0xff]
        %v1946 = vld [vmem:[%s276 + $0x4f8] sm:$0xff]
        %v1947 = vld [vmem:[%s276 + $0x500] sm:$0xff]
        %v1948 = vld [vmem:[%s276 + $0x508] sm:$0xff]
        %v1949 = vld [vmem:[%s276 + $0x510] sm:$0xff]
        %v1950 = vld [vmem:[%s276 + $0x518] sm:$0xff]
        %v1951 = vld [vmem:[%s276 + $0x520] sm:$0xff]
        %v1952 = vld [vmem:[%s276 + $0x528] sm:$0xff]
        %v1953 = vld [vmem:[%s276 + $0x530] sm:$0xff]
        %v1954 = vld [vmem:[%s276 + $0x538] sm:$0xff]
        %v1955 = vld [vmem:[%s276 + $0x540] sm:$0xff]
        %v1956 = vld [vmem:[%s276 + $0x548] sm:$0xff]
        %v1957 = vld [vmem:[%s276 + $0x550] sm:$0xff]
        %v1958 = vld [vmem:[%s276 + $0x558] sm:$0xff]
        %v1959 = vld [vmem:[%s276 + $0x560] sm:$0xff]
        %v1960 = vld [vmem:[%s276 + $0x568] sm:$0xff]
        %v1961 = vld [vmem:[%s276 + $0x570] sm:$0xff]
        %v1962 = vld [vmem:[%s276 + $0x578] sm:$0xff]
        %v1963 = vld [vmem:[%s276 + $0x580] sm:$0xff]
        %v1964 = vld [vmem:[%s276 + $0x588] sm:$0xff]
        %v1965 = vld [vmem:[%s276 + $0x590] sm:$0xff]
        %v1966 = vld [vmem:[%s276 + $0x598] sm:$0xff]
        %v1967 = vld [vmem:[%s276 + $0x5a0] sm:$0xff]
        %v1968 = vld [vmem:[%s276 + $0x5a8] sm:$0xff]
        %v1969 = vld [vmem:[%s276 + $0x5b0] sm:$0xff]
        %v1970 = vld [vmem:[%s276 + $0x5b8] sm:$0xff]
        %v1971 = vld [vmem:[%s276 + $0x5c0] sm:$0xff]
        %v1972 = vld [vmem:[%s276 + $0x5c8] sm:$0xff]
        %v1973 = vld [vmem:[%s276 + $0x5d0] sm:$0xff]
        %v1974 = vld [vmem:[%s276 + $0x5d8] sm:$0xff]
        %v1975 = vld [vmem:[%s276 + $0x5e0] sm:$0xff]
        %v1976 = vld [vmem:[%s276 + $0x5e8] sm:$0xff]
        %v1977 = vld [vmem:[%s276 + $0x5f0] sm:$0xff]
        %v1978 = vld [vmem:[%s276 + $0x5f8] sm:$0xff]
        %v1979 = vld [vmem:[%s276 + $0x600] sm:$0xff]
        %v1980 = vld [vmem:[%s276 + $0x608] sm:$0xff]
        %v1981 = vld [vmem:[%s276 + $0x610] sm:$0xff]
        %v1982 = vld [vmem:[%s276 + $0x618] sm:$0xff]
        %v1983 = vld [vmem:[%s276 + $0x620] sm:$0xff]
        %v1984 = vld [vmem:[%s276 + $0x628] sm:$0xff]
        %v1985 = vld [vmem:[%s276 + $0x630] sm:$0xff]
        %v1986 = vld [vmem:[%s276 + $0x638] sm:$0xff]
        %v1987 = vld [vmem:[%s276 + $0x640] sm:$0xff]
        %v1988 = vld [vmem:[%s276 + $0x648] sm:$0xff]
        %v1989 = vld [vmem:[%s276 + $0x650] sm:$0xff]
        %v1990 = vld [vmem:[%s276 + $0x658] sm:$0xff]
        %v1991 = vld [vmem:[%s276 + $0x660] sm:$0xff]
        %v1992 = vld [vmem:[%s276 + $0x668] sm:$0xff]
        %v1993 = vld [vmem:[%s276 + $0x670] sm:$0xff]
        %v1994 = vld [vmem:[%s276 + $0x678] sm:$0xff]
        %v1995 = vld [vmem:[%s276 + $0x680] sm:$0xff]
        %v1996 = vld [vmem:[%s276 + $0x688] sm:$0xff]
        %v1997 = vld [vmem:[%s276 + $0x690] sm:$0xff]
        %v1998 = vld [vmem:[%s276 + $0x698] sm:$0xff]
        %v1999 = vld [vmem:[%s276 + $0x6a0] sm:$0xff]
        %v2000 = vld [vmem:[%s276 + $0x6a8] sm:$0xff]
        %v2001 = vld [vmem:[%s276 + $0x6b0] sm:$0xff]
        %v2002 = vld [vmem:[%s276 + $0x6b8] sm:$0xff]
        %v2003 = vld [vmem:[%s276 + $0x6c0] sm:$0xff]
        %v2004 = vld [vmem:[%s276 + $0x6c8] sm:$0xff]
        %v2005 = vld [vmem:[%s276 + $0x6d0] sm:$0xff]
        %v2006 = vld [vmem:[%s276 + $0x6d8] sm:$0xff]
        %v2007 = vld [vmem:[%s276 + $0x6e0] sm:$0xff]
        %v2008 = vld [vmem:[%s276 + $0x6e8] sm:$0xff]
        %v2009 = vld [vmem:[%s276 + $0x6f0] sm:$0xff]
        %v2010 = vld [vmem:[%s276 + $0x6f8] sm:$0xff]
        %v2011 = vld [vmem:[%s276 + $0x700] sm:$0xff]
        %v2012 = vld [vmem:[%s276 + $0x708] sm:$0xff]
        %v2013 = vld [vmem:[%s276 + $0x710] sm:$0xff]
        %v2014 = vld [vmem:[%s276 + $0x718] sm:$0xff]
        %v2015 = vld [vmem:[%s276 + $0x720] sm:$0xff]
        %v2016 = vld [vmem:[%s276 + $0x728] sm:$0xff]
        %v2017 = vld [vmem:[%s276 + $0x730] sm:$0xff]
        %v2018 = vld [vmem:[%s276 + $0x738] sm:$0xff]
        %v2019 = vld [vmem:[%s276 + $0x740] sm:$0xff]
        %v2020 = vld [vmem:[%s276 + $0x748] sm:$0xff]
        %v2021 = vld [vmem:[%s276 + $0x750] sm:$0xff]
        %v2022 = vld [vmem:[%s276 + $0x758] sm:$0xff]
        %v2023 = vld [vmem:[%s276 + $0x760] sm:$0xff]
        %v2024 = vld [vmem:[%s276 + $0x768] sm:$0xff]
        %v2025 = vld [vmem:[%s276 + $0x770] sm:$0xff]
        %v2026 = vld [vmem:[%s276 + $0x778] sm:$0xff]
        %v2027 = vld [vmem:[%s276 + $0x780] sm:$0xff]
        %v2028 = vld [vmem:[%s276 + $0x788] sm:$0xff]
        %v2029 = vld [vmem:[%s276 + $0x790] sm:$0xff]
        %v2030 = vld [vmem:[%s276 + $0x798] sm:$0xff]
        %v2031 = vld [vmem:[%s276 + $0x7a0] sm:$0xff]
        %v2032 = vld [vmem:[%s276 + $0x7a8] sm:$0xff]
        %v2033 = vld [vmem:[%s276 + $0x7b0] sm:$0xff]
        %v2034 = vld [vmem:[%s276 + $0x7b8] sm:$0xff]
        %v2035 = vld [vmem:[%s276 + $0x7c0] sm:$0xff]
        %v2036 = vld [vmem:[%s276 + $0x7c8] sm:$0xff]
        %v2037 = vld [vmem:[%s276 + $0x7d0] sm:$0xff]
        %v2038 = vld [vmem:[%s276 + $0x7d8] sm:$0xff]
        %v2039 = vld [vmem:[%s276 + $0x7e0] sm:$0xff]
        %v2040 = vld [vmem:[%s276 + $0x7e8] sm:$0xff]
        %v2041 = vld [vmem:[%s276 + $0x7f0] sm:$0xff]
        %v2042 = vld [vmem:[%s276 + $0x7f8] sm:$0xff]
        %v2043 = vld [vmem:[%s276 + $0x800] sm:$0xff]
        %v2044 = vld [vmem:[%s276 + $0x808] sm:$0xff]
        %v2045 = vld [vmem:[%s276 + $0x810] sm:$0xff]
        %v2046 = vld [vmem:[%s276 + $0x818] sm:$0xff]
        %v2047 = vld [vmem:[%s276 + $0x820] sm:$0xff]
        %v2048 = vld [vmem:[%s276 + $0x828] sm:$0xff]
        %v2049 = vld [vmem:[%s276 + $0x830] sm:$0xff]
        %v2050 = vld [vmem:[%s276 + $0x838] sm:$0xff]
        %v2051 = vld [vmem:[%s276 + $0x840] sm:$0xff]
        %v2052 = vld [vmem:[%s276 + $0x848] sm:$0xff]
        %v2053 = vld [vmem:[%s276 + $0x850] sm:$0xff]
        %v2054 = vld [vmem:[%s276 + $0x858] sm:$0xff]
        %v2055 = vld [vmem:[%s276 + $0x860] sm:$0xff]
        %v2056 = vld [vmem:[%s276 + $0x868] sm:$0xff]
        %v2057 = vld [vmem:[%s276 + $0x870] sm:$0xff]
        %v2058 = vld [vmem:[%s276 + $0x878] sm:$0xff]
        %v2059 = vld [vmem:[%s276 + $0x880] sm:$0xff]
        %v2060 = vld [vmem:[%s276 + $0x888] sm:$0xff]
        %v2061 = vld [vmem:[%s276 + $0x890] sm:$0xff]
        %v2062 = vld [vmem:[%s276 + $0x898] sm:$0xff]
        %v2063 = vld [vmem:[%s276 + $0x8a0] sm:$0xff]
        %v2064 = vld [vmem:[%s276 + $0x8a8] sm:$0xff]
        %v2065 = vld [vmem:[%s276 + $0x8b0] sm:$0xff]
        %v2066 = vld [vmem:[%s276 + $0x8b8] sm:$0xff]
        %v2067 = vld [vmem:[%s276 + $0x8c0] sm:$0xff]
        %v2068 = vld [vmem:[%s276 + $0x8c8] sm:$0xff]
        %v2069 = vld [vmem:[%s276 + $0x8d0] sm:$0xff]
        %v2070 = vld [vmem:[%s276 + $0x8d8] sm:$0xff]
        %v2071 = vld [vmem:[%s276 + $0x8e0] sm:$0xff]
        %v2072 = vld [vmem:[%s276 + $0x8e8] sm:$0xff]
        %v2073 = vld [vmem:[%s276 + $0x8f0] sm:$0xff]
        %v2074 = vld [vmem:[%s276 + $0x8f8] sm:$0xff]
        %v2075 = vld [vmem:[%s276 + $0x900] sm:$0xff]
        %v2076 = vld [vmem:[%s276 + $0x908] sm:$0xff]
        %v2077 = vld [vmem:[%s276 + $0x910] sm:$0xff]
        %v2078 = vld [vmem:[%s276 + $0x918] sm:$0xff]
        %v2079 = vld [vmem:[%s276 + $0x920] sm:$0xff]
        %v2080 = vld [vmem:[%s276 + $0x928] sm:$0xff]
        %v2081 = vld [vmem:[%s276 + $0x930] sm:$0xff]
        %v2082 = vld [vmem:[%s276 + $0x938] sm:$0xff]
        %v2083 = vld [vmem:[%s276 + $0x940] sm:$0xff]
        %v2084 = vld [vmem:[%s276 + $0x948] sm:$0xff]
        %v2085 = vld [vmem:[%s276 + $0x950] sm:$0xff]
        %v2086 = vld [vmem:[%s276 + $0x958] sm:$0xff]
        %v2087 = vld [vmem:[%s276 + $0x960] sm:$0xff]
        %v2088 = vld [vmem:[%s276 + $0x968] sm:$0xff]
        %v2089 = vld [vmem:[%s276 + $0x970] sm:$0xff]
        %v2090 = vld [vmem:[%s276 + $0x978] sm:$0xff]
        %v2091 = vld [vmem:[%s276 + $0x980] sm:$0xff]
        %v2092 = vld [vmem:[%s276 + $0x988] sm:$0xff]
        %v2093 = vld [vmem:[%s276 + $0x990] sm:$0xff]
        %v2094 = vld [vmem:[%s276 + $0x998] sm:$0xff]
        %v2095 = vld [vmem:[%s276 + $0x9a0] sm:$0xff]
        %v2096 = vld [vmem:[%s276 + $0x9a8] sm:$0xff]
        %v2097 = vld [vmem:[%s276 + $0x9b0] sm:$0xff]
        %v2098 = vld [vmem:[%s276 + $0x9b8] sm:$0xff]
        %v2099 = vld [vmem:[%s276 + $0x9c0] sm:$0xff]
        %v2100 = vld [vmem:[%s276 + $0x9c8] sm:$0xff]
        %v2101 = vld [vmem:[%s276 + $0x9d0] sm:$0xff]
        %v2102 = vld [vmem:[%s276 + $0x9d8] sm:$0xff]
        %v2103 = vld [vmem:[%s276 + $0x9e0] sm:$0xff]
        %v2104 = vld [vmem:[%s276 + $0x9e8] sm:$0xff]
        %v2105 = vld [vmem:[%s276 + $0x9f0] sm:$0xff]
        %v2106 = vld [vmem:[%s276 + $0x9f8] sm:$0xff]
        %v2107 = vld [vmem:[%s276 + $0xa00] sm:$0xff]
        %v2108 = vld [vmem:[%s276 + $0xa08] sm:$0xff]
        %v2109 = vld [vmem:[%s276 + $0xa10] sm:$0xff]
        %v2110 = vld [vmem:[%s276 + $0xa18] sm:$0xff]
        %v2111 = vld [vmem:[%s276 + $0xa20] sm:$0xff]
        %v2112 = vld [vmem:[%s276 + $0xa28] sm:$0xff]
        %v2113 = vld [vmem:[%s276 + $0xa30] sm:$0xff]
        %v2114 = vld [vmem:[%s276 + $0xa38] sm:$0xff]
        %v2115 = vld [vmem:[%s276 + $0xa40] sm:$0xff]
        %v2116 = vld [vmem:[%s276 + $0xa48] sm:$0xff]
        %v2117 = vld [vmem:[%s276 + $0xa50] sm:$0xff]
        %v2118 = vld [vmem:[%s276 + $0xa58] sm:$0xff]
        %v2119 = vld [vmem:[%s276 + $0xa60] sm:$0xff]
        %v2120 = vld [vmem:[%s276 + $0xa68] sm:$0xff]
        %v2121 = vld [vmem:[%s276 + $0xa70] sm:$0xff]
        %v2122 = vld [vmem:[%s276 + $0xa78] sm:$0xff]
        %v2123 = vld [vmem:[%s276 + $0xa80] sm:$0xff]
        %v2124 = vld [vmem:[%s276 + $0xa88] sm:$0xff]
        %v2125 = vld [vmem:[%s276 + $0xa90] sm:$0xff]
        %v2126 = vld [vmem:[%s276 + $0xa98] sm:$0xff]
        %v2127 = vld [vmem:[%s276 + $0xaa0] sm:$0xff]
        %v2128 = vld [vmem:[%s276 + $0xaa8] sm:$0xff]
        %v2129 = vld [vmem:[%s276 + $0xab0] sm:$0xff]
        %v2130 = vld [vmem:[%s276 + $0xab8] sm:$0xff]
        %v2131 = vld [vmem:[%s276 + $0xac0] sm:$0xff]
        %v2132 = vld [vmem:[%s276 + $0xac8] sm:$0xff]
        %v2133 = vld [vmem:[%s276 + $0xad0] sm:$0xff]
        %v2134 = vld [vmem:[%s276 + $0xad8] sm:$0xff]
        %v2135 = vld [vmem:[%s276 + $0xae0] sm:$0xff]
        %v2136 = vld [vmem:[%s276 + $0xae8] sm:$0xff]
        %v2137 = vld [vmem:[%s276 + $0xaf0] sm:$0xff]
        %v2138 = vld [vmem:[%s276 + $0xaf8] sm:$0xff]
        %v2139 = vld [vmem:[%s276 + $0xb00] sm:$0xff]
        %v2140 = vld [vmem:[%s276 + $0xb08] sm:$0xff]
        %v2141 = vld [vmem:[%s276 + $0xb10] sm:$0xff]
        %v2142 = vld [vmem:[%s276 + $0xb18] sm:$0xff]
        %v2143 = vld [vmem:[%s276 + $0xb20] sm:$0xff]
        %v2144 = vld [vmem:[%s276 + $0xb28] sm:$0xff]
        %v2145 = vld [vmem:[%s276 + $0xb30] sm:$0xff]
        %v2146 = vld [vmem:[%s276 + $0xb38] sm:$0xff]
        %v2147 = vld [vmem:[%s276 + $0xb40] sm:$0xff]
        %v2148 = vld [vmem:[%s276 + $0xb48] sm:$0xff]
        %v2149 = vld [vmem:[%s276 + $0xb50] sm:$0xff]
        %v2150 = vld [vmem:[%s276 + $0xb58] sm:$0xff]
        %v2151 = vld [vmem:[%s276 + $0xb60] sm:$0xff]
        %v2152 = vld [vmem:[%s276 + $0xb68] sm:$0xff]
        %v2153 = vld [vmem:[%s276 + $0xb70] sm:$0xff]
        %v2154 = vld [vmem:[%s276 + $0xb78] sm:$0xff]
        %v2155 = vld [vmem:[%s276 + $0xb80] sm:$0xff]
        %v2156 = vld [vmem:[%s276 + $0xb88] sm:$0xff]
        %v2157 = vld [vmem:[%s276 + $0xb90] sm:$0xff]
        %v2158 = vld [vmem:[%s276 + $0xb98] sm:$0xff]
        %v2159 = vld [vmem:[%s276 + $0xba0] sm:$0xff]
        %v2160 = vld [vmem:[%s276 + $0xba8] sm:$0xff]
        %v2161 = vld [vmem:[%s276 + $0xbb0] sm:$0xff]
        %v2162 = vld [vmem:[%s276 + $0xbb8] sm:$0xff]
        %v2163 = vld [vmem:[%s276 + $0xbc0] sm:$0xff]
        %v2164 = vld [vmem:[%s276 + $0xbc8] sm:$0xff]
        %v2165 = vld [vmem:[%s276 + $0xbd0] sm:$0xff]
        %v2166 = vld [vmem:[%s276 + $0xbd8] sm:$0xff]
        %v2167 = vld [vmem:[%s276 + $0xbe0] sm:$0xff]
        %v2168 = vld [vmem:[%s276 + $0xbe8] sm:$0xff]
        %v2169 = vld [vmem:[%s276 + $0xbf0] sm:$0xff]
        %v2170 = vld [vmem:[%s276 + $0xbf8] sm:$0xff]
        %v2171 = vld [vmem:[%s276 + $0xc00] sm:$0xff]
        %v2172 = vld [vmem:[%s276 + $0xc08] sm:$0xff]
        %v2173 = vld [vmem:[%s276 + $0xc10] sm:$0xff]
        %v2174 = vld [vmem:[%s276 + $0xc18] sm:$0xff]
        %v2175 = vld [vmem:[%s276 + $0xc20] sm:$0xff]
        %v2176 = vld [vmem:[%s276 + $0xc28] sm:$0xff]
        %v2177 = vld [vmem:[%s276 + $0xc30] sm:$0xff]
        %v2178 = vld [vmem:[%s276 + $0xc38] sm:$0xff]
        %v2179 = vld [vmem:[%s276 + $0xc40] sm:$0xff]
        %v2180 = vld [vmem:[%s276 + $0xc48] sm:$0xff]
        %v2181 = vld [vmem:[%s276 + $0xc50] sm:$0xff]
        %v2182 = vld [vmem:[%s276 + $0xc58] sm:$0xff]
        %v2183 = vld [vmem:[%s276 + $0xc60] sm:$0xff]
        %v2184 = vld [vmem:[%s276 + $0xc68] sm:$0xff]
        %v2185 = vld [vmem:[%s276 + $0xc70] sm:$0xff]
        %v2186 = vld [vmem:[%s276 + $0xc78] sm:$0xff]
        %v2187 = vld [vmem:[%s276 + $0xc80] sm:$0xff]
        %v2188 = vld [vmem:[%s276 + $0xc88] sm:$0xff]
        %v2189 = vld [vmem:[%s276 + $0xc90] sm:$0xff]
        %v2190 = vld [vmem:[%s276 + $0xc98] sm:$0xff]
        %v2191 = vld [vmem:[%s276 + $0xca0] sm:$0xff]
        %v2192 = vld [vmem:[%s276 + $0xca8] sm:$0xff]
        %v2193 = vld [vmem:[%s276 + $0xcb0] sm:$0xff]
        %v2194 = vld [vmem:[%s276 + $0xcb8] sm:$0xff]
        %v2195 = vld [vmem:[%s276 + $0xcc0] sm:$0xff]
        %v2196 = vld [vmem:[%s276 + $0xcc8] sm:$0xff]
        %v2197 = vld [vmem:[%s276 + $0xcd0] sm:$0xff]
        %v2198 = vld [vmem:[%s276 + $0xcd8] sm:$0xff]
        %v2199 = vld [vmem:[%s276 + $0xce0] sm:$0xff]
        %v2200 = vld [vmem:[%s276 + $0xce8] sm:$0xff]
        %v2201 = vld [vmem:[%s276 + $0xcf0] sm:$0xff]
        %v2202 = vld [vmem:[%s276 + $0xcf8] sm:$0xff]
        %v2203 = vld [vmem:[%s276 + $0xd00] sm:$0xff]
        %v2204 = vld [vmem:[%s276 + $0xd08] sm:$0xff]
        %v2205 = vld [vmem:[%s276 + $0xd10] sm:$0xff]
        %v2206 = vld [vmem:[%s276 + $0xd18] sm:$0xff]
        %v2207 = vld [vmem:[%s276 + $0xd20] sm:$0xff]
        %v2208 = vld [vmem:[%s276 + $0xd28] sm:$0xff]
        %v2209 = vld [vmem:[%s276 + $0xd30] sm:$0xff]
        %v2210 = vld [vmem:[%s276 + $0xd38] sm:$0xff]
        %v2211 = vld [vmem:[%s276 + $0xd40] sm:$0xff]
        %v2212 = vld [vmem:[%s276 + $0xd48] sm:$0xff]
        %v2213 = vld [vmem:[%s276 + $0xd50] sm:$0xff]
        %v2214 = vld [vmem:[%s276 + $0xd58] sm:$0xff]
        %v2215 = vld [vmem:[%s276 + $0xd60] sm:$0xff]
        %v2216 = vld [vmem:[%s276 + $0xd68] sm:$0xff]
        %v2217 = vld [vmem:[%s276 + $0xd70] sm:$0xff]
        %v2218 = vld [vmem:[%s276 + $0xd78] sm:$0xff]
        %v2219 = vld [vmem:[%s276 + $0xd80] sm:$0xff]
        %v2220 = vld [vmem:[%s276 + $0xd88] sm:$0xff]
        %v2221 = vld [vmem:[%s276 + $0xd90] sm:$0xff]
        %v2222 = vld [vmem:[%s276 + $0xd98] sm:$0xff]
        %v2223 = vld [vmem:[%s276 + $0xda0] sm:$0xff]
        %v2224 = vld [vmem:[%s276 + $0xda8] sm:$0xff]
        %v2225 = vld [vmem:[%s276 + $0xdb0] sm:$0xff]
        %v2226 = vld [vmem:[%s276 + $0xdb8] sm:$0xff]
        %v2227 = vld [vmem:[%s276 + $0xdc0] sm:$0xff]
        %v2228 = vld [vmem:[%s276 + $0xdc8] sm:$0xff]
        %v2229 = vld [vmem:[%s276 + $0xdd0] sm:$0xff]
        %v2230 = vld [vmem:[%s276 + $0xdd8] sm:$0xff]
        %v2231 = vld [vmem:[%s276 + $0xde0] sm:$0xff]
        %v2232 = vld [vmem:[%s276 + $0xde8] sm:$0xff]
        %v2233 = vld [vmem:[%s276 + $0xdf0] sm:$0xff]
        %v2234 = vld [vmem:[%s276 + $0xdf8] sm:$0xff]
        %v2235 = vld [vmem:[%s276 + $0xe00] sm:$0xff]
        %v2236 = vld [vmem:[%s276 + $0xe08] sm:$0xff]
        %v2237 = vld [vmem:[%s276 + $0xe10] sm:$0xff]
        %v2238 = vld [vmem:[%s276 + $0xe18] sm:$0xff]
        %v2239 = vld [vmem:[%s276 + $0xe20] sm:$0xff]
        %v2240 = vld [vmem:[%s276 + $0xe28] sm:$0xff]
        %v2241 = vld [vmem:[%s276 + $0xe30] sm:$0xff]
        %v2242 = vld [vmem:[%s276 + $0xe38] sm:$0xff]
        %v2243 = vld [vmem:[%s276 + $0xe40] sm:$0xff]
        %v2244 = vld [vmem:[%s276 + $0xe48] sm:$0xff]
        %v2245 = vld [vmem:[%s276 + $0xe50] sm:$0xff]
        %v2246 = vld [vmem:[%s276 + $0xe58] sm:$0xff]
        %v2247 = vld [vmem:[%s276 + $0xe60] sm:$0xff]
        %v2248 = vld [vmem:[%s276 + $0xe68] sm:$0xff]
        %v2249 = vld [vmem:[%s276 + $0xe70] sm:$0xff]
        %v2250 = vld [vmem:[%s276 + $0xe78] sm:$0xff]
        %v2251 = vld [vmem:[%s276 + $0xe80] sm:$0xff]
        %v2252 = vld [vmem:[%s276 + $0xe88] sm:$0xff]
        %v2253 = vld [vmem:[%s276 + $0xe90] sm:$0xff]
        %v2254 = vld [vmem:[%s276 + $0xe98] sm:$0xff]
        %v2255 = vld [vmem:[%s276 + $0xea0] sm:$0xff]
        %v2256 = vld [vmem:[%s276 + $0xea8] sm:$0xff]
        %v2257 = vld [vmem:[%s276 + $0xeb0] sm:$0xff]
        %v2258 = vld [vmem:[%s276 + $0xeb8] sm:$0xff]
        %v2259 = vld [vmem:[%s276 + $0xec0] sm:$0xff]
        %v2260 = vld [vmem:[%s276 + $0xec8] sm:$0xff]
        %v2261 = vld [vmem:[%s276 + $0xed0] sm:$0xff]
        %v2262 = vld [vmem:[%s276 + $0xed8] sm:$0xff]
        %v2263 = vld [vmem:[%s276 + $0xee0] sm:$0xff]
        %v2264 = vld [vmem:[%s276 + $0xee8] sm:$0xff]
        %v2265 = vld [vmem:[%s276 + $0xef0] sm:$0xff]
        %v2266 = vld [vmem:[%s276 + $0xef8] sm:$0xff]
        %v2267 = vld [vmem:[%s276 + $0xf00] sm:$0xff]
        %v2268 = vld [vmem:[%s276 + $0xf08] sm:$0xff]
        %v2269 = vld [vmem:[%s276 + $0xf10] sm:$0xff]
        %v2270 = vld [vmem:[%s276 + $0xf18] sm:$0xff]
        %v2271 = vld [vmem:[%s276 + $0xf20] sm:$0xff]
        %v2272 = vld [vmem:[%s276 + $0xf28] sm:$0xff]
        %v2273 = vld [vmem:[%s276 + $0xf30] sm:$0xff]
        %v2274 = vld [vmem:[%s276 + $0xf38] sm:$0xff]
        %v2275 = vld [vmem:[%s276 + $0xf40] sm:$0xff]
        %v2276 = vld [vmem:[%s276 + $0xf48] sm:$0xff]
        %v2277 = vld [vmem:[%s276 + $0xf50] sm:$0xff]
        %v2278 = vld [vmem:[%s276 + $0xf58] sm:$0xff]
        %v2279 = vld [vmem:[%s276 + $0xf60] sm:$0xff]
        %v2280 = vld [vmem:[%s276 + $0xf68] sm:$0xff]
        %v2281 = vld [vmem:[%s276 + $0xf70] sm:$0xff]
        %v2282 = vld [vmem:[%s276 + $0xf78] sm:$0xff]
        %v2283 = vld [vmem:[%s276 + $0xf80] sm:$0xff]
        %v2284 = vld [vmem:[%s276 + $0xf88] sm:$0xff]
        %v2285 = vld [vmem:[%s276 + $0xf90] sm:$0xff]
        %v2286 = vld [vmem:[%s276 + $0xf98] sm:$0xff]
        %v2287 = vld [vmem:[%s276 + $0xfa0] sm:$0xff]
        %v2288 = vld [vmem:[%s276 + $0xfa8] sm:$0xff]
        %v2289 = vld [vmem:[%s276 + $0xfb0] sm:$0xff]
        %v2290 = vld [vmem:[%s276 + $0xfb8] sm:$0xff]
        %v2291 = vld [vmem:[%s276 + $0xfc0] sm:$0xff]
        %v2292 = vld [vmem:[%s276 + $0xfc8] sm:$0xff]
        %v2293 = vld [vmem:[%s276 + $0xfd0] sm:$0xff]
        %v2294 = vld [vmem:[%s276 + $0xfd8] sm:$0xff]
        %v2295 = vld [vmem:[%s276 + $0xfe0] sm:$0xff]
        %v2296 = vld [vmem:[%s276 + $0xfe8] sm:$0xff]
        %v2297 = vld [vmem:[%s276 + $0xff0] sm:$0xff]
        %v2298 = vld [vmem:[%s276 + $0xff8] sm:$0xff]
        %v2303 = vunpack.c.l.b16 %v1783
        %v2304 = vunpack.c.h.b16 %v1783
        %v2305 = vunpack.c.l.b16 %v1784
        %v2306 = vunpack.c.h.b16 %v1784
        %v2307 = vunpack.c.l.b16 %v1785
        %v2308 = vunpack.c.h.b16 %v1785
        %v2309 = vunpack.c.l.b16 %v1786
        %v2310 = vunpack.c.h.b16 %v1786
        %v2311 = vpack.c.b16 %v2303, %v2303
        %v2312 = vpack.c.b16 %v2304, %v2304
        %v2313 = vpack.c.b16 %v2305, %v2305
        %v2314 = vpack.c.b16 %v2306, %v2306
        %v2315 = vpack.c.b16 %v2307, %v2307
        %v2316 = vpack.c.b16 %v2308, %v2308
        %v2317 = vpack.c.b16 %v2309, %v2309
        %v2318 = vpack.c.b16 %v2310, %v2310
        %v2839 = vunpack.c.l.b16 %v1787
        %v2840 = vunpack.c.h.b16 %v1787
        %v2841 = vunpack.c.l.b16 %v1788
        %v2842 = vunpack.c.h.b16 %v1788
        %v2843 = vunpack.c.l.b16 %v1789
        %v2844 = vunpack.c.h.b16 %v1789
        %v2845 = vunpack.c.l.b16 %v1790
        %v2846 = vunpack.c.h.b16 %v1790
        %v2847 = vunpack.c.l.b16 %v1791
        %v2848 = vunpack.c.h.b16 %v1791
        %v2849 = vunpack.c.l.b16 %v1792
        %v2850 = vunpack.c.h.b16 %v1792
        %v2851 = vunpack.c.l.b16 %v1793
        %v2852 = vunpack.c.h.b16 %v1793
        %v2853 = vunpack.c.l.b16 %v1794
        %v2854 = vunpack.c.h.b16 %v1794
        %v2855 = vunpack.c.l.b16 %v1795
        %v2856 = vunpack.c.h.b16 %v1795
        %v2857 = vunpack.c.l.b16 %v1796
        %v2858 = vunpack.c.h.b16 %v1796
        %v2859 = vunpack.c.l.b16 %v1797
        %v2860 = vunpack.c.h.b16 %v1797
        %v2861 = vunpack.c.l.b16 %v1798
        %v2862 = vunpack.c.h.b16 %v1798
        %v2863 = vunpack.c.l.b16 %v1799
        %v2864 = vunpack.c.h.b16 %v1799
        %v2865 = vunpack.c.l.b16 %v1800
        %v2866 = vunpack.c.h.b16 %v1800
        %v2867 = vunpack.c.l.b16 %v1801
        %v2868 = vunpack.c.h.b16 %v1801
        %v2869 = vunpack.c.l.b16 %v1802
        %v2870 = vunpack.c.h.b16 %v1802
        %v2871 = vunpack.c.l.b16 %v1803
        %v2872 = vunpack.c.h.b16 %v1803
        %v2873 = vunpack.c.l.b16 %v1804
        %v2874 = vunpack.c.h.b16 %v1804
        %v2875 = vunpack.c.l.b16 %v1805
        %v2876 = vunpack.c.h.b16 %v1805
        %v2877 = vunpack.c.l.b16 %v1806
        %v2878 = vunpack.c.h.b16 %v1806
        %v2879 = vunpack.c.l.b16 %v1807
        %v2880 = vunpack.c.h.b16 %v1807
        %v2881 = vunpack.c.l.b16 %v1808
        %v2882 = vunpack.c.h.b16 %v1808
        %v2883 = vunpack.c.l.b16 %v1809
        %v2884 = vunpack.c.h.b16 %v1809
        %v2885 = vunpack.c.l.b16 %v1810
        %v2886 = vunpack.c.h.b16 %v1810
        %v2887 = vunpack.c.l.b16 %v1811
        %v2888 = vunpack.c.h.b16 %v1811
        %v2889 = vunpack.c.l.b16 %v1812
        %v2890 = vunpack.c.h.b16 %v1812
        %v2891 = vunpack.c.l.b16 %v1813
        %v2892 = vunpack.c.h.b16 %v1813
        %v2893 = vunpack.c.l.b16 %v1814
        %v2894 = vunpack.c.h.b16 %v1814
        %v2895 = vunpack.c.l.b16 %v1815
        %v2896 = vunpack.c.h.b16 %v1815
        %v2897 = vunpack.c.l.b16 %v1816
        %v2898 = vunpack.c.h.b16 %v1816
        %v2899 = vunpack.c.l.b16 %v1817
        %v2900 = vunpack.c.h.b16 %v1817
        %v2901 = vunpack.c.l.b16 %v1818
        %v2902 = vunpack.c.h.b16 %v1818
        %v2903 = vunpack.c.l.b16 %v1819
        %v2904 = vunpack.c.h.b16 %v1819
        %v2905 = vunpack.c.l.b16 %v1820
        %v2906 = vunpack.c.h.b16 %v1820
        %v2907 = vunpack.c.l.b16 %v1821
        %v2908 = vunpack.c.h.b16 %v1821
        %v2909 = vunpack.c.l.b16 %v1822
        %v2910 = vunpack.c.h.b16 %v1822
        %v2911 = vunpack.c.l.b16 %v1823
        %v2912 = vunpack.c.h.b16 %v1823
        %v2913 = vunpack.c.l.b16 %v1824
        %v2914 = vunpack.c.h.b16 %v1824
        %v2915 = vunpack.c.l.b16 %v1825
        %v2916 = vunpack.c.h.b16 %v1825
        %v2917 = vunpack.c.l.b16 %v1826
        %v2918 = vunpack.c.h.b16 %v1826
        %v2919 = vunpack.c.l.b16 %v1827
        %v2920 = vunpack.c.h.b16 %v1827
        %v2921 = vunpack.c.l.b16 %v1828
        %v2922 = vunpack.c.h.b16 %v1828
        %v2923 = vunpack.c.l.b16 %v1829
        %v2924 = vunpack.c.h.b16 %v1829
        %v2925 = vunpack.c.l.b16 %v1830
        %v2926 = vunpack.c.h.b16 %v1830
        %v2927 = vunpack.c.l.b16 %v1831
        %v2928 = vunpack.c.h.b16 %v1831
        %v2929 = vunpack.c.l.b16 %v1832
        %v2930 = vunpack.c.h.b16 %v1832
        %v2931 = vunpack.c.l.b16 %v1833
        %v2932 = vunpack.c.h.b16 %v1833
        %v2933 = vunpack.c.l.b16 %v1834
        %v2934 = vunpack.c.h.b16 %v1834
        %v2935 = vunpack.c.l.b16 %v1835
        %v2936 = vunpack.c.h.b16 %v1835
        %v2937 = vunpack.c.l.b16 %v1836
        %v2938 = vunpack.c.h.b16 %v1836
        %v2939 = vunpack.c.l.b16 %v1837
        %v2940 = vunpack.c.h.b16 %v1837
        %v2941 = vunpack.c.l.b16 %v1838
        %v2942 = vunpack.c.h.b16 %v1838
        %v2943 = vunpack.c.l.b16 %v1839
        %v2944 = vunpack.c.h.b16 %v1839
        %v2945 = vunpack.c.l.b16 %v1840
        %v2946 = vunpack.c.h.b16 %v1840
        %v2947 = vunpack.c.l.b16 %v1841
        %v2948 = vunpack.c.h.b16 %v1841
        %v2949 = vunpack.c.l.b16 %v1842
        %v2950 = vunpack.c.h.b16 %v1842
        %v2951 = vunpack.c.l.b16 %v1843
        %v2952 = vunpack.c.h.b16 %v1843
        %v2953 = vunpack.c.l.b16 %v1844
        %v2954 = vunpack.c.h.b16 %v1844
        %v2955 = vunpack.c.l.b16 %v1845
        %v2956 = vunpack.c.h.b16 %v1845
        %v2957 = vunpack.c.l.b16 %v1846
        %v2958 = vunpack.c.h.b16 %v1846
        %v2959 = vunpack.c.l.b16 %v1847
        %v2960 = vunpack.c.h.b16 %v1847
        %v2961 = vunpack.c.l.b16 %v1848
        %v2962 = vunpack.c.h.b16 %v1848
        %v2963 = vunpack.c.l.b16 %v1849
        %v2964 = vunpack.c.h.b16 %v1849
        %v2965 = vunpack.c.l.b16 %v1850
        %v2966 = vunpack.c.h.b16 %v1850
        %v2967 = vunpack.c.l.b16 %v1851
        %v2968 = vunpack.c.h.b16 %v1851
        %v2969 = vunpack.c.l.b16 %v1852
        %v2970 = vunpack.c.h.b16 %v1852
        %v2971 = vunpack.c.l.b16 %v1853
        %v2972 = vunpack.c.h.b16 %v1853
        %v2973 = vunpack.c.l.b16 %v1854
        %v2974 = vunpack.c.h.b16 %v1854
        %v2975 = vunpack.c.l.b16 %v1855
        %v2976 = vunpack.c.h.b16 %v1855
        %v2977 = vunpack.c.l.b16 %v1856
        %v2978 = vunpack.c.h.b16 %v1856
        %v2979 = vunpack.c.l.b16 %v1857
        %v2980 = vunpack.c.h.b16 %v1857
        %v2981 = vunpack.c.l.b16 %v1858
        %v2982 = vunpack.c.h.b16 %v1858
        %v2983 = vunpack.c.l.b16 %v1859
        %v2984 = vunpack.c.h.b16 %v1859
        %v2985 = vunpack.c.l.b16 %v1860
        %v2986 = vunpack.c.h.b16 %v1860
        %v2987 = vunpack.c.l.b16 %v1861
        %v2988 = vunpack.c.h.b16 %v1861
        %v2989 = vunpack.c.l.b16 %v1862
        %v2990 = vunpack.c.h.b16 %v1862
        %v2991 = vunpack.c.l.b16 %v1863
        %v2992 = vunpack.c.h.b16 %v1863
        %v2993 = vunpack.c.l.b16 %v1864
        %v2994 = vunpack.c.h.b16 %v1864
        %v2995 = vunpack.c.l.b16 %v1865
        %v2996 = vunpack.c.h.b16 %v1865
        %v2997 = vunpack.c.l.b16 %v1866
        %v2998 = vunpack.c.h.b16 %v1866
        %v2999 = vunpack.c.l.b16 %v1867
        %v3000 = vunpack.c.h.b16 %v1867
        %v3001 = vunpack.c.l.b16 %v1868
        %v3002 = vunpack.c.h.b16 %v1868
        %v3003 = vunpack.c.l.b16 %v1869
        %v3004 = vunpack.c.h.b16 %v1869
        %v3005 = vunpack.c.l.b16 %v1870
        %v3006 = vunpack.c.h.b16 %v1870
        %v3007 = vunpack.c.l.b16 %v1871
        %v3008 = vunpack.c.h.b16 %v1871
        %v3009 = vunpack.c.l.b16 %v1872
        %v3010 = vunpack.c.h.b16 %v1872
        %v3011 = vunpack.c.l.b16 %v1873
        %v3012 = vunpack.c.h.b16 %v1873
        %v3013 = vunpack.c.l.b16 %v1874
        %v3014 = vunpack.c.h.b16 %v1874
        %v3015 = vunpack.c.l.b16 %v1875
        %v3016 = vunpack.c.h.b16 %v1875
        %v3017 = vunpack.c.l.b16 %v1876
        %v3018 = vunpack.c.h.b16 %v1876
        %v3019 = vunpack.c.l.b16 %v1877
        %v3020 = vunpack.c.h.b16 %v1877
        %v3021 = vunpack.c.l.b16 %v1878
        %v3022 = vunpack.c.h.b16 %v1878
        %v3023 = vunpack.c.l.b16 %v1879
        %v3024 = vunpack.c.h.b16 %v1879
        %v3025 = vunpack.c.l.b16 %v1880
        %v3026 = vunpack.c.h.b16 %v1880
        %v3027 = vunpack.c.l.b16 %v1881
        %v3028 = vunpack.c.h.b16 %v1881
        %v3029 = vunpack.c.l.b16 %v1882
        %v3030 = vunpack.c.h.b16 %v1882
        %v3031 = vunpack.c.l.b16 %v1883
        %v3032 = vunpack.c.h.b16 %v1883
        %v3033 = vunpack.c.l.b16 %v1884
        %v3034 = vunpack.c.h.b16 %v1884
        %v3035 = vunpack.c.l.b16 %v1885
        %v3036 = vunpack.c.h.b16 %v1885
        %v3037 = vunpack.c.l.b16 %v1886
        %v3038 = vunpack.c.h.b16 %v1886
        %v3039 = vunpack.c.l.b16 %v1887
        %v3040 = vunpack.c.h.b16 %v1887
        %v3041 = vunpack.c.l.b16 %v1888
        %v3042 = vunpack.c.h.b16 %v1888
        %v3043 = vunpack.c.l.b16 %v1889
        %v3044 = vunpack.c.h.b16 %v1889
        %v3045 = vunpack.c.l.b16 %v1890
        %v3046 = vunpack.c.h.b16 %v1890
        %v3047 = vunpack.c.l.b16 %v1891
        %v3048 = vunpack.c.h.b16 %v1891
        %v3049 = vunpack.c.l.b16 %v1892
        %v3050 = vunpack.c.h.b16 %v1892
        %v3051 = vunpack.c.l.b16 %v1893
        %v3052 = vunpack.c.h.b16 %v1893
        %v3053 = vunpack.c.l.b16 %v1894
        %v3054 = vunpack.c.h.b16 %v1894
        %v3055 = vunpack.c.l.b16 %v1895
        %v3056 = vunpack.c.h.b16 %v1895
        %v3057 = vunpack.c.l.b16 %v1896
        %v3058 = vunpack.c.h.b16 %v1896
        %v3059 = vunpack.c.l.b16 %v1897
        %v3060 = vunpack.c.h.b16 %v1897
        %v3061 = vunpack.c.l.b16 %v1898
        %v3062 = vunpack.c.h.b16 %v1898
        %v3063 = vunpack.c.l.b16 %v1899
        %v3064 = vunpack.c.h.b16 %v1899
        %v3065 = vunpack.c.l.b16 %v1900
        %v3066 = vunpack.c.h.b16 %v1900
        %v3067 = vunpack.c.l.b16 %v1901
        %v3068 = vunpack.c.h.b16 %v1901
        %v3069 = vunpack.c.l.b16 %v1902
        %v3070 = vunpack.c.h.b16 %v1902
        %v3071 = vunpack.c.l.b16 %v1903
        %v3072 = vunpack.c.h.b16 %v1903
        %v3073 = vunpack.c.l.b16 %v1904
        %v3074 = vunpack.c.h.b16 %v1904
        %v3075 = vunpack.c.l.b16 %v1905
        %v3076 = vunpack.c.h.b16 %v1905
        %v3077 = vunpack.c.l.b16 %v1906
        %v3078 = vunpack.c.h.b16 %v1906
        %v3079 = vunpack.c.l.b16 %v1907
        %v3080 = vunpack.c.h.b16 %v1907
        %v3081 = vunpack.c.l.b16 %v1908
        %v3082 = vunpack.c.h.b16 %v1908
        %v3083 = vunpack.c.l.b16 %v1909
        %v3084 = vunpack.c.h.b16 %v1909
        %v3085 = vunpack.c.l.b16 %v1910
        %v3086 = vunpack.c.h.b16 %v1910
        %v3087 = vunpack.c.l.b16 %v1911
        %v3088 = vunpack.c.h.b16 %v1911
        %v3089 = vunpack.c.l.b16 %v1912
        %v3090 = vunpack.c.h.b16 %v1912
        %v3091 = vunpack.c.l.b16 %v1913
        %v3092 = vunpack.c.h.b16 %v1913
        %v3093 = vunpack.c.l.b16 %v1914
        %v3094 = vunpack.c.h.b16 %v1914
        %v3095 = vunpack.c.l.b16 %v1915
        %v3096 = vunpack.c.h.b16 %v1915
        %v3097 = vunpack.c.l.b16 %v1916
        %v3098 = vunpack.c.h.b16 %v1916
        %v3099 = vunpack.c.l.b16 %v1917
        %v3100 = vunpack.c.h.b16 %v1917
        %v3101 = vunpack.c.l.b16 %v1918
        %v3102 = vunpack.c.h.b16 %v1918
        %v3103 = vunpack.c.l.b16 %v1919
        %v3104 = vunpack.c.h.b16 %v1919
        %v3105 = vunpack.c.l.b16 %v1920
        %v3106 = vunpack.c.h.b16 %v1920
        %v3107 = vunpack.c.l.b16 %v1921
        %v3108 = vunpack.c.h.b16 %v1921
        %v3109 = vunpack.c.l.b16 %v1922
        %v3110 = vunpack.c.h.b16 %v1922
        %v3111 = vunpack.c.l.b16 %v1923
        %v3112 = vunpack.c.h.b16 %v1923
        %v3113 = vunpack.c.l.b16 %v1924
        %v3114 = vunpack.c.h.b16 %v1924
        %v3115 = vunpack.c.l.b16 %v1925
        %v3116 = vunpack.c.h.b16 %v1925
        %v3117 = vunpack.c.l.b16 %v1926
        %v3118 = vunpack.c.h.b16 %v1926
        %v3119 = vunpack.c.l.b16 %v1927
        %v3120 = vunpack.c.h.b16 %v1927
        %v3121 = vunpack.c.l.b16 %v1928
        %v3122 = vunpack.c.h.b16 %v1928
        %v3123 = vunpack.c.l.b16 %v1929
        %v3124 = vunpack.c.h.b16 %v1929
        %v3125 = vunpack.c.l.b16 %v1930
        %v3126 = vunpack.c.h.b16 %v1930
        %v3127 = vunpack.c.l.b16 %v1931
        %v3128 = vunpack.c.h.b16 %v1931
        %v3129 = vunpack.c.l.b16 %v1932
        %v3130 = vunpack.c.h.b16 %v1932
        %v3131 = vunpack.c.l.b16 %v1933
        %v3132 = vunpack.c.h.b16 %v1933
        %v3133 = vunpack.c.l.b16 %v1934
        %v3134 = vunpack.c.h.b16 %v1934
        %v3135 = vunpack.c.l.b16 %v1935
        %v3136 = vunpack.c.h.b16 %v1935
        %v3137 = vunpack.c.l.b16 %v1936
        %v3138 = vunpack.c.h.b16 %v1936
        %v3139 = vunpack.c.l.b16 %v1937
        %v3140 = vunpack.c.h.b16 %v1937
        %v3141 = vunpack.c.l.b16 %v1938
        %v3142 = vunpack.c.h.b16 %v1938
        %v3143 = vunpack.c.l.b16 %v1939
        %v3144 = vunpack.c.h.b16 %v1939
        %v3145 = vunpack.c.l.b16 %v1940
        %v3146 = vunpack.c.h.b16 %v1940
        %v3147 = vunpack.c.l.b16 %v1941
        %v3148 = vunpack.c.h.b16 %v1941
        %v3149 = vunpack.c.l.b16 %v1942
        %v3150 = vunpack.c.h.b16 %v1942
        %v3151 = vunpack.c.l.b16 %v1943
        %v3152 = vunpack.c.h.b16 %v1943
        %v3153 = vunpack.c.l.b16 %v1944
        %v3154 = vunpack.c.h.b16 %v1944
        %v3155 = vunpack.c.l.b16 %v1945
        %v3156 = vunpack.c.h.b16 %v1945
        %v3157 = vunpack.c.l.b16 %v1946
        %v3158 = vunpack.c.h.b16 %v1946
        %v3159 = vunpack.c.l.b16 %v1947
        %v3160 = vunpack.c.h.b16 %v1947
        %v3161 = vunpack.c.l.b16 %v1948
        %v3162 = vunpack.c.h.b16 %v1948
        %v3163 = vunpack.c.l.b16 %v1949
        %v3164 = vunpack.c.h.b16 %v1949
        %v3165 = vunpack.c.l.b16 %v1950
        %v3166 = vunpack.c.h.b16 %v1950
        %v3167 = vunpack.c.l.b16 %v1951
        %v3168 = vunpack.c.h.b16 %v1951
        %v3169 = vunpack.c.l.b16 %v1952
        %v3170 = vunpack.c.h.b16 %v1952
        %v3171 = vunpack.c.l.b16 %v1953
        %v3172 = vunpack.c.h.b16 %v1953
        %v3173 = vunpack.c.l.b16 %v1954
        %v3174 = vunpack.c.h.b16 %v1954
        %v3175 = vunpack.c.l.b16 %v1955
        %v3176 = vunpack.c.h.b16 %v1955
        %v3177 = vunpack.c.l.b16 %v1956
        %v3178 = vunpack.c.h.b16 %v1956
        %v3179 = vunpack.c.l.b16 %v1957
        %v3180 = vunpack.c.h.b16 %v1957
        %v3181 = vunpack.c.l.b16 %v1958
        %v3182 = vunpack.c.h.b16 %v1958
        %v3183 = vunpack.c.l.b16 %v1959
        %v3184 = vunpack.c.h.b16 %v1959
        %v3185 = vunpack.c.l.b16 %v1960
        %v3186 = vunpack.c.h.b16 %v1960
        %v3187 = vunpack.c.l.b16 %v1961
        %v3188 = vunpack.c.h.b16 %v1961
        %v3189 = vunpack.c.l.b16 %v1962
        %v3190 = vunpack.c.h.b16 %v1962
        %v3191 = vunpack.c.l.b16 %v1963
        %v3192 = vunpack.c.h.b16 %v1963
        %v3193 = vunpack.c.l.b16 %v1964
        %v3194 = vunpack.c.h.b16 %v1964
        %v3195 = vunpack.c.l.b16 %v1965
        %v3196 = vunpack.c.h.b16 %v1965
        %v3197 = vunpack.c.l.b16 %v1966
        %v3198 = vunpack.c.h.b16 %v1966
        %v3199 = vunpack.c.l.b16 %v1967
        %v3200 = vunpack.c.h.b16 %v1967
        %v3201 = vunpack.c.l.b16 %v1968
        %v3202 = vunpack.c.h.b16 %v1968
        %v3203 = vunpack.c.l.b16 %v1969
        %v3204 = vunpack.c.h.b16 %v1969
        %v3205 = vunpack.c.l.b16 %v1970
        %v3206 = vunpack.c.h.b16 %v1970
        %v3207 = vunpack.c.l.b16 %v1971
        %v3208 = vunpack.c.h.b16 %v1971
        %v3209 = vunpack.c.l.b16 %v1972
        %v3210 = vunpack.c.h.b16 %v1972
        %v3211 = vunpack.c.l.b16 %v1973
        %v3212 = vunpack.c.h.b16 %v1973
        %v3213 = vunpack.c.l.b16 %v1974
        %v3214 = vunpack.c.h.b16 %v1974
        %v3215 = vunpack.c.l.b16 %v1975
        %v3216 = vunpack.c.h.b16 %v1975
        %v3217 = vunpack.c.l.b16 %v1976
        %v3218 = vunpack.c.h.b16 %v1976
        %v3219 = vunpack.c.l.b16 %v1977
        %v3220 = vunpack.c.h.b16 %v1977
        %v3221 = vunpack.c.l.b16 %v1978
        %v3222 = vunpack.c.h.b16 %v1978
        %v3223 = vunpack.c.l.b16 %v1979
        %v3224 = vunpack.c.h.b16 %v1979
        %v3225 = vunpack.c.l.b16 %v1980
        %v3226 = vunpack.c.h.b16 %v1980
        %v3227 = vunpack.c.l.b16 %v1981
        %v3228 = vunpack.c.h.b16 %v1981
        %v3229 = vunpack.c.l.b16 %v1982
        %v3230 = vunpack.c.h.b16 %v1982
        %v3231 = vunpack.c.l.b16 %v1983
        %v3232 = vunpack.c.h.b16 %v1983
        %v3233 = vunpack.c.l.b16 %v1984
        %v3234 = vunpack.c.h.b16 %v1984
        %v3235 = vunpack.c.l.b16 %v1985
        %v3236 = vunpack.c.h.b16 %v1985
        %v3237 = vunpack.c.l.b16 %v1986
        %v3238 = vunpack.c.h.b16 %v1986
        %v3239 = vunpack.c.l.b16 %v1987
        %v3240 = vunpack.c.h.b16 %v1987
        %v3241 = vunpack.c.l.b16 %v1988
        %v3242 = vunpack.c.h.b16 %v1988
        %v3243 = vunpack.c.l.b16 %v1989
        %v3244 = vunpack.c.h.b16 %v1989
        %v3245 = vunpack.c.l.b16 %v1990
        %v3246 = vunpack.c.h.b16 %v1990
        %v3247 = vunpack.c.l.b16 %v1991
        %v3248 = vunpack.c.h.b16 %v1991
        %v3249 = vunpack.c.l.b16 %v1992
        %v3250 = vunpack.c.h.b16 %v1992
        %v3251 = vunpack.c.l.b16 %v1993
        %v3252 = vunpack.c.h.b16 %v1993
        %v3253 = vunpack.c.l.b16 %v1994
        %v3254 = vunpack.c.h.b16 %v1994
        %v3255 = vunpack.c.l.b16 %v1995
        %v3256 = vunpack.c.h.b16 %v1995
        %v3257 = vunpack.c.l.b16 %v1996
        %v3258 = vunpack.c.h.b16 %v1996
        %v3259 = vunpack.c.l.b16 %v1997
        %v3260 = vunpack.c.h.b16 %v1997
        %v3261 = vunpack.c.l.b16 %v1998
        %v3262 = vunpack.c.h.b16 %v1998
        %v3263 = vunpack.c.l.b16 %v1999
        %v3264 = vunpack.c.h.b16 %v1999
        %v3265 = vunpack.c.l.b16 %v2000
        %v3266 = vunpack.c.h.b16 %v2000
        %v3267 = vunpack.c.l.b16 %v2001
        %v3268 = vunpack.c.h.b16 %v2001
        %v3269 = vunpack.c.l.b16 %v2002
        %v3270 = vunpack.c.h.b16 %v2002
        %v3271 = vunpack.c.l.b16 %v2003
        %v3272 = vunpack.c.h.b16 %v2003
        %v3273 = vunpack.c.l.b16 %v2004
        %v3274 = vunpack.c.h.b16 %v2004
        %v3275 = vunpack.c.l.b16 %v2005
        %v3276 = vunpack.c.h.b16 %v2005
        %v3277 = vunpack.c.l.b16 %v2006
        %v3278 = vunpack.c.h.b16 %v2006
        %v3279 = vunpack.c.l.b16 %v2007
        %v3280 = vunpack.c.h.b16 %v2007
        %v3281 = vunpack.c.l.b16 %v2008
        %v3282 = vunpack.c.h.b16 %v2008
        %v3283 = vunpack.c.l.b16 %v2009
        %v3284 = vunpack.c.h.b16 %v2009
        %v3285 = vunpack.c.l.b16 %v2010
        %v3286 = vunpack.c.h.b16 %v2010
        %v3287 = vunpack.c.l.b16 %v2011
        %v3288 = vunpack.c.h.b16 %v2011
        %v3289 = vunpack.c.l.b16 %v2012
        %v3290 = vunpack.c.h.b16 %v2012
        %v3291 = vunpack.c.l.b16 %v2013
        %v3292 = vunpack.c.h.b16 %v2013
        %v3293 = vunpack.c.l.b16 %v2014
        %v3294 = vunpack.c.h.b16 %v2014
        %v3295 = vunpack.c.l.b16 %v2015
        %v3296 = vunpack.c.h.b16 %v2015
        %v3297 = vunpack.c.l.b16 %v2016
        %v3298 = vunpack.c.h.b16 %v2016
        %v3299 = vunpack.c.l.b16 %v2017
        %v3300 = vunpack.c.h.b16 %v2017
        %v3301 = vunpack.c.l.b16 %v2018
        %v3302 = vunpack.c.h.b16 %v2018
        %v3303 = vunpack.c.l.b16 %v2019
        %v3304 = vunpack.c.h.b16 %v2019
        %v3305 = vunpack.c.l.b16 %v2020
        %v3306 = vunpack.c.h.b16 %v2020
        %v3307 = vunpack.c.l.b16 %v2021
        %v3308 = vunpack.c.h.b16 %v2021
        %v3309 = vunpack.c.l.b16 %v2022
        %v3310 = vunpack.c.h.b16 %v2022
        %v3311 = vunpack.c.l.b16 %v2023
        %v3312 = vunpack.c.h.b16 %v2023
        %v3313 = vunpack.c.l.b16 %v2024
        %v3314 = vunpack.c.h.b16 %v2024
        %v3315 = vunpack.c.l.b16 %v2025
        %v3316 = vunpack.c.h.b16 %v2025
        %v3317 = vunpack.c.l.b16 %v2026
        %v3318 = vunpack.c.h.b16 %v2026
        %v3319 = vunpack.c.l.b16 %v2027
        %v3320 = vunpack.c.h.b16 %v2027
        %v3321 = vunpack.c.l.b16 %v2028
        %v3322 = vunpack.c.h.b16 %v2028
        %v3323 = vunpack.c.l.b16 %v2029
        %v3324 = vunpack.c.h.b16 %v2029
        %v3325 = vunpack.c.l.b16 %v2030
        %v3326 = vunpack.c.h.b16 %v2030
        %v3327 = vunpack.c.l.b16 %v2031
        %v3328 = vunpack.c.h.b16 %v2031
        %v3329 = vunpack.c.l.b16 %v2032
        %v3330 = vunpack.c.h.b16 %v2032
        %v3331 = vunpack.c.l.b16 %v2033
        %v3332 = vunpack.c.h.b16 %v2033
        %v3333 = vunpack.c.l.b16 %v2034
        %v3334 = vunpack.c.h.b16 %v2034
        %v3335 = vunpack.c.l.b16 %v2035
        %v3336 = vunpack.c.h.b16 %v2035
        %v3337 = vunpack.c.l.b16 %v2036
        %v3338 = vunpack.c.h.b16 %v2036
        %v3339 = vunpack.c.l.b16 %v2037
        %v3340 = vunpack.c.h.b16 %v2037
        %v3341 = vunpack.c.l.b16 %v2038
        %v3342 = vunpack.c.h.b16 %v2038
        %v3343 = vunpack.c.l.b16 %v2039
        %v3344 = vunpack.c.h.b16 %v2039
        %v3345 = vunpack.c.l.b16 %v2040
        %v3346 = vunpack.c.h.b16 %v2040
        %v3347 = vunpack.c.l.b16 %v2041
        %v3348 = vunpack.c.h.b16 %v2041
        %v3349 = vunpack.c.l.b16 %v2042
        %v3350 = vunpack.c.h.b16 %v2042
        %v3351 = vunpack.c.l.b16 %v2043
        %v3352 = vunpack.c.h.b16 %v2043
        %v3353 = vunpack.c.l.b16 %v2044
        %v3354 = vunpack.c.h.b16 %v2044
        %v3355 = vunpack.c.l.b16 %v2045
        %v3356 = vunpack.c.h.b16 %v2045
        %v3357 = vunpack.c.l.b16 %v2046
        %v3358 = vunpack.c.h.b16 %v2046
        %v3359 = vunpack.c.l.b16 %v2047
        %v3360 = vunpack.c.h.b16 %v2047
        %v3361 = vunpack.c.l.b16 %v2048
        %v3362 = vunpack.c.h.b16 %v2048
        %v3363 = vunpack.c.l.b16 %v2049
        %v3364 = vunpack.c.h.b16 %v2049
        %v3365 = vunpack.c.l.b16 %v2050
        %v3366 = vunpack.c.h.b16 %v2050
        %v3367 = vunpack.c.l.b16 %v2051
        %v3368 = vunpack.c.h.b16 %v2051
        %v3369 = vunpack.c.l.b16 %v2052
        %v3370 = vunpack.c.h.b16 %v2052
        %v3371 = vunpack.c.l.b16 %v2053
        %v3372 = vunpack.c.h.b16 %v2053
        %v3373 = vunpack.c.l.b16 %v2054
        %v3374 = vunpack.c.h.b16 %v2054
        %v3375 = vunpack.c.l.b16 %v2055
        %v3376 = vunpack.c.h.b16 %v2055
        %v3377 = vunpack.c.l.b16 %v2056
        %v3378 = vunpack.c.h.b16 %v2056
        %v3379 = vunpack.c.l.b16 %v2057
        %v3380 = vunpack.c.h.b16 %v2057
        %v3381 = vunpack.c.l.b16 %v2058
        %v3382 = vunpack.c.h.b16 %v2058
        %v3383 = vunpack.c.l.b16 %v2059
        %v3384 = vunpack.c.h.b16 %v2059
        %v3385 = vunpack.c.l.b16 %v2060
        %v3386 = vunpack.c.h.b16 %v2060
        %v3387 = vunpack.c.l.b16 %v2061
        %v3388 = vunpack.c.h.b16 %v2061
        %v3389 = vunpack.c.l.b16 %v2062
        %v3390 = vunpack.c.h.b16 %v2062
        %v3391 = vunpack.c.l.b16 %v2063
        %v3392 = vunpack.c.h.b16 %v2063
        %v3393 = vunpack.c.l.b16 %v2064
        %v3394 = vunpack.c.h.b16 %v2064
        %v3395 = vunpack.c.l.b16 %v2065
        %v3396 = vunpack.c.h.b16 %v2065
        %v3397 = vunpack.c.l.b16 %v2066
        %v3398 = vunpack.c.h.b16 %v2066
        %v3399 = vunpack.c.l.b16 %v2067
        %v3400 = vunpack.c.h.b16 %v2067
        %v3401 = vunpack.c.l.b16 %v2068
        %v3402 = vunpack.c.h.b16 %v2068
        %v3403 = vunpack.c.l.b16 %v2069
        %v3404 = vunpack.c.h.b16 %v2069
        %v3405 = vunpack.c.l.b16 %v2070
        %v3406 = vunpack.c.h.b16 %v2070
        %v3407 = vunpack.c.l.b16 %v2071
        %v3408 = vunpack.c.h.b16 %v2071
        %v3409 = vunpack.c.l.b16 %v2072
        %v3410 = vunpack.c.h.b16 %v2072
        %v3411 = vunpack.c.l.b16 %v2073
        %v3412 = vunpack.c.h.b16 %v2073
        %v3413 = vunpack.c.l.b16 %v2074
        %v3414 = vunpack.c.h.b16 %v2074
        %v3415 = vunpack.c.l.b16 %v2075
        %v3416 = vunpack.c.h.b16 %v2075
        %v3417 = vunpack.c.l.b16 %v2076
        %v3418 = vunpack.c.h.b16 %v2076
        %v3419 = vunpack.c.l.b16 %v2077
        %v3420 = vunpack.c.h.b16 %v2077
        %v3421 = vunpack.c.l.b16 %v2078
        %v3422 = vunpack.c.h.b16 %v2078
        %v3423 = vunpack.c.l.b16 %v2079
        %v3424 = vunpack.c.h.b16 %v2079
        %v3425 = vunpack.c.l.b16 %v2080
        %v3426 = vunpack.c.h.b16 %v2080
        %v3427 = vunpack.c.l.b16 %v2081
        %v3428 = vunpack.c.h.b16 %v2081
        %v3429 = vunpack.c.l.b16 %v2082
        %v3430 = vunpack.c.h.b16 %v2082
        %v3431 = vunpack.c.l.b16 %v2083
        %v3432 = vunpack.c.h.b16 %v2083
        %v3433 = vunpack.c.l.b16 %v2084
        %v3434 = vunpack.c.h.b16 %v2084
        %v3435 = vunpack.c.l.b16 %v2085
        %v3436 = vunpack.c.h.b16 %v2085
        %v3437 = vunpack.c.l.b16 %v2086
        %v3438 = vunpack.c.h.b16 %v2086
        %v3439 = vunpack.c.l.b16 %v2087
        %v3440 = vunpack.c.h.b16 %v2087
        %v3441 = vunpack.c.l.b16 %v2088
        %v3442 = vunpack.c.h.b16 %v2088
        %v3443 = vunpack.c.l.b16 %v2089
        %v3444 = vunpack.c.h.b16 %v2089
        %v3445 = vunpack.c.l.b16 %v2090
        %v3446 = vunpack.c.h.b16 %v2090
        %v3447 = vunpack.c.l.b16 %v2091
        %v3448 = vunpack.c.h.b16 %v2091
        %v3449 = vunpack.c.l.b16 %v2092
        %v3450 = vunpack.c.h.b16 %v2092
        %v3451 = vunpack.c.l.b16 %v2093
        %v3452 = vunpack.c.h.b16 %v2093
        %v3453 = vunpack.c.l.b16 %v2094
        %v3454 = vunpack.c.h.b16 %v2094
        %v3455 = vunpack.c.l.b16 %v2095
        %v3456 = vunpack.c.h.b16 %v2095
        %v3457 = vunpack.c.l.b16 %v2096
        %v3458 = vunpack.c.h.b16 %v2096
        %v3459 = vunpack.c.l.b16 %v2097
        %v3460 = vunpack.c.h.b16 %v2097
        %v3461 = vunpack.c.l.b16 %v2098
        %v3462 = vunpack.c.h.b16 %v2098
        %v3463 = vunpack.c.l.b16 %v2099
        %v3464 = vunpack.c.h.b16 %v2099
        %v3465 = vunpack.c.l.b16 %v2100
        %v3466 = vunpack.c.h.b16 %v2100
        %v3467 = vunpack.c.l.b16 %v2101
        %v3468 = vunpack.c.h.b16 %v2101
        %v3469 = vunpack.c.l.b16 %v2102
        %v3470 = vunpack.c.h.b16 %v2102
        %v3471 = vunpack.c.l.b16 %v2103
        %v3472 = vunpack.c.h.b16 %v2103
        %v3473 = vunpack.c.l.b16 %v2104
        %v3474 = vunpack.c.h.b16 %v2104
        %v3475 = vunpack.c.l.b16 %v2105
        %v3476 = vunpack.c.h.b16 %v2105
        %v3477 = vunpack.c.l.b16 %v2106
        %v3478 = vunpack.c.h.b16 %v2106
        %v3479 = vunpack.c.l.b16 %v2107
        %v3480 = vunpack.c.h.b16 %v2107
        %v3481 = vunpack.c.l.b16 %v2108
        %v3482 = vunpack.c.h.b16 %v2108
        %v3483 = vunpack.c.l.b16 %v2109
        %v3484 = vunpack.c.h.b16 %v2109
        %v3485 = vunpack.c.l.b16 %v2110
        %v3486 = vunpack.c.h.b16 %v2110
        %v3487 = vunpack.c.l.b16 %v2111
        %v3488 = vunpack.c.h.b16 %v2111
        %v3489 = vunpack.c.l.b16 %v2112
        %v3490 = vunpack.c.h.b16 %v2112
        %v3491 = vunpack.c.l.b16 %v2113
        %v3492 = vunpack.c.h.b16 %v2113
        %v3493 = vunpack.c.l.b16 %v2114
        %v3494 = vunpack.c.h.b16 %v2114
        %v3495 = vunpack.c.l.b16 %v2115
        %v3496 = vunpack.c.h.b16 %v2115
        %v3497 = vunpack.c.l.b16 %v2116
        %v3498 = vunpack.c.h.b16 %v2116
        %v3499 = vunpack.c.l.b16 %v2117
        %v3500 = vunpack.c.h.b16 %v2117
        %v3501 = vunpack.c.l.b16 %v2118
        %v3502 = vunpack.c.h.b16 %v2118
        %v3503 = vunpack.c.l.b16 %v2119
        %v3504 = vunpack.c.h.b16 %v2119
        %v3505 = vunpack.c.l.b16 %v2120
        %v3506 = vunpack.c.h.b16 %v2120
        %v3507 = vunpack.c.l.b16 %v2121
        %v3508 = vunpack.c.h.b16 %v2121
        %v3509 = vunpack.c.l.b16 %v2122
        %v3510 = vunpack.c.h.b16 %v2122
        %v3511 = vunpack.c.l.b16 %v2123
        %v3512 = vunpack.c.h.b16 %v2123
        %v3513 = vunpack.c.l.b16 %v2124
        %v3514 = vunpack.c.h.b16 %v2124
        %v3515 = vunpack.c.l.b16 %v2125
        %v3516 = vunpack.c.h.b16 %v2125
        %v3517 = vunpack.c.l.b16 %v2126
        %v3518 = vunpack.c.h.b16 %v2126
        %v3519 = vunpack.c.l.b16 %v2127
        %v3520 = vunpack.c.h.b16 %v2127
        %v3521 = vunpack.c.l.b16 %v2128
        %v3522 = vunpack.c.h.b16 %v2128
        %v3523 = vunpack.c.l.b16 %v2129
        %v3524 = vunpack.c.h.b16 %v2129
        %v3525 = vunpack.c.l.b16 %v2130
        %v3526 = vunpack.c.h.b16 %v2130
        %v3527 = vunpack.c.l.b16 %v2131
        %v3528 = vunpack.c.h.b16 %v2131
        %v3529 = vunpack.c.l.b16 %v2132
        %v3530 = vunpack.c.h.b16 %v2132
        %v3531 = vunpack.c.l.b16 %v2133
        %v3532 = vunpack.c.h.b16 %v2133
        %v3533 = vunpack.c.l.b16 %v2134
        %v3534 = vunpack.c.h.b16 %v2134
        %v3535 = vunpack.c.l.b16 %v2135
        %v3536 = vunpack.c.h.b16 %v2135
        %v3537 = vunpack.c.l.b16 %v2136
        %v3538 = vunpack.c.h.b16 %v2136
        %v3539 = vunpack.c.l.b16 %v2137
        %v3540 = vunpack.c.h.b16 %v2137
        %v3541 = vunpack.c.l.b16 %v2138
        %v3542 = vunpack.c.h.b16 %v2138
        %v3543 = vunpack.c.l.b16 %v2139
        %v3544 = vunpack.c.h.b16 %v2139
        %v3545 = vunpack.c.l.b16 %v2140
        %v3546 = vunpack.c.h.b16 %v2140
        %v3547 = vunpack.c.l.b16 %v2141
        %v3548 = vunpack.c.h.b16 %v2141
        %v3549 = vunpack.c.l.b16 %v2142
        %v3550 = vunpack.c.h.b16 %v2142
        %v3551 = vunpack.c.l.b16 %v2143
        %v3552 = vunpack.c.h.b16 %v2143
        %v3553 = vunpack.c.l.b16 %v2144
        %v3554 = vunpack.c.h.b16 %v2144
        %v3555 = vunpack.c.l.b16 %v2145
        %v3556 = vunpack.c.h.b16 %v2145
        %v3557 = vunpack.c.l.b16 %v2146
        %v3558 = vunpack.c.h.b16 %v2146
        %v3559 = vunpack.c.l.b16 %v2147
        %v3560 = vunpack.c.h.b16 %v2147
        %v3561 = vunpack.c.l.b16 %v2148
        %v3562 = vunpack.c.h.b16 %v2148
        %v3563 = vunpack.c.l.b16 %v2149
        %v3564 = vunpack.c.h.b16 %v2149
        %v3565 = vunpack.c.l.b16 %v2150
        %v3566 = vunpack.c.h.b16 %v2150
        %v3567 = vunpack.c.l.b16 %v2151
        %v3568 = vunpack.c.h.b16 %v2151
        %v3569 = vunpack.c.l.b16 %v2152
        %v3570 = vunpack.c.h.b16 %v2152
        %v3571 = vunpack.c.l.b16 %v2153
        %v3572 = vunpack.c.h.b16 %v2153
        %v3573 = vunpack.c.l.b16 %v2154
        %v3574 = vunpack.c.h.b16 %v2154
        %v3575 = vunpack.c.l.b16 %v2155
        %v3576 = vunpack.c.h.b16 %v2155
        %v3577 = vunpack.c.l.b16 %v2156
        %v3578 = vunpack.c.h.b16 %v2156
        %v3579 = vunpack.c.l.b16 %v2157
        %v3580 = vunpack.c.h.b16 %v2157
        %v3581 = vunpack.c.l.b16 %v2158
        %v3582 = vunpack.c.h.b16 %v2158
        %v3583 = vunpack.c.l.b16 %v2159
        %v3584 = vunpack.c.h.b16 %v2159
        %v3585 = vunpack.c.l.b16 %v2160
        %v3586 = vunpack.c.h.b16 %v2160
        %v3587 = vunpack.c.l.b16 %v2161
        %v3588 = vunpack.c.h.b16 %v2161
        %v3589 = vunpack.c.l.b16 %v2162
        %v3590 = vunpack.c.h.b16 %v2162
        %v3591 = vunpack.c.l.b16 %v2163
        %v3592 = vunpack.c.h.b16 %v2163
        %v3593 = vunpack.c.l.b16 %v2164
        %v3594 = vunpack.c.h.b16 %v2164
        %v3595 = vunpack.c.l.b16 %v2165
        %v3596 = vunpack.c.h.b16 %v2165
        %v3597 = vunpack.c.l.b16 %v2166
        %v3598 = vunpack.c.h.b16 %v2166
        %v3599 = vunpack.c.l.b16 %v2167
        %v3600 = vunpack.c.h.b16 %v2167
        %v3601 = vunpack.c.l.b16 %v2168
        %v3602 = vunpack.c.h.b16 %v2168
        %v3603 = vunpack.c.l.b16 %v2169
        %v3604 = vunpack.c.h.b16 %v2169
        %v3605 = vunpack.c.l.b16 %v2170
        %v3606 = vunpack.c.h.b16 %v2170
        %v3607 = vunpack.c.l.b16 %v2171
        %v3608 = vunpack.c.h.b16 %v2171
        %v3609 = vunpack.c.l.b16 %v2172
        %v3610 = vunpack.c.h.b16 %v2172
        %v3611 = vunpack.c.l.b16 %v2173
        %v3612 = vunpack.c.h.b16 %v2173
        %v3613 = vunpack.c.l.b16 %v2174
        %v3614 = vunpack.c.h.b16 %v2174
        %v3615 = vunpack.c.l.b16 %v2175
        %v3616 = vunpack.c.h.b16 %v2175
        %v3617 = vunpack.c.l.b16 %v2176
        %v3618 = vunpack.c.h.b16 %v2176
        %v3619 = vunpack.c.l.b16 %v2177
        %v3620 = vunpack.c.h.b16 %v2177
        %v3621 = vunpack.c.l.b16 %v2178
        %v3622 = vunpack.c.h.b16 %v2178
        %v3623 = vunpack.c.l.b16 %v2179
        %v3624 = vunpack.c.h.b16 %v2179
        %v3625 = vunpack.c.l.b16 %v2180
        %v3626 = vunpack.c.h.b16 %v2180
        %v3627 = vunpack.c.l.b16 %v2181
        %v3628 = vunpack.c.h.b16 %v2181
        %v3629 = vunpack.c.l.b16 %v2182
        %v3630 = vunpack.c.h.b16 %v2182
        %v3631 = vunpack.c.l.b16 %v2183
        %v3632 = vunpack.c.h.b16 %v2183
        %v3633 = vunpack.c.l.b16 %v2184
        %v3634 = vunpack.c.h.b16 %v2184
        %v3635 = vunpack.c.l.b16 %v2185
        %v3636 = vunpack.c.h.b16 %v2185
        %v3637 = vunpack.c.l.b16 %v2186
        %v3638 = vunpack.c.h.b16 %v2186
        %v3639 = vunpack.c.l.b16 %v2187
        %v3640 = vunpack.c.h.b16 %v2187
        %v3641 = vunpack.c.l.b16 %v2188
        %v3642 = vunpack.c.h.b16 %v2188
        %v3643 = vunpack.c.l.b16 %v2189
        %v3644 = vunpack.c.h.b16 %v2189
        %v3645 = vunpack.c.l.b16 %v2190
        %v3646 = vunpack.c.h.b16 %v2190
        %v3647 = vunpack.c.l.b16 %v2191
        %v3648 = vunpack.c.h.b16 %v2191
        %v3649 = vunpack.c.l.b16 %v2192
        %v3650 = vunpack.c.h.b16 %v2192
        %v3651 = vunpack.c.l.b16 %v2193
        %v3652 = vunpack.c.h.b16 %v2193
        %v3653 = vunpack.c.l.b16 %v2194
        %v3654 = vunpack.c.h.b16 %v2194
        %v3655 = vunpack.c.l.b16 %v2195
        %v3656 = vunpack.c.h.b16 %v2195
        %v3657 = vunpack.c.l.b16 %v2196
        %v3658 = vunpack.c.h.b16 %v2196
        %v3659 = vunpack.c.l.b16 %v2197
        %v3660 = vunpack.c.h.b16 %v2197
        %v3661 = vunpack.c.l.b16 %v2198
        %v3662 = vunpack.c.h.b16 %v2198
        %v3663 = vunpack.c.l.b16 %v2199
        %v3664 = vunpack.c.h.b16 %v2199
        %v3665 = vunpack.c.l.b16 %v2200
        %v3666 = vunpack.c.h.b16 %v2200
        %v3667 = vunpack.c.l.b16 %v2201
        %v3668 = vunpack.c.h.b16 %v2201
        %v3669 = vunpack.c.l.b16 %v2202
        %v3670 = vunpack.c.h.b16 %v2202
        %v3671 = vunpack.c.l.b16 %v2203
        %v3672 = vunpack.c.h.b16 %v2203
        %v3673 = vunpack.c.l.b16 %v2204
        %v3674 = vunpack.c.h.b16 %v2204
        %v3675 = vunpack.c.l.b16 %v2205
        %v3676 = vunpack.c.h.b16 %v2205
        %v3677 = vunpack.c.l.b16 %v2206
        %v3678 = vunpack.c.h.b16 %v2206
        %v3679 = vunpack.c.l.b16 %v2207
        %v3680 = vunpack.c.h.b16 %v2207
        %v3681 = vunpack.c.l.b16 %v2208
        %v3682 = vunpack.c.h.b16 %v2208
        %v3683 = vunpack.c.l.b16 %v2209
        %v3684 = vunpack.c.h.b16 %v2209
        %v3685 = vunpack.c.l.b16 %v2210
        %v3686 = vunpack.c.h.b16 %v2210
        %v3687 = vunpack.c.l.b16 %v2211
        %v3688 = vunpack.c.h.b16 %v2211
        %v3689 = vunpack.c.l.b16 %v2212
        %v3690 = vunpack.c.h.b16 %v2212
        %v3691 = vunpack.c.l.b16 %v2213
        %v3692 = vunpack.c.h.b16 %v2213
        %v3693 = vunpack.c.l.b16 %v2214
        %v3694 = vunpack.c.h.b16 %v2214
        %v3695 = vunpack.c.l.b16 %v2215
        %v3696 = vunpack.c.h.b16 %v2215
        %v3697 = vunpack.c.l.b16 %v2216
        %v3698 = vunpack.c.h.b16 %v2216
        %v3699 = vunpack.c.l.b16 %v2217
        %v3700 = vunpack.c.h.b16 %v2217
        %v3701 = vunpack.c.l.b16 %v2218
        %v3702 = vunpack.c.h.b16 %v2218
        %v3703 = vunpack.c.l.b16 %v2219
        %v3704 = vunpack.c.h.b16 %v2219
        %v3705 = vunpack.c.l.b16 %v2220
        %v3706 = vunpack.c.h.b16 %v2220
        %v3707 = vunpack.c.l.b16 %v2221
        %v3708 = vunpack.c.h.b16 %v2221
        %v3709 = vunpack.c.l.b16 %v2222
        %v3710 = vunpack.c.h.b16 %v2222
        %v3711 = vunpack.c.l.b16 %v2223
        %v3712 = vunpack.c.h.b16 %v2223
        %v3713 = vunpack.c.l.b16 %v2224
        %v3714 = vunpack.c.h.b16 %v2224
        %v3715 = vunpack.c.l.b16 %v2225
        %v3716 = vunpack.c.h.b16 %v2225
        %v3717 = vunpack.c.l.b16 %v2226
        %v3718 = vunpack.c.h.b16 %v2226
        %v3719 = vunpack.c.l.b16 %v2227
        %v3720 = vunpack.c.h.b16 %v2227
        %v3721 = vunpack.c.l.b16 %v2228
        %v3722 = vunpack.c.h.b16 %v2228
        %v3723 = vunpack.c.l.b16 %v2229
        %v3724 = vunpack.c.h.b16 %v2229
        %v3725 = vunpack.c.l.b16 %v2230
        %v3726 = vunpack.c.h.b16 %v2230
        %v3727 = vunpack.c.l.b16 %v2231
        %v3728 = vunpack.c.h.b16 %v2231
        %v3729 = vunpack.c.l.b16 %v2232
        %v3730 = vunpack.c.h.b16 %v2232
        %v3731 = vunpack.c.l.b16 %v2233
        %v3732 = vunpack.c.h.b16 %v2233
        %v3733 = vunpack.c.l.b16 %v2234
        %v3734 = vunpack.c.h.b16 %v2234
        %v3735 = vunpack.c.l.b16 %v2235
        %v3736 = vunpack.c.h.b16 %v2235
        %v3737 = vunpack.c.l.b16 %v2236
        %v3738 = vunpack.c.h.b16 %v2236
        %v3739 = vunpack.c.l.b16 %v2237
        %v3740 = vunpack.c.h.b16 %v2237
        %v3741 = vunpack.c.l.b16 %v2238
        %v3742 = vunpack.c.h.b16 %v2238
        %v3743 = vunpack.c.l.b16 %v2239
        %v3744 = vunpack.c.h.b16 %v2239
        %v3745 = vunpack.c.l.b16 %v2240
        %v3746 = vunpack.c.h.b16 %v2240
        %v3747 = vunpack.c.l.b16 %v2241
        %v3748 = vunpack.c.h.b16 %v2241
        %v3749 = vunpack.c.l.b16 %v2242
        %v3750 = vunpack.c.h.b16 %v2242
        %v3751 = vunpack.c.l.b16 %v2243
        %v3752 = vunpack.c.h.b16 %v2243
        %v3753 = vunpack.c.l.b16 %v2244
        %v3754 = vunpack.c.h.b16 %v2244
        %v3755 = vunpack.c.l.b16 %v2245
        %v3756 = vunpack.c.h.b16 %v2245
        %v3757 = vunpack.c.l.b16 %v2246
        %v3758 = vunpack.c.h.b16 %v2246
        %v3759 = vunpack.c.l.b16 %v2247
        %v3760 = vunpack.c.h.b16 %v2247
        %v3761 = vunpack.c.l.b16 %v2248
        %v3762 = vunpack.c.h.b16 %v2248
        %v3763 = vunpack.c.l.b16 %v2249
        %v3764 = vunpack.c.h.b16 %v2249
        %v3765 = vunpack.c.l.b16 %v2250
        %v3766 = vunpack.c.h.b16 %v2250
        %v3767 = vunpack.c.l.b16 %v2251
        %v3768 = vunpack.c.h.b16 %v2251
        %v3769 = vunpack.c.l.b16 %v2252
        %v3770 = vunpack.c.h.b16 %v2252
        %v3771 = vunpack.c.l.b16 %v2253
        %v3772 = vunpack.c.h.b16 %v2253
        %v3773 = vunpack.c.l.b16 %v2254
        %v3774 = vunpack.c.h.b16 %v2254
        %v3775 = vunpack.c.l.b16 %v2255
        %v3776 = vunpack.c.h.b16 %v2255
        %v3777 = vunpack.c.l.b16 %v2256
        %v3778 = vunpack.c.h.b16 %v2256
        %v3779 = vunpack.c.l.b16 %v2257
        %v3780 = vunpack.c.h.b16 %v2257
        %v3781 = vunpack.c.l.b16 %v2258
        %v3782 = vunpack.c.h.b16 %v2258
        %v3783 = vunpack.c.l.b16 %v2259
        %v3784 = vunpack.c.h.b16 %v2259
        %v3785 = vunpack.c.l.b16 %v2260
        %v3786 = vunpack.c.h.b16 %v2260
        %v3787 = vunpack.c.l.b16 %v2261
        %v3788 = vunpack.c.h.b16 %v2261
        %v3789 = vunpack.c.l.b16 %v2262
        %v3790 = vunpack.c.h.b16 %v2262
        %v3791 = vunpack.c.l.b16 %v2263
        %v3792 = vunpack.c.h.b16 %v2263
        %v3793 = vunpack.c.l.b16 %v2264
        %v3794 = vunpack.c.h.b16 %v2264
        %v3795 = vunpack.c.l.b16 %v2265
        %v3796 = vunpack.c.h.b16 %v2265
        %v3797 = vunpack.c.l.b16 %v2266
        %v3798 = vunpack.c.h.b16 %v2266
        %v3799 = vunpack.c.l.b16 %v2267
        %v3800 = vunpack.c.h.b16 %v2267
        %v3801 = vunpack.c.l.b16 %v2268
        %v3802 = vunpack.c.h.b16 %v2268
        %v3803 = vunpack.c.l.b16 %v2269
        %v3804 = vunpack.c.h.b16 %v2269
        %v3805 = vunpack.c.l.b16 %v2270
        %v3806 = vunpack.c.h.b16 %v2270
        %v3807 = vunpack.c.l.b16 %v2271
        %v3808 = vunpack.c.h.b16 %v2271
        %v3809 = vunpack.c.l.b16 %v2272
        %v3810 = vunpack.c.h.b16 %v2272
        %v3811 = vunpack.c.l.b16 %v2273
        %v3812 = vunpack.c.h.b16 %v2273
        %v3813 = vunpack.c.l.b16 %v2274
        %v3814 = vunpack.c.h.b16 %v2274
        %v3815 = vunpack.c.l.b16 %v2275
        %v3816 = vunpack.c.h.b16 %v2275
        %v3817 = vunpack.c.l.b16 %v2276
        %v3818 = vunpack.c.h.b16 %v2276
        %v3819 = vunpack.c.l.b16 %v2277
        %v3820 = vunpack.c.h.b16 %v2277
        %v3821 = vunpack.c.l.b16 %v2278
        %v3822 = vunpack.c.h.b16 %v2278
        %v3823 = vunpack.c.l.b16 %v2279
        %v3824 = vunpack.c.h.b16 %v2279
        %v3825 = vunpack.c.l.b16 %v2280
        %v3826 = vunpack.c.h.b16 %v2280
        %v3827 = vunpack.c.l.b16 %v2281
        %v3828 = vunpack.c.h.b16 %v2281
        %v3829 = vunpack.c.l.b16 %v2282
        %v3830 = vunpack.c.h.b16 %v2282
        %v3831 = vunpack.c.l.b16 %v2283
        %v3832 = vunpack.c.h.b16 %v2283
        %v3833 = vunpack.c.l.b16 %v2284
        %v3834 = vunpack.c.h.b16 %v2284
        %v3835 = vunpack.c.l.b16 %v2285
        %v3836 = vunpack.c.h.b16 %v2285
        %v3837 = vunpack.c.l.b16 %v2286
        %v3838 = vunpack.c.h.b16 %v2286
        %v3839 = vunpack.c.l.b16 %v2287
        %v3840 = vunpack.c.h.b16 %v2287
        %v3841 = vunpack.c.l.b16 %v2288
        %v3842 = vunpack.c.h.b16 %v2288
        %v3843 = vunpack.c.l.b16 %v2289
        %v3844 = vunpack.c.h.b16 %v2289
        %v3845 = vunpack.c.l.b16 %v2290
        %v3846 = vunpack.c.h.b16 %v2290
        %v3847 = vunpack.c.l.b16 %v2291
        %v3848 = vunpack.c.h.b16 %v2291
        %v3849 = vunpack.c.l.b16 %v2292
        %v3850 = vunpack.c.h.b16 %v2292
        %v3851 = vunpack.c.l.b16 %v2293
        %v3852 = vunpack.c.h.b16 %v2293
        %v3853 = vunpack.c.l.b16 %v2294
        %v3854 = vunpack.c.h.b16 %v2294
        %v3855 = vunpack.c.l.b16 %v2295
        %v3856 = vunpack.c.h.b16 %v2295
        %v3857 = vunpack.c.l.b16 %v2296
        %v3858 = vunpack.c.h.b16 %v2296
        %v3859 = vunpack.c.l.b16 %v2297
        %v3860 = vunpack.c.h.b16 %v2297
        %v3861 = vunpack.c.l.b16 %v2298
        %v3862 = vunpack.c.h.b16 %v2298
        %v3863 = vpack.c.b16 %v2847, %v2839
        %v3864 = vpack.c.b16 %v2848, %v2840
        %v3865 = vpack.c.b16 %v2849, %v2841
        %v3866 = vpack.c.b16 %v2850, %v2842
        %v3867 = vpack.c.b16 %v2851, %v2843
        %v3868 = vpack.c.b16 %v2852, %v2844
        %v3869 = vpack.c.b16 %v2853, %v2845
        %v3870 = vpack.c.b16 %v2854, %v2846
        %v3871 = vpack.c.b16 %v2863, %v2855
        %v3872 = vpack.c.b16 %v2864, %v2856
        %v3873 = vpack.c.b16 %v2865, %v2857
        %v3874 = vpack.c.b16 %v2866, %v2858
        %v3875 = vpack.c.b16 %v2867, %v2859
        %v3876 = vpack.c.b16 %v2868, %v2860
        %v3877 = vpack.c.b16 %v2869, %v2861
        %v3878 = vpack.c.b16 %v2870, %v2862
        %v3879 = vpack.c.b16 %v2879, %v2871
        %v3880 = vpack.c.b16 %v2880, %v2872
        %v3881 = vpack.c.b16 %v2881, %v2873
        %v3882 = vpack.c.b16 %v2882, %v2874
        %v3883 = vpack.c.b16 %v2883, %v2875
        %v3884 = vpack.c.b16 %v2884, %v2876
        %v3885 = vpack.c.b16 %v2885, %v2877
        %v3886 = vpack.c.b16 %v2886, %v2878
        %v3887 = vpack.c.b16 %v2895, %v2887
        %v3888 = vpack.c.b16 %v2896, %v2888
        %v3889 = vpack.c.b16 %v2897, %v2889
        %v3890 = vpack.c.b16 %v2898, %v2890
        %v3891 = vpack.c.b16 %v2899, %v2891
        %v3892 = vpack.c.b16 %v2900, %v2892
        %v3893 = vpack.c.b16 %v2901, %v2893
        %v3894 = vpack.c.b16 %v2902, %v2894
        %v3895 = vpack.c.b16 %v2911, %v2903
        %v3896 = vpack.c.b16 %v2912, %v2904
        %v3897 = vpack.c.b16 %v2913, %v2905
        %v3898 = vpack.c.b16 %v2914, %v2906
        %v3899 = vpack.c.b16 %v2915, %v2907
        %v3900 = vpack.c.b16 %v2916, %v2908
        %v3901 = vpack.c.b16 %v2917, %v2909
        %v3902 = vpack.c.b16 %v2918, %v2910
        %v3903 = vpack.c.b16 %v2927, %v2919
        %v3904 = vpack.c.b16 %v2928, %v2920
        %v3905 = vpack.c.b16 %v2929, %v2921
        %v3906 = vpack.c.b16 %v2930, %v2922
        %v3907 = vpack.c.b16 %v2931, %v2923
        %v3908 = vpack.c.b16 %v2932, %v2924
        %v3909 = vpack.c.b16 %v2933, %v2925
        %v3910 = vpack.c.b16 %v2934, %v2926
        %v3911 = vpack.c.b16 %v2943, %v2935
        %v3912 = vpack.c.b16 %v2944, %v2936
        %v3913 = vpack.c.b16 %v2945, %v2937
        %v3914 = vpack.c.b16 %v2946, %v2938
        %v3915 = vpack.c.b16 %v2947, %v2939
        %v3916 = vpack.c.b16 %v2948, %v2940
        %v3917 = vpack.c.b16 %v2949, %v2941
        %v3918 = vpack.c.b16 %v2950, %v2942
        %v3919 = vpack.c.b16 %v2959, %v2951
        %v3920 = vpack.c.b16 %v2960, %v2952
        %v3921 = vpack.c.b16 %v2961, %v2953
        %v3922 = vpack.c.b16 %v2962, %v2954
        %v3923 = vpack.c.b16 %v2963, %v2955
        %v3924 = vpack.c.b16 %v2964, %v2956
        %v3925 = vpack.c.b16 %v2965, %v2957
        %v3926 = vpack.c.b16 %v2966, %v2958
        %v3927 = vpack.c.b16 %v2975, %v2967
        %v3928 = vpack.c.b16 %v2976, %v2968
        %v3929 = vpack.c.b16 %v2977, %v2969
        %v3930 = vpack.c.b16 %v2978, %v2970
        %v3931 = vpack.c.b16 %v2979, %v2971
        %v3932 = vpack.c.b16 %v2980, %v2972
        %v3933 = vpack.c.b16 %v2981, %v2973
        %v3934 = vpack.c.b16 %v2982, %v2974
        %v3935 = vpack.c.b16 %v2991, %v2983
        %v3936 = vpack.c.b16 %v2992, %v2984
        %v3937 = vpack.c.b16 %v2993, %v2985
        %v3938 = vpack.c.b16 %v2994, %v2986
        %v3939 = vpack.c.b16 %v2995, %v2987
        %v3940 = vpack.c.b16 %v2996, %v2988
        %v3941 = vpack.c.b16 %v2997, %v2989
        %v3942 = vpack.c.b16 %v2998, %v2990
        %v3943 = vpack.c.b16 %v3007, %v2999
        %v3944 = vpack.c.b16 %v3008, %v3000
        %v3945 = vpack.c.b16 %v3009, %v3001
        %v3946 = vpack.c.b16 %v3010, %v3002
        %v3947 = vpack.c.b16 %v3011, %v3003
        %v3948 = vpack.c.b16 %v3012, %v3004
        %v3949 = vpack.c.b16 %v3013, %v3005
        %v3950 = vpack.c.b16 %v3014, %v3006
        %v3951 = vpack.c.b16 %v3023, %v3015
        %v3952 = vpack.c.b16 %v3024, %v3016
        %v3953 = vpack.c.b16 %v3025, %v3017
        %v3954 = vpack.c.b16 %v3026, %v3018
        %v3955 = vpack.c.b16 %v3027, %v3019
        %v3956 = vpack.c.b16 %v3028, %v3020
        %v3957 = vpack.c.b16 %v3029, %v3021
        %v3958 = vpack.c.b16 %v3030, %v3022
        %v3959 = vpack.c.b16 %v3039, %v3031
        %v3960 = vpack.c.b16 %v3040, %v3032
        %v3961 = vpack.c.b16 %v3041, %v3033
        %v3962 = vpack.c.b16 %v3042, %v3034
        %v3963 = vpack.c.b16 %v3043, %v3035
        %v3964 = vpack.c.b16 %v3044, %v3036
        %v3965 = vpack.c.b16 %v3045, %v3037
        %v3966 = vpack.c.b16 %v3046, %v3038
        %v3967 = vpack.c.b16 %v3055, %v3047
        %v3968 = vpack.c.b16 %v3056, %v3048
        %v3969 = vpack.c.b16 %v3057, %v3049
        %v3970 = vpack.c.b16 %v3058, %v3050
        %v3971 = vpack.c.b16 %v3059, %v3051
        %v3972 = vpack.c.b16 %v3060, %v3052
        %v3973 = vpack.c.b16 %v3061, %v3053
        %v3974 = vpack.c.b16 %v3062, %v3054
        %v3975 = vpack.c.b16 %v3071, %v3063
        %v3976 = vpack.c.b16 %v3072, %v3064
        %v3977 = vpack.c.b16 %v3073, %v3065
        %v3978 = vpack.c.b16 %v3074, %v3066
        %v3979 = vpack.c.b16 %v3075, %v3067
        %v3980 = vpack.c.b16 %v3076, %v3068
        %v3981 = vpack.c.b16 %v3077, %v3069
        %v3982 = vpack.c.b16 %v3078, %v3070
        %v3983 = vpack.c.b16 %v3087, %v3079
        %v3984 = vpack.c.b16 %v3088, %v3080
        %v3985 = vpack.c.b16 %v3089, %v3081
        %v3986 = vpack.c.b16 %v3090, %v3082
        %v3987 = vpack.c.b16 %v3091, %v3083
        %v3988 = vpack.c.b16 %v3092, %v3084
        %v3989 = vpack.c.b16 %v3093, %v3085
        %v3990 = vpack.c.b16 %v3094, %v3086
        %v3991 = vpack.c.b16 %v3103, %v3095
        %v3992 = vpack.c.b16 %v3104, %v3096
        %v3993 = vpack.c.b16 %v3105, %v3097
        %v3994 = vpack.c.b16 %v3106, %v3098
        %v3995 = vpack.c.b16 %v3107, %v3099
        %v3996 = vpack.c.b16 %v3108, %v3100
        %v3997 = vpack.c.b16 %v3109, %v3101
        %v3998 = vpack.c.b16 %v3110, %v3102
        %v3999 = vpack.c.b16 %v3119, %v3111
        %v4000 = vpack.c.b16 %v3120, %v3112
        %v4001 = vpack.c.b16 %v3121, %v3113
        %v4002 = vpack.c.b16 %v3122, %v3114
        %v4003 = vpack.c.b16 %v3123, %v3115
        %v4004 = vpack.c.b16 %v3124, %v3116
        %v4005 = vpack.c.b16 %v3125, %v3117
        %v4006 = vpack.c.b16 %v3126, %v3118
        %v4007 = vpack.c.b16 %v3135, %v3127
        %v4008 = vpack.c.b16 %v3136, %v3128
        %v4009 = vpack.c.b16 %v3137, %v3129
        %v4010 = vpack.c.b16 %v3138, %v3130
        %v4011 = vpack.c.b16 %v3139, %v3131
        %v4012 = vpack.c.b16 %v3140, %v3132
        %v4013 = vpack.c.b16 %v3141, %v3133
        %v4014 = vpack.c.b16 %v3142, %v3134
        %v4015 = vpack.c.b16 %v3151, %v3143
        %v4016 = vpack.c.b16 %v3152, %v3144
        %v4017 = vpack.c.b16 %v3153, %v3145
        %v4018 = vpack.c.b16 %v3154, %v3146
        %v4019 = vpack.c.b16 %v3155, %v3147
        %v4020 = vpack.c.b16 %v3156, %v3148
        %v4021 = vpack.c.b16 %v3157, %v3149
        %v4022 = vpack.c.b16 %v3158, %v3150
        %v4023 = vpack.c.b16 %v3167, %v3159
        %v4024 = vpack.c.b16 %v3168, %v3160
        %v4025 = vpack.c.b16 %v3169, %v3161
        %v4026 = vpack.c.b16 %v3170, %v3162
        %v4027 = vpack.c.b16 %v3171, %v3163
        %v4028 = vpack.c.b16 %v3172, %v3164
        %v4029 = vpack.c.b16 %v3173, %v3165
        %v4030 = vpack.c.b16 %v3174, %v3166
        %v4031 = vpack.c.b16 %v3183, %v3175
        %v4032 = vpack.c.b16 %v3184, %v3176
        %v4033 = vpack.c.b16 %v3185, %v3177
        %v4034 = vpack.c.b16 %v3186, %v3178
        %v4035 = vpack.c.b16 %v3187, %v3179
        %v4036 = vpack.c.b16 %v3188, %v3180
        %v4037 = vpack.c.b16 %v3189, %v3181
        %v4038 = vpack.c.b16 %v3190, %v3182
        %v4039 = vpack.c.b16 %v3199, %v3191
        %v4040 = vpack.c.b16 %v3200, %v3192
        %v4041 = vpack.c.b16 %v3201, %v3193
        %v4042 = vpack.c.b16 %v3202, %v3194
        %v4043 = vpack.c.b16 %v3203, %v3195
        %v4044 = vpack.c.b16 %v3204, %v3196
        %v4045 = vpack.c.b16 %v3205, %v3197
        %v4046 = vpack.c.b16 %v3206, %v3198
        %v4047 = vpack.c.b16 %v3215, %v3207
        %v4048 = vpack.c.b16 %v3216, %v3208
        %v4049 = vpack.c.b16 %v3217, %v3209
        %v4050 = vpack.c.b16 %v3218, %v3210
        %v4051 = vpack.c.b16 %v3219, %v3211
        %v4052 = vpack.c.b16 %v3220, %v3212
        %v4053 = vpack.c.b16 %v3221, %v3213
        %v4054 = vpack.c.b16 %v3222, %v3214
        %v4055 = vpack.c.b16 %v3231, %v3223
        %v4056 = vpack.c.b16 %v3232, %v3224
        %v4057 = vpack.c.b16 %v3233, %v3225
        %v4058 = vpack.c.b16 %v3234, %v3226
        %v4059 = vpack.c.b16 %v3235, %v3227
        %v4060 = vpack.c.b16 %v3236, %v3228
        %v4061 = vpack.c.b16 %v3237, %v3229
        %v4062 = vpack.c.b16 %v3238, %v3230
        %v4063 = vpack.c.b16 %v3247, %v3239
        %v4064 = vpack.c.b16 %v3248, %v3240
        %v4065 = vpack.c.b16 %v3249, %v3241
        %v4066 = vpack.c.b16 %v3250, %v3242
        %v4067 = vpack.c.b16 %v3251, %v3243
        %v4068 = vpack.c.b16 %v3252, %v3244
        %v4069 = vpack.c.b16 %v3253, %v3245
        %v4070 = vpack.c.b16 %v3254, %v3246
        %v4071 = vpack.c.b16 %v3263, %v3255
        %v4072 = vpack.c.b16 %v3264, %v3256
        %v4073 = vpack.c.b16 %v3265, %v3257
        %v4074 = vpack.c.b16 %v3266, %v3258
        %v4075 = vpack.c.b16 %v3267, %v3259
        %v4076 = vpack.c.b16 %v3268, %v3260
        %v4077 = vpack.c.b16 %v3269, %v3261
        %v4078 = vpack.c.b16 %v3270, %v3262
        %v4079 = vpack.c.b16 %v3279, %v3271
        %v4080 = vpack.c.b16 %v3280, %v3272
        %v4081 = vpack.c.b16 %v3281, %v3273
        %v4082 = vpack.c.b16 %v3282, %v3274
        %v4083 = vpack.c.b16 %v3283, %v3275
        %v4084 = vpack.c.b16 %v3284, %v3276
        %v4085 = vpack.c.b16 %v3285, %v3277
        %v4086 = vpack.c.b16 %v3286, %v3278
        %v4087 = vpack.c.b16 %v3295, %v3287
        %v4088 = vpack.c.b16 %v3296, %v3288
        %v4089 = vpack.c.b16 %v3297, %v3289
        %v4090 = vpack.c.b16 %v3298, %v3290
        %v4091 = vpack.c.b16 %v3299, %v3291
        %v4092 = vpack.c.b16 %v3300, %v3292
        %v4093 = vpack.c.b16 %v3301, %v3293
        %v4094 = vpack.c.b16 %v3302, %v3294
        %v4095 = vpack.c.b16 %v3311, %v3303
        %v4096 = vpack.c.b16 %v3312, %v3304
        %v4097 = vpack.c.b16 %v3313, %v3305
        %v4098 = vpack.c.b16 %v3314, %v3306
        %v4099 = vpack.c.b16 %v3315, %v3307
        %v4100 = vpack.c.b16 %v3316, %v3308
        %v4101 = vpack.c.b16 %v3317, %v3309
        %v4102 = vpack.c.b16 %v3318, %v3310
        %v4103 = vpack.c.b16 %v3327, %v3319
        %v4104 = vpack.c.b16 %v3328, %v3320
        %v4105 = vpack.c.b16 %v3329, %v3321
        %v4106 = vpack.c.b16 %v3330, %v3322
        %v4107 = vpack.c.b16 %v3331, %v3323
        %v4108 = vpack.c.b16 %v3332, %v3324
        %v4109 = vpack.c.b16 %v3333, %v3325
        %v4110 = vpack.c.b16 %v3334, %v3326
        %v4111 = vpack.c.b16 %v3343, %v3335
        %v4112 = vpack.c.b16 %v3344, %v3336
        %v4113 = vpack.c.b16 %v3345, %v3337
        %v4114 = vpack.c.b16 %v3346, %v3338
        %v4115 = vpack.c.b16 %v3347, %v3339
        %v4116 = vpack.c.b16 %v3348, %v3340
        %v4117 = vpack.c.b16 %v3349, %v3341
        %v4118 = vpack.c.b16 %v3350, %v3342
        %v4119 = vpack.c.b16 %v3359, %v3351
        %v4120 = vpack.c.b16 %v3360, %v3352
        %v4121 = vpack.c.b16 %v3361, %v3353
        %v4122 = vpack.c.b16 %v3362, %v3354
        %v4123 = vpack.c.b16 %v3363, %v3355
        %v4124 = vpack.c.b16 %v3364, %v3356
        %v4125 = vpack.c.b16 %v3365, %v3357
        %v4126 = vpack.c.b16 %v3366, %v3358
        %v4127 = vpack.c.b16 %v3375, %v3367
        %v4128 = vpack.c.b16 %v3376, %v3368
        %v4129 = vpack.c.b16 %v3377, %v3369
        %v4130 = vpack.c.b16 %v3378, %v3370
        %v4131 = vpack.c.b16 %v3379, %v3371
        %v4132 = vpack.c.b16 %v3380, %v3372
        %v4133 = vpack.c.b16 %v3381, %v3373
        %v4134 = vpack.c.b16 %v3382, %v3374
        %v4135 = vpack.c.b16 %v3391, %v3383
        %v4136 = vpack.c.b16 %v3392, %v3384
        %v4137 = vpack.c.b16 %v3393, %v3385
        %v4138 = vpack.c.b16 %v3394, %v3386
        %v4139 = vpack.c.b16 %v3395, %v3387
        %v4140 = vpack.c.b16 %v3396, %v3388
        %v4141 = vpack.c.b16 %v3397, %v3389
        %v4142 = vpack.c.b16 %v3398, %v3390
        %v4143 = vpack.c.b16 %v3407, %v3399
        %v4144 = vpack.c.b16 %v3408, %v3400
        %v4145 = vpack.c.b16 %v3409, %v3401
        %v4146 = vpack.c.b16 %v3410, %v3402
        %v4147 = vpack.c.b16 %v3411, %v3403
        %v4148 = vpack.c.b16 %v3412, %v3404
        %v4149 = vpack.c.b16 %v3413, %v3405
        %v4150 = vpack.c.b16 %v3414, %v3406
        %v4151 = vpack.c.b16 %v3423, %v3415
        %v4152 = vpack.c.b16 %v3424, %v3416
        %v4153 = vpack.c.b16 %v3425, %v3417
        %v4154 = vpack.c.b16 %v3426, %v3418
        %v4155 = vpack.c.b16 %v3427, %v3419
        %v4156 = vpack.c.b16 %v3428, %v3420
        %v4157 = vpack.c.b16 %v3429, %v3421
        %v4158 = vpack.c.b16 %v3430, %v3422
        %v4159 = vpack.c.b16 %v3439, %v3431
        %v4160 = vpack.c.b16 %v3440, %v3432
        %v4161 = vpack.c.b16 %v3441, %v3433
        %v4162 = vpack.c.b16 %v3442, %v3434
        %v4163 = vpack.c.b16 %v3443, %v3435
        %v4164 = vpack.c.b16 %v3444, %v3436
        %v4165 = vpack.c.b16 %v3445, %v3437
        %v4166 = vpack.c.b16 %v3446, %v3438
        %v4167 = vpack.c.b16 %v3455, %v3447
        %v4168 = vpack.c.b16 %v3456, %v3448
        %v4169 = vpack.c.b16 %v3457, %v3449
        %v4170 = vpack.c.b16 %v3458, %v3450
        %v4171 = vpack.c.b16 %v3459, %v3451
        %v4172 = vpack.c.b16 %v3460, %v3452
        %v4173 = vpack.c.b16 %v3461, %v3453
        %v4174 = vpack.c.b16 %v3462, %v3454
        %v4175 = vpack.c.b16 %v3471, %v3463
        %v4176 = vpack.c.b16 %v3472, %v3464
        %v4177 = vpack.c.b16 %v3473, %v3465
        %v4178 = vpack.c.b16 %v3474, %v3466
        %v4179 = vpack.c.b16 %v3475, %v3467
        %v4180 = vpack.c.b16 %v3476, %v3468
        %v4181 = vpack.c.b16 %v3477, %v3469
        %v4182 = vpack.c.b16 %v3478, %v3470
        %v4183 = vpack.c.b16 %v3487, %v3479
        %v4184 = vpack.c.b16 %v3488, %v3480
        %v4185 = vpack.c.b16 %v3489, %v3481
        %v4186 = vpack.c.b16 %v3490, %v3482
        %v4187 = vpack.c.b16 %v3491, %v3483
        %v4188 = vpack.c.b16 %v3492, %v3484
        %v4189 = vpack.c.b16 %v3493, %v3485
        %v4190 = vpack.c.b16 %v3494, %v3486
        %v4191 = vpack.c.b16 %v3503, %v3495
        %v4192 = vpack.c.b16 %v3504, %v3496
        %v4193 = vpack.c.b16 %v3505, %v3497
        %v4194 = vpack.c.b16 %v3506, %v3498
        %v4195 = vpack.c.b16 %v3507, %v3499
        %v4196 = vpack.c.b16 %v3508, %v3500
        %v4197 = vpack.c.b16 %v3509, %v3501
        %v4198 = vpack.c.b16 %v3510, %v3502
        %v4199 = vpack.c.b16 %v3519, %v3511
        %v4200 = vpack.c.b16 %v3520, %v3512
        %v4201 = vpack.c.b16 %v3521, %v3513
        %v4202 = vpack.c.b16 %v3522, %v3514
        %v4203 = vpack.c.b16 %v3523, %v3515
        %v4204 = vpack.c.b16 %v3524, %v3516
        %v4205 = vpack.c.b16 %v3525, %v3517
        %v4206 = vpack.c.b16 %v3526, %v3518
        %v4207 = vpack.c.b16 %v3535, %v3527
        %v4208 = vpack.c.b16 %v3536, %v3528
        %v4209 = vpack.c.b16 %v3537, %v3529
        %v4210 = vpack.c.b16 %v3538, %v3530
        %v4211 = vpack.c.b16 %v3539, %v3531
        %v4212 = vpack.c.b16 %v3540, %v3532
        %v4213 = vpack.c.b16 %v3541, %v3533
        %v4214 = vpack.c.b16 %v3542, %v3534
        %v4215 = vpack.c.b16 %v3551, %v3543
        %v4216 = vpack.c.b16 %v3552, %v3544
        %v4217 = vpack.c.b16 %v3553, %v3545
        %v4218 = vpack.c.b16 %v3554, %v3546
        %v4219 = vpack.c.b16 %v3555, %v3547
        %v4220 = vpack.c.b16 %v3556, %v3548
        %v4221 = vpack.c.b16 %v3557, %v3549
        %v4222 = vpack.c.b16 %v3558, %v3550
        %v4223 = vpack.c.b16 %v3567, %v3559
        %v4224 = vpack.c.b16 %v3568, %v3560
        %v4225 = vpack.c.b16 %v3569, %v3561
        %v4226 = vpack.c.b16 %v3570, %v3562
        %v4227 = vpack.c.b16 %v3571, %v3563
        %v4228 = vpack.c.b16 %v3572, %v3564
        %v4229 = vpack.c.b16 %v3573, %v3565
        %v4230 = vpack.c.b16 %v3574, %v3566
        %v4231 = vpack.c.b16 %v3583, %v3575
        %v4232 = vpack.c.b16 %v3584, %v3576
        %v4233 = vpack.c.b16 %v3585, %v3577
        %v4234 = vpack.c.b16 %v3586, %v3578
        %v4235 = vpack.c.b16 %v3587, %v3579
        %v4236 = vpack.c.b16 %v3588, %v3580
        %v4237 = vpack.c.b16 %v3589, %v3581
        %v4238 = vpack.c.b16 %v3590, %v3582
        %v4239 = vpack.c.b16 %v3599, %v3591
        %v4240 = vpack.c.b16 %v3600, %v3592
        %v4241 = vpack.c.b16 %v3601, %v3593
        %v4242 = vpack.c.b16 %v3602, %v3594
        %v4243 = vpack.c.b16 %v3603, %v3595
        %v4244 = vpack.c.b16 %v3604, %v3596
        %v4245 = vpack.c.b16 %v3605, %v3597
        %v4246 = vpack.c.b16 %v3606, %v3598
        %v4247 = vpack.c.b16 %v3615, %v3607
        %v4248 = vpack.c.b16 %v3616, %v3608
        %v4249 = vpack.c.b16 %v3617, %v3609
        %v4250 = vpack.c.b16 %v3618, %v3610
        %v4251 = vpack.c.b16 %v3619, %v3611
        %v4252 = vpack.c.b16 %v3620, %v3612
        %v4253 = vpack.c.b16 %v3621, %v3613
        %v4254 = vpack.c.b16 %v3622, %v3614
        %v4255 = vpack.c.b16 %v3631, %v3623
        %v4256 = vpack.c.b16 %v3632, %v3624
        %v4257 = vpack.c.b16 %v3633, %v3625
        %v4258 = vpack.c.b16 %v3634, %v3626
        %v4259 = vpack.c.b16 %v3635, %v3627
        %v4260 = vpack.c.b16 %v3636, %v3628
        %v4261 = vpack.c.b16 %v3637, %v3629
        %v4262 = vpack.c.b16 %v3638, %v3630
        %v4263 = vpack.c.b16 %v3647, %v3639
        %v4264 = vpack.c.b16 %v3648, %v3640
        %v4265 = vpack.c.b16 %v3649, %v3641
        %v4266 = vpack.c.b16 %v3650, %v3642
        %v4267 = vpack.c.b16 %v3651, %v3643
        %v4268 = vpack.c.b16 %v3652, %v3644
        %v4269 = vpack.c.b16 %v3653, %v3645
        %v4270 = vpack.c.b16 %v3654, %v3646
        %v4271 = vpack.c.b16 %v3663, %v3655
        %v4272 = vpack.c.b16 %v3664, %v3656
        %v4273 = vpack.c.b16 %v3665, %v3657
        %v4274 = vpack.c.b16 %v3666, %v3658
        %v4275 = vpack.c.b16 %v3667, %v3659
        %v4276 = vpack.c.b16 %v3668, %v3660
        %v4277 = vpack.c.b16 %v3669, %v3661
        %v4278 = vpack.c.b16 %v3670, %v3662
        %v4279 = vpack.c.b16 %v3679, %v3671
        %v4280 = vpack.c.b16 %v3680, %v3672
        %v4281 = vpack.c.b16 %v3681, %v3673
        %v4282 = vpack.c.b16 %v3682, %v3674
        %v4283 = vpack.c.b16 %v3683, %v3675
        %v4284 = vpack.c.b16 %v3684, %v3676
        %v4285 = vpack.c.b16 %v3685, %v3677
        %v4286 = vpack.c.b16 %v3686, %v3678
        %v4287 = vpack.c.b16 %v3695, %v3687
        %v4288 = vpack.c.b16 %v3696, %v3688
        %v4289 = vpack.c.b16 %v3697, %v3689
        %v4290 = vpack.c.b16 %v3698, %v3690
        %v4291 = vpack.c.b16 %v3699, %v3691
        %v4292 = vpack.c.b16 %v3700, %v3692
        %v4293 = vpack.c.b16 %v3701, %v3693
        %v4294 = vpack.c.b16 %v3702, %v3694
        %v4295 = vpack.c.b16 %v3711, %v3703
        %v4296 = vpack.c.b16 %v3712, %v3704
        %v4297 = vpack.c.b16 %v3713, %v3705
        %v4298 = vpack.c.b16 %v3714, %v3706
        %v4299 = vpack.c.b16 %v3715, %v3707
        %v4300 = vpack.c.b16 %v3716, %v3708
        %v4301 = vpack.c.b16 %v3717, %v3709
        %v4302 = vpack.c.b16 %v3718, %v3710
        %v4303 = vpack.c.b16 %v3727, %v3719
        %v4304 = vpack.c.b16 %v3728, %v3720
        %v4305 = vpack.c.b16 %v3729, %v3721
        %v4306 = vpack.c.b16 %v3730, %v3722
        %v4307 = vpack.c.b16 %v3731, %v3723
        %v4308 = vpack.c.b16 %v3732, %v3724
        %v4309 = vpack.c.b16 %v3733, %v3725
        %v4310 = vpack.c.b16 %v3734, %v3726
        %v4311 = vpack.c.b16 %v3743, %v3735
        %v4312 = vpack.c.b16 %v3744, %v3736
        %v4313 = vpack.c.b16 %v3745, %v3737
        %v4314 = vpack.c.b16 %v3746, %v3738
        %v4315 = vpack.c.b16 %v3747, %v3739
        %v4316 = vpack.c.b16 %v3748, %v3740
        %v4317 = vpack.c.b16 %v3749, %v3741
        %v4318 = vpack.c.b16 %v3750, %v3742
        %v4319 = vpack.c.b16 %v3759, %v3751
        %v4320 = vpack.c.b16 %v3760, %v3752
        %v4321 = vpack.c.b16 %v3761, %v3753
        %v4322 = vpack.c.b16 %v3762, %v3754
        %v4323 = vpack.c.b16 %v3763, %v3755
        %v4324 = vpack.c.b16 %v3764, %v3756
        %v4325 = vpack.c.b16 %v3765, %v3757
        %v4326 = vpack.c.b16 %v3766, %v3758
        %v4327 = vpack.c.b16 %v3775, %v3767
        %v4328 = vpack.c.b16 %v3776, %v3768
        %v4329 = vpack.c.b16 %v3777, %v3769
        %v4330 = vpack.c.b16 %v3778, %v3770
        %v4331 = vpack.c.b16 %v3779, %v3771
        %v4332 = vpack.c.b16 %v3780, %v3772
        %v4333 = vpack.c.b16 %v3781, %v3773
        %v4334 = vpack.c.b16 %v3782, %v3774
        %v4335 = vpack.c.b16 %v3791, %v3783
        %v4336 = vpack.c.b16 %v3792, %v3784
        %v4337 = vpack.c.b16 %v3793, %v3785
        %v4338 = vpack.c.b16 %v3794, %v3786
        %v4339 = vpack.c.b16 %v3795, %v3787
        %v4340 = vpack.c.b16 %v3796, %v3788
        %v4341 = vpack.c.b16 %v3797, %v3789
        %v4342 = vpack.c.b16 %v3798, %v3790
        %v4343 = vpack.c.b16 %v3807, %v3799
        %v4344 = vpack.c.b16 %v3808, %v3800
        %v4345 = vpack.c.b16 %v3809, %v3801
        %v4346 = vpack.c.b16 %v3810, %v3802
        %v4347 = vpack.c.b16 %v3811, %v3803
        %v4348 = vpack.c.b16 %v3812, %v3804
        %v4349 = vpack.c.b16 %v3813, %v3805
        %v4350 = vpack.c.b16 %v3814, %v3806
        %v4351 = vpack.c.b16 %v3823, %v3815
        %v4352 = vpack.c.b16 %v3824, %v3816
        %v4353 = vpack.c.b16 %v3825, %v3817
        %v4354 = vpack.c.b16 %v3826, %v3818
        %v4355 = vpack.c.b16 %v3827, %v3819
        %v4356 = vpack.c.b16 %v3828, %v3820
        %v4357 = vpack.c.b16 %v3829, %v3821
        %v4358 = vpack.c.b16 %v3830, %v3822
        %v4359 = vpack.c.b16 %v3839, %v3831
        %v4360 = vpack.c.b16 %v3840, %v3832
        %v4361 = vpack.c.b16 %v3841, %v3833
        %v4362 = vpack.c.b16 %v3842, %v3834
        %v4363 = vpack.c.b16 %v3843, %v3835
        %v4364 = vpack.c.b16 %v3844, %v3836
        %v4365 = vpack.c.b16 %v3845, %v3837
        %v4366 = vpack.c.b16 %v3846, %v3838
        %v4367 = vpack.c.b16 %v3855, %v3847
        %v4368 = vpack.c.b16 %v3856, %v3848
        %v4369 = vpack.c.b16 %v3857, %v3849
        %v4370 = vpack.c.b16 %v3858, %v3850
        %v4371 = vpack.c.b16 %v3859, %v3851
        %v4372 = vpack.c.b16 %v3860, %v3852
        %v4373 = vpack.c.b16 %v3861, %v3853
        %v4374 = vpack.c.b16 %v3862, %v3854
        %4887 = vmatprep.subr.bf16.mxu0 %v3864
        %4888 = vmatpush1.bf16.msra.mxu0 %v3863
        %4889 = vmatprep.subr.bf16.mxu0 %v3872
        %4890 = vmatpush1.bf16.msra.mxu0 %v3871
        %4891 = vmatprep.subr.bf16.mxu0 %v3880
        %4892 = vmatpush1.bf16.msra.mxu0 %v3879
        %4893 = vmatprep.subr.bf16.mxu0 %v3888
        %4894 = vmatpush1.bf16.msra.mxu0 %v3887
        %4895 = vmatprep.subr.bf16.mxu0 %v3896
        %4896 = vmatpush1.bf16.msra.mxu0 %v3895
        %4897 = vmatprep.subr.bf16.mxu0 %v3904
        %4898 = vmatpush1.bf16.msra.mxu0 %v3903
        %4899 = vmatprep.subr.bf16.mxu0 %v3912
        %4900 = vmatpush1.bf16.msra.mxu0 %v3911
        %4901 = vmatprep.subr.bf16.mxu0 %v3920
        %4902 = vmatpush1.bf16.msra.mxu0 %v3919
        %4903 = vmatprep.subr.bf16.mxu0 %v3928
        %4904 = vmatpush1.bf16.msra.mxu0 %v3927
        %4905 = vmatprep.subr.bf16.mxu0 %v3936
        %4906 = vmatpush1.bf16.msra.mxu0 %v3935
        %4907 = vmatprep.subr.bf16.mxu0 %v3944
        %4908 = vmatpush1.bf16.msra.mxu0 %v3943
        %4909 = vmatprep.subr.bf16.mxu0 %v3952
        %4910 = vmatpush1.bf16.msra.mxu0 %v3951
        %4911 = vmatprep.subr.bf16.mxu0 %v3960
        %4912 = vmatpush1.bf16.msra.mxu0 %v3959
        %4913 = vmatprep.subr.bf16.mxu0 %v3968
        %4914 = vmatpush1.bf16.msra.mxu0 %v3967
        %4915 = vmatprep.subr.bf16.mxu0 %v3976
        %4916 = vmatpush1.bf16.msra.mxu0 %v3975
        %4917 = vmatprep.subr.bf16.mxu0 %v3984
        %4918 = vmatpush1.bf16.msra.mxu0 %v3983
        %4919 = vmatprep.mubr.bf16.mxu0 %v2312
        %4920 = vmatmul.mubr.bf16.gmra.mrb[0].mxu0 %v2311
        %v4921 = vpop.f32.mrb[0].mxu0
        %v4922 = vadd.f32 0.0, %v4921
        %v4923 = vpop.f32.mrb[0].mxu0
        %v4924 = vadd.f32 0.0, %v4923
        %v4925 = vpop.f32.mrb[0].mxu0
        %v4926 = vpop.f32.mrb[0].mxu0
        %4927 = vdwg.mxu0
        %4928 = vmatprep.subr.bf16.mxu0 %v3992
        %4929 = vmatpush1.bf16.msra.mxu0 %v3991
        %4930 = vmatprep.subr.bf16.mxu0 %v4000
        %4931 = vmatpush1.bf16.msra.mxu0 %v3999
        %4932 = vmatprep.subr.bf16.mxu0 %v4008
        %4933 = vmatpush1.bf16.msra.mxu0 %v4007
        %4934 = vmatprep.subr.bf16.mxu0 %v4016
        %4935 = vmatpush1.bf16.msra.mxu0 %v4015
        %4936 = vmatprep.subr.bf16.mxu0 %v4024
        %4937 = vmatpush1.bf16.msra.mxu0 %v4023
        %4938 = vmatprep.subr.bf16.mxu0 %v4032
        %4939 = vmatpush1.bf16.msra.mxu0 %v4031
        %4940 = vmatprep.subr.bf16.mxu0 %v4040
        %4941 = vmatpush1.bf16.msra.mxu0 %v4039
        %4942 = vmatprep.subr.bf16.mxu0 %v4048
        %4943 = vmatpush1.bf16.msra.mxu0 %v4047
        %4944 = vmatprep.subr.bf16.mxu0 %v4056
        %4945 = vmatpush1.bf16.msra.mxu0 %v4055
        %4946 = vmatprep.subr.bf16.mxu0 %v4064
        %4947 = vmatpush1.bf16.msra.mxu0 %v4063
        %4948 = vmatprep.subr.bf16.mxu0 %v4072
        %4949 = vmatpush1.bf16.msra.mxu0 %v4071
        %4950 = vmatprep.subr.bf16.mxu0 %v4080
        %4951 = vmatpush1.bf16.msra.mxu0 %v4079
        %4952 = vmatprep.subr.bf16.mxu0 %v4088
        %4953 = vmatpush1.bf16.msra.mxu0 %v4087
        %4954 = vmatprep.subr.bf16.mxu0 %v4096
        %4955 = vmatpush1.bf16.msra.mxu0 %v4095
        %4956 = vmatprep.subr.bf16.mxu0 %v4104
        %4957 = vmatpush1.bf16.msra.mxu0 %v4103
        %4958 = vmatprep.subr.bf16.mxu0 %v4112
        %4959 = vmatpush1.bf16.msra.mxu0 %v4111
        %4960 = vmatprep.mubr.bf16.mxu0 %v2314
        %4961 = vmatmul.mubr.bf16.gmra.mrb[0].mxu0 %v2313
        %v4962 = vpop.f32.mrb[0].mxu0
        %v4963 = vadd.f32 %v4922, %v4962
        %v4964 = vpop.f32.mrb[0].mxu0
        %v4965 = vadd.f32 %v4924, %v4964
        %v4966 = vpop.f32.mrb[0].mxu0
        %v4967 = vpop.f32.mrb[0].mxu0
        %4968 = vdwg.mxu0
        %4969 = vmatprep.subr.bf16.mxu0 %v4120
        %4970 = vmatpush1.bf16.msra.mxu0 %v4119
        %4971 = vmatprep.subr.bf16.mxu0 %v4128
        %4972 = vmatpush1.bf16.msra.mxu0 %v4127
        %4973 = vmatprep.subr.bf16.mxu0 %v4136
        %4974 = vmatpush1.bf16.msra.mxu0 %v4135
        %4975 = vmatprep.subr.bf16.mxu0 %v4144
        %4976 = vmatpush1.bf16.msra.mxu0 %v4143
        %4977 = vmatprep.subr.bf16.mxu0 %v4152
        %4978 = vmatpush1.bf16.msra.mxu0 %v4151
        %4979 = vmatprep.subr.bf16.mxu0 %v4160
        %4980 = vmatpush1.bf16.msra.mxu0 %v4159
        %4981 = vmatprep.subr.bf16.mxu0 %v4168
        %4982 = vmatpush1.bf16.msra.mxu0 %v4167
        %4983 = vmatprep.subr.bf16.mxu0 %v4176
        %4984 = vmatpush1.bf16.msra.mxu0 %v4175
        %4985 = vmatprep.subr.bf16.mxu0 %v4184
        %4986 = vmatpush1.bf16.msra.mxu0 %v4183
        %4987 = vmatprep.subr.bf16.mxu0 %v4192
        %4988 = vmatpush1.bf16.msra.mxu0 %v4191
        %4989 = vmatprep.subr.bf16.mxu0 %v4200
        %4990 = vmatpush1.bf16.msra.mxu0 %v4199
        %4991 = vmatprep.subr.bf16.mxu0 %v4208
        %4992 = vmatpush1.bf16.msra.mxu0 %v4207
        %4993 = vmatprep.subr.bf16.mxu0 %v4216
        %4994 = vmatpush1.bf16.msra.mxu0 %v4215
        %4995 = vmatprep.subr.bf16.mxu0 %v4224
        %4996 = vmatpush1.bf16.msra.mxu0 %v4223
        %4997 = vmatprep.subr.bf16.mxu0 %v4232
        %4998 = vmatpush1.bf16.msra.mxu0 %v4231
        %4999 = vmatprep.subr.bf16.mxu0 %v4240
        %5000 = vmatpush1.bf16.msra.mxu0 %v4239
        %5001 = vmatprep.mubr.bf16.mxu0 %v2316
        %5002 = vmatmul.mubr.bf16.gmra.mrb[0].mxu0 %v2315
        %v5003 = vpop.f32.mrb[0].mxu0
        %v5004 = vadd.f32 %v4963, %v5003
        %v5005 = vpop.f32.mrb[0].mxu0
        %v5006 = vadd.f32 %v4965, %v5005
        %v5007 = vpop.f32.mrb[0].mxu0
        %v5008 = vpop.f32.mrb[0].mxu0
        %5009 = vdwg.mxu0
        %5010 = vmatprep.subr.bf16.mxu0 %v4248
        %5011 = vmatpush1.bf16.msra.mxu0 %v4247
        %5012 = vmatprep.subr.bf16.mxu0 %v4256
        %5013 = vmatpush1.bf16.msra.mxu0 %v4255
        %5014 = vmatprep.subr.bf16.mxu0 %v4264
        %5015 = vmatpush1.bf16.msra.mxu0 %v4263
        %5016 = vmatprep.subr.bf16.mxu0 %v4272
        %5017 = vmatpush1.bf16.msra.mxu0 %v4271
        %5018 = vmatprep.subr.bf16.mxu0 %v4280
        %5019 = vmatpush1.bf16.msra.mxu0 %v4279
        %5020 = vmatprep.subr.bf16.mxu0 %v4288
        %5021 = vmatpush1.bf16.msra.mxu0 %v4287
        %5022 = vmatprep.subr.bf16.mxu0 %v4296
        %5023 = vmatpush1.bf16.msra.mxu0 %v4295
        %5024 = vmatprep.subr.bf16.mxu0 %v4304
        %5025 = vmatpush1.bf16.msra.mxu0 %v4303
        %5026 = vmatprep.subr.bf16.mxu0 %v4312
        %5027 = vmatpush1.bf16.msra.mxu0 %v4311
        %5028 = vmatprep.subr.bf16.mxu0 %v4320
        %5029 = vmatpush1.bf16.msra.mxu0 %v4319
        %5030 = vmatprep.subr.bf16.mxu0 %v4328
        %5031 = vmatpush1.bf16.msra.mxu0 %v4327
        %5032 = vmatprep.subr.bf16.mxu0 %v4336
        %5033 = vmatpush1.bf16.msra.mxu0 %v4335
        %5034 = vmatprep.subr.bf16.mxu0 %v4344
        %5035 = vmatpush1.bf16.msra.mxu0 %v4343
        %5036 = vmatprep.subr.bf16.mxu0 %v4352
        %5037 = vmatpush1.bf16.msra.mxu0 %v4351
        %5038 = vmatprep.subr.bf16.mxu0 %v4360
        %5039 = vmatpush1.bf16.msra.mxu0 %v4359
        %5040 = vmatprep.subr.bf16.mxu0 %v4368
        %5041 = vmatpush1.bf16.msra.mxu0 %v4367
        %5042 = vmatprep.mubr.bf16.mxu0 %v2318
        %5043 = vmatmul.mubr.bf16.gmra.mrb[0].mxu0 %v2317
        %v5044 = vpop.f32.mrb[0].mxu0
        %v5045 = vadd.f32 %v5004, %v5044
        %v5046 = vpop.f32.mrb[0].mxu0
        %v5047 = vadd.f32 %v5006, %v5046
        %v5048 = vpop.f32.mrb[0].mxu0
        %v5049 = vpop.f32.mrb[0].mxu0
        %5050 = vdwg.mxu0
        %5051 = vmatprep.subr.bf16.mxu0 %v3866
        %5052 = vmatpush1.bf16.msra.mxu0 %v3865
        %5053 = vmatprep.subr.bf16.mxu0 %v3874
        %5054 = vmatpush1.bf16.msra.mxu0 %v3873
        %5055 = vmatprep.subr.bf16.mxu0 %v3882
        %5056 = vmatpush1.bf16.msra.mxu0 %v3881
        %5057 = vmatprep.subr.bf16.mxu0 %v3890
        %5058 = vmatpush1.bf16.msra.mxu0 %v3889
        %5059 = vmatprep.subr.bf16.mxu0 %v3898
        %5060 = vmatpush1.bf16.msra.mxu0 %v3897
        %5061 = vmatprep.subr.bf16.mxu0 %v3906
        %5062 = vmatpush1.bf16.msra.mxu0 %v3905
        %5063 = vmatprep.subr.bf16.mxu0 %v3914
        %5064 = vmatpush1.bf16.msra.mxu0 %v3913
        %5065 = vmatprep.subr.bf16.mxu0 %v3922
        %5066 = vmatpush1.bf16.msra.mxu0 %v3921
        %5067 = vmatprep.subr.bf16.mxu0 %v3930
        %5068 = vmatpush1.bf16.msra.mxu0 %v3929
        %5069 = vmatprep.subr.bf16.mxu0 %v3938
        %5070 = vmatpush1.bf16.msra.mxu0 %v3937
        %5071 = vmatprep.subr.bf16.mxu0 %v3946
        %5072 = vmatpush1.bf16.msra.mxu0 %v3945
        %5073 = vmatprep.subr.bf16.mxu0 %v3954
        %5074 = vmatpush1.bf16.msra.mxu0 %v3953
        %5075 = vmatprep.subr.bf16.mxu0 %v3962
        %5076 = vmatpush1.bf16.msra.mxu0 %v3961
        %5077 = vmatprep.subr.bf16.mxu0 %v3970
        %5078 = vmatpush1.bf16.msra.mxu0 %v3969
        %5079 = vmatprep.subr.bf16.mxu0 %v3978
        %5080 = vmatpush1.bf16.msra.mxu0 %v3977
        %5081 = vmatprep.subr.bf16.mxu0 %v3986
        %5082 = vmatpush1.bf16.msra.mxu0 %v3985
        %5083 = vmatprep.mubr.bf16.mxu0 %v2312
        %5084 = vmatmul.mubr.bf16.gmra.mrb[0].mxu0 %v2311
        %v5085 = vpop.f32.mrb[0].mxu0
        %v5086 = vadd.f32 0.0, %v5085
        %v5087 = vpop.f32.mrb[0].mxu0
        %v5088 = vadd.f32 0.0, %v5087
        %v5089 = vpop.f32.mrb[0].mxu0
        %v5090 = vpop.f32.mrb[0].mxu0
        %5091 = vdwg.mxu0
        %5092 = vmatprep.subr.bf16.mxu0 %v3994
        %5093 = vmatpush1.bf16.msra.mxu0 %v3993
        %5094 = vmatprep.subr.bf16.mxu0 %v4002
        %5095 = vmatpush1.bf16.msra.mxu0 %v4001
        %5096 = vmatprep.subr.bf16.mxu0 %v4010
        %5097 = vmatpush1.bf16.msra.mxu0 %v4009
        %5098 = vmatprep.subr.bf16.mxu0 %v4018
        %5099 = vmatpush1.bf16.msra.mxu0 %v4017
        %5100 = vmatprep.subr.bf16.mxu0 %v4026
        %5101 = vmatpush1.bf16.msra.mxu0 %v4025
        %5102 = vmatprep.subr.bf16.mxu0 %v4034
        %5103 = vmatpush1.bf16.msra.mxu0 %v4033
        %5104 = vmatprep.subr.bf16.mxu0 %v4042
        %5105 = vmatpush1.bf16.msra.mxu0 %v4041
        %5106 = vmatprep.subr.bf16.mxu0 %v4050
        %5107 = vmatpush1.bf16.msra.mxu0 %v4049
        %5108 = vmatprep.subr.bf16.mxu0 %v4058
        %5109 = vmatpush1.bf16.msra.mxu0 %v4057
        %5110 = vmatprep.subr.bf16.mxu0 %v4066
        %5111 = vmatpush1.bf16.msra.mxu0 %v4065
        %5112 = vmatprep.subr.bf16.mxu0 %v4074
        %5113 = vmatpush1.bf16.msra.mxu0 %v4073
        %5114 = vmatprep.subr.bf16.mxu0 %v4082
        %5115 = vmatpush1.bf16.msra.mxu0 %v4081
        %5116 = vmatprep.subr.bf16.mxu0 %v4090
        %5117 = vmatpush1.bf16.msra.mxu0 %v4089
        %5118 = vmatprep.subr.bf16.mxu0 %v4098
        %5119 = vmatpush1.bf16.msra.mxu0 %v4097
        %5120 = vmatprep.subr.bf16.mxu0 %v4106
        %5121 = vmatpush1.bf16.msra.mxu0 %v4105
        %5122 = vmatprep.subr.bf16.mxu0 %v4114
        %5123 = vmatpush1.bf16.msra.mxu0 %v4113
        %5124 = vmatprep.mubr.bf16.mxu0 %v2314
        %5125 = vmatmul.mubr.bf16.gmra.mrb[0].mxu0 %v2313
        %v5126 = vpop.f32.mrb[0].mxu0
        %v5127 = vadd.f32 %v5086, %v5126
        %v5128 = vpop.f32.mrb[0].mxu0
        %v5129 = vadd.f32 %v5088, %v5128
        %v5130 = vpop.f32.mrb[0].mxu0
        %v5131 = vpop.f32.mrb[0].mxu0
        %5132 = vdwg.mxu0
        %5133 = vmatprep.subr.bf16.mxu0 %v4122
        %5134 = vmatpush1.bf16.msra.mxu0 %v4121
        %5135 = vmatprep.subr.bf16.mxu0 %v4130
        %5136 = vmatpush1.bf16.msra.mxu0 %v4129
        %5137 = vmatprep.subr.bf16.mxu0 %v4138
        %5138 = vmatpush1.bf16.msra.mxu0 %v4137
        %5139 = vmatprep.subr.bf16.mxu0 %v4146
        %5140 = vmatpush1.bf16.msra.mxu0 %v4145
        %5141 = vmatprep.subr.bf16.mxu0 %v4154
        %5142 = vmatpush1.bf16.msra.mxu0 %v4153
        %5143 = vmatprep.subr.bf16.mxu0 %v4162
        %5144 = vmatpush1.bf16.msra.mxu0 %v4161
        %5145 = vmatprep.subr.bf16.mxu0 %v4170
        %5146 = vmatpush1.bf16.msra.mxu0 %v4169
        %5147 = vmatprep.subr.bf16.mxu0 %v4178
        %5148 = vmatpush1.bf16.msra.mxu0 %v4177
        %5149 = vmatprep.subr.bf16.mxu0 %v4186
        %5150 = vmatpush1.bf16.msra.mxu0 %v4185
        %5151 = vmatprep.subr.bf16.mxu0 %v4194
        %5152 = vmatpush1.bf16.msra.mxu0 %v4193
        %5153 = vmatprep.subr.bf16.mxu0 %v4202
        %5154 = vmatpush1.bf16.msra.mxu0 %v4201
        %5155 = vmatprep.subr.bf16.mxu0 %v4210
        %5156 = vmatpush1.bf16.msra.mxu0 %v4209
        %5157 = vmatprep.subr.bf16.mxu0 %v4218
        %5158 = vmatpush1.bf16.msra.mxu0 %v4217
        %5159 = vmatprep.subr.bf16.mxu0 %v4226
        %5160 = vmatpush1.bf16.msra.mxu0 %v4225
        %5161 = vmatprep.subr.bf16.mxu0 %v4234
        %5162 = vmatpush1.bf16.msra.mxu0 %v4233
        %5163 = vmatprep.subr.bf16.mxu0 %v4242
        %5164 = vmatpush1.bf16.msra.mxu0 %v4241
        %5165 = vmatprep.mubr.bf16.mxu0 %v2316
        %5166 = vmatmul.mubr.bf16.gmra.mrb[0].mxu0 %v2315
        %v5167 = vpop.f32.mrb[0].mxu0
        %v5168 = vadd.f32 %v5127, %v5167
        %v5169 = vpop.f32.mrb[0].mxu0
        %v5170 = vadd.f32 %v5129, %v5169
        %v5171 = vpop.f32.mrb[0].mxu0
        %v5172 = vpop.f32.mrb[0].mxu0
        %5173 = vdwg.mxu0
        %5174 = vmatprep.subr.bf16.mxu0 %v4250
        %5175 = vmatpush1.bf16.msra.mxu0 %v4249
        %5176 = vmatprep.subr.bf16.mxu0 %v4258
        %5177 = vmatpush1.bf16.msra.mxu0 %v4257
        %5178 = vmatprep.subr.bf16.mxu0 %v4266
        %5179 = vmatpush1.bf16.msra.mxu0 %v4265
        %5180 = vmatprep.subr.bf16.mxu0 %v4274
        %5181 = vmatpush1.bf16.msra.mxu0 %v4273
        %5182 = vmatprep.subr.bf16.mxu0 %v4282
        %5183 = vmatpush1.bf16.msra.mxu0 %v4281
        %5184 = vmatprep.subr.bf16.mxu0 %v4290
        %5185 = vmatpush1.bf16.msra.mxu0 %v4289
        %5186 = vmatprep.subr.bf16.mxu0 %v4298
        %5187 = vmatpush1.bf16.msra.mxu0 %v4297
        %5188 = vmatprep.subr.bf16.mxu0 %v4306
        %5189 = vmatpush1.bf16.msra.mxu0 %v4305
        %5190 = vmatprep.subr.bf16.mxu0 %v4314
        %5191 = vmatpush1.bf16.msra.mxu0 %v4313
        %5192 = vmatprep.subr.bf16.mxu0 %v4322
        %5193 = vmatpush1.bf16.msra.mxu0 %v4321
        %5194 = vmatprep.subr.bf16.mxu0 %v4330
        %5195 = vmatpush1.bf16.msra.mxu0 %v4329
        %5196 = vmatprep.subr.bf16.mxu0 %v4338
        %5197 = vmatpush1.bf16.msra.mxu0 %v4337
        %5198 = vmatprep.subr.bf16.mxu0 %v4346
        %5199 = vmatpush1.bf16.msra.mxu0 %v4345
        %5200 = vmatprep.subr.bf16.mxu0 %v4354
        %5201 = vmatpush1.bf16.msra.mxu0 %v4353
        %5202 = vmatprep.subr.bf16.mxu0 %v4362
        %5203 = vmatpush1.bf16.msra.mxu0 %v4361
        %5204 = vmatprep.subr.bf16.mxu0 %v4370
        %5205 = vmatpush1.bf16.msra.mxu0 %v4369
        %5206 = vmatprep.mubr.bf16.mxu0 %v2318
        %5207 = vmatmul.mubr.bf16.gmra.mrb[0].mxu0 %v2317
        %v5208 = vpop.f32.mrb[0].mxu0
        %v5209 = vadd.f32 %v5168, %v5208
        %v5210 = vpop.f32.mrb[0].mxu0
        %v5211 = vadd.f32 %v5170, %v5210
        %v5212 = vpop.f32.mrb[0].mxu0
        %v5213 = vpop.f32.mrb[0].mxu0
        %5214 = vdwg.mxu0
        %5215 = vmatprep.subr.bf16.mxu0 %v3868
        %5216 = vmatpush1.bf16.msra.mxu0 %v3867
        %5217 = vmatprep.subr.bf16.mxu0 %v3876
        %5218 = vmatpush1.bf16.msra.mxu0 %v3875
        %5219 = vmatprep.subr.bf16.mxu0 %v3884
        %5220 = vmatpush1.bf16.msra.mxu0 %v3883
        %5221 = vmatprep.subr.bf16.mxu0 %v3892
        %5222 = vmatpush1.bf16.msra.mxu0 %v3891
        %5223 = vmatprep.subr.bf16.mxu0 %v3900
        %5224 = vmatpush1.bf16.msra.mxu0 %v3899
        %5225 = vmatprep.subr.bf16.mxu0 %v3908
        %5226 = vmatpush1.bf16.msra.mxu0 %v3907
        %5227 = vmatprep.subr.bf16.mxu0 %v3916
        %5228 = vmatpush1.bf16.msra.mxu0 %v3915
        %5229 = vmatprep.subr.bf16.mxu0 %v3924
        %5230 = vmatpush1.bf16.msra.mxu0 %v3923
        %5231 = vmatprep.subr.bf16.mxu0 %v3932
        %5232 = vmatpush1.bf16.msra.mxu0 %v3931
        %5233 = vmatprep.subr.bf16.mxu0 %v3940
        %5234 = vmatpush1.bf16.msra.mxu0 %v3939
        %5235 = vmatprep.subr.bf16.mxu0 %v3948
        %5236 = vmatpush1.bf16.msra.mxu0 %v3947
        %5237 = vmatprep.subr.bf16.mxu0 %v3956
        %5238 = vmatpush1.bf16.msra.mxu0 %v3955
        %5239 = vmatprep.subr.bf16.mxu0 %v3964
        %5240 = vmatpush1.bf16.msra.mxu0 %v3963
        %5241 = vmatprep.subr.bf16.mxu0 %v3972
        %5242 = vmatpush1.bf16.msra.mxu0 %v3971
        %5243 = vmatprep.subr.bf16.mxu0 %v3980
        %5244 = vmatpush1.bf16.msra.mxu0 %v3979
        %5245 = vmatprep.subr.bf16.mxu0 %v3988
        %5246 = vmatpush1.bf16.msra.mxu0 %v3987
        %5247 = vmatprep.mubr.bf16.mxu0 %v2312
        %5248 = vmatmul.mubr.bf16.gmra.mrb[0].mxu0 %v2311
        %v5249 = vpop.f32.mrb[0].mxu0
        %v5250 = vadd.f32 0.0, %v5249
        %v5251 = vpop.f32.mrb[0].mxu0
        %v5252 = vadd.f32 0.0, %v5251
        %v5253 = vpop.f32.mrb[0].mxu0
        %v5254 = vpop.f32.mrb[0].mxu0
        %5255 = vdwg.mxu0
        %5256 = vmatprep.subr.bf16.mxu0 %v3996
        %5257 = vmatpush1.bf16.msra.mxu0 %v3995
        %5258 = vmatprep.subr.bf16.mxu0 %v4004
        %5259 = vmatpush1.bf16.msra.mxu0 %v4003
        %5260 = vmatprep.subr.bf16.mxu0 %v4012
        %5261 = vmatpush1.bf16.msra.mxu0 %v4011
        %5262 = vmatprep.subr.bf16.mxu0 %v4020
        %5263 = vmatpush1.bf16.msra.mxu0 %v4019
        %5264 = vmatprep.subr.bf16.mxu0 %v4028
        %5265 = vmatpush1.bf16.msra.mxu0 %v4027
        %5266 = vmatprep.subr.bf16.mxu0 %v4036
        %5267 = vmatpush1.bf16.msra.mxu0 %v4035
        %5268 = vmatprep.subr.bf16.mxu0 %v4044
        %5269 = vmatpush1.bf16.msra.mxu0 %v4043
        %5270 = vmatprep.subr.bf16.mxu0 %v4052
        %5271 = vmatpush1.bf16.msra.mxu0 %v4051
        %5272 = vmatprep.subr.bf16.mxu0 %v4060
        %5273 = vmatpush1.bf16.msra.mxu0 %v4059
        %5274 = vmatprep.subr.bf16.mxu0 %v4068
        %5275 = vmatpush1.bf16.msra.mxu0 %v4067
        %5276 = vmatprep.subr.bf16.mxu0 %v4076
        %5277 = vmatpush1.bf16.msra.mxu0 %v4075
        %5278 = vmatprep.subr.bf16.mxu0 %v4084
        %5279 = vmatpush1.bf16.msra.mxu0 %v4083
        %5280 = vmatprep.subr.bf16.mxu0 %v4092
        %5281 = vmatpush1.bf16.msra.mxu0 %v4091
        %5282 = vmatprep.subr.bf16.mxu0 %v4100
        %5283 = vmatpush1.bf16.msra.mxu0 %v4099
        %5284 = vmatprep.subr.bf16.mxu0 %v4108
        %5285 = vmatpush1.bf16.msra.mxu0 %v4107
        %5286 = vmatprep.subr.bf16.mxu0 %v4116
        %5287 = vmatpush1.bf16.msra.mxu0 %v4115
        %5288 = vmatprep.mubr.bf16.mxu0 %v2314
        %5289 = vmatmul.mubr.bf16.gmra.mrb[0].mxu0 %v2313
        %v5290 = vpop.f32.mrb[0].mxu0
        %v5291 = vadd.f32 %v5250, %v5290
        %v5292 = vpop.f32.mrb[0].mxu0
        %v5293 = vadd.f32 %v5252, %v5292
        %v5294 = vpop.f32.mrb[0].mxu0
        %v5295 = vpop.f32.mrb[0].mxu0
        %5296 = vdwg.mxu0
        %5297 = vmatprep.subr.bf16.mxu0 %v4124
        %5298 = vmatpush1.bf16.msra.mxu0 %v4123
        %5299 = vmatprep.subr.bf16.mxu0 %v4132
        %5300 = vmatpush1.bf16.msra.mxu0 %v4131
        %5301 = vmatprep.subr.bf16.mxu0 %v4140
        %5302 = vmatpush1.bf16.msra.mxu0 %v4139
        %5303 = vmatprep.subr.bf16.mxu0 %v4148
        %5304 = vmatpush1.bf16.msra.mxu0 %v4147
        %5305 = vmatprep.subr.bf16.mxu0 %v4156
        %5306 = vmatpush1.bf16.msra.mxu0 %v4155
        %5307 = vmatprep.subr.bf16.mxu0 %v4164
        %5308 = vmatpush1.bf16.msra.mxu0 %v4163
        %5309 = vmatprep.subr.bf16.mxu0 %v4172
        %5310 = vmatpush1.bf16.msra.mxu0 %v4171
        %5311 = vmatprep.subr.bf16.mxu0 %v4180
        %5312 = vmatpush1.bf16.msra.mxu0 %v4179
        %5313 = vmatprep.subr.bf16.mxu0 %v4188
        %5314 = vmatpush1.bf16.msra.mxu0 %v4187
        %5315 = vmatprep.subr.bf16.mxu0 %v4196
        %5316 = vmatpush1.bf16.msra.mxu0 %v4195
        %5317 = vmatprep.subr.bf16.mxu0 %v4204
        %5318 = vmatpush1.bf16.msra.mxu0 %v4203
        %5319 = vmatprep.subr.bf16.mxu0 %v4212
        %5320 = vmatpush1.bf16.msra.mxu0 %v4211
        %5321 = vmatprep.subr.bf16.mxu0 %v4220
        %5322 = vmatpush1.bf16.msra.mxu0 %v4219
        %5323 = vmatprep.subr.bf16.mxu0 %v4228
        %5324 = vmatpush1.bf16.msra.mxu0 %v4227
        %5325 = vmatprep.subr.bf16.mxu0 %v4236
        %5326 = vmatpush1.bf16.msra.mxu0 %v4235
        %5327 = vmatprep.subr.bf16.mxu0 %v4244
        %5328 = vmatpush1.bf16.msra.mxu0 %v4243
        %5329 = vmatprep.mubr.bf16.mxu0 %v2316
        %5330 = vmatmul.mubr.bf16.gmra.mrb[0].mxu0 %v2315
        %v5331 = vpop.f32.mrb[0].mxu0
        %v5332 = vadd.f32 %v5291, %v5331
        %v5333 = vpop.f32.mrb[0].mxu0
        %v5334 = vadd.f32 %v5293, %v5333
        %v5335 = vpop.f32.mrb[0].mxu0
        %v5336 = vpop.f32.mrb[0].mxu0
        %5337 = vdwg.mxu0
        %5338 = vmatprep.subr.bf16.mxu0 %v4252
        %5339 = vmatpush1.bf16.msra.mxu0 %v4251
        %5340 = vmatprep.subr.bf16.mxu0 %v4260
        %5341 = vmatpush1.bf16.msra.mxu0 %v4259
        %5342 = vmatprep.subr.bf16.mxu0 %v4268
        %5343 = vmatpush1.bf16.msra.mxu0 %v4267
        %5344 = vmatprep.subr.bf16.mxu0 %v4276
        %5345 = vmatpush1.bf16.msra.mxu0 %v4275
        %5346 = vmatprep.subr.bf16.mxu0 %v4284
        %5347 = vmatpush1.bf16.msra.mxu0 %v4283
        %5348 = vmatprep.subr.bf16.mxu0 %v4292
        %5349 = vmatpush1.bf16.msra.mxu0 %v4291
        %5350 = vmatprep.subr.bf16.mxu0 %v4300
        %5351 = vmatpush1.bf16.msra.mxu0 %v4299
        %5352 = vmatprep.subr.bf16.mxu0 %v4308
        %5353 = vmatpush1.bf16.msra.mxu0 %v4307
        %5354 = vmatprep.subr.bf16.mxu0 %v4316
        %5355 = vmatpush1.bf16.msra.mxu0 %v4315
        %5356 = vmatprep.subr.bf16.mxu0 %v4324
        %5357 = vmatpush1.bf16.msra.mxu0 %v4323
        %5358 = vmatprep.subr.bf16.mxu0 %v4332
        %5359 = vmatpush1.bf16.msra.mxu0 %v4331
        %5360 = vmatprep.subr.bf16.mxu0 %v4340
        %5361 = vmatpush1.bf16.msra.mxu0 %v4339
        %5362 = vmatprep.subr.bf16.mxu0 %v4348
        %5363 = vmatpush1.bf16.msra.mxu0 %v4347
        %5364 = vmatprep.subr.bf16.mxu0 %v4356
        %5365 = vmatpush1.bf16.msra.mxu0 %v4355
        %5366 = vmatprep.subr.bf16.mxu0 %v4364
        %5367 = vmatpush1.bf16.msra.mxu0 %v4363
        %5368 = vmatprep.subr.bf16.mxu0 %v4372
        %5369 = vmatpush1.bf16.msra.mxu0 %v4371
        %5370 = vmatprep.mubr.bf16.mxu0 %v2318
        %5371 = vmatmul.mubr.bf16.gmra.mrb[0].mxu0 %v2317
        %v5372 = vpop.f32.mrb[0].mxu0
        %v5373 = vadd.f32 %v5332, %v5372
        %v5374 = vpop.f32.mrb[0].mxu0
        %v5375 = vadd.f32 %v5334, %v5374
        %v5376 = vpop.f32.mrb[0].mxu0
        %v5377 = vpop.f32.mrb[0].mxu0
        %5378 = vdwg.mxu0
        %5379 = vmatprep.subr.bf16.mxu0 %v3870
        %5380 = vmatpush1.bf16.msra.mxu0 %v3869
        %5381 = vmatprep.subr.bf16.mxu0 %v3878
        %5382 = vmatpush1.bf16.msra.mxu0 %v3877
        %5383 = vmatprep.subr.bf16.mxu0 %v3886
        %5384 = vmatpush1.bf16.msra.mxu0 %v3885
        %5385 = vmatprep.subr.bf16.mxu0 %v3894
        %5386 = vmatpush1.bf16.msra.mxu0 %v3893
        %5387 = vmatprep.subr.bf16.mxu0 %v3902
        %5388 = vmatpush1.bf16.msra.mxu0 %v3901
        %5389 = vmatprep.subr.bf16.mxu0 %v3910
        %5390 = vmatpush1.bf16.msra.mxu0 %v3909
        %5391 = vmatprep.subr.bf16.mxu0 %v3918
        %5392 = vmatpush1.bf16.msra.mxu0 %v3917
        %5393 = vmatprep.subr.bf16.mxu0 %v3926
        %5394 = vmatpush1.bf16.msra.mxu0 %v3925
        %5395 = vmatprep.subr.bf16.mxu0 %v3934
        %5396 = vmatpush1.bf16.msra.mxu0 %v3933
        %5397 = vmatprep.subr.bf16.mxu0 %v3942
        %5398 = vmatpush1.bf16.msra.mxu0 %v3941
        %5399 = vmatprep.subr.bf16.mxu0 %v3950
        %5400 = vmatpush1.bf16.msra.mxu0 %v3949
        %5401 = vmatprep.subr.bf16.mxu0 %v3958
        %5402 = vmatpush1.bf16.msra.mxu0 %v3957
        %5403 = vmatprep.subr.bf16.mxu0 %v3966
        %5404 = vmatpush1.bf16.msra.mxu0 %v3965
        %5405 = vmatprep.subr.bf16.mxu0 %v3974
        %5406 = vmatpush1.bf16.msra.mxu0 %v3973
        %5407 = vmatprep.subr.bf16.mxu0 %v3982
        %5408 = vmatpush1.bf16.msra.mxu0 %v3981
        %5409 = vmatprep.subr.bf16.mxu0 %v3990
        %5410 = vmatpush1.bf16.msra.mxu0 %v3989
        %5411 = vmatprep.mubr.bf16.mxu0 %v2312
        %5412 = vmatmul.mubr.bf16.gmra.mrb[0].mxu0 %v2311
        %v5413 = vpop.f32.mrb[0].mxu0
        %v5414 = vadd.f32 0.0, %v5413
        %v5415 = vpop.f32.mrb[0].mxu0
        %v5416 = vadd.f32 0.0, %v5415
        %v5417 = vpop.f32.mrb[0].mxu0
        %v5418 = vpop.f32.mrb[0].mxu0
        %5419 = vdwg.mxu0
        %5420 = vmatprep.subr.bf16.mxu0 %v3998
        %5421 = vmatpush1.bf16.msra.mxu0 %v3997
        %5422 = vmatprep.subr.bf16.mxu0 %v4006
        %5423 = vmatpush1.bf16.msra.mxu0 %v4005
        %5424 = vmatprep.subr.bf16.mxu0 %v4014
        %5425 = vmatpush1.bf16.msra.mxu0 %v4013
        %5426 = vmatprep.subr.bf16.mxu0 %v4022
        %5427 = vmatpush1.bf16.msra.mxu0 %v4021
        %5428 = vmatprep.subr.bf16.mxu0 %v4030
        %5429 = vmatpush1.bf16.msra.mxu0 %v4029
        %5430 = vmatprep.subr.bf16.mxu0 %v4038
        %5431 = vmatpush1.bf16.msra.mxu0 %v4037
        %5432 = vmatprep.subr.bf16.mxu0 %v4046
        %5433 = vmatpush1.bf16.msra.mxu0 %v4045
        %5434 = vmatprep.subr.bf16.mxu0 %v4054
        %5435 = vmatpush1.bf16.msra.mxu0 %v4053
        %5436 = vmatprep.subr.bf16.mxu0 %v4062
        %5437 = vmatpush1.bf16.msra.mxu0 %v4061
        %5438 = vmatprep.subr.bf16.mxu0 %v4070
        %5439 = vmatpush1.bf16.msra.mxu0 %v4069
        %5440 = vmatprep.subr.bf16.mxu0 %v4078
        %5441 = vmatpush1.bf16.msra.mxu0 %v4077
        %5442 = vmatprep.subr.bf16.mxu0 %v4086
        %5443 = vmatpush1.bf16.msra.mxu0 %v4085
        %5444 = vmatprep.subr.bf16.mxu0 %v4094
        %5445 = vmatpush1.bf16.msra.mxu0 %v4093
        %5446 = vmatprep.subr.bf16.mxu0 %v4102
        %5447 = vmatpush1.bf16.msra.mxu0 %v4101
        %5448 = vmatprep.subr.bf16.mxu0 %v4110
        %5449 = vmatpush1.bf16.msra.mxu0 %v4109
        %5450 = vmatprep.subr.bf16.mxu0 %v4118
        %5451 = vmatpush1.bf16.msra.mxu0 %v4117
        %5452 = vmatprep.mubr.bf16.mxu0 %v2314
        %5453 = vmatmul.mubr.bf16.gmra.mrb[0].mxu0 %v2313
        %v5454 = vpop.f32.mrb[0].mxu0
        %v5455 = vadd.f32 %v5414, %v5454
        %v5456 = vpop.f32.mrb[0].mxu0
        %v5457 = vadd.f32 %v5416, %v5456
        %v5458 = vpop.f32.mrb[0].mxu0
        %v5459 = vpop.f32.mrb[0].mxu0
        %5460 = vdwg.mxu0
        %5461 = vmatprep.subr.bf16.mxu0 %v4126
        %5462 = vmatpush1.bf16.msra.mxu0 %v4125
        %5463 = vmatprep.subr.bf16.mxu0 %v4134
        %5464 = vmatpush1.bf16.msra.mxu0 %v4133
        %5465 = vmatprep.subr.bf16.mxu0 %v4142
        %5466 = vmatpush1.bf16.msra.mxu0 %v4141
        %5467 = vmatprep.subr.bf16.mxu0 %v4150
        %5468 = vmatpush1.bf16.msra.mxu0 %v4149
        %5469 = vmatprep.subr.bf16.mxu0 %v4158
        %5470 = vmatpush1.bf16.msra.mxu0 %v4157
        %5471 = vmatprep.subr.bf16.mxu0 %v4166
        %5472 = vmatpush1.bf16.msra.mxu0 %v4165
        %5473 = vmatprep.subr.bf16.mxu0 %v4174
        %5474 = vmatpush1.bf16.msra.mxu0 %v4173
        %5475 = vmatprep.subr.bf16.mxu0 %v4182
        %5476 = vmatpush1.bf16.msra.mxu0 %v4181
        %5477 = vmatprep.subr.bf16.mxu0 %v4190
        %5478 = vmatpush1.bf16.msra.mxu0 %v4189
        %5479 = vmatprep.subr.bf16.mxu0 %v4198
        %5480 = vmatpush1.bf16.msra.mxu0 %v4197
        %5481 = vmatprep.subr.bf16.mxu0 %v4206
        %5482 = vmatpush1.bf16.msra.mxu0 %v4205
        %5483 = vmatprep.subr.bf16.mxu0 %v4214
        %5484 = vmatpush1.bf16.msra.mxu0 %v4213
        %5485 = vmatprep.subr.bf16.mxu0 %v4222
        %5486 = vmatpush1.bf16.msra.mxu0 %v4221
        %5487 = vmatprep.subr.bf16.mxu0 %v4230
        %5488 = vmatpush1.bf16.msra.mxu0 %v4229
        %5489 = vmatprep.subr.bf16.mxu0 %v4238
        %5490 = vmatpush1.bf16.msra.mxu0 %v4237
        %5491 = vmatprep.subr.bf16.mxu0 %v4246
        %5492 = vmatpush1.bf16.msra.mxu0 %v4245
        %5493 = vmatprep.mubr.bf16.mxu0 %v2316
        %5494 = vmatmul.mubr.bf16.gmra.mrb[0].mxu0 %v2315
        %v5495 = vpop.f32.mrb[0].mxu0
        %v5496 = vadd.f32 %v5455, %v5495
        %v5497 = vpop.f32.mrb[0].mxu0
        %v5498 = vadd.f32 %v5457, %v5497
        %v5499 = vpop.f32.mrb[0].mxu0
        %v5500 = vpop.f32.mrb[0].mxu0
        %5501 = vdwg.mxu0
        %5502 = vmatprep.subr.bf16.mxu0 %v4254
        %5503 = vmatpush1.bf16.msra.mxu0 %v4253
        %5504 = vmatprep.subr.bf16.mxu0 %v4262
        %5505 = vmatpush1.bf16.msra.mxu0 %v4261
        %5506 = vmatprep.subr.bf16.mxu0 %v4270
        %5507 = vmatpush1.bf16.msra.mxu0 %v4269
        %5508 = vmatprep.subr.bf16.mxu0 %v4278
        %5509 = vmatpush1.bf16.msra.mxu0 %v4277
        %5510 = vmatprep.subr.bf16.mxu0 %v4286
        %5511 = vmatpush1.bf16.msra.mxu0 %v4285
        %5512 = vmatprep.subr.bf16.mxu0 %v4294
        %5513 = vmatpush1.bf16.msra.mxu0 %v4293
        %5514 = vmatprep.subr.bf16.mxu0 %v4302
        %5515 = vmatpush1.bf16.msra.mxu0 %v4301
        %5516 = vmatprep.subr.bf16.mxu0 %v4310
        %5517 = vmatpush1.bf16.msra.mxu0 %v4309
        %5518 = vmatprep.subr.bf16.mxu0 %v4318
        %5519 = vmatpush1.bf16.msra.mxu0 %v4317
        %5520 = vmatprep.subr.bf16.mxu0 %v4326
        %5521 = vmatpush1.bf16.msra.mxu0 %v4325
        %5522 = vmatprep.subr.bf16.mxu0 %v4334
        %5523 = vmatpush1.bf16.msra.mxu0 %v4333
        %5524 = vmatprep.subr.bf16.mxu0 %v4342
        %5525 = vmatpush1.bf16.msra.mxu0 %v4341
        %5526 = vmatprep.subr.bf16.mxu0 %v4350
        %5527 = vmatpush1.bf16.msra.mxu0 %v4349
        %5528 = vmatprep.subr.bf16.mxu0 %v4358
        %5529 = vmatpush1.bf16.msra.mxu0 %v4357
        %5530 = vmatprep.subr.bf16.mxu0 %v4366
        %5531 = vmatpush1.bf16.msra.mxu0 %v4365
        %5532 = vmatprep.subr.bf16.mxu0 %v4374
        %5533 = vmatpush1.bf16.msra.mxu0 %v4373
        %5534 = vmatprep.mubr.bf16.mxu0 %v2318
        %5535 = vmatmul.mubr.bf16.gmra.mrb[0].mxu0 %v2317
        %v5536 = vpop.f32.mrb[0].mxu0
        %v5537 = vadd.f32 %v5496, %v5536
        %v5538 = vpop.f32.mrb[0].mxu0
        %v5539 = vadd.f32 %v5498, %v5538
        %v5540 = vpop.f32.mrb[0].mxu0
        %v5541 = vpop.f32.mrb[0].mxu0
        %5542 = vdwg.mxu0
        %v5543 = vadd.f32 %v1771, %v5045
        %v5544 = vadd.f32 %v1772, %v5047
        %v5545 = vadd.f32 %v1773, %v5209
        %v5546 = vadd.f32 %v1774, %v5211
        %v5547 = vadd.f32 %v1775, %v5373
        %v5548 = vadd.f32 %v1776, %v5375
        %v5549 = vadd.f32 %v1777, %v5537
        %v5550 = vadd.f32 %v1778, %v5539
        %5551 = vst [vmem:[%s324] sm:$0xff] %v5543
        %5552 = vst [vmem:[%s324 + $0x8] sm:$0xff] %v5544
        %5553 = vst [vmem:[%s324 + $0x10] sm:$0xff] %v5545
        %5554 = vst [vmem:[%s324 + $0x18] sm:$0xff] %v5546
        %5555 = vst [vmem:[%s324 + $0x20] sm:$0xff] %v5547
        %5556 = vst [vmem:[%s324 + $0x28] sm:$0xff] %v5548
        %5557 = vst [vmem:[%s324 + $0x30] sm:$0xff] %v5549
        %5558 = vst [vmem:[%s324 + $0x38] sm:$0xff] %v5550
        %p5559 = scmp.eq.s32.totalorder %s23, 3
        // Predicated region
        $region61: #{net_forward.2} parent=39 // pred_check
          %p5560 = pneg %p5559
        $region62: #{net_forward.2} parent=39 // pred_check_branch
          %5562 = sbr.rel (%p5560) target = $region64
        $region63: #{net_forward.2} parent=39 // pred_region
          %v5563 = vld [vmem:[%s324] sm:$0xff]
          %v5564 = vld [vmem:[%s324 + $0x8] sm:$0xff]
          %v5565 = vld [vmem:[%s324 + $0x10] sm:$0xff]
          %v5566 = vld [vmem:[%s324 + $0x18] sm:$0xff]
          %v5567 = vld [vmem:[%s324 + $0x20] sm:$0xff]
          %v5568 = vld [vmem:[%s324 + $0x28] sm:$0xff]
          %v5569 = vld [vmem:[%s324 + $0x30] sm:$0xff]
          %v5570 = vld [vmem:[%s324 + $0x38] sm:$0xff]
          %v5571 = vmax.f32 %v5563, 0.0
          %v5572 = vmax.f32 %v5564, 0.0
          %v5573 = vmax.f32 %v5565, 0.0
          %v5574 = vmax.f32 %v5566, 0.0
          %v5575 = vmax.f32 %v5567, 0.0
          %v5576 = vmax.f32 %v5568, 0.0
          %v5577 = vmax.f32 %v5569, 0.0
          %v5578 = vmax.f32 %v5570, 0.0
          %5579 = vst [vmem:[%s324] sm:$0xff] %v5571
          %5580 = vst [vmem:[%s324 + $0x8] sm:$0xff] %v5572
          %5581 = vst [vmem:[%s324 + $0x10] sm:$0xff] %v5573
          %5582 = vst [vmem:[%s324 + $0x18] sm:$0xff] %v5574
          %5583 = vst [vmem:[%s324 + $0x20] sm:$0xff] %v5575
          %5584 = vst [vmem:[%s324 + $0x28] sm:$0xff] %v5576
          %5585 = vst [vmem:[%s324 + $0x30] sm:$0xff] %v5577
          %5586 = vst [vmem:[%s324 + $0x38] sm:$0xff] %v5578
        $region64: #{net_forward.2} parent=39 // pred_fallthru
          _
        %s5587 = smul.u32 8, %s22
        %p5588 = scmp.lt.s32.totalorder %s5587, 15
        %s5589 = scalar_select %p5588, %s5587, 15
        %s5590 = smul.addr %s5589, 8
        %s5591 = scalar_lea.vmem %s5, %s5590
        // Predicated region
        $region65: #{net_forward.2} parent=39 // pred_check
          %p5592 = pneg %p165
        $region66: #{net_forward.2} parent=39 // pred_check_branch
          %5594 = sbr.rel (%p5592) target = $region68
        $region67: #{net_forward.2} parent=39 // pred_region
          %s5595 = smul.u32 8, %s22
        $region68: #{net_forward.2} parent=39 // pred_fallthru
          _
      $region40: #{net_forward.2} parent=5 // pred_fallthru
        _
      %p5596 = scmp.le.s32.totalorder 2, %s13
      // Predicated region
      $region69: #{net_forward.2} parent=5 // pred_check
        %p5597 = pneg %p5596
      $region70: #{net_forward.2} parent=5 // pred_check_branch
        %5599 = sbr.rel (%p5597) target = $region72
      $region71: #{net_forward.2} parent=5 // pred_region
        %s5600 = ssub.s32 %s13, 2
        // Predicated region
        $region73: #{net_forward.2} parent=71 // pred_check
          %p5601 = pneg %p171
        $region74: #{net_forward.2} parent=71 // pred_check_branch
          %5603 = sbr.rel (%p5601) target = $region76
        $region75: #{net_forward.2} parent=71 // pred_region
          %s5604 = smul.u32 8, %s24
          %p5605 = scmp.lt.s32.totalorder %s5604, 15
          %s5606 = scalar_select %p5605, %s5604, 15
          %s5607 = smul.addr %s5606, 8
          %s5608 = scalar_lea.vmem %s5, %s5607
        $region76: #{net_forward.2} parent=71 // pred_fallthru
          _
      $region72: #{net_forward.2} parent=5 // pred_fallthru
        _
    $region6: #{net_forward.2} parent=1 // loop_footer
      %s17 = sadd.s32 1, %s13
    $region7: #{net_forward.2} parent=1 // loop_footer_branch
      %12 = sbr.rel target = $region3
    $region8: #{net_forward.2} parent=1 // loop_exit
      _
    %5609 = vsyncpa [#allocation4], 1
    %s5610 = scalar_lea.sflag [#allocation4], 1
    %5611 = vsyncpa %s5610, 1
    %5612 = vsyncpa [#allocation6], 1

</llo_original>
